<compile_context>
chip_gen: v7x
topology: tpu7x:2x2x1
jax: 0.10.0
libtpu: 0.0.40
codegen_flags: <defaults>
</compile_context>

<pallas_src>
import jax
import jax.numpy as jnp
from jax.experimental import pallas as pl
from jax.experimental.pallas import tpu as pltpu

BN_EPS = 1e-5
VMEM_SPEC = pl.BlockSpec(memory_space=pltpu.MemorySpace.VMEM)
ANY_SPEC = pl.BlockSpec(memory_space=pl.ANY)


# ----------------------------------------------------------------------------
# Fused kernel:
#   HistogramCNN:
#     conv1d(1->32,k3,p1)+ReLU -> conv1d(32->64,k3,p1)+ReLU -> global max pool
#     -> fc1(64->128)+BN+ReLU -> fc2(128->256)+BN+ReLU -> fc3(256->Hd)
#   MCNN head (int8 weights, per-output-channel dequant in epilogue):
#     [text | img | hist] -> fc1(->2048)+ReLU -> fc2(->1024)+ReLU
#     -> fc3(->512)+ReLU -> fc4(->1)
#   (dropout = identity in eval; BatchNorm uses running stats, pre-folded to
#    scale/shift outside the kernel)
# ----------------------------------------------------------------------------
def mcnn_fused_kernel(
    # inputs
    hist_ref,                     # [B, L+2] f32, pre-zero-padded along length
    text_ref, img_ref,            # [B, Td], [B, Id] f32
    c1w_ref,                      # [3, C1] f32
    c2w_ref,                      # [3*C1, C2] f32 (im2col layout, tap-major)
    hfc1w_ref, hfc2w_ref, hfc3w_ref,   # [64,128], [128,256], [256,Hd] f32
    hsmall_ref,                   # [9, 256] f32 packed biases / BN scale+shift
    w1_hbm,                       # [Td+Id+Hd, 2048] int8, HBM
    w2_hbm,                       # [2, 2048, 512]     int8, HBM (column chunks)
    w3_hbm,                       # [1024, 512]        int8, HBM
    hdsmall_ref,                  # [8, 2048] f32 packed head biases/scales/fc4 row
    # output
    out_ref,                      # [B, 1] f32
    # scratch
    w1_vmem, w2_vmem, w3_vmem, dma_sem,
):
    f32 = jnp.float32
    bf16 = jnp.bfloat16

    # Kick off the int8 head-weight DMAs immediately, ordered by first use
    # (w1 -> w2 chunk0 -> w2 chunk1 -> w3): each stream wins HBM arbitration
    # over the one needed after it, and all of it overlaps the histogram
    # branch compute below.
    w1_cp = pltpu.make_async_copy(w1_hbm, w1_vmem, dma_sem.at[0])
    w2c0_cp = pltpu.make_async_copy(w2_hbm.at[0], w2_vmem.at[0], dma_sem.at[1])
    w2c1_cp = pltpu.make_async_copy(w2_hbm.at[1], w2_vmem.at[1], dma_sem.at[2])
    w3_cp = pltpu.make_async_copy(w3_hbm, w3_vmem, dma_sem.at[3])
    w1_cp.start()
    w2c0_cp.start()
    w2c1_cp.start()
    w3_cp.start()

    x_pad = hist_ref[...]                         # [B, L+2]
    B = x_pad.shape[0]
    L = x_pad.shape[1] - 2

    hsmall = hsmall_ref[...]                      # [9, 256]
    conv1_b = hsmall[0:1, 0:32]
    conv2_b = hsmall[1:2, 0:64]
    fc1_b = hsmall[2:3, 0:128]
    bn1_s = hsmall[3:4, 0:128]
    bn1_t = hsmall[4:5, 0:128]
    fc2_b = hsmall[5:6, 0:256]
    bn2_s = hsmall[6:7, 0:256]
    bn2_t = hsmall[7:8, 0:256]
    Hd = hfc3w_ref.shape[1]
    fc3_b = hsmall[8:9, 0:Hd]

    # ---- conv1 (in_channels=1): 3 shifted broadcast-mul taps (VPU) ----
    w1 = c1w_ref[...]                             # [3, C1]
    C1 = w1.shape[1]
    h1 = (x_pad[:, 0:L, None] * w1[0][None, None, :]
          + x_pad[:, 1:L + 1, None] * w1[1][None, None, :]
          + x_pad[:, 2:L + 2, None] * w1[2][None, None, :])
    h1 = jnp.maximum(h1 + conv1_b[None, :, :], 0.0)          # [B, L, C1]

    # ---- conv2 as a single im2col MXU dot: [B*L, 3*C1] @ [3*C1, C2] ----
    zrow = jnp.zeros((B, 1, C1), f32)
    h1_pad = jnp.concatenate([zrow, h1, zrow], axis=1)        # [B, L+2, C1]
    cols = jnp.concatenate(
        [h1_pad[:, 0:L, :], h1_pad[:, 1:L + 1, :], h1_pad[:, 2:L + 2, :]],
        axis=2)                                               # [B, L, 3*C1]
    w2c = c2w_ref[...]                                        # [3*C1, C2]
    C2 = w2c.shape[1]
    h2 = jnp.dot(cols.reshape(B * L, 3 * C1), w2c,
                 preferred_element_type=f32) + conv2_b        # [B*L, C2]
    h2 = jnp.maximum(h2, 0.0)

    # ---- AdaptiveMaxPool1d(1) == global max over length ----
    pooled = jnp.max(h2.reshape(B, L, C2), axis=1)            # [B, C2]

    # ---- fc1 + BN1(scale/shift) + ReLU ----
    z = jnp.dot(pooled, hfc1w_ref[...], preferred_element_type=f32) + fc1_b
    z = jnp.maximum(z * bn1_s + bn1_t, 0.0)
    # ---- fc2 + BN2(scale/shift) + ReLU ----
    z = jnp.dot(z, hfc2w_ref[...], preferred_element_type=f32) + fc2_b
    z = jnp.maximum(z * bn2_s + bn2_t, 0.0)
    # ---- fc3 -> histogram features ----
    hist_feat = jnp.dot(z, hfc3w_ref[...], preferred_element_type=f32) + fc3_b  # [B, Hd]

    # ---- fusion head ----
    hd = hdsmall_ref[...]                                     # [8, 2048]
    b1 = hd[0:1, :]
    b2a = hd[1:2, 0:512]
    b2b = hd[1:2, 512:1024]
    b3 = hd[2:3, 0:512]
    b4 = hd[3:4, 0:1]
    w4_row = hd[4:5, 0:512]
    s1 = hd[5:6, :]
    s2a = hd[6:7, 0:512]
    s2b = hd[6:7, 512:1024]
    s3 = hd[7:8, 0:512]

    # concat order matches torch.cat((text, image, hist), dim=1)
    x96 = jnp.concatenate([text_ref[...], img_ref[...], hist_feat], axis=-1)

    # fc1: single merged K=(Td+Id+Hd) dot; dequant via per-column scale s1.
    w1_cp.wait()
    h = jnp.dot(x96.astype(bf16), w1_vmem[...].astype(bf16),
                preferred_element_type=f32)
    h = jnp.maximum(h * s1 + b1, 0.0)                         # [B, 2048]
    h_bf = h.astype(bf16)

    # fc2: two 512-column blocks, computed as each chunk's DMA lands.
    w2c0_cp.wait()
    h2a = jnp.maximum(
        jnp.dot(h_bf, w2_vmem[0].astype(bf16),
                preferred_element_type=f32) * s2a + b2a, 0.0)
    w2c1_cp.wait()
    h2b = jnp.maximum(
        jnp.dot(h_bf, w2_vmem[1].astype(bf16),
                preferred_element_type=f32) * s2b + b2b, 0.0)
    hcat = jnp.concatenate([h2a, h2b], axis=-1).astype(bf16)  # [B, 1024]

    # fc3
    w3_cp.wait()
    h3 = jnp.maximum(
        jnp.dot(hcat, w3_vmem[...].astype(bf16),
                preferred_element_type=f32) * s3 + b3, 0.0)   # [B, 512]

    # fc4 (512 -> 1) as a row-vector multiply + lane reduce.
    out_ref[...] = jnp.sum(h3 * w4_row, axis=-1, keepdims=True) + b4


def mcnn_fused(text_feat, img_feat, hist, params):
    hp, hd = params["hist"], params["head"]
    B, L = hist.shape
    B_pad = max(8, ((B + 7) // 8) * 8)    # pad batch to f32 sublane multiple

    def pad_b(a):
        return jnp.pad(a, ((0, B_pad - B), (0, 0)))

    # pre-pad histogram length by 1 on each side (conv1 zero padding) + batch
    hist_pad = jnp.pad(hist.astype(jnp.float32), ((0, B_pad - B), (1, 1)))
    text_p = pad_b(text_feat.astype(jnp.float32))
    img_p = pad_b(img_feat.astype(jnp.float32))

    args = (
        hist_pad, text_p, img_p,
        hp["conv1_w"], hp["conv2_w"],
        hp["fc1_w"], hp["fc2_w"], hp["fc3_w"],
        hp["small"],
        hd["w1"], hd["w2"], hd["w3"],
        hd["small"],
    )
    in_specs = [VMEM_SPEC] * 9 + [ANY_SPEC, ANY_SPEC, ANY_SPEC] + [VMEM_SPEC]

    out = pl.pallas_call(
        mcnn_fused_kernel,
        out_shape=jax.ShapeDtypeStruct((B_pad, 1), jnp.float32),
        in_specs=in_specs,
        out_specs=VMEM_SPEC,
        scratch_shapes=[
            pltpu.VMEM(hd["w1"].shape, hd["w1"].dtype),   # int8
            pltpu.VMEM(hd["w2"].shape, hd["w2"].dtype),   # int8, 2 chunks
            pltpu.VMEM(hd["w3"].shape, hd["w3"].dtype),   # int8
            pltpu.SemaphoreType.DMA((4,)),
        ],
        compiler_params=pltpu.CompilerParams(vmem_limit_bytes=16 * 1024 * 1024),
    )(*args)
    return jnp.squeeze(out[:B])      # matches torch .squeeze()


# ----------------------------------------------------------------------------
# Parameter construction (deterministic, synthetic), pre-packed for the kernel
# ----------------------------------------------------------------------------
def make_params(key, text_dim, img_dim, hist_dim):
    keys = jax.random.split(key, 16)
    f32 = jnp.float32

    def dense(k, fi, fo, scale=0.05):
        kw, kb = jax.random.split(k)
        return (jax.random.normal(kw, (fi, fo), f32) * scale,
                jax.random.normal(kb, (fo,), f32) * scale)

    def row(vec, width):
        r = jnp.zeros((1, width), f32)
        return r.at[0, :vec.shape[-1]].set(vec.reshape(-1))

    def quant8_cols(w):
        # per-output-channel symmetric int8; dequant folded into epilogue
        s = jnp.max(jnp.abs(w), axis=0) / 127.0
        s = jnp.maximum(s, 1e-8)
        q = jnp.clip(jnp.round(w / s[None, :]), -127, 127).astype(jnp.int8)
        return q, s

    # ---- HistogramCNN ----
    conv1_w = jax.random.normal(keys[0], (3, 32), f32) * 0.1        # PyTorch [32,1,3] -> [tap, C1]
    conv1_b = jax.random.normal(keys[1], (32,), f32) * 0.05
    conv2_w = jax.random.normal(keys[2], (3, 32, 64), f32) * 0.05   # PyTorch [64,32,3] -> [tap, C1, C2]
    conv2_b = jax.random.normal(keys[3], (64,), f32) * 0.05
    fc1_w, fc1_b = dense(keys[4], 64, 128)
    fc2_w, fc2_b = dense(keys[5], 128, 256)
    fc3_w, fc3_b = dense(keys[6], 256, hist_dim)

    def bn_fold(k, n):
        k1, k2, k3, k4 = jax.random.split(k, 4)
        g = 1.0 + 0.1 * jax.random.normal(k1, (n,), f32)
        b = 0.1 * jax.random.normal(k2, (n,), f32)
        m = 0.1 * jax.random.normal(k3, (n,), f32)
        v = 1.0 + 0.5 * jax.random.uniform(k4, (n,), f32)
        scale = g * jax.lax.rsqrt(v + BN_EPS)
        shift = b - m * scale
        return scale, shift

    bn1_s, bn1_t = bn_fold(keys[7], 128)
    bn2_s, bn2_t = bn_fold(keys[8], 256)

    hist_small = jnp.concatenate([
        row(conv1_b, 256), row(conv2_b, 256),
        row(fc1_b, 256), row(bn1_s, 256), row(bn1_t, 256),
        row(fc2_b, 256), row(bn2_s, 256), row(bn2_t, 256),
        row(fc3_b, 256),
    ], axis=0)                                                      # [9, 256]

    hist = {
        "conv1_w": conv1_w,
        "conv2_w": conv2_w.reshape(3 * 32, 64),   # im2col layout [tap*C1, C2]
        "fc1_w": fc1_w, "fc2_w": fc2_w, "fc3_w": fc3_w,
        "small": hist_small,
    }

    # ---- Fusion head: int8 weights + per-channel scales packed with biases ----
    D = text_dim + img_dim + hist_dim
    w1, b1 = dense(keys[9], D, 2048)
    w2, b2 = dense(keys[10], 2048, 1024)
    w3, b3 = dense(keys[11], 1024, 512)
    w4, b4 = dense(keys[12], 512, 1)

    q1, s1 = quant8_cols(w1)                    # [D, 2048] int8, [2048]
    q2, s2 = quant8_cols(w2)                    # [2048, 1024] int8, [1024]
    q3, s3 = quant8_cols(w3)                    # [1024, 512] int8, [512]

    head_small = jnp.concatenate([
        row(b1, 2048), row(b2, 2048), row(b3, 2048), row(b4, 2048),
        row(w4.reshape(-1), 2048),
        row(s1, 2048), row(s2, 2048), row(s3, 2048),
    ], axis=0)                                                      # [8, 2048]

    head = {
        "w1": q1,                                                   # [D, 2048]
        "w2": jnp.stack([q2[:, :512], q2[:, 512:]], axis=0),        # [2, 2048, 512]
        "w3": q3,                                                   # [1024, 512]
        "small": head_small,
    }

    # ---- text / image proxy stubs (plain JAX glue) ----
    text = {
        "emb": jax.random.normal(keys[13], (100, text_dim), f32) * 0.1,
        "pool_w": jax.random.normal(keys[14], (text_dim, text_dim), f32) * 0.1,
    }
    image = {
        "proj_w": jax.random.normal(keys[15], (3 * 16 * 16, img_dim), f32) * 0.02,
    }
    return {"hist": hist, "head": head, "text": text, "image": image}


# ----------------------------------------------------------------------------
# Full MCNN forward (eval mode)
# ----------------------------------------------------------------------------
def mcnn_forward(params, input_ids, attention_mask, images, histograms):
    # TODO(synk): stand-in for pretrained BERT pooled output (no Pallas equivalent).
    emb = params["text"]["emb"][input_ids]                        # [B, S, Td]
    mask = attention_mask[..., None].astype(jnp.float32)
    pooled = (emb * mask).sum(axis=1) / jnp.maximum(mask.sum(axis=1), 1.0)
    text_features = jnp.tanh(pooled @ params["text"]["pool_w"])   # [B, Td]

    # TODO(synk): stand-in for frozen VGG16 backbone + classifier head (no Pallas equivalent).
    img_flat = images.reshape(images.shape[0], -1).astype(jnp.float32)
    image_features = jnp.maximum(img_flat @ params["image"]["proj_w"], 0.0)  # [B, Id]

    # Histogram branch + fusion head: one fused Pallas kernel.
    return mcnn_fused(text_features, image_features,
                      histograms.astype(jnp.float32), params)


if __name__ == "__main__":
    key = jax.random.PRNGKey(0)
    k_ids, k_img, k_hist, k_params = jax.random.split(key, 4)

    B, S, L = 2, 8, 16
    text_dim = img_dim = hist_dim = 32

    input_ids = jax.random.randint(k_ids, (B, S), 0, 100, dtype=jnp.int32)
    attention_mask = jnp.ones((B, S), jnp.int32)
    images = jax.random.normal(k_img, (B, 3, 16, 16), jnp.float32)
    histograms = jax.random.uniform(k_hist, (B, L), jnp.float32)

    params = make_params(k_params, text_dim, img_dim, hist_dim)

    out = mcnn_forward(params, input_ids, attention_mask, images, histograms)
    out = jax.block_until_ready(out)
    assert out.shape == (B,), out.shape
    print("KERNEL_OK")
</pallas_src>

<mosaic_0001>
module attributes {stable_mosaic.version = 11 : i64} {
  func.func @mcnn_fused_kernel(%arg0: memref<8x18xf32, #tpu.memory_space<vmem>>, %arg1: memref<8x32xf32, #tpu.memory_space<vmem>>, %arg2: memref<8x32xf32, #tpu.memory_space<vmem>>, %arg3: memref<3x32xf32, #tpu.memory_space<vmem>>, %arg4: memref<96x64xf32, #tpu.memory_space<vmem>>, %arg5: memref<64x128xf32, #tpu.memory_space<vmem>>, %arg6: memref<128x256xf32, #tpu.memory_space<vmem>>, %arg7: memref<256x32xf32, #tpu.memory_space<vmem>>, %arg8: memref<9x256xf32, #tpu.memory_space<vmem>>, %arg9: memref<96x2048xi8, #tpu.memory_space<any>>, %arg10: memref<2x2048x512xi8, #tpu.memory_space<any>>, %arg11: memref<1024x512xi8, #tpu.memory_space<any>>, %arg12: memref<8x2048xf32, #tpu.memory_space<vmem>>, %arg13: memref<8x1xf32, #tpu.memory_space<vmem>>, %arg14: memref<96x2048xi8, #tpu.memory_space<vmem>>, %arg15: memref<2x2048x512xi8, #tpu.memory_space<vmem>>, %arg16: memref<1024x512xi8, #tpu.memory_space<vmem>>, %arg17: memref<4x!tpu.dma_semaphore, #tpu.memory_space<semaphore_mem>>) attributes {dimension_semantics = [], scalar_prefetch = 0 : i64, scratch_operands = 4 : i64, tpu.core_type = #tpu.core_type<tc>} {
    %c0_i32 = arith.constant 0 : i32
    %0 = tpu.memref_slice %arg17[%c0_i32] : memref<4x!tpu.dma_semaphore, #tpu.memory_space<semaphore_mem>> -> memref<1x!tpu.dma_semaphore, #tpu.memory_space<semaphore_mem>>
    %1 = tpu.memref_squeeze %0 : memref<1x!tpu.dma_semaphore, #tpu.memory_space<semaphore_mem>> -> memref<!tpu.dma_semaphore, #tpu.memory_space<semaphore_mem>>
    tpu.enqueue_dma source(%arg9 : memref<96x2048xi8, #tpu.memory_space<any>>) target(%arg14 : memref<96x2048xi8, #tpu.memory_space<vmem>>) target_semaphore(%1 : memref<!tpu.dma_semaphore, #tpu.memory_space<semaphore_mem>>)
    %c0_i32_0 = arith.constant 0 : i32
    %c0_i32_1 = arith.constant 0 : i32
    %c1_i32 = arith.constant 1 : i32
    %c0_i32_2 = arith.constant 0 : i32
    %c0_i32_3 = arith.constant 0 : i32
    %2 = tpu.memref_slice %arg10[%c0_i32_0, %c0_i32_2, %c0_i32_3] : memref<2x2048x512xi8, #tpu.memory_space<any>> -> memref<1x2048x512xi8, #tpu.memory_space<any>>
    %3 = tpu.memref_squeeze %2 : memref<1x2048x512xi8, #tpu.memory_space<any>> -> memref<2048x512xi8, #tpu.memory_space<any>>
    %c0_i32_4 = arith.constant 0 : i32
    %c0_i32_5 = arith.constant 0 : i32
    %4 = tpu.memref_slice %arg15[%c0_i32_1, %c0_i32_4, %c0_i32_5] : memref<2x2048x512xi8, #tpu.memory_space<vmem>> -> memref<1x2048x512xi8, #tpu.memory_space<vmem>>
    %5 = tpu.memref_squeeze %4 : memref<1x2048x512xi8, #tpu.memory_space<vmem>> -> memref<2048x512xi8, #tpu.memory_space<vmem>>
    %6 = tpu.memref_slice %arg17[%c1_i32] : memref<4x!tpu.dma_semaphore, #tpu.memory_space<semaphore_mem>> -> memref<1x!tpu.dma_semaphore, #tpu.memory_space<semaphore_mem>>
    %7 = tpu.memref_squeeze %6 : memref<1x!tpu.dma_semaphore, #tpu.memory_space<semaphore_mem>> -> memref<!tpu.dma_semaphore, #tpu.memory_space<semaphore_mem>>
    tpu.enqueue_dma source(%3 : memref<2048x512xi8, #tpu.memory_space<any>>) target(%5 : memref<2048x512xi8, #tpu.memory_space<vmem>>) target_semaphore(%7 : memref<!tpu.dma_semaphore, #tpu.memory_space<semaphore_mem>>)
    %c1_i32_6 = arith.constant 1 : i32
    %c1_i32_7 = arith.constant 1 : i32
    %c2_i32 = arith.constant 2 : i32
    %c0_i32_8 = arith.constant 0 : i32
    %c0_i32_9 = arith.constant 0 : i32
    %8 = tpu.memref_slice %arg10[%c1_i32_6, %c0_i32_8, %c0_i32_9] : memref<2x2048x512xi8, #tpu.memory_space<any>> -> memref<1x2048x512xi8, #tpu.memory_space<any>>
    %9 = tpu.memref_squeeze %8 : memref<1x2048x512xi8, #tpu.memory_space<any>> -> memref<2048x512xi8, #tpu.memory_space<any>>
    %c0_i32_10 = arith.constant 0 : i32
    %c0_i32_11 = arith.constant 0 : i32
    %10 = tpu.memref_slice %arg15[%c1_i32_7, %c0_i32_10, %c0_i32_11] : memref<2x2048x512xi8, #tpu.memory_space<vmem>> -> memref<1x2048x512xi8, #tpu.memory_space<vmem>>
    %11 = tpu.memref_squeeze %10 : memref<1x2048x512xi8, #tpu.memory_space<vmem>> -> memref<2048x512xi8, #tpu.memory_space<vmem>>
    %12 = tpu.memref_slice %arg17[%c2_i32] : memref<4x!tpu.dma_semaphore, #tpu.memory_space<semaphore_mem>> -> memref<1x!tpu.dma_semaphore, #tpu.memory_space<semaphore_mem>>
    %13 = tpu.memref_squeeze %12 : memref<1x!tpu.dma_semaphore, #tpu.memory_space<semaphore_mem>> -> memref<!tpu.dma_semaphore, #tpu.memory_space<semaphore_mem>>
    tpu.enqueue_dma source(%9 : memref<2048x512xi8, #tpu.memory_space<any>>) target(%11 : memref<2048x512xi8, #tpu.memory_space<vmem>>) target_semaphore(%13 : memref<!tpu.dma_semaphore, #tpu.memory_space<semaphore_mem>>)
    %c3_i32 = arith.constant 3 : i32
    %14 = tpu.memref_slice %arg17[%c3_i32] : memref<4x!tpu.dma_semaphore, #tpu.memory_space<semaphore_mem>> -> memref<1x!tpu.dma_semaphore, #tpu.memory_space<semaphore_mem>>
    %15 = tpu.memref_squeeze %14 : memref<1x!tpu.dma_semaphore, #tpu.memory_space<semaphore_mem>> -> memref<!tpu.dma_semaphore, #tpu.memory_space<semaphore_mem>>
    tpu.enqueue_dma source(%arg11 : memref<1024x512xi8, #tpu.memory_space<any>>) target(%arg16 : memref<1024x512xi8, #tpu.memory_space<vmem>>) target_semaphore(%15 : memref<!tpu.dma_semaphore, #tpu.memory_space<semaphore_mem>>)
    %c0 = arith.constant 0 : index
    %c0_12 = arith.constant 0 : index
    %16 = vector.load %arg0[%c0, %c0_12] : memref<8x18xf32, #tpu.memory_space<vmem>>, vector<8x18xf32>
    %c0_13 = arith.constant 0 : index
    %c0_14 = arith.constant 0 : index
    %17 = vector.load %arg8[%c0_13, %c0_14] : memref<9x256xf32, #tpu.memory_space<vmem>>, vector<9x256xf32>
    %18 = vector.extract_strided_slice %17 {offsets = [0, 0], sizes = [1, 32], strides = [1, 1]} : vector<9x256xf32> to vector<1x32xf32>
    %19 = vector.extract_strided_slice %17 {offsets = [1, 0], sizes = [1, 64], strides = [1, 1]} : vector<9x256xf32> to vector<1x64xf32>
    %20 = vector.extract_strided_slice %17 {offsets = [2, 0], sizes = [1, 128], strides = [1, 1]} : vector<9x256xf32> to vector<1x128xf32>
    %21 = vector.extract_strided_slice %17 {offsets = [3, 0], sizes = [1, 128], strides = [1, 1]} : vector<9x256xf32> to vector<1x128xf32>
    %22 = vector.extract_strided_slice %17 {offsets = [4, 0], sizes = [1, 128], strides = [1, 1]} : vector<9x256xf32> to vector<1x128xf32>
    %23 = vector.extract_strided_slice %17 {offsets = [5, 0], sizes = [1, 256], strides = [1, 1]} : vector<9x256xf32> to vector<1x256xf32>
    %24 = vector.extract_strided_slice %17 {offsets = [6, 0], sizes = [1, 256], strides = [1, 1]} : vector<9x256xf32> to vector<1x256xf32>
    %25 = vector.extract_strided_slice %17 {offsets = [7, 0], sizes = [1, 256], strides = [1, 1]} : vector<9x256xf32> to vector<1x256xf32>
    %26 = vector.extract_strided_slice %17 {offsets = [8, 0], sizes = [1, 32], strides = [1, 1]} : vector<9x256xf32> to vector<1x32xf32>
    %c0_15 = arith.constant 0 : index
    %c0_16 = arith.constant 0 : index
    %27 = vector.load %arg3[%c0_15, %c0_16] : memref<3x32xf32, #tpu.memory_space<vmem>>, vector<3x32xf32>
    %28 = vector.extract_strided_slice %16 {offsets = [0, 0], sizes = [8, 16], strides = [1, 1]} : vector<8x18xf32> to vector<8x16xf32>
    %29 = vector.shape_cast %28 : vector<8x16xf32> to vector<8x16x1xf32>
    %30 = vector.extract_strided_slice %27 {offsets = [0, 0], sizes = [1, 32], strides = [1, 1]} : vector<3x32xf32> to vector<1x32xf32>
    %31 = vector.shape_cast %30 : vector<1x32xf32> to vector<32xf32>
    %32 = vector.shape_cast %31 : vector<32xf32> to vector<1x1x32xf32>
    %33 = vector.broadcast %29 : vector<8x16x1xf32> to vector<8x16x32xf32>
    %34 = vector.broadcast %32 : vector<1x1x32xf32> to vector<8x16x32xf32>
    %35 = arith.mulf %33, %34 : vector<8x16x32xf32>
    %36 = vector.extract_strided_slice %16 {offsets = [0, 1], sizes = [8, 16], strides = [1, 1]} : vector<8x18xf32> to vector<8x16xf32>
    %37 = vector.shape_cast %36 : vector<8x16xf32> to vector<8x16x1xf32>
    %38 = vector.extract_strided_slice %27 {offsets = [1, 0], sizes = [1, 32], strides = [1, 1]} : vector<3x32xf32> to vector<1x32xf32>
    %39 = vector.shape_cast %38 : vector<1x32xf32> to vector<32xf32>
    %40 = vector.shape_cast %39 : vector<32xf32> to vector<1x1x32xf32>
    %41 = vector.broadcast %37 : vector<8x16x1xf32> to vector<8x16x32xf32>
    %42 = vector.broadcast %40 : vector<1x1x32xf32> to vector<8x16x32xf32>
    %43 = arith.mulf %41, %42 : vector<8x16x32xf32>
    %44 = arith.addf %35, %43 : vector<8x16x32xf32>
    %45 = vector.extract_strided_slice %16 {offsets = [0, 2], sizes = [8, 16], strides = [1, 1]} : vector<8x18xf32> to vector<8x16xf32>
    %46 = vector.shape_cast %45 : vector<8x16xf32> to vector<8x16x1xf32>
    %47 = vector.extract_strided_slice %27 {offsets = [2, 0], sizes = [1, 32], strides = [1, 1]} : vector<3x32xf32> to vector<1x32xf32>
    %48 = vector.shape_cast %47 : vector<1x32xf32> to vector<32xf32>
    %49 = vector.shape_cast %48 : vector<32xf32> to vector<1x1x32xf32>
    %50 = vector.broadcast %46 : vector<8x16x1xf32> to vector<8x16x32xf32>
    %51 = vector.broadcast %49 : vector<1x1x32xf32> to vector<8x16x32xf32>
    %52 = arith.mulf %50, %51 : vector<8x16x32xf32>
    %53 = arith.addf %44, %52 : vector<8x16x32xf32>
    %54 = vector.shape_cast %18 : vector<1x32xf32> to vector<1x1x32xf32>
    %55 = vector.broadcast %54 : vector<1x1x32xf32> to vector<8x16x32xf32>
    %56 = arith.addf %53, %55 : vector<8x16x32xf32>
    %cst = arith.constant 0.000000e+00 : f32
    %57 = vector.broadcast %cst : f32 to vector<8x16x32xf32>
    %58 = arith.maximumf %56, %57 : vector<8x16x32xf32>
    %cst_17 = arith.constant 0.000000e+00 : f32
    %59 = vector.broadcast %cst_17 : f32 to vector<8x1x32xf32>
    %60 = tpu.concatenate %59, %58, %59 in 1 : vector<8x1x32xf32>, vector<8x16x32xf32>, vector<8x1x32xf32> -> vector<8x18x32xf32>
    %61 = vector.extract_strided_slice %60 {offsets = [0, 0, 0], sizes = [8, 16, 32], strides = [1, 1, 1]} : vector<8x18x32xf32> to vector<8x16x32xf32>
    %62 = vector.extract_strided_slice %60 {offsets = [0, 1, 0], sizes = [8, 16, 32], strides = [1, 1, 1]} : vector<8x18x32xf32> to vector<8x16x32xf32>
    %63 = vector.extract_strided_slice %60 {offsets = [0, 2, 0], sizes = [8, 16, 32], strides = [1, 1, 1]} : vector<8x18x32xf32> to vector<8x16x32xf32>
    %64 = tpu.concatenate %61, %62, %63 in 2 : vector<8x16x32xf32>, vector<8x16x32xf32>, vector<8x16x32xf32> -> vector<8x16x96xf32>
    %c0_18 = arith.constant 0 : index
    %c0_19 = arith.constant 0 : index
    %65 = vector.load %arg4[%c0_18, %c0_19] : memref<96x64xf32, #tpu.memory_space<vmem>>, vector<96x64xf32>
    %66 = vector.shape_cast %64 : vector<8x16x96xf32> to vector<128x96xf32>
    %cst_20 = arith.constant dense<0.000000e+00> : vector<128x64xf32>
    %67 = tpu.matmul %66, %65, %cst_20 {dimension_numbers = #tpu.dot_dimension_numbers<[1], [0], [0], [1], [0, 0, 1, 1], [], []>} : vector<128x96xf32>, vector<96x64xf32>, vector<128x64xf32> -> vector<128x64xf32>
    %68 = vector.broadcast %19 : vector<1x64xf32> to vector<128x64xf32>
    %69 = arith.addf %67, %68 : vector<128x64xf32>
    %cst_21 = arith.constant 0.000000e+00 : f32
    %70 = vector.broadcast %cst_21 : f32 to vector<128x64xf32>
    %71 = arith.maximumf %69, %70 : vector<128x64xf32>
    %72 = vector.shape_cast %71 : vector<128x64xf32> to vector<8x16x64xf32>
    %cst_22 = arith.constant dense<0xFF800000> : vector<8x64xf32>
    %73 = vector.multi_reduction <maximumf>, %72, %cst_22 [1] : vector<8x16x64xf32> to vector<8x64xf32>
    %c0_23 = arith.constant 0 : index
    %c0_24 = arith.constant 0 : index
    %74 = vector.load %arg5[%c0_23, %c0_24] : memref<64x128xf32, #tpu.memory_space<vmem>>, vector<64x128xf32>
    %cst_25 = arith.constant dense<0.000000e+00> : vector<8x128xf32>
    %75 = tpu.matmul %73, %74, %cst_25 {dimension_numbers = #tpu.dot_dimension_numbers<[1], [0], [0], [1], [0, 0, 1, 1], [], []>} : vector<8x64xf32>, vector<64x128xf32>, vector<8x128xf32> -> vector<8x128xf32>
    %76 = vector.broadcast %20 : vector<1x128xf32> to vector<8x128xf32>
    %77 = arith.addf %75, %76 : vector<8x128xf32>
    %78 = vector.broadcast %21 : vector<1x128xf32> to vector<8x128xf32>
    %79 = arith.mulf %77, %78 : vector<8x128xf32>
    %80 = vector.broadcast %22 : vector<1x128xf32> to vector<8x128xf32>
    %81 = arith.addf %79, %80 : vector<8x128xf32>
    %cst_26 = arith.constant 0.000000e+00 : f32
    %82 = vector.broadcast %cst_26 : f32 to vector<8x128xf32>
    %83 = arith.maximumf %81, %82 : vector<8x128xf32>
    %c0_27 = arith.constant 0 : index
    %c0_28 = arith.constant 0 : index
    %84 = vector.load %arg6[%c0_27, %c0_28] : memref<128x256xf32, #tpu.memory_space<vmem>>, vector<128x256xf32>
    %cst_29 = arith.constant dense<0.000000e+00> : vector<8x256xf32>
    %85 = tpu.matmul %83, %84, %cst_29 {dimension_numbers = #tpu.dot_dimension_numbers<[1], [0], [0], [1], [0, 0, 1, 1], [], []>} : vector<8x128xf32>, vector<128x256xf32>, vector<8x256xf32> -> vector<8x256xf32>
    %86 = vector.broadcast %23 : vector<1x256xf32> to vector<8x256xf32>
    %87 = arith.addf %85, %86 : vector<8x256xf32>
    %88 = vector.broadcast %24 : vector<1x256xf32> to vector<8x256xf32>
    %89 = arith.mulf %87, %88 : vector<8x256xf32>
    %90 = vector.broadcast %25 : vector<1x256xf32> to vector<8x256xf32>
    %91 = arith.addf %89, %90 : vector<8x256xf32>
    %cst_30 = arith.constant 0.000000e+00 : f32
    %92 = vector.broadcast %cst_30 : f32 to vector<8x256xf32>
    %93 = arith.maximumf %91, %92 : vector<8x256xf32>
    %c0_31 = arith.constant 0 : index
    %c0_32 = arith.constant 0 : index
    %94 = vector.load %arg7[%c0_31, %c0_32] : memref<256x32xf32, #tpu.memory_space<vmem>>, vector<256x32xf32>
    %cst_33 = arith.constant dense<0.000000e+00> : vector<8x32xf32>
    %95 = tpu.matmul %93, %94, %cst_33 {dimension_numbers = #tpu.dot_dimension_numbers<[1], [0], [0], [1], [0, 0, 1, 1], [], []>} : vector<8x256xf32>, vector<256x32xf32>, vector<8x32xf32> -> vector<8x32xf32>
    %96 = vector.broadcast %26 : vector<1x32xf32> to vector<8x32xf32>
    %97 = arith.addf %95, %96 : vector<8x32xf32>
    %c0_34 = arith.constant 0 : index
    %c0_35 = arith.constant 0 : index
    %98 = vector.load %arg12[%c0_34, %c0_35] : memref<8x2048xf32, #tpu.memory_space<vmem>>, vector<8x2048xf32>
    %99 = vector.extract_strided_slice %98 {offsets = [0, 0], sizes = [1, 2048], strides = [1, 1]} : vector<8x2048xf32> to vector<1x2048xf32>
    %100 = vector.extract_strided_slice %98 {offsets = [1, 0], sizes = [1, 512], strides = [1, 1]} : vector<8x2048xf32> to vector<1x512xf32>
    %101 = vector.extract_strided_slice %98 {offsets = [1, 512], sizes = [1, 512], strides = [1, 1]} : vector<8x2048xf32> to vector<1x512xf32>
    %102 = vector.extract_strided_slice %98 {offsets = [2, 0], sizes = [1, 512], strides = [1, 1]} : vector<8x2048xf32> to vector<1x512xf32>
    %103 = vector.extract_strided_slice %98 {offsets = [3, 0], sizes = [1, 1], strides = [1, 1]} : vector<8x2048xf32> to vector<1x1xf32>
    %104 = vector.extract_strided_slice %98 {offsets = [4, 0], sizes = [1, 512], strides = [1, 1]} : vector<8x2048xf32> to vector<1x512xf32>
    %105 = vector.extract_strided_slice %98 {offsets = [5, 0], sizes = [1, 2048], strides = [1, 1]} : vector<8x2048xf32> to vector<1x2048xf32>
    %106 = vector.extract_strided_slice %98 {offsets = [6, 0], sizes = [1, 512], strides = [1, 1]} : vector<8x2048xf32> to vector<1x512xf32>
    %107 = vector.extract_strided_slice %98 {offsets = [6, 512], sizes = [1, 512], strides = [1, 1]} : vector<8x2048xf32> to vector<1x512xf32>
    %108 = vector.extract_strided_slice %98 {offsets = [7, 0], sizes = [1, 512], strides = [1, 1]} : vector<8x2048xf32> to vector<1x512xf32>
    %c0_36 = arith.constant 0 : index
    %c0_37 = arith.constant 0 : index
    %109 = vector.load %arg1[%c0_36, %c0_37] : memref<8x32xf32, #tpu.memory_space<vmem>>, vector<8x32xf32>
    %c0_38 = arith.constant 0 : index
    %c0_39 = arith.constant 0 : index
    %110 = vector.load %arg2[%c0_38, %c0_39] : memref<8x32xf32, #tpu.memory_space<vmem>>, vector<8x32xf32>
    %111 = tpu.concatenate %109, %110, %97 in 1 : vector<8x32xf32>, vector<8x32xf32>, vector<8x32xf32> -> vector<8x96xf32>
    %c0_i32_40 = arith.constant 0 : i32
    %112 = tpu.memref_slice %arg17[%c0_i32_40] : memref<4x!tpu.dma_semaphore, #tpu.memory_space<semaphore_mem>> -> memref<1x!tpu.dma_semaphore, #tpu.memory_space<semaphore_mem>>
    %113 = tpu.memref_squeeze %112 : memref<1x!tpu.dma_semaphore, #tpu.memory_space<semaphore_mem>> -> memref<!tpu.dma_semaphore, #tpu.memory_space<semaphore_mem>>
    tpu.wait_dma2 semaphore(%113 : memref<!tpu.dma_semaphore, #tpu.memory_space<semaphore_mem>>) src(%arg9 : memref<96x2048xi8, #tpu.memory_space<any>>) dst(%arg14 : memref<96x2048xi8, #tpu.memory_space<vmem>>)
    %114 = arith.truncf %111 : vector<8x96xf32> to vector<8x96xbf16>
    %c0_41 = arith.constant 0 : index
    %c0_42 = arith.constant 0 : index
    %115 = vector.load %arg14[%c0_41, %c0_42] : memref<96x2048xi8, #tpu.memory_space<vmem>>, vector<96x2048xi8>
    %116 = arith.sitofp %115 : vector<96x2048xi8> to vector<96x2048xbf16>
    %cst_43 = arith.constant dense<0.000000e+00> : vector<8x2048xf32>
    %117 = tpu.matmul %114, %116, %cst_43 {dimension_numbers = #tpu.dot_dimension_numbers<[1], [0], [0], [1], [0, 0, 1, 1], [], []>} : vector<8x96xbf16>, vector<96x2048xbf16>, vector<8x2048xf32> -> vector<8x2048xf32>
    %118 = vector.broadcast %105 : vector<1x2048xf32> to vector<8x2048xf32>
    %119 = arith.mulf %117, %118 : vector<8x2048xf32>
    %120 = vector.broadcast %99 : vector<1x2048xf32> to vector<8x2048xf32>
    %121 = arith.addf %119, %120 : vector<8x2048xf32>
    %cst_44 = arith.constant 0.000000e+00 : f32
    %122 = vector.broadcast %cst_44 : f32 to vector<8x2048xf32>
    %123 = arith.maximumf %121, %122 : vector<8x2048xf32>
    %124 = arith.truncf %123 : vector<8x2048xf32> to vector<8x2048xbf16>
    %c0_i32_45 = arith.constant 0 : i32
    %c0_i32_46 = arith.constant 0 : i32
    %c1_i32_47 = arith.constant 1 : i32
    %c0_i32_48 = arith.constant 0 : i32
    %c0_i32_49 = arith.constant 0 : i32
    %125 = tpu.memref_slice %arg10[%c0_i32_45, %c0_i32_48, %c0_i32_49] : memref<2x2048x512xi8, #tpu.memory_space<any>> -> memref<1x2048x512xi8, #tpu.memory_space<any>>
    %126 = tpu.memref_squeeze %125 : memref<1x2048x512xi8, #tpu.memory_space<any>> -> memref<2048x512xi8, #tpu.memory_space<any>>
    %c0_i32_50 = arith.constant 0 : i32
    %c0_i32_51 = arith.constant 0 : i32
    %127 = tpu.memref_slice %arg15[%c0_i32_46, %c0_i32_50, %c0_i32_51] : memref<2x2048x512xi8, #tpu.memory_space<vmem>> -> memref<1x2048x512xi8, #tpu.memory_space<vmem>>
    %128 = tpu.memref_squeeze %127 : memref<1x2048x512xi8, #tpu.memory_space<vmem>> -> memref<2048x512xi8, #tpu.memory_space<vmem>>
    %129 = tpu.memref_slice %arg17[%c1_i32_47] : memref<4x!tpu.dma_semaphore, #tpu.memory_space<semaphore_mem>> -> memref<1x!tpu.dma_semaphore, #tpu.memory_space<semaphore_mem>>
    %130 = tpu.memref_squeeze %129 : memref<1x!tpu.dma_semaphore, #tpu.memory_space<semaphore_mem>> -> memref<!tpu.dma_semaphore, #tpu.memory_space<semaphore_mem>>
    tpu.wait_dma2 semaphore(%130 : memref<!tpu.dma_semaphore, #tpu.memory_space<semaphore_mem>>) src(%126 : memref<2048x512xi8, #tpu.memory_space<any>>) dst(%128 : memref<2048x512xi8, #tpu.memory_space<vmem>>)
    %c0_52 = arith.constant 0 : index
    %c0_53 = arith.constant 0 : index
    %c0_54 = arith.constant 0 : index
    %131 = vector.load %arg15[%c0_52, %c0_53, %c0_54] : memref<2x2048x512xi8, #tpu.memory_space<vmem>>, vector<1x2048x512xi8>
    %132 = vector.shape_cast %131 : vector<1x2048x512xi8> to vector<2048x512xi8>
    %133 = arith.sitofp %132 : vector<2048x512xi8> to vector<2048x512xbf16>
    %cst_55 = arith.constant dense<0.000000e+00> : vector<8x512xf32>
    %134 = tpu.matmul %124, %133, %cst_55 {dimension_numbers = #tpu.dot_dimension_numbers<[1], [0], [0], [1], [0, 0, 1, 1], [], []>} : vector<8x2048xbf16>, vector<2048x512xbf16>, vector<8x512xf32> -> vector<8x512xf32>
    %135 = vector.broadcast %106 : vector<1x512xf32> to vector<8x512xf32>
    %136 = arith.mulf %134, %135 : vector<8x512xf32>
    %137 = vector.broadcast %100 : vector<1x512xf32> to vector<8x512xf32>
    %138 = arith.addf %136, %137 : vector<8x512xf32>
    %cst_56 = arith.constant 0.000000e+00 : f32
    %139 = vector.broadcast %cst_56 : f32 to vector<8x512xf32>
    %140 = arith.maximumf %138, %139 : vector<8x512xf32>
    %c1_i32_57 = arith.constant 1 : i32
    %c1_i32_58 = arith.constant 1 : i32
    %c2_i32_59 = arith.constant 2 : i32
    %c0_i32_60 = arith.constant 0 : i32
    %c0_i32_61 = arith.constant 0 : i32
    %141 = tpu.memref_slice %arg10[%c1_i32_57, %c0_i32_60, %c0_i32_61] : memref<2x2048x512xi8, #tpu.memory_space<any>> -> memref<1x2048x512xi8, #tpu.memory_space<any>>
    %142 = tpu.memref_squeeze %141 : memref<1x2048x512xi8, #tpu.memory_space<any>> -> memref<2048x512xi8, #tpu.memory_space<any>>
    %c0_i32_62 = arith.constant 0 : i32
    %c0_i32_63 = arith.constant 0 : i32
    %143 = tpu.memref_slice %arg15[%c1_i32_58, %c0_i32_62, %c0_i32_63] : memref<2x2048x512xi8, #tpu.memory_space<vmem>> -> memref<1x2048x512xi8, #tpu.memory_space<vmem>>
    %144 = tpu.memref_squeeze %143 : memref<1x2048x512xi8, #tpu.memory_space<vmem>> -> memref<2048x512xi8, #tpu.memory_space<vmem>>
    %145 = tpu.memref_slice %arg17[%c2_i32_59] : memref<4x!tpu.dma_semaphore, #tpu.memory_space<semaphore_mem>> -> memref<1x!tpu.dma_semaphore, #tpu.memory_space<semaphore_mem>>
    %146 = tpu.memref_squeeze %145 : memref<1x!tpu.dma_semaphore, #tpu.memory_space<semaphore_mem>> -> memref<!tpu.dma_semaphore, #tpu.memory_space<semaphore_mem>>
    tpu.wait_dma2 semaphore(%146 : memref<!tpu.dma_semaphore, #tpu.memory_space<semaphore_mem>>) src(%142 : memref<2048x512xi8, #tpu.memory_space<any>>) dst(%144 : memref<2048x512xi8, #tpu.memory_space<vmem>>)
    %c1 = arith.constant 1 : index
    %c0_64 = arith.constant 0 : index
    %c0_65 = arith.constant 0 : index
    %147 = vector.load %arg15[%c1, %c0_64, %c0_65] : memref<2x2048x512xi8, #tpu.memory_space<vmem>>, vector<1x2048x512xi8>
    %148 = vector.shape_cast %147 : vector<1x2048x512xi8> to vector<2048x512xi8>
    %149 = arith.sitofp %148 : vector<2048x512xi8> to vector<2048x512xbf16>
    %cst_66 = arith.constant dense<0.000000e+00> : vector<8x512xf32>
    %150 = tpu.matmul %124, %149, %cst_66 {dimension_numbers = #tpu.dot_dimension_numbers<[1], [0], [0], [1], [0, 0, 1, 1], [], []>} : vector<8x2048xbf16>, vector<2048x512xbf16>, vector<8x512xf32> -> vector<8x512xf32>
    %151 = vector.broadcast %107 : vector<1x512xf32> to vector<8x512xf32>
    %152 = arith.mulf %150, %151 : vector<8x512xf32>
    %153 = vector.broadcast %101 : vector<1x512xf32> to vector<8x512xf32>
    %154 = arith.addf %152, %153 : vector<8x512xf32>
    %cst_67 = arith.constant 0.000000e+00 : f32
    %155 = vector.broadcast %cst_67 : f32 to vector<8x512xf32>
    %156 = arith.maximumf %154, %155 : vector<8x512xf32>
    %157 = tpu.concatenate %140, %156 in 1 : vector<8x512xf32>, vector<8x512xf32> -> vector<8x1024xf32>
    %158 = arith.truncf %157 : vector<8x1024xf32> to vector<8x1024xbf16>
    %c3_i32_68 = arith.constant 3 : i32
    %159 = tpu.memref_slice %arg17[%c3_i32_68] : memref<4x!tpu.dma_semaphore, #tpu.memory_space<semaphore_mem>> -> memref<1x!tpu.dma_semaphore, #tpu.memory_space<semaphore_mem>>
    %160 = tpu.memref_squeeze %159 : memref<1x!tpu.dma_semaphore, #tpu.memory_space<semaphore_mem>> -> memref<!tpu.dma_semaphore, #tpu.memory_space<semaphore_mem>>
    tpu.wait_dma2 semaphore(%160 : memref<!tpu.dma_semaphore, #tpu.memory_space<semaphore_mem>>) src(%arg11 : memref<1024x512xi8, #tpu.memory_space<any>>) dst(%arg16 : memref<1024x512xi8, #tpu.memory_space<vmem>>)
    %c0_69 = arith.constant 0 : index
    %c0_70 = arith.constant 0 : index
    %161 = vector.load %arg16[%c0_69, %c0_70] : memref<1024x512xi8, #tpu.memory_space<vmem>>, vector<1024x512xi8>
    %162 = arith.sitofp %161 : vector<1024x512xi8> to vector<1024x512xbf16>
    %cst_71 = arith.constant dense<0.000000e+00> : vector<8x512xf32>
    %163 = tpu.matmul %158, %162, %cst_71 {dimension_numbers = #tpu.dot_dimension_numbers<[1], [0], [0], [1], [0, 0, 1, 1], [], []>} : vector<8x1024xbf16>, vector<1024x512xbf16>, vector<8x512xf32> -> vector<8x512xf32>
    %164 = vector.broadcast %108 : vector<1x512xf32> to vector<8x512xf32>
    %165 = arith.mulf %163, %164 : vector<8x512xf32>
    %166 = vector.broadcast %102 : vector<1x512xf32> to vector<8x512xf32>
    %167 = arith.addf %165, %166 : vector<8x512xf32>
    %cst_72 = arith.constant 0.000000e+00 : f32
    %168 = vector.broadcast %cst_72 : f32 to vector<8x512xf32>
    %169 = arith.maximumf %167, %168 : vector<8x512xf32>
    %170 = vector.broadcast %104 : vector<1x512xf32> to vector<8x512xf32>
    %171 = arith.mulf %169, %170 : vector<8x512xf32>
    %cst_73 = arith.constant dense<0.000000e+00> : vector<8xf32>
    %172 = vector.multi_reduction <add>, %171, %cst_73 [1] : vector<8x512xf32> to vector<8xf32>
    %173 = vector.shape_cast %172 : vector<8xf32> to vector<8x1xf32>
    %174 = vector.broadcast %103 : vector<1x1xf32> to vector<8x1xf32>
    %175 = arith.addf %173, %174 : vector<8x1xf32>
    %c0_74 = arith.constant 0 : index
    %c0_75 = arith.constant 0 : index
    %176 = vector.load %arg13[%c0_74, %c0_75] : memref<8x1xf32, #tpu.memory_space<vmem>>, vector<8x1xf32>
    tpu.vector_store %arg13[%c0_74, %c0_75], %175 {strides = array<i32>} : memref<8x1xf32, #tpu.memory_space<vmem>>, vector<8x1xf32>,
    return
  }
}

</mosaic_0001>

<llo_original>
// kernel: tpu_custom_call.1
$region0: #{tpu_custom_call.1}
  #allocation0 [shape = 'u32[]', space=smem, size = 0x4, offset = 0x4, fixed_abs, tag = 'smem constant byte address 0x4 - core index']
  #allocation1 [shape = 'u32[144,128]{1,0:T(1,128)}', space=vmem, size = 0x12000, scoped, tag = 'internal scratch']
  #allocation2 [shape = 's8[96,2048]{1,0:T(32,128)(4,1)}', space=vmem, size = 0x30000, scoped, tag = 'scratch operand']
  #allocation3 [shape = 's8[2,2048,512]{2,1,0:T(32,128)(4,1)}', space=vmem, size = 0x200000, scoped, tag = 'scratch operand']
  #allocation4 [shape = 's8[1024,512]{1,0:T(32,128)(4,1)}', space=vmem, size = 0x80000, scoped, tag = 'scratch operand']
  #allocation5 [shape = 's32[4]{0}', space=sflag, size = 0x10, scoped, tag = 'scratch operand']
  #allocation19 [shape = 's32[]', space=sflag, size = 0x4, offset = 0, fixed_abs, tag = 'sflag constant byte address 0x0 - dummy sync flag']
  #allocation20 [shape = 's32[]', space=sflag, size = 0x4, offset = 0, fixed_abs, tag = 'sflag constant byte address 0x0 - dummy sync flag']
  #allocation21 [shape = 'u32[]', space=smem, size = 0x4, offset = 0x44, fixed_abs, tag = 'smem constant byte address 0x44 - assertion arg 0']
  #allocation22 [shape = 'u32[]', space=smem, size = 0x4, offset = 0x48, fixed_abs, tag = 'smem constant byte address 0x48 - assertion arg 1']
  #allocation23 [shape = 's32[]', space=sflag, size = 0x4, offset = 0, fixed_abs, tag = 'sflag constant byte address 0x0 - dummy sync flag']
  #allocation24 [shape = 's32[]', space=sflag, size = 0x4, offset = 0, fixed_abs, tag = 'sflag constant byte address 0x0 - dummy sync flag']
  #allocation25 [shape = 's32[]', space=sflag, size = 0x4, offset = 0, fixed_abs, tag = 'sflag constant byte address 0x0 - dummy sync flag']
  #allocation26 [shape = 's32[]', space=sflag, size = 0x4, offset = 0, fixed_abs, tag = 'sflag constant byte address 0x0 - dummy sync flag']
  #allocation27 [shape = 's32[]', space=sflag, size = 0x4, offset = 0, fixed_abs, tag = 'sflag constant byte address 0x0 - dummy sync flag']
  #allocation28 [shape = 's32[]', space=sflag, size = 0x4, offset = 0, fixed_abs, tag = 'sflag constant byte address 0x0 - dummy sync flag']
  %s0 = inlined_call_operand.hbm [shape: f32[8,18], index: 0, kind: input, shape index: {}]
  %s1 = inlined_call_operand.hbm [shape: f32[8,32], index: 1, kind: input, shape index: {}]
  %s2 = inlined_call_operand.hbm [shape: f32[8,32], index: 2, kind: input, shape index: {}]
  %s3 = inlined_call_operand.hbm [shape: f32[3,32], index: 3, kind: input, shape index: {}]
  %s4 = inlined_call_operand.vmem [shape: f32[96,64], index: 4, kind: input, shape index: {}]
  %s5 = inlined_call_operand.hbm [shape: f32[64,128], index: 5, kind: input, shape index: {}]
  %s6 = inlined_call_operand.hbm [shape: f32[128,256], index: 6, kind: input, shape index: {}]
  %s7 = inlined_call_operand.vmem [shape: f32[256,32], index: 7, kind: input, shape index: {}]
  %s8 = inlined_call_operand.hbm [shape: f32[9,256], index: 8, kind: input, shape index: {}]
  %s9 = inlined_call_operand.hbm [shape: s8[96,2048], index: 9, kind: input, shape index: {}]
  %s10 = inlined_call_operand.hbm [shape: s8[2,2048,512], index: 10, kind: input, shape index: {}]
  %s11 = inlined_call_operand.hbm [shape: s8[1024,512], index: 11, kind: input, shape index: {}]
  %s12 = inlined_call_operand.hbm [shape: f32[8,2048], index: 12, kind: input, shape index: {}]
  %s13 = inlined_call_operand.vmem [shape: f32[8,1], index: 13, kind: output, shape index: {}]
  %s14 = sld [smem:[#allocation0]]
  $region98: #{tpu_custom_call.1} parent=0
    _
  %s16 = ssub.s32 1, %s14
  %s17 = scalar_select 0, %s16, %s14
  $region1: #{tpu_custom_call.1} parent=0
    #allocation6 [shape = 'u8[4096]{0}', space=vmem, size = 0x1000, scoped, tag = 'input window, operand 0, single buffered']
    #allocation7 [shape = 's32[1]{0}', space=sflag, size = 0x4, scoped, tag = 'scoped memory for tpu_custom_call.1']
    #allocation8 [shape = 'u8[4096]{0}', space=vmem, size = 0x1000, scoped, tag = 'input window, operand 1, single buffered']
    #allocation9 [shape = 's32[1]{0}', space=sflag, size = 0x4, scoped, tag = 'scoped memory for tpu_custom_call.1']
    #allocation10 [shape = 'u8[4096]{0}', space=vmem, size = 0x1000, scoped, tag = 'input window, operand 2, single buffered']
    #allocation11 [shape = 'u8[2048]{0}', space=vmem, size = 0x800, scoped, tag = 'input window, operand 3, single buffered']
    #allocation12 [shape = 's32[1]{0}', space=sflag, size = 0x4, scoped, tag = 'scoped memory for tpu_custom_call.1']
    #allocation13 [shape = 'u8[32768]{0}', space=vmem, size = 0x8000, scoped, tag = 'input window, operand 5, single buffered']
    #allocation14 [shape = 'u8[131072]{0}', space=vmem, size = 0x20000, scoped, tag = 'input window, operand 6, single buffered']
    #allocation15 [shape = 's32[1]{0}', space=sflag, size = 0x4, scoped, tag = 'scoped memory for tpu_custom_call.1']
    #allocation16 [shape = 'u8[16384]{0}', space=vmem, size = 0x4000, scoped, tag = 'input window, operand 8, single buffered']
    #allocation17 [shape = 'u8[65536]{0}', space=vmem, size = 0x10000, scoped, tag = 'input window, operand 12, single buffered']
    #allocation18 [shape = 's32[1]{0}', space=sflag, size = 0x4, scoped, tag = 'scoped memory for tpu_custom_call.1']
    %18 = vsyncpa [#allocation7], 0
    %19 = vsyncpa [#allocation9], 0
    %20 = vsyncpa [#allocation12], 0
    %21 = vsyncpa [#allocation15], 0
    %22 = vsyncpa [#allocation18], 0
    // Predicated region
    $region2: #{tpu_custom_call.1} parent=1 // pred_check
      _
    $region3: #{tpu_custom_call.1} parent=1 // pred_check_branch
      %24 = sbr.rel (0) target = $region5
    $region4: #{tpu_custom_call.1} parent=1 // pred_region
      %s26 = ssub.s32 128, 128
      %27 = vsyncadd [#allocation7], %s26
      %s29 = sshll.u32 [#allocation6], 4
      %s30 = int_to_ptr.vmem [resolvable:$true] %s29
      %32 = dma.hbm_to_vmem [thread:$0]  %s0, 128, %s30, [#allocation7]
    $region5: #{tpu_custom_call.1} parent=1 // pred_fallthru
      _
    // Predicated region
    $region6: #{tpu_custom_call.1} parent=1 // pred_check
      _
    $region7: #{tpu_custom_call.1} parent=1 // pred_check_branch
      %34 = sbr.rel (0) target = $region9
    $region8: #{tpu_custom_call.1} parent=1 // pred_region
      %s36 = ssub.s32 128, 128
      %37 = vsyncadd [#allocation9], %s36
      %s39 = sshll.u32 [#allocation8], 4
      %s40 = int_to_ptr.vmem [resolvable:$true] %s39
      %42 = dma.hbm_to_vmem [thread:$0]  %s1, 128, %s40, [#allocation9]
    $region9: #{tpu_custom_call.1} parent=1 // pred_fallthru
      _
    // Predicated region
    $region10: #{tpu_custom_call.1} parent=1 // pred_check
      _
    $region11: #{tpu_custom_call.1} parent=1 // pred_check_branch
      %44 = sbr.rel (0) target = $region13
    $region12: #{tpu_custom_call.1} parent=1 // pred_region
      %s46 = ssub.s32 128, 128
      %47 = vsyncadd [#allocation9], %s46
      %s49 = sshll.u32 [#allocation10], 4
      %s50 = int_to_ptr.vmem [resolvable:$true] %s49
      %52 = dma.hbm_to_vmem [thread:$0]  %s2, 128, %s50, [#allocation9]
    $region13: #{tpu_custom_call.1} parent=1 // pred_fallthru
      _
    // Predicated region
    $region14: #{tpu_custom_call.1} parent=1 // pred_check
      _
    $region15: #{tpu_custom_call.1} parent=1 // pred_check_branch
      %54 = sbr.rel (0) target = $region17
    $region16: #{tpu_custom_call.1} parent=1 // pred_region
      %s56 = ssub.s32 64, 64
      %57 = vsyncadd [#allocation12], %s56
      %s59 = sshll.u32 [#allocation11], 4
      %s60 = int_to_ptr.vmem [resolvable:$true] %s59
      %62 = dma.hbm_to_vmem [thread:$0]  %s3, 64, %s60, [#allocation12]
    $region17: #{tpu_custom_call.1} parent=1 // pred_fallthru
      _
    // Predicated region
    $region18: #{tpu_custom_call.1} parent=1 // pred_check
      _
    $region19: #{tpu_custom_call.1} parent=1 // pred_check_branch
      %64 = sbr.rel (0) target = $region21
    $region20: #{tpu_custom_call.1} parent=1 // pred_region
      _
    $region21: #{tpu_custom_call.1} parent=1 // pred_fallthru
      _
    // Predicated region
    $region22: #{tpu_custom_call.1} parent=1 // pred_check
      _
    $region23: #{tpu_custom_call.1} parent=1 // pred_check_branch
      %66 = sbr.rel (0) target = $region25
    $region24: #{tpu_custom_call.1} parent=1 // pred_region
      %s68 = ssub.s32 1024, 1024
      %69 = vsyncadd [#allocation12], %s68
      %s70 = sshll.u32 [#allocation13], 4
      %s71 = int_to_ptr.vmem [resolvable:$true] %s70
      %76 = dma.hbm_to_vmem [thread:$0]  %s5, 1024, %s71, [#allocation12], 128, 128, 8
    $region25: #{tpu_custom_call.1} parent=1 // pred_fallthru
      _
    // Predicated region
    $region26: #{tpu_custom_call.1} parent=1 // pred_check
      _
    $region27: #{tpu_custom_call.1} parent=1 // pred_check_branch
      %78 = sbr.rel (0) target = $region29
    $region28: #{tpu_custom_call.1} parent=1 // pred_region
      %s80 = ssub.s32 4096, 4096
      %81 = vsyncadd [#allocation15], %s80
      %s82 = sshll.u32 [#allocation14], 4
      %s83 = int_to_ptr.vmem [resolvable:$true] %s82
      %88 = dma.hbm_to_vmem [thread:$0]  %s6, 4096, %s83, [#allocation15], 256, 256, 16
    $region29: #{tpu_custom_call.1} parent=1 // pred_fallthru
      _
    // Predicated region
    $region30: #{tpu_custom_call.1} parent=1 // pred_check
      _
    $region31: #{tpu_custom_call.1} parent=1 // pred_check_branch
      %90 = sbr.rel (0) target = $region33
    $region32: #{tpu_custom_call.1} parent=1 // pred_region
      _
    $region33: #{tpu_custom_call.1} parent=1 // pred_fallthru
      _
    // Predicated region
    $region34: #{tpu_custom_call.1} parent=1 // pred_check
      _
    $region35: #{tpu_custom_call.1} parent=1 // pred_check_branch
      %92 = sbr.rel (0) target = $region37
    $region36: #{tpu_custom_call.1} parent=1 // pred_region
      %s94 = ssub.s32 512, 512
      %95 = vsyncadd [#allocation15], %s94
      %s96 = sshll.u32 [#allocation16], 4
      %s97 = int_to_ptr.vmem [resolvable:$true] %s96
      %102 = dma.hbm_to_vmem [thread:$0]  %s8, 512, %s97, [#allocation15], 256, 256, 16
    $region37: #{tpu_custom_call.1} parent=1 // pred_fallthru
      _
    // Predicated region
    $region38: #{tpu_custom_call.1} parent=1 // pred_check
      _
    $region39: #{tpu_custom_call.1} parent=1 // pred_check_branch
      %104 = sbr.rel (0) target = $region41
    $region40: #{tpu_custom_call.1} parent=1 // pred_region
      %s106 = ssub.s32 2048, 2048
      %107 = vsyncadd [#allocation18], %s106
      %s109 = sshll.u32 [#allocation17], 4
      %s110 = int_to_ptr.vmem [resolvable:$true] %s109
      %112 = dma.hbm_to_vmem [thread:$0]  %s12, 2048, %s110, [#allocation18]
    $region41: #{tpu_custom_call.1} parent=1 // pred_fallthru
      _
    // Predicated region
    $region42: #{tpu_custom_call.1} parent=1 // pred_check
      _
    $region43: #{tpu_custom_call.1} parent=1 // pred_check_branch
      %114 = sbr.rel (0) target = $region45
    $region44: #{tpu_custom_call.1} parent=1 // pred_region
      %115 = dma.done [#allocation7], 128
    $region45: #{tpu_custom_call.1} parent=1 // pred_fallthru
      _
    // Predicated region
    $region46: #{tpu_custom_call.1} parent=1 // pred_check
      _
    $region47: #{tpu_custom_call.1} parent=1 // pred_check_branch
      %117 = sbr.rel (0) target = $region49
    $region48: #{tpu_custom_call.1} parent=1 // pred_region
      %118 = dma.done [#allocation9], 128
    $region49: #{tpu_custom_call.1} parent=1 // pred_fallthru
      _
    // Predicated region
    $region50: #{tpu_custom_call.1} parent=1 // pred_check
      _
    $region51: #{tpu_custom_call.1} parent=1 // pred_check_branch
      %120 = sbr.rel (0) target = $region53
    $region52: #{tpu_custom_call.1} parent=1 // pred_region
      %121 = dma.done [#allocation9], 128
    $region53: #{tpu_custom_call.1} parent=1 // pred_fallthru
      _
    // Predicated region
    $region54: #{tpu_custom_call.1} parent=1 // pred_check
      _
    $region55: #{tpu_custom_call.1} parent=1 // pred_check_branch
      %123 = sbr.rel (0) target = $region57
    $region56: #{tpu_custom_call.1} parent=1 // pred_region
      %124 = dma.done [#allocation12], 64
    $region57: #{tpu_custom_call.1} parent=1 // pred_fallthru
      _
    // Predicated region
    $region58: #{tpu_custom_call.1} parent=1 // pred_check
      _
    $region59: #{tpu_custom_call.1} parent=1 // pred_check_branch
      %126 = sbr.rel (0) target = $region61
    $region60: #{tpu_custom_call.1} parent=1 // pred_region
      %127 = dma.done [#allocation12], 1024
    $region61: #{tpu_custom_call.1} parent=1 // pred_fallthru
      _
    // Predicated region
    $region62: #{tpu_custom_call.1} parent=1 // pred_check
      _
    $region63: #{tpu_custom_call.1} parent=1 // pred_check_branch
      %129 = sbr.rel (0) target = $region65
    $region64: #{tpu_custom_call.1} parent=1 // pred_region
      %130 = dma.done [#allocation15], 4096
    $region65: #{tpu_custom_call.1} parent=1 // pred_fallthru
      _
    // Predicated region
    $region66: #{tpu_custom_call.1} parent=1 // pred_check
      _
    $region67: #{tpu_custom_call.1} parent=1 // pred_check_branch
      %132 = sbr.rel (0) target = $region69
    $region68: #{tpu_custom_call.1} parent=1 // pred_region
      %133 = dma.done [#allocation15], 512
    $region69: #{tpu_custom_call.1} parent=1 // pred_fallthru
      _
    // Predicated region
    $region70: #{tpu_custom_call.1} parent=1 // pred_check
      _
    $region71: #{tpu_custom_call.1} parent=1 // pred_check_branch
      %135 = sbr.rel (0) target = $region73
    $region72: #{tpu_custom_call.1} parent=1 // pred_region
      %136 = dma.done [#allocation18], 2048
    $region73: #{tpu_custom_call.1} parent=1 // pred_fallthru
      _
    // Predicated region
    $region74: #{tpu_custom_call.1} parent=1 // pred_check
      _
    $region75: #{tpu_custom_call.1} parent=1 // pred_check_branch
      %139 = sbr.rel target = $region77
    $region76: #{tpu_custom_call.1} parent=1 // pred_region
      %140 = sst [smem:[#allocation21]] [#allocation20]
      %141 = sst [smem:[#allocation22]] [#allocation19]
    $region77: #{tpu_custom_call.1} parent=1 // pred_fallthru
      _
    %143 = shalt.err (0)
    %s145 = sshll.u32 [#allocation2], 4
    %s146 = int_to_ptr.vmem [resolvable:$true] %s145
    %148 = dma.hbm_to_vmem [thread:$0]  %s9, 6144, %s146, [#allocation5]
    %s149 = scalar_lea.sflag [#allocation5], 1
    // Predicated region
    $region78: #{tpu_custom_call.1} parent=1 // pred_check
      _
    $region79: #{tpu_custom_call.1} parent=1 // pred_check_branch
      %151 = sbr.rel target = $region81
    $region80: #{tpu_custom_call.1} parent=1 // pred_region
      %152 = sst [smem:[#allocation21]] [#allocation24]
      %153 = sst [smem:[#allocation22]] [#allocation23]
    $region81: #{tpu_custom_call.1} parent=1 // pred_fallthru
      _
    %155 = shalt.err (0)
    %s157 = sshll.u32 [#allocation3], 4
    %s158 = int_to_ptr.vmem [resolvable:$true] %s157
    %160 = dma.hbm_to_vmem [thread:$0]  %s10, 32768, %s158, %s149
    %s161 = scalar_lea.hbm %s10, 32768
    %s162 = scalar_lea.vmem [#allocation3], 2048
    %s163 = scalar_lea.sflag [#allocation5], 2
    // Predicated region
    $region82: #{tpu_custom_call.1} parent=1 // pred_check
      _
    $region83: #{tpu_custom_call.1} parent=1 // pred_check_branch
      %165 = sbr.rel target = $region85
    $region84: #{tpu_custom_call.1} parent=1 // pred_region
      %166 = sst [smem:[#allocation21]] [#allocation26]
      %167 = sst [smem:[#allocation22]] [#allocation25]
    $region85: #{tpu_custom_call.1} parent=1 // pred_fallthru
      _
    %169 = shalt.err (0)
    %s171 = sshll.u32 %s162, 4
    %s172 = int_to_ptr.vmem [resolvable:$true] %s171
    %174 = dma.hbm_to_vmem [thread:$0]  %s161, 32768, %s172, %s163
    %s175 = scalar_lea.sflag [#allocation5], 3
    // Predicated region
    $region86: #{tpu_custom_call.1} parent=1 // pred_check
      _
    $region87: #{tpu_custom_call.1} parent=1 // pred_check_branch
      %177 = sbr.rel target = $region89
    $region88: #{tpu_custom_call.1} parent=1 // pred_region
      %178 = sst [smem:[#allocation21]] [#allocation28]
      %179 = sst [smem:[#allocation22]] [#allocation27]
    $region89: #{tpu_custom_call.1} parent=1 // pred_fallthru
      _
    %181 = shalt.err (0)
    %s183 = sshll.u32 [#allocation4], 4
    %s184 = int_to_ptr.vmem [resolvable:$true] %s183
    %186 = dma.hbm_to_vmem [thread:$0]  %s11, 16384, %s184, %s175
    %v187 = vld [vmem:[#allocation6] sm:$0xff]
    %v188 = vld [vmem:[#allocation16] sm:$0xff]
    %v189 = vld [vmem:[#allocation16 + $0x8] sm:$0xff]
    %v190 = vld [vmem:[#allocation16 + $0x10] sm:$0x1]
    %v191 = vld [vmem:[#allocation11] sm:$0x7]
    %v192 = vlaneseq
    %v193 = vshrl.u32 %v192, 7
    %v194 = vsub.s32 0, %v193
    %v195 = vrot.slane %v187, %v194
    %197 = vbcast.lane.b32.xlu0 %v195, 256
    %v198 = vpop.permute.xlu0 %197
    %s200 = sor.u32 256, 8
    %201 = vbcast.lane.b32.xlu0 %v195, %s200
    %v202 = vpop.permute.xlu0 %201
    %v203 = vlaneseq
    %v204 = vshrl.u32 %v203, 7
    %v205 = vsub.s32 1, %v204
    %v206 = vrot.slane %v187, %v205
    %208 = vbcast.lane.b32.xlu0 %v206, 256
    %v209 = vpop.permute.xlu0 %208
    %s211 = sor.u32 256, 8
    %212 = vbcast.lane.b32.xlu0 %v206, %s211
    %v213 = vpop.permute.xlu0 %212
    %v214 = vlaneseq
    %v215 = vshrl.u32 %v214, 7
    %v216 = vsub.s32 2, %v215
    %v217 = vrot.slane %v187, %v216
    %219 = vbcast.lane.b32.xlu0 %v217, 256
    %v220 = vpop.permute.xlu0 %219
    %s222 = sor.u32 256, 8
    %223 = vbcast.lane.b32.xlu0 %v217, %s222
    %v224 = vpop.permute.xlu0 %223
    %v225 = vlaneseq
    %v226 = vshrl.u32 %v225, 7
    %v227 = vsub.s32 3, %v226
    %v228 = vrot.slane %v187, %v227
    %230 = vbcast.lane.b32.xlu0 %v228, 256
    %v231 = vpop.permute.xlu0 %230
    %s233 = sor.u32 256, 8
    %234 = vbcast.lane.b32.xlu0 %v228, %s233
    %v235 = vpop.permute.xlu0 %234
    %v236 = vlaneseq
    %v237 = vshrl.u32 %v236, 7
    %v238 = vsub.s32 4, %v237
    %v239 = vrot.slane %v187, %v238
    %241 = vbcast.lane.b32.xlu0 %v239, 256
    %v242 = vpop.permute.xlu0 %241
    %s244 = sor.u32 256, 8
    %245 = vbcast.lane.b32.xlu0 %v239, %s244
    %v246 = vpop.permute.xlu0 %245
    %v247 = vlaneseq
    %v248 = vshrl.u32 %v247, 7
    %v249 = vsub.s32 5, %v248
    %v250 = vrot.slane %v187, %v249
    %252 = vbcast.lane.b32.xlu0 %v250, 256
    %v253 = vpop.permute.xlu0 %252
    %s255 = sor.u32 256, 8
    %256 = vbcast.lane.b32.xlu0 %v250, %s255
    %v257 = vpop.permute.xlu0 %256
    %v258 = vlaneseq
    %v259 = vshrl.u32 %v258, 7
    %v260 = vsub.s32 6, %v259
    %v261 = vrot.slane %v187, %v260
    %263 = vbcast.lane.b32.xlu0 %v261, 256
    %v264 = vpop.permute.xlu0 %263
    %s266 = sor.u32 256, 8
    %267 = vbcast.lane.b32.xlu0 %v261, %s266
    %v268 = vpop.permute.xlu0 %267
    %v269 = vlaneseq
    %v270 = vshrl.u32 %v269, 7
    %v271 = vsub.s32 7, %v270
    %v272 = vrot.slane %v187, %v271
    %274 = vbcast.lane.b32.xlu0 %v272, 256
    %v275 = vpop.permute.xlu0 %274
    %s277 = sor.u32 256, 8
    %278 = vbcast.lane.b32.xlu0 %v272, %s277
    %v279 = vpop.permute.xlu0 %278
    %v280 = vlaneseq
    %v281 = vshrl.u32 %v280, 7
    %v282 = vsub.s32 0, %v281
    %v283 = vrot.slane %v191, %v282
    %v284 = vmul.f32 %v198, %v283
    %v285 = vmul.f32 %v202, %v283
    %v286 = vmul.f32 %v209, %v283
    %v287 = vmul.f32 %v213, %v283
    %v288 = vmul.f32 %v220, %v283
    %v289 = vmul.f32 %v224, %v283
    %v290 = vmul.f32 %v231, %v283
    %v291 = vmul.f32 %v235, %v283
    %v292 = vmul.f32 %v242, %v283
    %v293 = vmul.f32 %v246, %v283
    %v294 = vmul.f32 %v253, %v283
    %v295 = vmul.f32 %v257, %v283
    %v296 = vmul.f32 %v264, %v283
    %v297 = vmul.f32 %v268, %v283
    %v298 = vmul.f32 %v275, %v283
    %v299 = vmul.f32 %v279, %v283
    %s301 = sor.u32 256, 1
    %302 = vbcast.lane.b32.xlu0 %v195, %s301
    %v303 = vpop.permute.xlu0 %302
    %s305 = sor.u32 256, 9
    %306 = vbcast.lane.b32.xlu0 %v195, %s305
    %v307 = vpop.permute.xlu0 %306
    %s309 = sor.u32 256, 1
    %310 = vbcast.lane.b32.xlu0 %v206, %s309
    %v311 = vpop.permute.xlu0 %310
    %s313 = sor.u32 256, 9
    %314 = vbcast.lane.b32.xlu0 %v206, %s313
    %v315 = vpop.permute.xlu0 %314
    %s317 = sor.u32 256, 1
    %318 = vbcast.lane.b32.xlu0 %v217, %s317
    %v319 = vpop.permute.xlu0 %318
    %s321 = sor.u32 256, 9
    %322 = vbcast.lane.b32.xlu0 %v217, %s321
    %v323 = vpop.permute.xlu0 %322
    %s325 = sor.u32 256, 1
    %326 = vbcast.lane.b32.xlu0 %v228, %s325
    %v327 = vpop.permute.xlu0 %326
    %s329 = sor.u32 256, 9
    %330 = vbcast.lane.b32.xlu0 %v228, %s329
    %v331 = vpop.permute.xlu0 %330
    %s333 = sor.u32 256, 1
    %334 = vbcast.lane.b32.xlu0 %v239, %s333
    %v335 = vpop.permute.xlu0 %334
    %s337 = sor.u32 256, 9
    %338 = vbcast.lane.b32.xlu0 %v239, %s337
    %v339 = vpop.permute.xlu0 %338
    %s341 = sor.u32 256, 1
    %342 = vbcast.lane.b32.xlu0 %v250, %s341
    %v343 = vpop.permute.xlu0 %342
    %s345 = sor.u32 256, 9
    %346 = vbcast.lane.b32.xlu0 %v250, %s345
    %v347 = vpop.permute.xlu0 %346
    %s349 = sor.u32 256, 1
    %350 = vbcast.lane.b32.xlu0 %v261, %s349
    %v351 = vpop.permute.xlu0 %350
    %s353 = sor.u32 256, 9
    %354 = vbcast.lane.b32.xlu0 %v261, %s353
    %v355 = vpop.permute.xlu0 %354
    %s357 = sor.u32 256, 1
    %358 = vbcast.lane.b32.xlu0 %v272, %s357
    %v359 = vpop.permute.xlu0 %358
    %s361 = sor.u32 256, 9
    %362 = vbcast.lane.b32.xlu0 %v272, %s361
    %v363 = vpop.permute.xlu0 %362
    %v364 = vlaneseq
    %v365 = vshrl.u32 %v364, 7
    %v366 = vsub.s32 1, %v365
    %v367 = vrot.slane %v191, %v366
    %v368 = vmul.f32 %v303, %v367
    %v369 = vmul.f32 %v307, %v367
    %v370 = vmul.f32 %v311, %v367
    %v371 = vmul.f32 %v315, %v367
    %v372 = vmul.f32 %v319, %v367
    %v373 = vmul.f32 %v323, %v367
    %v374 = vmul.f32 %v327, %v367
    %v375 = vmul.f32 %v331, %v367
    %v376 = vmul.f32 %v335, %v367
    %v377 = vmul.f32 %v339, %v367
    %v378 = vmul.f32 %v343, %v367
    %v379 = vmul.f32 %v347, %v367
    %v380 = vmul.f32 %v351, %v367
    %v381 = vmul.f32 %v355, %v367
    %v382 = vmul.f32 %v359, %v367
    %v383 = vmul.f32 %v363, %v367
    %v384 = vadd.f32 %v284, %v368
    %v385 = vadd.f32 %v285, %v369
    %v386 = vadd.f32 %v286, %v370
    %v387 = vadd.f32 %v287, %v371
    %v388 = vadd.f32 %v288, %v372
    %v389 = vadd.f32 %v289, %v373
    %v390 = vadd.f32 %v290, %v374
    %v391 = vadd.f32 %v291, %v375
    %v392 = vadd.f32 %v292, %v376
    %v393 = vadd.f32 %v293, %v377
    %v394 = vadd.f32 %v294, %v378
    %v395 = vadd.f32 %v295, %v379
    %v396 = vadd.f32 %v296, %v380
    %v397 = vadd.f32 %v297, %v381
    %v398 = vadd.f32 %v298, %v382
    %v399 = vadd.f32 %v299, %v383
    %s401 = sor.u32 256, 2
    %402 = vbcast.lane.b32.xlu0 %v195, %s401
    %v403 = vpop.permute.xlu0 %402
    %s405 = sor.u32 256, 10
    %406 = vbcast.lane.b32.xlu0 %v195, %s405
    %v407 = vpop.permute.xlu0 %406
    %s409 = sor.u32 256, 2
    %410 = vbcast.lane.b32.xlu0 %v206, %s409
    %v411 = vpop.permute.xlu0 %410
    %s413 = sor.u32 256, 10
    %414 = vbcast.lane.b32.xlu0 %v206, %s413
    %v415 = vpop.permute.xlu0 %414
    %s417 = sor.u32 256, 2
    %418 = vbcast.lane.b32.xlu0 %v217, %s417
    %v419 = vpop.permute.xlu0 %418
    %s421 = sor.u32 256, 10
    %422 = vbcast.lane.b32.xlu0 %v217, %s421
    %v423 = vpop.permute.xlu0 %422
    %s425 = sor.u32 256, 2
    %426 = vbcast.lane.b32.xlu0 %v228, %s425
    %v427 = vpop.permute.xlu0 %426
    %s429 = sor.u32 256, 10
    %430 = vbcast.lane.b32.xlu0 %v228, %s429
    %v431 = vpop.permute.xlu0 %430
    %s433 = sor.u32 256, 2
    %434 = vbcast.lane.b32.xlu0 %v239, %s433
    %v435 = vpop.permute.xlu0 %434
    %s437 = sor.u32 256, 10
    %438 = vbcast.lane.b32.xlu0 %v239, %s437
    %v439 = vpop.permute.xlu0 %438
    %s441 = sor.u32 256, 2
    %442 = vbcast.lane.b32.xlu0 %v250, %s441
    %v443 = vpop.permute.xlu0 %442
    %s445 = sor.u32 256, 10
    %446 = vbcast.lane.b32.xlu0 %v250, %s445
    %v447 = vpop.permute.xlu0 %446
    %s449 = sor.u32 256, 2
    %450 = vbcast.lane.b32.xlu0 %v261, %s449
    %v451 = vpop.permute.xlu0 %450
    %s453 = sor.u32 256, 10
    %454 = vbcast.lane.b32.xlu0 %v261, %s453
    %v455 = vpop.permute.xlu0 %454
    %s457 = sor.u32 256, 2
    %458 = vbcast.lane.b32.xlu0 %v272, %s457
    %v459 = vpop.permute.xlu0 %458
    %s461 = sor.u32 256, 10
    %462 = vbcast.lane.b32.xlu0 %v272, %s461
    %v463 = vpop.permute.xlu0 %462
    %v464 = vlaneseq
    %v465 = vshrl.u32 %v464, 7
    %v466 = vsub.s32 2, %v465
    %v467 = vrot.slane %v191, %v466
    %v468 = vmul.f32 %v403, %v467
    %v469 = vmul.f32 %v407, %v467
    %v470 = vmul.f32 %v411, %v467
    %v471 = vmul.f32 %v415, %v467
    %v472 = vmul.f32 %v419, %v467
    %v473 = vmul.f32 %v423, %v467
    %v474 = vmul.f32 %v427, %v467
    %v475 = vmul.f32 %v431, %v467
    %v476 = vmul.f32 %v435, %v467
    %v477 = vmul.f32 %v439, %v467
    %v478 = vmul.f32 %v443, %v467
    %v479 = vmul.f32 %v447, %v467
    %v480 = vmul.f32 %v451, %v467
    %v481 = vmul.f32 %v455, %v467
    %v482 = vmul.f32 %v459, %v467
    %v483 = vmul.f32 %v463, %v467
    %v484 = vadd.f32 %v384, %v468
    %v485 = vadd.f32 %v385, %v469
    %v486 = vadd.f32 %v386, %v470
    %v487 = vadd.f32 %v387, %v471
    %v488 = vadd.f32 %v388, %v472
    %v489 = vadd.f32 %v389, %v473
    %v490 = vadd.f32 %v390, %v474
    %v491 = vadd.f32 %v391, %v475
    %v492 = vadd.f32 %v392, %v476
    %v493 = vadd.f32 %v393, %v477
    %v494 = vadd.f32 %v394, %v478
    %v495 = vadd.f32 %v395, %v479
    %v496 = vadd.f32 %v396, %v480
    %v497 = vadd.f32 %v397, %v481
    %v498 = vadd.f32 %v398, %v482
    %v499 = vadd.f32 %v399, %v483
    %v500 = vlaneseq
    %v501 = vshrl.u32 %v500, 7
    %v502 = vsub.s32 0, %v501
    %v503 = vrot.slane %v188, %v502
    %v504 = vadd.f32 %v484, %v503
    %v505 = vadd.f32 %v485, %v503
    %v506 = vadd.f32 %v486, %v503
    %v507 = vadd.f32 %v487, %v503
    %v508 = vadd.f32 %v488, %v503
    %v509 = vadd.f32 %v489, %v503
    %v510 = vadd.f32 %v490, %v503
    %v511 = vadd.f32 %v491, %v503
    %v512 = vadd.f32 %v492, %v503
    %v513 = vadd.f32 %v493, %v503
    %v514 = vadd.f32 %v494, %v503
    %v515 = vadd.f32 %v495, %v503
    %v516 = vadd.f32 %v496, %v503
    %v517 = vadd.f32 %v497, %v503
    %v518 = vadd.f32 %v498, %v503
    %v519 = vadd.f32 %v499, %v503
    %v520 = vmax.f32 %v504, 0.0
    %v521 = vmax.f32 %v505, 0.0
    %v522 = vmax.f32 %v506, 0.0
    %v523 = vmax.f32 %v507, 0.0
    %v524 = vmax.f32 %v508, 0.0
    %v525 = vmax.f32 %v509, 0.0
    %v526 = vmax.f32 %v510, 0.0
    %v527 = vmax.f32 %v511, 0.0
    %v528 = vmax.f32 %v512, 0.0
    %v529 = vmax.f32 %v513, 0.0
    %v530 = vmax.f32 %v514, 0.0
    %v531 = vmax.f32 %v515, 0.0
    %v532 = vmax.f32 %v516, 0.0
    %v533 = vmax.f32 %v517, 0.0
    %v534 = vmax.f32 %v518, 0.0
    %v535 = vmax.f32 %v519, 0.0
    %vm552 = vcmask 1040384
    %v553 = vrot.slane %v520, 7
    %v554 = vrot.slane %v521, 7
    %v555 = vsel %vm552, %v553, %v554
    %v556 = vrot.slane %v522, 7
    %v557 = vrot.slane %v523, 7
    %v558 = vsel %vm552, %v556, %v557
    %v559 = vrot.slane %v524, 7
    %v560 = vrot.slane %v525, 7
    %v561 = vsel %vm552, %v559, %v560
    %v562 = vrot.slane %v526, 7
    %v563 = vrot.slane %v527, 7
    %v564 = vsel %vm552, %v562, %v563
    %v565 = vrot.slane %v528, 7
    %v566 = vrot.slane %v529, 7
    %v567 = vsel %vm552, %v565, %v566
    %v568 = vrot.slane %v530, 7
    %v569 = vrot.slane %v531, 7
    %v570 = vsel %vm552, %v568, %v569
    %v571 = vrot.slane %v532, 7
    %v572 = vrot.slane %v533, 7
    %v573 = vsel %vm552, %v571, %v572
    %v574 = vrot.slane %v534, 7
    %v575 = vrot.slane %v535, 7
    %v576 = vsel %vm552, %v574, %v575
    %v601 = vsel %vm552, 0.0, %v553
    %v602 = vsel %vm552, 0.0, %v556
    %v603 = vsel %vm552, 0.0, %v559
    %v604 = vsel %vm552, 0.0, %v562
    %v605 = vsel %vm552, 0.0, %v565
    %v606 = vsel %vm552, 0.0, %v568
    %v607 = vsel %vm552, 0.0, %v571
    %v608 = vsel %vm552, 0.0, %v574
    %v609 = vsel %vm552, %v554, 0.0
    %v610 = vsel %vm552, %v557, 0.0
    %v611 = vsel %vm552, %v560, 0.0
    %v612 = vsel %vm552, %v563, 0.0
    %v613 = vsel %vm552, %v566, 0.0
    %v614 = vsel %vm552, %v569, 0.0
    %v615 = vsel %vm552, %v572, 0.0
    %v616 = vsel %vm552, %v575, 0.0
    %vm633 = vcmask 1046528
    %v634 = vrot.slane %v601, 1
    %v635 = vrot.slane %v555, 1
    %v636 = vsel %vm633, %v634, %v635
    %v637 = vrot.slane %v609, 1
    %v638 = vsel %vm633, %v635, %v637
    %v639 = vrot.slane %v602, 1
    %v640 = vrot.slane %v558, 1
    %v641 = vsel %vm633, %v639, %v640
    %v642 = vrot.slane %v610, 1
    %v643 = vsel %vm633, %v640, %v642
    %v644 = vrot.slane %v603, 1
    %v645 = vrot.slane %v561, 1
    %v646 = vsel %vm633, %v644, %v645
    %v647 = vrot.slane %v611, 1
    %v648 = vsel %vm633, %v645, %v647
    %v649 = vrot.slane %v604, 1
    %v650 = vrot.slane %v564, 1
    %v651 = vsel %vm633, %v649, %v650
    %v652 = vrot.slane %v612, 1
    %v653 = vsel %vm633, %v650, %v652
    %v654 = vrot.slane %v605, 1
    %v655 = vrot.slane %v567, 1
    %v656 = vsel %vm633, %v654, %v655
    %v657 = vrot.slane %v613, 1
    %v658 = vsel %vm633, %v655, %v657
    %v659 = vrot.slane %v606, 1
    %v660 = vrot.slane %v570, 1
    %v661 = vsel %vm633, %v659, %v660
    %v662 = vrot.slane %v614, 1
    %v663 = vsel %vm633, %v660, %v662
    %v664 = vrot.slane %v607, 1
    %v665 = vrot.slane %v573, 1
    %v666 = vsel %vm633, %v664, %v665
    %v667 = vrot.slane %v615, 1
    %v668 = vsel %vm633, %v665, %v667
    %v669 = vrot.slane %v608, 1
    %v670 = vrot.slane %v576, 1
    %v671 = vsel %vm633, %v669, %v670
    %v672 = vrot.slane %v616, 1
    %v673 = vsel %vm633, %v670, %v672
    %674 = vrot.lane.b32.xlu0 %v636, 32
    %v675 = vpop.permute.xlu0 %674
    %676 = vrot.lane.b32.xlu0 %v638, 32
    %v677 = vpop.permute.xlu0 %676
    %678 = vrot.lane.b32.xlu0 %v641, 32
    %v679 = vpop.permute.xlu0 %678
    %680 = vrot.lane.b32.xlu0 %v643, 32
    %v681 = vpop.permute.xlu0 %680
    %682 = vrot.lane.b32.xlu0 %v646, 32
    %v683 = vpop.permute.xlu0 %682
    %684 = vrot.lane.b32.xlu0 %v648, 32
    %v685 = vpop.permute.xlu0 %684
    %686 = vrot.lane.b32.xlu0 %v651, 32
    %v687 = vpop.permute.xlu0 %686
    %688 = vrot.lane.b32.xlu0 %v653, 32
    %v689 = vpop.permute.xlu0 %688
    %690 = vrot.lane.b32.xlu0 %v656, 32
    %v691 = vpop.permute.xlu0 %690
    %692 = vrot.lane.b32.xlu0 %v658, 32
    %v693 = vpop.permute.xlu0 %692
    %694 = vrot.lane.b32.xlu0 %v661, 32
    %v695 = vpop.permute.xlu0 %694
    %696 = vrot.lane.b32.xlu0 %v663, 32
    %v697 = vpop.permute.xlu0 %696
    %698 = vrot.lane.b32.xlu0 %v666, 32
    %v699 = vpop.permute.xlu0 %698
    %700 = vrot.lane.b32.xlu0 %v668, 32
    %v701 = vpop.permute.xlu0 %700
    %702 = vrot.lane.b32.xlu0 %v671, 32
    %v703 = vpop.permute.xlu0 %702
    %704 = vrot.lane.b32.xlu0 %v673, 32
    %v705 = vpop.permute.xlu0 %704
    %vm722 = vcmask 1045504
    %v723 = vrot.slane %v601, 2
    %v724 = vrot.slane %v555, 2
    %v725 = vsel %vm722, %v723, %v724
    %v726 = vrot.slane %v609, 2
    %v727 = vsel %vm722, %v724, %v726
    %v728 = vrot.slane %v602, 2
    %v729 = vrot.slane %v558, 2
    %v730 = vsel %vm722, %v728, %v729
    %v731 = vrot.slane %v610, 2
    %v732 = vsel %vm722, %v729, %v731
    %v733 = vrot.slane %v603, 2
    %v734 = vrot.slane %v561, 2
    %v735 = vsel %vm722, %v733, %v734
    %v736 = vrot.slane %v611, 2
    %v737 = vsel %vm722, %v734, %v736
    %v738 = vrot.slane %v604, 2
    %v739 = vrot.slane %v564, 2
    %v740 = vsel %vm722, %v738, %v739
    %v741 = vrot.slane %v612, 2
    %v742 = vsel %vm722, %v739, %v741
    %v743 = vrot.slane %v605, 2
    %v744 = vrot.slane %v567, 2
    %v745 = vsel %vm722, %v743, %v744
    %v746 = vrot.slane %v613, 2
    %v747 = vsel %vm722, %v744, %v746
    %v748 = vrot.slane %v606, 2
    %v749 = vrot.slane %v570, 2
    %v750 = vsel %vm722, %v748, %v749
    %v751 = vrot.slane %v614, 2
    %v752 = vsel %vm722, %v749, %v751
    %v753 = vrot.slane %v607, 2
    %v754 = vrot.slane %v573, 2
    %v755 = vsel %vm722, %v753, %v754
    %v756 = vrot.slane %v615, 2
    %v757 = vsel %vm722, %v754, %v756
    %v758 = vrot.slane %v608, 2
    %v759 = vrot.slane %v576, 2
    %v760 = vsel %vm722, %v758, %v759
    %v761 = vrot.slane %v616, 2
    %v762 = vsel %vm722, %v759, %v761
    %763 = vrot.lane.b32.xlu0 %v725, 64
    %v764 = vpop.permute.xlu0 %763
    %765 = vrot.lane.b32.xlu0 %v727, 64
    %v766 = vpop.permute.xlu0 %765
    %767 = vrot.lane.b32.xlu0 %v730, 64
    %v768 = vpop.permute.xlu0 %767
    %769 = vrot.lane.b32.xlu0 %v732, 64
    %v770 = vpop.permute.xlu0 %769
    %771 = vrot.lane.b32.xlu0 %v735, 64
    %v772 = vpop.permute.xlu0 %771
    %773 = vrot.lane.b32.xlu0 %v737, 64
    %v774 = vpop.permute.xlu0 %773
    %775 = vrot.lane.b32.xlu0 %v740, 64
    %v776 = vpop.permute.xlu0 %775
    %777 = vrot.lane.b32.xlu0 %v742, 64
    %v778 = vpop.permute.xlu0 %777
    %779 = vrot.lane.b32.xlu0 %v745, 64
    %v780 = vpop.permute.xlu0 %779
    %781 = vrot.lane.b32.xlu0 %v747, 64
    %v782 = vpop.permute.xlu0 %781
    %783 = vrot.lane.b32.xlu0 %v750, 64
    %v784 = vpop.permute.xlu0 %783
    %785 = vrot.lane.b32.xlu0 %v752, 64
    %v786 = vpop.permute.xlu0 %785
    %787 = vrot.lane.b32.xlu0 %v755, 64
    %v788 = vpop.permute.xlu0 %787
    %789 = vrot.lane.b32.xlu0 %v757, 64
    %v790 = vpop.permute.xlu0 %789
    %791 = vrot.lane.b32.xlu0 %v760, 64
    %v792 = vpop.permute.xlu0 %791
    %793 = vrot.lane.b32.xlu0 %v762, 64
    %v794 = vpop.permute.xlu0 %793
    %vm811 = vcmask 261120
    %v812 = vsel %vm811, %v601, %v675
    %v813 = vsel %vm811, %v555, %v677
    %v814 = vsel %vm811, %v602, %v679
    %v815 = vsel %vm811, %v558, %v681
    %v816 = vsel %vm811, %v603, %v683
    %v817 = vsel %vm811, %v561, %v685
    %v818 = vsel %vm811, %v604, %v687
    %v819 = vsel %vm811, %v564, %v689
    %v820 = vsel %vm811, %v605, %v691
    %v821 = vsel %vm811, %v567, %v693
    %v822 = vsel %vm811, %v606, %v695
    %v823 = vsel %vm811, %v570, %v697
    %v824 = vsel %vm811, %v607, %v699
    %v825 = vsel %vm811, %v573, %v701
    %v826 = vsel %vm811, %v608, %v703
    %v827 = vsel %vm811, %v576, %v705
    %vm828 = vcmask 523264
    %v829 = vsel %vm828, %v812, %v764
    %v830 = vsel %vm828, %v813, %v766
    %v831 = vsel %vm828, %v814, %v768
    %v832 = vsel %vm828, %v815, %v770
    %v833 = vsel %vm828, %v816, %v772
    %v834 = vsel %vm828, %v817, %v774
    %v835 = vsel %vm828, %v818, %v776
    %v836 = vsel %vm828, %v819, %v778
    %v837 = vsel %vm828, %v820, %v780
    %v838 = vsel %vm828, %v821, %v782
    %v839 = vsel %vm828, %v822, %v784
    %v840 = vsel %vm828, %v823, %v786
    %v841 = vsel %vm828, %v824, %v788
    %v842 = vsel %vm828, %v825, %v790
    %v843 = vsel %vm828, %v826, %v792
    %v844 = vsel %vm828, %v827, %v794
    %v845 = vld [vmem:[%s4] sm:$0xff]
    %v846 = vld [vmem:[%s4 + $0x8] sm:$0xff]
    %v847 = vld [vmem:[%s4 + $0x10] sm:$0xff]
    %v848 = vld [vmem:[%s4 + $0x18] sm:$0xff]
    %v849 = vld [vmem:[%s4 + $0x20] sm:$0xff]
    %v850 = vld [vmem:[%s4 + $0x28] sm:$0xff]
    %v851 = vld [vmem:[%s4 + $0x30] sm:$0xff]
    %v852 = vld [vmem:[%s4 + $0x38] sm:$0xff]
    %v853 = vld [vmem:[%s4 + $0x40] sm:$0xff]
    %v854 = vld [vmem:[%s4 + $0x48] sm:$0xff]
    %v855 = vld [vmem:[%s4 + $0x50] sm:$0xff]
    %v856 = vld [vmem:[%s4 + $0x58] sm:$0xff]
    %v857 = vlaneseq
    %v858 = vshrl.u32 %v857, 7
    %v859 = vsub.s32 1, %v858
    %v860 = vrot.slane %v188, %v859
    %vm861 = vcmask 785408
    %v863 = vsel %vm861, %v829, 0
    %v866 = vsel %vm861, %v830, 0
    %v869 = vsel %vm861, %v831, 0
    %v872 = vsel %vm861, %v832, 0
    %v875 = vsel %vm861, %v833, 0
    %v878 = vsel %vm861, %v834, 0
    %v881 = vsel %vm861, %v835, 0
    %v884 = vsel %vm861, %v836, 0
    %v887 = vsel %vm861, %v837, 0
    %v890 = vsel %vm861, %v838, 0
    %v893 = vsel %vm861, %v839, 0
    %v896 = vsel %vm861, %v840, 0
    %v899 = vsel %vm861, %v841, 0
    %v902 = vsel %vm861, %v842, 0
    %v905 = vsel %vm861, %v843, 0
    %v908 = vsel %vm861, %v844, 0
    %910 = vmatprep.subr.mxu0 0.0
    %911 = vmatpush1.msra.mxu0 %v845
    %912 = vmatprep.subr.mxu0 0.0
    %913 = vmatpush1.msra.mxu0 %v846
    %914 = vmatprep.subr.mxu0 0.0
    %915 = vmatpush1.msra.mxu0 %v847
    %916 = vmatprep.subr.mxu0 0.0
    %917 = vmatpush1.msra.mxu0 %v848
    %918 = vmatprep.subr.mxu0 0.0
    %919 = vmatpush1.msra.mxu0 %v849
    %920 = vmatprep.subr.mxu0 0.0
    %921 = vmatpush1.msra.mxu0 %v850
    %922 = vmatprep.subr.mxu0 0.0
    %923 = vmatpush1.msra.mxu0 %v851
    %924 = vmatprep.subr.mxu0 0.0
    %925 = vmatpush1.msra.mxu0 %v852
    %926 = vmatprep.subr.mxu0 0.0
    %927 = vmatpush1.msra.mxu0 %v853
    %928 = vmatprep.subr.mxu0 0.0
    %929 = vmatpush1.msra.mxu0 %v854
    %930 = vmatprep.subr.mxu0 0.0
    %931 = vmatpush1.msra.mxu0 %v855
    %932 = vmatprep.subr.mxu0 0.0
    %933 = vmatpush1.msra.mxu0 %v856
    %934 = vmatprep.subr.mxu0 0.0
    %935 = vmatpush1.msra.mxu0 0.0
    %936 = vmatprep.subr.mxu0 0.0
    %937 = vmatpush1.msra.mxu0 0.0
    %938 = vmatprep.subr.mxu0 0.0
    %939 = vmatpush1.msra.mxu0 0.0
    %940 = vmatprep.subr.mxu0 0.0
    %941 = vmatpush1.msra.mxu0 0.0
    %942 = vmatprep.subr.mxu0 0.0
    %943 = vmatpush1.msra.mxu0 0.0
    %944 = vmatprep.subr.mxu0 0.0
    %945 = vmatpush1.msra.mxu0 0.0
    %946 = vmatprep.subr.mxu0 0.0
    %947 = vmatpush1.msra.mxu0 0.0
    %948 = vmatprep.subr.mxu0 0.0
    %949 = vmatpush1.msra.mxu0 0.0
    %950 = vmatprep.subr.mxu0 0.0
    %951 = vmatpush1.msra.mxu0 0.0
    %952 = vmatprep.subr.mxu0 0.0
    %953 = vmatpush1.msra.mxu0 0.0
    %954 = vmatprep.subr.mxu0 0.0
    %955 = vmatpush1.msra.mxu0 0.0
    %956 = vmatprep.subr.mxu0 0.0
    %957 = vmatpush1.msra.mxu0 0.0
    %958 = vmatprep.subr.mxu0 0.0
    %959 = vmatpush1.msra.mxu0 0.0
    %960 = vmatprep.subr.mxu0 0.0
    %961 = vmatpush1.msra.mxu0 0.0
    %962 = vmatprep.subr.mxu0 0.0
    %963 = vmatpush1.msra.mxu0 0.0
    %964 = vmatprep.subr.mxu0 0.0
    %965 = vmatpush1.msra.mxu0 0.0
    %966 = vmatprep.subr.mxu0 0.0
    %967 = vmatpush1.msra.mxu0 0.0
    %968 = vmatprep.subr.mxu0 0.0
    %969 = vmatpush1.msra.mxu0 0.0
    %970 = vmatprep.subr.mxu0 0.0
    %971 = vmatpush1.msra.mxu0 0.0
    %972 = vmatprep.subr.mxu0 0.0
    %973 = vmatpush1.msra.mxu0 0.0
    %974 = vmatprep.mubr.f32.mxu0 0.0
    %975 = vmatmul.mubr.f32.gmra.mrb[0].mxu0 %v863
    %v976 = vpop.f32.mrb[0].mxu0
    %v977 = vadd.f32 %v860, %v976
    %v978 = vpop.f32.mrb[0].mxu0
    %979 = vmatprep.mubr.f32.mxu0 0.0
    %980 = vmatmul.mubr.f32.gmra.mrb[0].mxu0 %v866
    %v981 = vpop.f32.mrb[0].mxu0
    %v982 = vadd.f32 %v860, %v981
    %v983 = vpop.f32.mrb[0].mxu0
    %984 = vmatprep.mubr.f32.mxu0 0.0
    %985 = vmatmul.mubr.f32.gmra.mrb[0].mxu0 %v869
    %v986 = vpop.f32.mrb[0].mxu0
    %v987 = vadd.f32 %v860, %v986
    %v988 = vpop.f32.mrb[0].mxu0
    %989 = vmatprep.mubr.f32.mxu0 0.0
    %990 = vmatmul.mubr.f32.gmra.mrb[0].mxu0 %v872
    %v991 = vpop.f32.mrb[0].mxu0
    %v992 = vadd.f32 %v860, %v991
    %v993 = vpop.f32.mrb[0].mxu0
    %994 = vmatprep.mubr.f32.mxu0 0.0
    %995 = vmatmul.mubr.f32.gmra.mrb[0].mxu0 %v875
    %v996 = vpop.f32.mrb[0].mxu0
    %v997 = vadd.f32 %v860, %v996
    %v998 = vpop.f32.mrb[0].mxu0
    %999 = vmatprep.mubr.f32.mxu0 0.0
    %1000 = vmatmul.mubr.f32.gmra.mrb[0].mxu0 %v878
    %v1001 = vpop.f32.mrb[0].mxu0
    %v1002 = vadd.f32 %v860, %v1001
    %v1003 = vpop.f32.mrb[0].mxu0
    %1004 = vmatprep.mubr.f32.mxu0 0.0
    %1005 = vmatmul.mubr.f32.gmra.mrb[0].mxu0 %v881
    %v1006 = vpop.f32.mrb[0].mxu0
    %v1007 = vadd.f32 %v860, %v1006
    %v1008 = vpop.f32.mrb[0].mxu0
    %1009 = vmatprep.mubr.f32.mxu0 0.0
    %1010 = vmatmul.mubr.f32.gmra.mrb[0].mxu0 %v884
    %v1011 = vpop.f32.mrb[0].mxu0
    %v1012 = vadd.f32 %v860, %v1011
    %v1013 = vpop.f32.mrb[0].mxu0
    %1014 = vmatprep.mubr.f32.mxu0 0.0
    %1015 = vmatmul.mubr.f32.gmra.mrb[0].mxu0 %v887
    %v1016 = vpop.f32.mrb[0].mxu0
    %v1017 = vadd.f32 %v860, %v1016
    %v1018 = vpop.f32.mrb[0].mxu0
    %1019 = vmatprep.mubr.f32.mxu0 0.0
    %1020 = vmatmul.mubr.f32.gmra.mrb[0].mxu0 %v890
    %v1021 = vpop.f32.mrb[0].mxu0
    %v1022 = vadd.f32 %v860, %v1021
    %v1023 = vpop.f32.mrb[0].mxu0
    %1024 = vmatprep.mubr.f32.mxu0 0.0
    %1025 = vmatmul.mubr.f32.gmra.mrb[0].mxu0 %v893
    %v1026 = vpop.f32.mrb[0].mxu0
    %v1027 = vadd.f32 %v860, %v1026
    %v1028 = vpop.f32.mrb[0].mxu0
    %1029 = vmatprep.mubr.f32.mxu0 0.0
    %1030 = vmatmul.mubr.f32.gmra.mrb[0].mxu0 %v896
    %v1031 = vpop.f32.mrb[0].mxu0
    %v1032 = vadd.f32 %v860, %v1031
    %v1033 = vpop.f32.mrb[0].mxu0
    %1034 = vmatprep.mubr.f32.mxu0 0.0
    %1035 = vmatmul.mubr.f32.gmra.mrb[0].mxu0 %v899
    %v1036 = vpop.f32.mrb[0].mxu0
    %v1037 = vadd.f32 %v860, %v1036
    %v1038 = vpop.f32.mrb[0].mxu0
    %1039 = vmatprep.mubr.f32.mxu0 0.0
    %1040 = vmatmul.mubr.f32.gmra.mrb[0].mxu0 %v902
    %v1041 = vpop.f32.mrb[0].mxu0
    %v1042 = vadd.f32 %v860, %v1041
    %v1043 = vpop.f32.mrb[0].mxu0
    %1044 = vmatprep.mubr.f32.mxu0 0.0
    %1045 = vmatmul.mubr.f32.gmra.mrb[0].mxu0 %v905
    %v1046 = vpop.f32.mrb[0].mxu0
    %v1047 = vadd.f32 %v860, %v1046
    %v1048 = vpop.f32.mrb[0].mxu0
    %1049 = vmatprep.mubr.f32.mxu0 0.0
    %1050 = vmatmul.mubr.f32.gmra.mrb[0].mxu0 %v908
    %v1051 = vpop.f32.mrb[0].mxu0
    %v1052 = vadd.f32 %v860, %v1051
    %v1053 = vpop.f32.mrb[0].mxu0
    %1054 = vdwg.mxu0
    %v1055 = vmax.f32 %v977, 0.0
    %v1056 = vmax.f32 %v982, 0.0
    %v1057 = vmax.f32 %v987, 0.0
    %v1058 = vmax.f32 %v992, 0.0
    %v1059 = vmax.f32 %v997, 0.0
    %v1060 = vmax.f32 %v1002, 0.0
    %v1061 = vmax.f32 %v1007, 0.0
    %v1062 = vmax.f32 %v1012, 0.0
    %v1063 = vmax.f32 %v1017, 0.0
    %v1064 = vmax.f32 %v1022, 0.0
    %v1065 = vmax.f32 %v1027, 0.0
    %v1066 = vmax.f32 %v1032, 0.0
    %v1067 = vmax.f32 %v1037, 0.0
    %v1068 = vmax.f32 %v1042, 0.0
    %v1069 = vmax.f32 %v1047, 0.0
    %v1070 = vmax.f32 %v1052, 0.0
    %v1071 = vsel %vm828, %v1055, -inf
    %v1072 = vsel %vm828, %v1056, -inf
    %v1073 = vmax.f32 %v1071, %v1072
    %v1074 = vrot.slane %v1073, 4
    %v1075 = vmax.f32 %v1073, %v1074
    %v1076 = vrot.slane %v1075, 2
    %v1077 = vmax.f32 %v1075, %v1076
    %v1078 = vrot.slane %v1077, 1
    %v1079 = vmax.f32 %v1077, %v1078
    %v1080 = vsel %vm828, %v1057, -inf
    %v1081 = vsel %vm828, %v1058, -inf
    %v1082 = vmax.f32 %v1080, %v1081
    %v1083 = vrot.slane %v1082, 4
    %v1084 = vmax.f32 %v1082, %v1083
    %v1085 = vrot.slane %v1084, 2
    %v1086 = vmax.f32 %v1084, %v1085
    %v1087 = vrot.slane %v1086, 1
    %v1088 = vmax.f32 %v1086, %v1087
    %v1089 = vsel %vm828, %v1059, -inf
    %v1090 = vsel %vm828, %v1060, -inf
    %v1091 = vmax.f32 %v1089, %v1090
    %v1092 = vrot.slane %v1091, 4
    %v1093 = vmax.f32 %v1091, %v1092
    %v1094 = vrot.slane %v1093, 2
    %v1095 = vmax.f32 %v1093, %v1094
    %v1096 = vrot.slane %v1095, 1
    %v1097 = vmax.f32 %v1095, %v1096
    %v1098 = vsel %vm828, %v1061, -inf
    %v1099 = vsel %vm828, %v1062, -inf
    %v1100 = vmax.f32 %v1098, %v1099
    %v1101 = vrot.slane %v1100, 4
    %v1102 = vmax.f32 %v1100, %v1101
    %v1103 = vrot.slane %v1102, 2
    %v1104 = vmax.f32 %v1102, %v1103
    %v1105 = vrot.slane %v1104, 1
    %v1106 = vmax.f32 %v1104, %v1105
    %v1107 = vsel %vm828, %v1063, -inf
    %v1108 = vsel %vm828, %v1064, -inf
    %v1109 = vmax.f32 %v1107, %v1108
    %v1110 = vrot.slane %v1109, 4
    %v1111 = vmax.f32 %v1109, %v1110
    %v1112 = vrot.slane %v1111, 2
    %v1113 = vmax.f32 %v1111, %v1112
    %v1114 = vrot.slane %v1113, 1
    %v1115 = vmax.f32 %v1113, %v1114
    %v1116 = vsel %vm828, %v1065, -inf
    %v1117 = vsel %vm828, %v1066, -inf
    %v1118 = vmax.f32 %v1116, %v1117
    %v1119 = vrot.slane %v1118, 4
    %v1120 = vmax.f32 %v1118, %v1119
    %v1121 = vrot.slane %v1120, 2
    %v1122 = vmax.f32 %v1120, %v1121
    %v1123 = vrot.slane %v1122, 1
    %v1124 = vmax.f32 %v1122, %v1123
    %v1125 = vsel %vm828, %v1067, -inf
    %v1126 = vsel %vm828, %v1068, -inf
    %v1127 = vmax.f32 %v1125, %v1126
    %v1128 = vrot.slane %v1127, 4
    %v1129 = vmax.f32 %v1127, %v1128
    %v1130 = vrot.slane %v1129, 2
    %v1131 = vmax.f32 %v1129, %v1130
    %v1132 = vrot.slane %v1131, 1
    %v1133 = vmax.f32 %v1131, %v1132
    %v1134 = vsel %vm828, %v1069, -inf
    %v1135 = vsel %vm828, %v1070, -inf
    %v1136 = vmax.f32 %v1134, %v1135
    %v1137 = vrot.slane %v1136, 4
    %v1138 = vmax.f32 %v1136, %v1137
    %v1139 = vrot.slane %v1138, 2
    %v1140 = vmax.f32 %v1138, %v1139
    %v1141 = vrot.slane %v1140, 1
    %v1142 = vmax.f32 %v1140, %v1141
    %v1143 = vld [vmem:[#allocation13] sm:$0xff]
    %v1144 = vld [vmem:[#allocation13 + $0x8] sm:$0xff]
    %v1145 = vld [vmem:[#allocation13 + $0x10] sm:$0xff]
    %v1146 = vld [vmem:[#allocation13 + $0x18] sm:$0xff]
    %v1147 = vld [vmem:[#allocation13 + $0x20] sm:$0xff]
    %v1148 = vld [vmem:[#allocation13 + $0x28] sm:$0xff]
    %v1149 = vld [vmem:[#allocation13 + $0x30] sm:$0xff]
    %v1150 = vld [vmem:[#allocation13 + $0x38] sm:$0xff]
    %v1151 = vlaneseq
    %v1152 = vshrl.u32 %v1151, 7
    %v1153 = vsub.s32 2, %v1152
    %v1154 = vrot.slane %v188, %v1153
    %vm1163 = vcmask 1041409
    %v1164 = vsel %vm1163, %v1088, %v1079
    %vm1165 = vcmask 1042434
    %v1166 = vsel %vm1165, %v1097, %v1164
    %vm1167 = vcmask 1043459
    %v1168 = vsel %vm1167, %v1106, %v1166
    %vm1169 = vcmask 1044484
    %v1170 = vsel %vm1169, %v1115, %v1168
    %vm1171 = vcmask 1045509
    %v1172 = vsel %vm1171, %v1124, %v1170
    %vm1173 = vcmask 1046534
    %v1174 = vsel %vm1173, %v1133, %v1172
    %vm1175 = vcmask 1047559
    %v1176 = vsel %vm1175, %v1142, %v1174
    %v1177 = vsel %vm828, %v1176, 0
    %1179 = vmatprep.subr.mxu0 0.0
    %1180 = vmatpush1.msra.mxu0 %v1143
    %1181 = vmatprep.subr.mxu0 0.0
    %1182 = vmatpush1.msra.mxu0 %v1144
    %1183 = vmatprep.subr.mxu0 0.0
    %1184 = vmatpush1.msra.mxu0 %v1145
    %1185 = vmatprep.subr.mxu0 0.0
    %1186 = vmatpush1.msra.mxu0 %v1146
    %1187 = vmatprep.subr.mxu0 0.0
    %1188 = vmatpush1.msra.mxu0 %v1147
    %1189 = vmatprep.subr.mxu0 0.0
    %1190 = vmatpush1.msra.mxu0 %v1148
    %1191 = vmatprep.subr.mxu0 0.0
    %1192 = vmatpush1.msra.mxu0 %v1149
    %1193 = vmatprep.subr.mxu0 0.0
    %1194 = vmatpush1.msra.mxu0 %v1150
    %1195 = vmatprep.subr.mxu0 0.0
    %1196 = vmatpush1.msra.mxu0 0.0
    %1197 = vmatprep.subr.mxu0 0.0
    %1198 = vmatpush1.msra.mxu0 0.0
    %1199 = vmatprep.subr.mxu0 0.0
    %1200 = vmatpush1.msra.mxu0 0.0
    %1201 = vmatprep.subr.mxu0 0.0
    %1202 = vmatpush1.msra.mxu0 0.0
    %1203 = vmatprep.subr.mxu0 0.0
    %1204 = vmatpush1.msra.mxu0 0.0
    %1205 = vmatprep.subr.mxu0 0.0
    %1206 = vmatpush1.msra.mxu0 0.0
    %1207 = vmatprep.subr.mxu0 0.0
    %1208 = vmatpush1.msra.mxu0 0.0
    %1209 = vmatprep.subr.mxu0 0.0
    %1210 = vmatpush1.msra.mxu0 0.0
    %1211 = vmatprep.subr.mxu0 0.0
    %1212 = vmatpush1.msra.mxu0 0.0
    %1213 = vmatprep.subr.mxu0 0.0
    %1214 = vmatpush1.msra.mxu0 0.0
    %1215 = vmatprep.subr.mxu0 0.0
    %1216 = vmatpush1.msra.mxu0 0.0
    %1217 = vmatprep.subr.mxu0 0.0
    %1218 = vmatpush1.msra.mxu0 0.0
    %1219 = vmatprep.subr.mxu0 0.0
    %1220 = vmatpush1.msra.mxu0 0.0
    %1221 = vmatprep.subr.mxu0 0.0
    %1222 = vmatpush1.msra.mxu0 0.0
    %1223 = vmatprep.subr.mxu0 0.0
    %1224 = vmatpush1.msra.mxu0 0.0
    %1225 = vmatprep.subr.mxu0 0.0
    %1226 = vmatpush1.msra.mxu0 0.0
    %1227 = vmatprep.subr.mxu0 0.0
    %1228 = vmatpush1.msra.mxu0 0.0
    %1229 = vmatprep.subr.mxu0 0.0
    %1230 = vmatpush1.msra.mxu0 0.0
    %1231 = vmatprep.subr.mxu0 0.0
    %1232 = vmatpush1.msra.mxu0 0.0
    %1233 = vmatprep.subr.mxu0 0.0
    %1234 = vmatpush1.msra.mxu0 0.0
    %1235 = vmatprep.subr.mxu0 0.0
    %1236 = vmatpush1.msra.mxu0 0.0
    %1237 = vmatprep.subr.mxu0 0.0
    %1238 = vmatpush1.msra.mxu0 0.0
    %1239 = vmatprep.subr.mxu0 0.0
    %1240 = vmatpush1.msra.mxu0 0.0
    %1241 = vmatprep.subr.mxu0 0.0
    %1242 = vmatpush1.msra.mxu0 0.0
    %1243 = vmatprep.mubr.f32.mxu0 0.0
    %1244 = vmatmul.mubr.f32.gmra.mrb[0].mxu0 %v1177
    %v1245 = vpop.f32.mrb[0].mxu0
    %v1246 = vadd.f32 %v1154, %v1245
    %v1247 = vpop.f32.mrb[0].mxu0
    %1248 = vdwg.mxu0
    %v1249 = vlaneseq
    %v1250 = vshrl.u32 %v1249, 7
    %v1251 = vsub.s32 3, %v1250
    %v1252 = vrot.slane %v188, %v1251
    %v1253 = vmul.f32 %v1246, %v1252
    %v1254 = vlaneseq
    %v1255 = vshrl.u32 %v1254, 7
    %v1256 = vsub.s32 4, %v1255
    %v1257 = vrot.slane %v188, %v1256
    %v1258 = vadd.f32 %v1253, %v1257
    %v1259 = vmax.f32 %v1258, 0.0
    %v1260 = vld [vmem:[#allocation14] sm:$0xff]
    %v1261 = vld [vmem:[#allocation14 + $0x8] sm:$0xff]
    %v1262 = vld [vmem:[#allocation14 + $0x10] sm:$0xff]
    %v1263 = vld [vmem:[#allocation14 + $0x18] sm:$0xff]
    %v1264 = vld [vmem:[#allocation14 + $0x20] sm:$0xff]
    %v1265 = vld [vmem:[#allocation14 + $0x28] sm:$0xff]
    %v1266 = vld [vmem:[#allocation14 + $0x30] sm:$0xff]
    %v1267 = vld [vmem:[#allocation14 + $0x38] sm:$0xff]
    %v1268 = vld [vmem:[#allocation14 + $0x40] sm:$0xff]
    %v1269 = vld [vmem:[#allocation14 + $0x48] sm:$0xff]
    %v1270 = vld [vmem:[#allocation14 + $0x50] sm:$0xff]
    %v1271 = vld [vmem:[#allocation14 + $0x58] sm:$0xff]
    %v1272 = vld [vmem:[#allocation14 + $0x60] sm:$0xff]
    %v1273 = vld [vmem:[#allocation14 + $0x68] sm:$0xff]
    %v1274 = vld [vmem:[#allocation14 + $0x70] sm:$0xff]
    %v1275 = vld [vmem:[#allocation14 + $0x78] sm:$0xff]
    %v1276 = vld [vmem:[#allocation14 + $0x80] sm:$0xff]
    %v1277 = vld [vmem:[#allocation14 + $0x88] sm:$0xff]
    %v1278 = vld [vmem:[#allocation14 + $0x90] sm:$0xff]
    %v1279 = vld [vmem:[#allocation14 + $0x98] sm:$0xff]
    %v1280 = vld [vmem:[#allocation14 + $0xa0] sm:$0xff]
    %v1281 = vld [vmem:[#allocation14 + $0xa8] sm:$0xff]
    %v1282 = vld [vmem:[#allocation14 + $0xb0] sm:$0xff]
    %v1283 = vld [vmem:[#allocation14 + $0xb8] sm:$0xff]
    %v1284 = vld [vmem:[#allocation14 + $0xc0] sm:$0xff]
    %v1285 = vld [vmem:[#allocation14 + $0xc8] sm:$0xff]
    %v1286 = vld [vmem:[#allocation14 + $0xd0] sm:$0xff]
    %v1287 = vld [vmem:[#allocation14 + $0xd8] sm:$0xff]
    %v1288 = vld [vmem:[#allocation14 + $0xe0] sm:$0xff]
    %v1289 = vld [vmem:[#allocation14 + $0xe8] sm:$0xff]
    %v1290 = vld [vmem:[#allocation14 + $0xf0] sm:$0xff]
    %v1291 = vld [vmem:[#allocation14 + $0xf8] sm:$0xff]
    %v1292 = vlaneseq
    %v1293 = vshrl.u32 %v1292, 7
    %v1294 = vsub.s32 5, %v1293
    %v1295 = vrot.slane %v188, %v1294
    %v1296 = vlaneseq
    %v1297 = vshrl.u32 %v1296, 7
    %v1298 = vsub.s32 5, %v1297
    %v1299 = vrot.slane %v189, %v1298
    %1300 = vmatprep.subr.mxu0 %v1261
    %1301 = vmatpush1.msra.mxu0 %v1260
    %1302 = vmatprep.subr.mxu0 %v1263
    %1303 = vmatpush1.msra.mxu0 %v1262
    %1304 = vmatprep.subr.mxu0 %v1265
    %1305 = vmatpush1.msra.mxu0 %v1264
    %1306 = vmatprep.subr.mxu0 %v1267
    %1307 = vmatpush1.msra.mxu0 %v1266
    %1308 = vmatprep.subr.mxu0 %v1269
    %1309 = vmatpush1.msra.mxu0 %v1268
    %1310 = vmatprep.subr.mxu0 %v1271
    %1311 = vmatpush1.msra.mxu0 %v1270
    %1312 = vmatprep.subr.mxu0 %v1273
    %1313 = vmatpush1.msra.mxu0 %v1272
    %1314 = vmatprep.subr.mxu0 %v1275
    %1315 = vmatpush1.msra.mxu0 %v1274
    %1316 = vmatprep.subr.mxu0 %v1277
    %1317 = vmatpush1.msra.mxu0 %v1276
    %1318 = vmatprep.subr.mxu0 %v1279
    %1319 = vmatpush1.msra.mxu0 %v1278
    %1320 = vmatprep.subr.mxu0 %v1281
    %1321 = vmatpush1.msra.mxu0 %v1280
    %1322 = vmatprep.subr.mxu0 %v1283
    %1323 = vmatpush1.msra.mxu0 %v1282
    %1324 = vmatprep.subr.mxu0 %v1285
    %1325 = vmatpush1.msra.mxu0 %v1284
    %1326 = vmatprep.subr.mxu0 %v1287
    %1327 = vmatpush1.msra.mxu0 %v1286
    %1328 = vmatprep.subr.mxu0 %v1289
    %1329 = vmatpush1.msra.mxu0 %v1288
    %1330 = vmatprep.subr.mxu0 %v1291
    %1331 = vmatpush1.msra.mxu0 %v1290
    %1332 = vmatprep.subr.mxu0 0.0
    %1333 = vmatpush1.msra.mxu0 0.0
    %1334 = vmatprep.subr.mxu0 0.0
    %1335 = vmatpush1.msra.mxu0 0.0
    %1336 = vmatprep.subr.mxu0 0.0
    %1337 = vmatpush1.msra.mxu0 0.0
    %1338 = vmatprep.subr.mxu0 0.0
    %1339 = vmatpush1.msra.mxu0 0.0
    %1340 = vmatprep.subr.mxu0 0.0
    %1341 = vmatpush1.msra.mxu0 0.0
    %1342 = vmatprep.subr.mxu0 0.0
    %1343 = vmatpush1.msra.mxu0 0.0
    %1344 = vmatprep.subr.mxu0 0.0
    %1345 = vmatpush1.msra.mxu0 0.0
    %1346 = vmatprep.subr.mxu0 0.0
    %1347 = vmatpush1.msra.mxu0 0.0
    %1348 = vmatprep.subr.mxu0 0.0
    %1349 = vmatpush1.msra.mxu0 0.0
    %1350 = vmatprep.subr.mxu0 0.0
    %1351 = vmatpush1.msra.mxu0 0.0
    %1352 = vmatprep.subr.mxu0 0.0
    %1353 = vmatpush1.msra.mxu0 0.0
    %1354 = vmatprep.subr.mxu0 0.0
    %1355 = vmatpush1.msra.mxu0 0.0
    %1356 = vmatprep.subr.mxu0 0.0
    %1357 = vmatpush1.msra.mxu0 0.0
    %1358 = vmatprep.subr.mxu0 0.0
    %1359 = vmatpush1.msra.mxu0 0.0
    %1360 = vmatprep.subr.mxu0 0.0
    %1361 = vmatpush1.msra.mxu0 0.0
    %1362 = vmatprep.subr.mxu0 0.0
    %1363 = vmatpush1.msra.mxu0 0.0
    %1364 = vmatprep.mubr.f32.mxu0 0.0
    %1365 = vmatmul.mubr.f32.gmra.mrb[0].mxu0 %v1259
    %v1366 = vpop.f32.mrb[0].mxu0
    %v1367 = vadd.f32 %v1295, %v1366
    %v1368 = vpop.f32.mrb[0].mxu0
    %v1369 = vadd.f32 %v1299, %v1368
    %1370 = vdwg.mxu0
    %v1371 = vlaneseq
    %v1372 = vshrl.u32 %v1371, 7
    %v1373 = vsub.s32 6, %v1372
    %v1374 = vrot.slane %v188, %v1373
    %v1375 = vlaneseq
    %v1376 = vshrl.u32 %v1375, 7
    %v1377 = vsub.s32 6, %v1376
    %v1378 = vrot.slane %v189, %v1377
    %v1379 = vmul.f32 %v1367, %v1374
    %v1380 = vmul.f32 %v1369, %v1378
    %v1381 = vlaneseq
    %v1382 = vshrl.u32 %v1381, 7
    %v1383 = vsub.s32 7, %v1382
    %v1384 = vrot.slane %v188, %v1383
    %v1385 = vlaneseq
    %v1386 = vshrl.u32 %v1385, 7
    %v1387 = vsub.s32 7, %v1386
    %v1388 = vrot.slane %v189, %v1387
    %v1389 = vadd.f32 %v1379, %v1384
    %v1390 = vadd.f32 %v1380, %v1388
    %v1391 = vmax.f32 %v1389, 0.0
    %v1392 = vmax.f32 %v1390, 0.0
    %v1393 = vld [vmem:[%s7] sm:$0xff]
    %v1394 = vld [vmem:[%s7 + $0x8] sm:$0xff]
    %v1395 = vld [vmem:[%s7 + $0x10] sm:$0xff]
    %v1396 = vld [vmem:[%s7 + $0x18] sm:$0xff]
    %v1397 = vld [vmem:[%s7 + $0x20] sm:$0xff]
    %v1398 = vld [vmem:[%s7 + $0x28] sm:$0xff]
    %v1399 = vld [vmem:[%s7 + $0x30] sm:$0xff]
    %v1400 = vld [vmem:[%s7 + $0x38] sm:$0xff]
    %v1401 = vld [vmem:[%s7 + $0x40] sm:$0xff]
    %v1402 = vld [vmem:[%s7 + $0x48] sm:$0xff]
    %v1403 = vld [vmem:[%s7 + $0x50] sm:$0xff]
    %v1404 = vld [vmem:[%s7 + $0x58] sm:$0xff]
    %v1405 = vld [vmem:[%s7 + $0x60] sm:$0xff]
    %v1406 = vld [vmem:[%s7 + $0x68] sm:$0xff]
    %v1407 = vld [vmem:[%s7 + $0x70] sm:$0xff]
    %v1408 = vld [vmem:[%s7 + $0x78] sm:$0xff]
    %v1409 = vld [vmem:[%s7 + $0x80] sm:$0xff]
    %v1410 = vld [vmem:[%s7 + $0x88] sm:$0xff]
    %v1411 = vld [vmem:[%s7 + $0x90] sm:$0xff]
    %v1412 = vld [vmem:[%s7 + $0x98] sm:$0xff]
    %v1413 = vld [vmem:[%s7 + $0xa0] sm:$0xff]
    %v1414 = vld [vmem:[%s7 + $0xa8] sm:$0xff]
    %v1415 = vld [vmem:[%s7 + $0xb0] sm:$0xff]
    %v1416 = vld [vmem:[%s7 + $0xb8] sm:$0xff]
    %v1417 = vld [vmem:[%s7 + $0xc0] sm:$0xff]
    %v1418 = vld [vmem:[%s7 + $0xc8] sm:$0xff]
    %v1419 = vld [vmem:[%s7 + $0xd0] sm:$0xff]
    %v1420 = vld [vmem:[%s7 + $0xd8] sm:$0xff]
    %v1421 = vld [vmem:[%s7 + $0xe0] sm:$0xff]
    %v1422 = vld [vmem:[%s7 + $0xe8] sm:$0xff]
    %v1423 = vld [vmem:[%s7 + $0xf0] sm:$0xff]
    %v1424 = vld [vmem:[%s7 + $0xf8] sm:$0xff]
    %v1425 = vlaneseq
    %v1426 = vshrl.u32 %v1425, 7
    %v1427 = vsub.s32 0, %v1426
    %v1428 = vrot.slane %v190, %v1427
    %1429 = vmatprep.subr.mxu0 0.0
    %1430 = vmatpush1.msra.mxu0 %v1393
    %1431 = vmatprep.subr.mxu0 0.0
    %1432 = vmatpush1.msra.mxu0 %v1394
    %1433 = vmatprep.subr.mxu0 0.0
    %1434 = vmatpush1.msra.mxu0 %v1395
    %1435 = vmatprep.subr.mxu0 0.0
    %1436 = vmatpush1.msra.mxu0 %v1396
    %1437 = vmatprep.subr.mxu0 0.0
    %1438 = vmatpush1.msra.mxu0 %v1397
    %1439 = vmatprep.subr.mxu0 0.0
    %1440 = vmatpush1.msra.mxu0 %v1398
    %1441 = vmatprep.subr.mxu0 0.0
    %1442 = vmatpush1.msra.mxu0 %v1399
    %1443 = vmatprep.subr.mxu0 0.0
    %1444 = vmatpush1.msra.mxu0 %v1400
    %1445 = vmatprep.subr.mxu0 0.0
    %1446 = vmatpush1.msra.mxu0 %v1401
    %1447 = vmatprep.subr.mxu0 0.0
    %1448 = vmatpush1.msra.mxu0 %v1402
    %1449 = vmatprep.subr.mxu0 0.0
    %1450 = vmatpush1.msra.mxu0 %v1403
    %1451 = vmatprep.subr.mxu0 0.0
    %1452 = vmatpush1.msra.mxu0 %v1404
    %1453 = vmatprep.subr.mxu0 0.0
    %1454 = vmatpush1.msra.mxu0 %v1405
    %1455 = vmatprep.subr.mxu0 0.0
    %1456 = vmatpush1.msra.mxu0 %v1406
    %1457 = vmatprep.subr.mxu0 0.0
    %1458 = vmatpush1.msra.mxu0 %v1407
    %1459 = vmatprep.subr.mxu0 0.0
    %1460 = vmatpush1.msra.mxu0 %v1408
    %1461 = vmatprep.subr.mxu0 0.0
    %1462 = vmatpush1.msra.mxu0 %v1409
    %1463 = vmatprep.subr.mxu0 0.0
    %1464 = vmatpush1.msra.mxu0 %v1410
    %1465 = vmatprep.subr.mxu0 0.0
    %1466 = vmatpush1.msra.mxu0 %v1411
    %1467 = vmatprep.subr.mxu0 0.0
    %1468 = vmatpush1.msra.mxu0 %v1412
    %1469 = vmatprep.subr.mxu0 0.0
    %1470 = vmatpush1.msra.mxu0 %v1413
    %1471 = vmatprep.subr.mxu0 0.0
    %1472 = vmatpush1.msra.mxu0 %v1414
    %1473 = vmatprep.subr.mxu0 0.0
    %1474 = vmatpush1.msra.mxu0 %v1415
    %1475 = vmatprep.subr.mxu0 0.0
    %1476 = vmatpush1.msra.mxu0 %v1416
    %1477 = vmatprep.subr.mxu0 0.0
    %1478 = vmatpush1.msra.mxu0 %v1417
    %1479 = vmatprep.subr.mxu0 0.0
    %1480 = vmatpush1.msra.mxu0 %v1418
    %1481 = vmatprep.subr.mxu0 0.0
    %1482 = vmatpush1.msra.mxu0 %v1419
    %1483 = vmatprep.subr.mxu0 0.0
    %1484 = vmatpush1.msra.mxu0 %v1420
    %1485 = vmatprep.subr.mxu0 0.0
    %1486 = vmatpush1.msra.mxu0 %v1421
    %1487 = vmatprep.subr.mxu0 0.0
    %1488 = vmatpush1.msra.mxu0 %v1422
    %1489 = vmatprep.subr.mxu0 0.0
    %1490 = vmatpush1.msra.mxu0 %v1423
    %1491 = vmatprep.subr.mxu0 0.0
    %1492 = vmatpush1.msra.mxu0 %v1424
    %1493 = vmatprep.mubr.f32.mxu0 %v1392
    %1494 = vmatmul.mubr.f32.gmra.mrb[0].mxu0 %v1391
    %v1495 = vpop.f32.mrb[0].mxu0
    %v1496 = vadd.f32 %v1428, %v1495
    %v1497 = vpop.f32.mrb[0].mxu0
    %1498 = vdwg.mxu0
    %v1499 = vld [vmem:[#allocation17] sm:$0xff]
    %v1500 = vld [vmem:[#allocation17 + $0x8] sm:$0xff]
    %v1501 = vld [vmem:[#allocation17 + $0x10] sm:$0xff]
    %v1502 = vld [vmem:[#allocation17 + $0x18] sm:$0xff]
    %v1503 = vld [vmem:[#allocation17 + $0x20] sm:$0xff]
    %v1504 = vld [vmem:[#allocation17 + $0x28] sm:$0xff]
    %v1505 = vld [vmem:[#allocation17 + $0x30] sm:$0xff]
    %v1506 = vld [vmem:[#allocation17 + $0x38] sm:$0xff]
    %v1507 = vld [vmem:[#allocation17 + $0x40] sm:$0xff]
    %v1508 = vld [vmem:[#allocation17 + $0x48] sm:$0xff]
    %v1509 = vld [vmem:[#allocation17 + $0x50] sm:$0xff]
    %v1510 = vld [vmem:[#allocation17 + $0x58] sm:$0xff]
    %v1511 = vld [vmem:[#allocation17 + $0x60] sm:$0xff]
    %v1512 = vld [vmem:[#allocation17 + $0x68] sm:$0xff]
    %v1513 = vld [vmem:[#allocation17 + $0x70] sm:$0xff]
    %v1514 = vld [vmem:[#allocation17 + $0x78] sm:$0xff]
    %v1515 = vld [vmem:[#allocation8] sm:$0xff]
    %v1516 = vld [vmem:[#allocation10] sm:$0xff]
    %1518 = vrot.lane.b32.xlu0 %v1516, 32
    %v1519 = vpop.permute.xlu0 %1518
    %1522 = vrot.lane.b32.xlu0 %v1496, 64
    %v1523 = vpop.permute.xlu0 %1522
    %v1525 = vsel %vm811, %v1515, %v1519
    %v1526 = vsel %vm828, %v1525, %v1523
    %s1527 = smul.u32 2, 12
    %s1528 = smul.u32 %s1527, 16
    %s1529 = sshll.u32 %s1528, 4
    %1530 = dma.done [#allocation5], %s1529
    %v1531 = vpack.c.bf16 %v1526, %v1526
    %v1532 = vld [vmem:[#allocation2] sm:$0xff]
    %v1533 = vld [vmem:[#allocation2 + $0x8] sm:$0xff]
    %v1534 = vld [vmem:[#allocation2 + $0x10] sm:$0xff]
    %v1535 = vld [vmem:[#allocation2 + $0x18] sm:$0xff]
    %v1536 = vld [vmem:[#allocation2 + $0x20] sm:$0xff]
    %v1537 = vld [vmem:[#allocation2 + $0x28] sm:$0xff]
    %v1538 = vld [vmem:[#allocation2 + $0x30] sm:$0xff]
    %v1539 = vld [vmem:[#allocation2 + $0x38] sm:$0xff]
    %v1540 = vld [vmem:[#allocation2 + $0x40] sm:$0xff]
    %v1541 = vld [vmem:[#allocation2 + $0x48] sm:$0xff]
    %v1542 = vld [vmem:[#allocation2 + $0x50] sm:$0xff]
    %v1543 = vld [vmem:[#allocation2 + $0x58] sm:$0xff]
    %v1544 = vld [vmem:[#allocation2 + $0x60] sm:$0xff]
    %v1545 = vld [vmem:[#allocation2 + $0x68] sm:$0xff]
    %v1546 = vld [vmem:[#allocation2 + $0x70] sm:$0xff]
    %v1547 = vld [vmem:[#allocation2 + $0x78] sm:$0xff]
    %v1548 = vld [vmem:[#allocation2 + $0x80] sm:$0xff]
    %v1549 = vld [vmem:[#allocation2 + $0x88] sm:$0xff]
    %v1550 = vld [vmem:[#allocation2 + $0x90] sm:$0xff]
    %v1551 = vld [vmem:[#allocation2 + $0x98] sm:$0xff]
    %v1552 = vld [vmem:[#allocation2 + $0xa0] sm:$0xff]
    %v1553 = vld [vmem:[#allocation2 + $0xa8] sm:$0xff]
    %v1554 = vld [vmem:[#allocation2 + $0xb0] sm:$0xff]
    %v1555 = vld [vmem:[#allocation2 + $0xb8] sm:$0xff]
    %v1556 = vld [vmem:[#allocation2 + $0xc0] sm:$0xff]
    %v1557 = vld [vmem:[#allocation2 + $0xc8] sm:$0xff]
    %v1558 = vld [vmem:[#allocation2 + $0xd0] sm:$0xff]
    %v1559 = vld [vmem:[#allocation2 + $0xd8] sm:$0xff]
    %v1560 = vld [vmem:[#allocation2 + $0xe0] sm:$0xff]
    %v1561 = vld [vmem:[#allocation2 + $0xe8] sm:$0xff]
    %v1562 = vld [vmem:[#allocation2 + $0xf0] sm:$0xff]
    %v1563 = vld [vmem:[#allocation2 + $0xf8] sm:$0xff]
    %v1564 = vld [vmem:[#allocation2 + $0x100] sm:$0xff]
    %v1565 = vld [vmem:[#allocation2 + $0x108] sm:$0xff]
    %v1566 = vld [vmem:[#allocation2 + $0x110] sm:$0xff]
    %v1567 = vld [vmem:[#allocation2 + $0x118] sm:$0xff]
    %v1568 = vld [vmem:[#allocation2 + $0x120] sm:$0xff]
    %v1569 = vld [vmem:[#allocation2 + $0x128] sm:$0xff]
    %v1570 = vld [vmem:[#allocation2 + $0x130] sm:$0xff]
    %v1571 = vld [vmem:[#allocation2 + $0x138] sm:$0xff]
    %v1572 = vld [vmem:[#allocation2 + $0x140] sm:$0xff]
    %v1573 = vld [vmem:[#allocation2 + $0x148] sm:$0xff]
    %v1574 = vld [vmem:[#allocation2 + $0x150] sm:$0xff]
    %v1575 = vld [vmem:[#allocation2 + $0x158] sm:$0xff]
    %v1576 = vld [vmem:[#allocation2 + $0x160] sm:$0xff]
    %v1577 = vld [vmem:[#allocation2 + $0x168] sm:$0xff]
    %v1578 = vld [vmem:[#allocation2 + $0x170] sm:$0xff]
    %v1579 = vld [vmem:[#allocation2 + $0x178] sm:$0xff]
    %v1580 = vunpack.c.l.s8.bf16 %v1532
    %v1581 = vunpack.c.l.s8.bf16 %v1533
    %v1582 = vunpack.c.l.s8.bf16 %v1534
    %v1583 = vunpack.c.l.s8.bf16 %v1535
    %v1584 = vunpack.c.l.s8.bf16 %v1536
    %v1585 = vunpack.c.l.s8.bf16 %v1537
    %v1586 = vunpack.c.l.s8.bf16 %v1538
    %v1587 = vunpack.c.l.s8.bf16 %v1539
    %v1588 = vunpack.c.l.s8.bf16 %v1540
    %v1589 = vunpack.c.l.s8.bf16 %v1541
    %v1590 = vunpack.c.l.s8.bf16 %v1542
    %v1591 = vunpack.c.l.s8.bf16 %v1543
    %v1592 = vunpack.c.l.s8.bf16 %v1544
    %v1593 = vunpack.c.l.s8.bf16 %v1545
    %v1594 = vunpack.c.l.s8.bf16 %v1546
    %v1595 = vunpack.c.l.s8.bf16 %v1547
    %v1596 = vunpack.c.h.s8.bf16 %v1532
    %v1597 = vunpack.c.h.s8.bf16 %v1533
    %v1598 = vunpack.c.h.s8.bf16 %v1534
    %v1599 = vunpack.c.h.s8.bf16 %v1535
    %v1600 = vunpack.c.h.s8.bf16 %v1536
    %v1601 = vunpack.c.h.s8.bf16 %v1537
    %v1602 = vunpack.c.h.s8.bf16 %v1538
    %v1603 = vunpack.c.h.s8.bf16 %v1539
    %v1604 = vunpack.c.h.s8.bf16 %v1540
    %v1605 = vunpack.c.h.s8.bf16 %v1541
    %v1606 = vunpack.c.h.s8.bf16 %v1542
    %v1607 = vunpack.c.h.s8.bf16 %v1543
    %v1608 = vunpack.c.h.s8.bf16 %v1544
    %v1609 = vunpack.c.h.s8.bf16 %v1545
    %v1610 = vunpack.c.h.s8.bf16 %v1546
    %v1611 = vunpack.c.h.s8.bf16 %v1547
    %v1612 = vunpack.c.l.s8.bf16 %v1548
    %v1613 = vunpack.c.l.s8.bf16 %v1549
    %v1614 = vunpack.c.l.s8.bf16 %v1550
    %v1615 = vunpack.c.l.s8.bf16 %v1551
    %v1616 = vunpack.c.l.s8.bf16 %v1552
    %v1617 = vunpack.c.l.s8.bf16 %v1553
    %v1618 = vunpack.c.l.s8.bf16 %v1554
    %v1619 = vunpack.c.l.s8.bf16 %v1555
    %v1620 = vunpack.c.l.s8.bf16 %v1556
    %v1621 = vunpack.c.l.s8.bf16 %v1557
    %v1622 = vunpack.c.l.s8.bf16 %v1558
    %v1623 = vunpack.c.l.s8.bf16 %v1559
    %v1624 = vunpack.c.l.s8.bf16 %v1560
    %v1625 = vunpack.c.l.s8.bf16 %v1561
    %v1626 = vunpack.c.l.s8.bf16 %v1562
    %v1627 = vunpack.c.l.s8.bf16 %v1563
    %v1628 = vunpack.c.h.s8.bf16 %v1548
    %v1629 = vunpack.c.h.s8.bf16 %v1549
    %v1630 = vunpack.c.h.s8.bf16 %v1550
    %v1631 = vunpack.c.h.s8.bf16 %v1551
    %v1632 = vunpack.c.h.s8.bf16 %v1552
    %v1633 = vunpack.c.h.s8.bf16 %v1553
    %v1634 = vunpack.c.h.s8.bf16 %v1554
    %v1635 = vunpack.c.h.s8.bf16 %v1555
    %v1636 = vunpack.c.h.s8.bf16 %v1556
    %v1637 = vunpack.c.h.s8.bf16 %v1557
    %v1638 = vunpack.c.h.s8.bf16 %v1558
    %v1639 = vunpack.c.h.s8.bf16 %v1559
    %v1640 = vunpack.c.h.s8.bf16 %v1560
    %v1641 = vunpack.c.h.s8.bf16 %v1561
    %v1642 = vunpack.c.h.s8.bf16 %v1562
    %v1643 = vunpack.c.h.s8.bf16 %v1563
    %v1644 = vunpack.c.l.s8.bf16 %v1564
    %v1645 = vunpack.c.l.s8.bf16 %v1565
    %v1646 = vunpack.c.l.s8.bf16 %v1566
    %v1647 = vunpack.c.l.s8.bf16 %v1567
    %v1648 = vunpack.c.l.s8.bf16 %v1568
    %v1649 = vunpack.c.l.s8.bf16 %v1569
    %v1650 = vunpack.c.l.s8.bf16 %v1570
    %v1651 = vunpack.c.l.s8.bf16 %v1571
    %v1652 = vunpack.c.l.s8.bf16 %v1572
    %v1653 = vunpack.c.l.s8.bf16 %v1573
    %v1654 = vunpack.c.l.s8.bf16 %v1574
    %v1655 = vunpack.c.l.s8.bf16 %v1575
    %v1656 = vunpack.c.l.s8.bf16 %v1576
    %v1657 = vunpack.c.l.s8.bf16 %v1577
    %v1658 = vunpack.c.l.s8.bf16 %v1578
    %v1659 = vunpack.c.l.s8.bf16 %v1579
    %v1660 = vunpack.c.h.s8.bf16 %v1564
    %v1661 = vunpack.c.h.s8.bf16 %v1565
    %v1662 = vunpack.c.h.s8.bf16 %v1566
    %v1663 = vunpack.c.h.s8.bf16 %v1567
    %v1664 = vunpack.c.h.s8.bf16 %v1568
    %v1665 = vunpack.c.h.s8.bf16 %v1569
    %v1666 = vunpack.c.h.s8.bf16 %v1570
    %v1667 = vunpack.c.h.s8.bf16 %v1571
    %v1668 = vunpack.c.h.s8.bf16 %v1572
    %v1669 = vunpack.c.h.s8.bf16 %v1573
    %v1670 = vunpack.c.h.s8.bf16 %v1574
    %v1671 = vunpack.c.h.s8.bf16 %v1575
    %v1672 = vunpack.c.h.s8.bf16 %v1576
    %v1673 = vunpack.c.h.s8.bf16 %v1577
    %v1674 = vunpack.c.h.s8.bf16 %v1578
    %v1675 = vunpack.c.h.s8.bf16 %v1579
    %v1677 = vsel %vm861, %v1531, 0
    %1679 = vmatprep.subr.bf16.mxu0 %v1581
    %1680 = vmatpush1.bf16.msra.mxu0 %v1580
    %1681 = vmatprep.subr.bf16.mxu0 %v1597
    %1682 = vmatpush1.bf16.msra.mxu0 %v1596
    %1683 = vmatprep.subr.bf16.mxu0 %v1613
    %1684 = vmatpush1.bf16.msra.mxu0 %v1612
    %1685 = vmatprep.subr.bf16.mxu0 %v1629
    %1686 = vmatpush1.bf16.msra.mxu0 %v1628
    %1687 = vmatprep.subr.bf16.mxu0 %v1645
    %1688 = vmatpush1.bf16.msra.mxu0 %v1644
    %1689 = vmatprep.subr.bf16.mxu0 %v1661
    %1690 = vmatpush1.bf16.msra.mxu0 %v1660
    %1691 = vmatprep.subr.bf16.mxu0 0
    %1692 = vmatpush1.bf16.msra.mxu0 0
    %1693 = vmatprep.subr.bf16.mxu0 0
    %1694 = vmatpush1.bf16.msra.mxu0 0
    %1695 = vmatprep.subr.bf16.mxu0 0
    %1696 = vmatpush1.bf16.msra.mxu0 0
    %1697 = vmatprep.subr.bf16.mxu0 0
    %1698 = vmatpush1.bf16.msra.mxu0 0
    %1699 = vmatprep.subr.bf16.mxu0 0
    %1700 = vmatpush1.bf16.msra.mxu0 0
    %1701 = vmatprep.subr.bf16.mxu0 0
    %1702 = vmatpush1.bf16.msra.mxu0 0
    %1703 = vmatprep.subr.bf16.mxu0 0
    %1704 = vmatpush1.bf16.msra.mxu0 0
    %1705 = vmatprep.subr.bf16.mxu0 0
    %1706 = vmatpush1.bf16.msra.mxu0 0
    %1707 = vmatprep.subr.bf16.mxu0 0
    %1708 = vmatpush1.bf16.msra.mxu0 0
    %1709 = vmatprep.subr.bf16.mxu0 0
    %1710 = vmatpush1.bf16.msra.mxu0 0
    %1711 = vmatprep.mubr.bf16.mxu0 0
    %1712 = vmatmul.mubr.bf16.gmra.mrb[0].mxu0 %v1677
    %v1713 = vpop.f32.mrb[0].mxu0
    %v1714 = vadd.f32 0.0, %v1713
    %v1715 = vpop.f32.mrb[0].mxu0
    %v1716 = vadd.f32 0.0, %v1715
    %v1717 = vpop.f32.mrb[0].mxu0
    %v1718 = vpop.f32.mrb[0].mxu0
    %1719 = vdwg.mxu0
    %1720 = vmatprep.subr.bf16.mxu0 %v1583
    %1721 = vmatpush1.bf16.msra.mxu0 %v1582
    %1722 = vmatprep.subr.bf16.mxu0 %v1599
    %1723 = vmatpush1.bf16.msra.mxu0 %v1598
    %1724 = vmatprep.subr.bf16.mxu0 %v1615
    %1725 = vmatpush1.bf16.msra.mxu0 %v1614
    %1726 = vmatprep.subr.bf16.mxu0 %v1631
    %1727 = vmatpush1.bf16.msra.mxu0 %v1630
    %1728 = vmatprep.subr.bf16.mxu0 %v1647
    %1729 = vmatpush1.bf16.msra.mxu0 %v1646
    %1730 = vmatprep.subr.bf16.mxu0 %v1663
    %1731 = vmatpush1.bf16.msra.mxu0 %v1662
    %1732 = vmatprep.subr.bf16.mxu0 0
    %1733 = vmatpush1.bf16.msra.mxu0 0
    %1734 = vmatprep.subr.bf16.mxu0 0
    %1735 = vmatpush1.bf16.msra.mxu0 0
    %1736 = vmatprep.subr.bf16.mxu0 0
    %1737 = vmatpush1.bf16.msra.mxu0 0
    %1738 = vmatprep.subr.bf16.mxu0 0
    %1739 = vmatpush1.bf16.msra.mxu0 0
    %1740 = vmatprep.subr.bf16.mxu0 0
    %1741 = vmatpush1.bf16.msra.mxu0 0
    %1742 = vmatprep.subr.bf16.mxu0 0
    %1743 = vmatpush1.bf16.msra.mxu0 0
    %1744 = vmatprep.subr.bf16.mxu0 0
    %1745 = vmatpush1.bf16.msra.mxu0 0
    %1746 = vmatprep.subr.bf16.mxu0 0
    %1747 = vmatpush1.bf16.msra.mxu0 0
    %1748 = vmatprep.subr.bf16.mxu0 0
    %1749 = vmatpush1.bf16.msra.mxu0 0
    %1750 = vmatprep.subr.bf16.mxu0 0
    %1751 = vmatpush1.bf16.msra.mxu0 0
    %1752 = vmatprep.mubr.bf16.mxu0 0
    %1753 = vmatmul.mubr.bf16.gmra.mrb[0].mxu0 %v1677
    %v1754 = vpop.f32.mrb[0].mxu0
    %v1755 = vadd.f32 0.0, %v1754
    %v1756 = vpop.f32.mrb[0].mxu0
    %v1757 = vadd.f32 0.0, %v1756
    %v1758 = vpop.f32.mrb[0].mxu0
    %v1759 = vpop.f32.mrb[0].mxu0
    %1760 = vdwg.mxu0
    %1761 = vmatprep.subr.bf16.mxu0 %v1585
    %1762 = vmatpush1.bf16.msra.mxu0 %v1584
    %1763 = vmatprep.subr.bf16.mxu0 %v1601
    %1764 = vmatpush1.bf16.msra.mxu0 %v1600
    %1765 = vmatprep.subr.bf16.mxu0 %v1617
    %1766 = vmatpush1.bf16.msra.mxu0 %v1616
    %1767 = vmatprep.subr.bf16.mxu0 %v1633
    %1768 = vmatpush1.bf16.msra.mxu0 %v1632
    %1769 = vmatprep.subr.bf16.mxu0 %v1649
    %1770 = vmatpush1.bf16.msra.mxu0 %v1648
    %1771 = vmatprep.subr.bf16.mxu0 %v1665
    %1772 = vmatpush1.bf16.msra.mxu0 %v1664
    %1773 = vmatprep.subr.bf16.mxu0 0
    %1774 = vmatpush1.bf16.msra.mxu0 0
    %1775 = vmatprep.subr.bf16.mxu0 0
    %1776 = vmatpush1.bf16.msra.mxu0 0
    %1777 = vmatprep.subr.bf16.mxu0 0
    %1778 = vmatpush1.bf16.msra.mxu0 0
    %1779 = vmatprep.subr.bf16.mxu0 0
    %1780 = vmatpush1.bf16.msra.mxu0 0
    %1781 = vmatprep.subr.bf16.mxu0 0
    %1782 = vmatpush1.bf16.msra.mxu0 0
    %1783 = vmatprep.subr.bf16.mxu0 0
    %1784 = vmatpush1.bf16.msra.mxu0 0
    %1785 = vmatprep.subr.bf16.mxu0 0
    %1786 = vmatpush1.bf16.msra.mxu0 0
    %1787 = vmatprep.subr.bf16.mxu0 0
    %1788 = vmatpush1.bf16.msra.mxu0 0
    %1789 = vmatprep.subr.bf16.mxu0 0
    %1790 = vmatpush1.bf16.msra.mxu0 0
    %1791 = vmatprep.subr.bf16.mxu0 0
    %1792 = vmatpush1.bf16.msra.mxu0 0
    %1793 = vmatprep.mubr.bf16.mxu0 0
    %1794 = vmatmul.mubr.bf16.gmra.mrb[0].mxu0 %v1677
    %v1795 = vpop.f32.mrb[0].mxu0
    %v1796 = vadd.f32 0.0, %v1795
    %v1797 = vpop.f32.mrb[0].mxu0
    %v1798 = vadd.f32 0.0, %v1797
    %v1799 = vpop.f32.mrb[0].mxu0
    %v1800 = vpop.f32.mrb[0].mxu0
    %1801 = vdwg.mxu0
    %1802 = vmatprep.subr.bf16.mxu0 %v1587
    %1803 = vmatpush1.bf16.msra.mxu0 %v1586
    %1804 = vmatprep.subr.bf16.mxu0 %v1603
    %1805 = vmatpush1.bf16.msra.mxu0 %v1602
    %1806 = vmatprep.subr.bf16.mxu0 %v1619
    %1807 = vmatpush1.bf16.msra.mxu0 %v1618
    %1808 = vmatprep.subr.bf16.mxu0 %v1635
    %1809 = vmatpush1.bf16.msra.mxu0 %v1634
    %1810 = vmatprep.subr.bf16.mxu0 %v1651
    %1811 = vmatpush1.bf16.msra.mxu0 %v1650
    %1812 = vmatprep.subr.bf16.mxu0 %v1667
    %1813 = vmatpush1.bf16.msra.mxu0 %v1666
    %1814 = vmatprep.subr.bf16.mxu0 0
    %1815 = vmatpush1.bf16.msra.mxu0 0
    %1816 = vmatprep.subr.bf16.mxu0 0
    %1817 = vmatpush1.bf16.msra.mxu0 0
    %1818 = vmatprep.subr.bf16.mxu0 0
    %1819 = vmatpush1.bf16.msra.mxu0 0
    %1820 = vmatprep.subr.bf16.mxu0 0
    %1821 = vmatpush1.bf16.msra.mxu0 0
    %1822 = vmatprep.subr.bf16.mxu0 0
    %1823 = vmatpush1.bf16.msra.mxu0 0
    %1824 = vmatprep.subr.bf16.mxu0 0
    %1825 = vmatpush1.bf16.msra.mxu0 0
    %1826 = vmatprep.subr.bf16.mxu0 0
    %1827 = vmatpush1.bf16.msra.mxu0 0
    %1828 = vmatprep.subr.bf16.mxu0 0
    %1829 = vmatpush1.bf16.msra.mxu0 0
    %1830 = vmatprep.subr.bf16.mxu0 0
    %1831 = vmatpush1.bf16.msra.mxu0 0
    %1832 = vmatprep.subr.bf16.mxu0 0
    %1833 = vmatpush1.bf16.msra.mxu0 0
    %1834 = vmatprep.mubr.bf16.mxu0 0
    %1835 = vmatmul.mubr.bf16.gmra.mrb[0].mxu0 %v1677
    %v1836 = vpop.f32.mrb[0].mxu0
    %v1837 = vadd.f32 0.0, %v1836
    %v1838 = vpop.f32.mrb[0].mxu0
    %v1839 = vadd.f32 0.0, %v1838
    %v1840 = vpop.f32.mrb[0].mxu0
    %v1841 = vpop.f32.mrb[0].mxu0
    %1842 = vdwg.mxu0
    %1843 = vmatprep.subr.bf16.mxu0 %v1589
    %1844 = vmatpush1.bf16.msra.mxu0 %v1588
    %1845 = vmatprep.subr.bf16.mxu0 %v1605
    %1846 = vmatpush1.bf16.msra.mxu0 %v1604
    %1847 = vmatprep.subr.bf16.mxu0 %v1621
    %1848 = vmatpush1.bf16.msra.mxu0 %v1620
    %1849 = vmatprep.subr.bf16.mxu0 %v1637
    %1850 = vmatpush1.bf16.msra.mxu0 %v1636
    %1851 = vmatprep.subr.bf16.mxu0 %v1653
    %1852 = vmatpush1.bf16.msra.mxu0 %v1652
    %1853 = vmatprep.subr.bf16.mxu0 %v1669
    %1854 = vmatpush1.bf16.msra.mxu0 %v1668
    %1855 = vmatprep.subr.bf16.mxu0 0
    %1856 = vmatpush1.bf16.msra.mxu0 0
    %1857 = vmatprep.subr.bf16.mxu0 0
    %1858 = vmatpush1.bf16.msra.mxu0 0
    %1859 = vmatprep.subr.bf16.mxu0 0
    %1860 = vmatpush1.bf16.msra.mxu0 0
    %1861 = vmatprep.subr.bf16.mxu0 0
    %1862 = vmatpush1.bf16.msra.mxu0 0
    %1863 = vmatprep.subr.bf16.mxu0 0
    %1864 = vmatpush1.bf16.msra.mxu0 0
    %1865 = vmatprep.subr.bf16.mxu0 0
    %1866 = vmatpush1.bf16.msra.mxu0 0
    %1867 = vmatprep.subr.bf16.mxu0 0
    %1868 = vmatpush1.bf16.msra.mxu0 0
    %1869 = vmatprep.subr.bf16.mxu0 0
    %1870 = vmatpush1.bf16.msra.mxu0 0
    %1871 = vmatprep.subr.bf16.mxu0 0
    %1872 = vmatpush1.bf16.msra.mxu0 0
    %1873 = vmatprep.subr.bf16.mxu0 0
    %1874 = vmatpush1.bf16.msra.mxu0 0
    %1875 = vmatprep.mubr.bf16.mxu0 0
    %1876 = vmatmul.mubr.bf16.gmra.mrb[0].mxu0 %v1677
    %v1877 = vpop.f32.mrb[0].mxu0
    %v1878 = vadd.f32 0.0, %v1877
    %v1879 = vpop.f32.mrb[0].mxu0
    %v1880 = vadd.f32 0.0, %v1879
    %v1881 = vpop.f32.mrb[0].mxu0
    %v1882 = vpop.f32.mrb[0].mxu0
    %1883 = vdwg.mxu0
    %1884 = vmatprep.subr.bf16.mxu0 %v1591
    %1885 = vmatpush1.bf16.msra.mxu0 %v1590
    %1886 = vmatprep.subr.bf16.mxu0 %v1607
    %1887 = vmatpush1.bf16.msra.mxu0 %v1606
    %1888 = vmatprep.subr.bf16.mxu0 %v1623
    %1889 = vmatpush1.bf16.msra.mxu0 %v1622
    %1890 = vmatprep.subr.bf16.mxu0 %v1639
    %1891 = vmatpush1.bf16.msra.mxu0 %v1638
    %1892 = vmatprep.subr.bf16.mxu0 %v1655
    %1893 = vmatpush1.bf16.msra.mxu0 %v1654
    %1894 = vmatprep.subr.bf16.mxu0 %v1671
    %1895 = vmatpush1.bf16.msra.mxu0 %v1670
    %1896 = vmatprep.subr.bf16.mxu0 0
    %1897 = vmatpush1.bf16.msra.mxu0 0
    %1898 = vmatprep.subr.bf16.mxu0 0
    %1899 = vmatpush1.bf16.msra.mxu0 0
    %1900 = vmatprep.subr.bf16.mxu0 0
    %1901 = vmatpush1.bf16.msra.mxu0 0
    %1902 = vmatprep.subr.bf16.mxu0 0
    %1903 = vmatpush1.bf16.msra.mxu0 0
    %1904 = vmatprep.subr.bf16.mxu0 0
    %1905 = vmatpush1.bf16.msra.mxu0 0
    %1906 = vmatprep.subr.bf16.mxu0 0
    %1907 = vmatpush1.bf16.msra.mxu0 0
    %1908 = vmatprep.subr.bf16.mxu0 0
    %1909 = vmatpush1.bf16.msra.mxu0 0
    %1910 = vmatprep.subr.bf16.mxu0 0
    %1911 = vmatpush1.bf16.msra.mxu0 0
    %1912 = vmatprep.subr.bf16.mxu0 0
    %1913 = vmatpush1.bf16.msra.mxu0 0
    %1914 = vmatprep.subr.bf16.mxu0 0
    %1915 = vmatpush1.bf16.msra.mxu0 0
    %1916 = vmatprep.mubr.bf16.mxu0 0
    %1917 = vmatmul.mubr.bf16.gmra.mrb[0].mxu0 %v1677
    %v1918 = vpop.f32.mrb[0].mxu0
    %v1919 = vadd.f32 0.0, %v1918
    %v1920 = vpop.f32.mrb[0].mxu0
    %v1921 = vadd.f32 0.0, %v1920
    %v1922 = vpop.f32.mrb[0].mxu0
    %v1923 = vpop.f32.mrb[0].mxu0
    %1924 = vdwg.mxu0
    %1925 = vmatprep.subr.bf16.mxu0 %v1593
    %1926 = vmatpush1.bf16.msra.mxu0 %v1592
    %1927 = vmatprep.subr.bf16.mxu0 %v1609
    %1928 = vmatpush1.bf16.msra.mxu0 %v1608
    %1929 = vmatprep.subr.bf16.mxu0 %v1625
    %1930 = vmatpush1.bf16.msra.mxu0 %v1624
    %1931 = vmatprep.subr.bf16.mxu0 %v1641
    %1932 = vmatpush1.bf16.msra.mxu0 %v1640
    %1933 = vmatprep.subr.bf16.mxu0 %v1657
    %1934 = vmatpush1.bf16.msra.mxu0 %v1656
    %1935 = vmatprep.subr.bf16.mxu0 %v1673
    %1936 = vmatpush1.bf16.msra.mxu0 %v1672
    %1937 = vmatprep.subr.bf16.mxu0 0
    %1938 = vmatpush1.bf16.msra.mxu0 0
    %1939 = vmatprep.subr.bf16.mxu0 0
    %1940 = vmatpush1.bf16.msra.mxu0 0
    %1941 = vmatprep.subr.bf16.mxu0 0
    %1942 = vmatpush1.bf16.msra.mxu0 0
    %1943 = vmatprep.subr.bf16.mxu0 0
    %1944 = vmatpush1.bf16.msra.mxu0 0
    %1945 = vmatprep.subr.bf16.mxu0 0
    %1946 = vmatpush1.bf16.msra.mxu0 0
    %1947 = vmatprep.subr.bf16.mxu0 0
    %1948 = vmatpush1.bf16.msra.mxu0 0
    %1949 = vmatprep.subr.bf16.mxu0 0
    %1950 = vmatpush1.bf16.msra.mxu0 0
    %1951 = vmatprep.subr.bf16.mxu0 0
    %1952 = vmatpush1.bf16.msra.mxu0 0
    %1953 = vmatprep.subr.bf16.mxu0 0
    %1954 = vmatpush1.bf16.msra.mxu0 0
    %1955 = vmatprep.subr.bf16.mxu0 0
    %1956 = vmatpush1.bf16.msra.mxu0 0
    %1957 = vmatprep.mubr.bf16.mxu0 0
    %1958 = vmatmul.mubr.bf16.gmra.mrb[0].mxu0 %v1677
    %v1959 = vpop.f32.mrb[0].mxu0
    %v1960 = vadd.f32 0.0, %v1959
    %v1961 = vpop.f32.mrb[0].mxu0
    %v1962 = vadd.f32 0.0, %v1961
    %v1963 = vpop.f32.mrb[0].mxu0
    %v1964 = vpop.f32.mrb[0].mxu0
    %1965 = vdwg.mxu0
    %1966 = vmatprep.subr.bf16.mxu0 %v1595
    %1967 = vmatpush1.bf16.msra.mxu0 %v1594
    %1968 = vmatprep.subr.bf16.mxu0 %v1611
    %1969 = vmatpush1.bf16.msra.mxu0 %v1610
    %1970 = vmatprep.subr.bf16.mxu0 %v1627
    %1971 = vmatpush1.bf16.msra.mxu0 %v1626
    %1972 = vmatprep.subr.bf16.mxu0 %v1643
    %1973 = vmatpush1.bf16.msra.mxu0 %v1642
    %1974 = vmatprep.subr.bf16.mxu0 %v1659
    %1975 = vmatpush1.bf16.msra.mxu0 %v1658
    %1976 = vmatprep.subr.bf16.mxu0 %v1675
    %1977 = vmatpush1.bf16.msra.mxu0 %v1674
    %1978 = vmatprep.subr.bf16.mxu0 0
    %1979 = vmatpush1.bf16.msra.mxu0 0
    %1980 = vmatprep.subr.bf16.mxu0 0
    %1981 = vmatpush1.bf16.msra.mxu0 0
    %1982 = vmatprep.subr.bf16.mxu0 0
    %1983 = vmatpush1.bf16.msra.mxu0 0
    %1984 = vmatprep.subr.bf16.mxu0 0
    %1985 = vmatpush1.bf16.msra.mxu0 0
    %1986 = vmatprep.subr.bf16.mxu0 0
    %1987 = vmatpush1.bf16.msra.mxu0 0
    %1988 = vmatprep.subr.bf16.mxu0 0
    %1989 = vmatpush1.bf16.msra.mxu0 0
    %1990 = vmatprep.subr.bf16.mxu0 0
    %1991 = vmatpush1.bf16.msra.mxu0 0
    %1992 = vmatprep.subr.bf16.mxu0 0
    %1993 = vmatpush1.bf16.msra.mxu0 0
    %1994 = vmatprep.subr.bf16.mxu0 0
    %1995 = vmatpush1.bf16.msra.mxu0 0
    %1996 = vmatprep.subr.bf16.mxu0 0
    %1997 = vmatpush1.bf16.msra.mxu0 0
    %1998 = vmatprep.mubr.bf16.mxu0 0
    %1999 = vmatmul.mubr.bf16.gmra.mrb[0].mxu0 %v1677
    %v2000 = vpop.f32.mrb[0].mxu0
    %v2001 = vadd.f32 0.0, %v2000
    %v2002 = vpop.f32.mrb[0].mxu0
    %v2003 = vadd.f32 0.0, %v2002
    %v2004 = vpop.f32.mrb[0].mxu0
    %v2005 = vpop.f32.mrb[0].mxu0
    %2006 = vdwg.mxu0
    %v2007 = vlaneseq
    %v2008 = vshrl.u32 %v2007, 7
    %v2009 = vsub.s32 5, %v2008
    %v2010 = vrot.slane %v1499, %v2009
    %v2011 = vlaneseq
    %v2012 = vshrl.u32 %v2011, 7
    %v2013 = vsub.s32 5, %v2012
    %v2014 = vrot.slane %v1500, %v2013
    %v2015 = vlaneseq
    %v2016 = vshrl.u32 %v2015, 7
    %v2017 = vsub.s32 5, %v2016
    %v2018 = vrot.slane %v1501, %v2017
    %v2019 = vlaneseq
    %v2020 = vshrl.u32 %v2019, 7
    %v2021 = vsub.s32 5, %v2020
    %v2022 = vrot.slane %v1502, %v2021
    %v2023 = vlaneseq
    %v2024 = vshrl.u32 %v2023, 7
    %v2025 = vsub.s32 5, %v2024
    %v2026 = vrot.slane %v1503, %v2025
    %v2027 = vlaneseq
    %v2028 = vshrl.u32 %v2027, 7
    %v2029 = vsub.s32 5, %v2028
    %v2030 = vrot.slane %v1504, %v2029
    %v2031 = vlaneseq
    %v2032 = vshrl.u32 %v2031, 7
    %v2033 = vsub.s32 5, %v2032
    %v2034 = vrot.slane %v1505, %v2033
    %v2035 = vlaneseq
    %v2036 = vshrl.u32 %v2035, 7
    %v2037 = vsub.s32 5, %v2036
    %v2038 = vrot.slane %v1506, %v2037
    %v2039 = vlaneseq
    %v2040 = vshrl.u32 %v2039, 7
    %v2041 = vsub.s32 5, %v2040
    %v2042 = vrot.slane %v1507, %v2041
    %v2043 = vlaneseq
    %v2044 = vshrl.u32 %v2043, 7
    %v2045 = vsub.s32 5, %v2044
    %v2046 = vrot.slane %v1508, %v2045
    %v2047 = vlaneseq
    %v2048 = vshrl.u32 %v2047, 7
    %v2049 = vsub.s32 5, %v2048
    %v2050 = vrot.slane %v1509, %v2049
    %v2051 = vlaneseq
    %v2052 = vshrl.u32 %v2051, 7
    %v2053 = vsub.s32 5, %v2052
    %v2054 = vrot.slane %v1510, %v2053
    %v2055 = vlaneseq
    %v2056 = vshrl.u32 %v2055, 7
    %v2057 = vsub.s32 5, %v2056
    %v2058 = vrot.slane %v1511, %v2057
    %v2059 = vlaneseq
    %v2060 = vshrl.u32 %v2059, 7
    %v2061 = vsub.s32 5, %v2060
    %v2062 = vrot.slane %v1512, %v2061
    %v2063 = vlaneseq
    %v2064 = vshrl.u32 %v2063, 7
    %v2065 = vsub.s32 5, %v2064
    %v2066 = vrot.slane %v1513, %v2065
    %v2067 = vlaneseq
    %v2068 = vshrl.u32 %v2067, 7
    %v2069 = vsub.s32 5, %v2068
    %v2070 = vrot.slane %v1514, %v2069
    %v2071 = vmul.f32 %v1714, %v2010
    %v2072 = vmul.f32 %v1716, %v2014
    %v2073 = vmul.f32 %v1755, %v2018
    %v2074 = vmul.f32 %v1757, %v2022
    %v2075 = vmul.f32 %v1796, %v2026
    %v2076 = vmul.f32 %v1798, %v2030
    %v2077 = vmul.f32 %v1837, %v2034
    %v2078 = vmul.f32 %v1839, %v2038
    %v2079 = vmul.f32 %v1878, %v2042
    %v2080 = vmul.f32 %v1880, %v2046
    %v2081 = vmul.f32 %v1919, %v2050
    %v2082 = vmul.f32 %v1921, %v2054
    %v2083 = vmul.f32 %v1960, %v2058
    %v2084 = vmul.f32 %v1962, %v2062
    %v2085 = vmul.f32 %v2001, %v2066
    %v2086 = vmul.f32 %v2003, %v2070
    %v2087 = vlaneseq
    %v2088 = vshrl.u32 %v2087, 7
    %v2089 = vsub.s32 0, %v2088
    %v2090 = vrot.slane %v1499, %v2089
    %v2091 = vlaneseq
    %v2092 = vshrl.u32 %v2091, 7
    %v2093 = vsub.s32 0, %v2092
    %v2094 = vrot.slane %v1500, %v2093
    %v2095 = vlaneseq
    %v2096 = vshrl.u32 %v2095, 7
    %v2097 = vsub.s32 0, %v2096
    %v2098 = vrot.slane %v1501, %v2097
    %v2099 = vlaneseq
    %v2100 = vshrl.u32 %v2099, 7
    %v2101 = vsub.s32 0, %v2100
    %v2102 = vrot.slane %v1502, %v2101
    %v2103 = vlaneseq
    %v2104 = vshrl.u32 %v2103, 7
    %v2105 = vsub.s32 0, %v2104
    %v2106 = vrot.slane %v1503, %v2105
    %v2107 = vlaneseq
    %v2108 = vshrl.u32 %v2107, 7
    %v2109 = vsub.s32 0, %v2108
    %v2110 = vrot.slane %v1504, %v2109
    %v2111 = vlaneseq
    %v2112 = vshrl.u32 %v2111, 7
    %v2113 = vsub.s32 0, %v2112
    %v2114 = vrot.slane %v1505, %v2113
    %v2115 = vlaneseq
    %v2116 = vshrl.u32 %v2115, 7
    %v2117 = vsub.s32 0, %v2116
    %v2118 = vrot.slane %v1506, %v2117
    %v2119 = vlaneseq
    %v2120 = vshrl.u32 %v2119, 7
    %v2121 = vsub.s32 0, %v2120
    %v2122 = vrot.slane %v1507, %v2121
    %v2123 = vlaneseq
    %v2124 = vshrl.u32 %v2123, 7
    %v2125 = vsub.s32 0, %v2124
    %v2126 = vrot.slane %v1508, %v2125
    %v2127 = vlaneseq
    %v2128 = vshrl.u32 %v2127, 7
    %v2129 = vsub.s32 0, %v2128
    %v2130 = vrot.slane %v1509, %v2129
    %v2131 = vlaneseq
    %v2132 = vshrl.u32 %v2131, 7
    %v2133 = vsub.s32 0, %v2132
    %v2134 = vrot.slane %v1510, %v2133
    %v2135 = vlaneseq
    %v2136 = vshrl.u32 %v2135, 7
    %v2137 = vsub.s32 0, %v2136
    %v2138 = vrot.slane %v1511, %v2137
    %v2139 = vlaneseq
    %v2140 = vshrl.u32 %v2139, 7
    %v2141 = vsub.s32 0, %v2140
    %v2142 = vrot.slane %v1512, %v2141
    %v2143 = vlaneseq
    %v2144 = vshrl.u32 %v2143, 7
    %v2145 = vsub.s32 0, %v2144
    %v2146 = vrot.slane %v1513, %v2145
    %v2147 = vlaneseq
    %v2148 = vshrl.u32 %v2147, 7
    %v2149 = vsub.s32 0, %v2148
    %v2150 = vrot.slane %v1514, %v2149
    %v2151 = vadd.f32 %v2071, %v2090
    %v2152 = vadd.f32 %v2072, %v2094
    %v2153 = vadd.f32 %v2073, %v2098
    %v2154 = vadd.f32 %v2074, %v2102
    %v2155 = vadd.f32 %v2075, %v2106
    %v2156 = vadd.f32 %v2076, %v2110
    %v2157 = vadd.f32 %v2077, %v2114
    %v2158 = vadd.f32 %v2078, %v2118
    %v2159 = vadd.f32 %v2079, %v2122
    %v2160 = vadd.f32 %v2080, %v2126
    %v2161 = vadd.f32 %v2081, %v2130
    %v2162 = vadd.f32 %v2082, %v2134
    %v2163 = vadd.f32 %v2083, %v2138
    %v2164 = vadd.f32 %v2084, %v2142
    %v2165 = vadd.f32 %v2085, %v2146
    %v2166 = vadd.f32 %v2086, %v2150
    %v2167 = vmax.f32 %v2151, 0.0
    %v2168 = vmax.f32 %v2152, 0.0
    %v2169 = vmax.f32 %v2153, 0.0
    %v2170 = vmax.f32 %v2154, 0.0
    %v2171 = vmax.f32 %v2155, 0.0
    %v2172 = vmax.f32 %v2156, 0.0
    %v2173 = vmax.f32 %v2157, 0.0
    %v2174 = vmax.f32 %v2158, 0.0
    %v2175 = vmax.f32 %v2159, 0.0
    %v2176 = vmax.f32 %v2160, 0.0
    %v2177 = vmax.f32 %v2161, 0.0
    %v2178 = vmax.f32 %v2162, 0.0
    %v2179 = vmax.f32 %v2163, 0.0
    %v2180 = vmax.f32 %v2164, 0.0
    %v2181 = vmax.f32 %v2165, 0.0
    %v2182 = vmax.f32 %v2166, 0.0
    %v2183 = vpack.c.bf16 %v2167, %v2167
    %v2184 = vpack.c.bf16 %v2168, %v2168
    %v2185 = vpack.c.bf16 %v2169, %v2169
    %v2186 = vpack.c.bf16 %v2170, %v2170
    %v2187 = vpack.c.bf16 %v2171, %v2171
    %v2188 = vpack.c.bf16 %v2172, %v2172
    %v2189 = vpack.c.bf16 %v2173, %v2173
    %v2190 = vpack.c.bf16 %v2174, %v2174
    %v2191 = vpack.c.bf16 %v2175, %v2175
    %v2192 = vpack.c.bf16 %v2176, %v2176
    %v2193 = vpack.c.bf16 %v2177, %v2177
    %v2194 = vpack.c.bf16 %v2178, %v2178
    %v2195 = vpack.c.bf16 %v2179, %v2179
    %v2196 = vpack.c.bf16 %v2180, %v2180
    %v2197 = vpack.c.bf16 %v2181, %v2181
    %v2198 = vpack.c.bf16 %v2182, %v2182
    %s2199 = smul.u32 2, 256
    %s2200 = smul.u32 %s2199, 4
    %s2201 = sshll.u32 %s2200, 4
    %2202 = dma.done %s149, %s2201
    %v2203 = vld [vmem:[#allocation3] sm:$0xff]
    %v2204 = vld [vmem:[#allocation3 + $0x8] sm:$0xff]
    %v2205 = vld [vmem:[#allocation3 + $0x10] sm:$0xff]
    %v2206 = vld [vmem:[#allocation3 + $0x18] sm:$0xff]
    %v2207 = vld [vmem:[#allocation3 + $0x20] sm:$0xff]
    %v2208 = vld [vmem:[#allocation3 + $0x28] sm:$0xff]
    %v2209 = vld [vmem:[#allocation3 + $0x30] sm:$0xff]
    %v2210 = vld [vmem:[#allocation3 + $0x38] sm:$0xff]
    %v2211 = vld [vmem:[#allocation3 + $0x40] sm:$0xff]
    %v2212 = vld [vmem:[#allocation3 + $0x48] sm:$0xff]
    %v2213 = vld [vmem:[#allocation3 + $0x50] sm:$0xff]
    %v2214 = vld [vmem:[#allocation3 + $0x58] sm:$0xff]
    %v2215 = vld [vmem:[#allocation3 + $0x60] sm:$0xff]
    %v2216 = vld [vmem:[#allocation3 + $0x68] sm:$0xff]
    %v2217 = vld [vmem:[#allocation3 + $0x70] sm:$0xff]
    %v2218 = vld [vmem:[#allocation3 + $0x78] sm:$0xff]
    %v2219 = vld [vmem:[#allocation3 + $0x80] sm:$0xff]
    %v2220 = vld [vmem:[#allocation3 + $0x88] sm:$0xff]
    %v2221 = vld [vmem:[#allocation3 + $0x90] sm:$0xff]
    %v2222 = vld [vmem:[#allocation3 + $0x98] sm:$0xff]
    %v2223 = vld [vmem:[#allocation3 + $0xa0] sm:$0xff]
    %v2224 = vld [vmem:[#allocation3 + $0xa8] sm:$0xff]
    %v2225 = vld [vmem:[#allocation3 + $0xb0] sm:$0xff]
    %v2226 = vld [vmem:[#allocation3 + $0xb8] sm:$0xff]
    %v2227 = vld [vmem:[#allocation3 + $0xc0] sm:$0xff]
    %v2228 = vld [vmem:[#allocation3 + $0xc8] sm:$0xff]
    %v2229 = vld [vmem:[#allocation3 + $0xd0] sm:$0xff]
    %v2230 = vld [vmem:[#allocation3 + $0xd8] sm:$0xff]
    %v2231 = vld [vmem:[#allocation3 + $0xe0] sm:$0xff]
    %v2232 = vld [vmem:[#allocation3 + $0xe8] sm:$0xff]
    %v2233 = vld [vmem:[#allocation3 + $0xf0] sm:$0xff]
    %v2234 = vld [vmem:[#allocation3 + $0xf8] sm:$0xff]
    %v2235 = vld [vmem:[#allocation3 + $0x100] sm:$0xff]
    %v2236 = vld [vmem:[#allocation3 + $0x108] sm:$0xff]
    %v2237 = vld [vmem:[#allocation3 + $0x110] sm:$0xff]
    %v2238 = vld [vmem:[#allocation3 + $0x118] sm:$0xff]
    %v2239 = vld [vmem:[#allocation3 + $0x120] sm:$0xff]
    %v2240 = vld [vmem:[#allocation3 + $0x128] sm:$0xff]
    %v2241 = vld [vmem:[#allocation3 + $0x130] sm:$0xff]
    %v2242 = vld [vmem:[#allocation3 + $0x138] sm:$0xff]
    %v2243 = vld [vmem:[#allocation3 + $0x140] sm:$0xff]
    %v2244 = vld [vmem:[#allocation3 + $0x148] sm:$0xff]
    %v2245 = vld [vmem:[#allocation3 + $0x150] sm:$0xff]
    %v2246 = vld [vmem:[#allocation3 + $0x158] sm:$0xff]
    %v2247 = vld [vmem:[#allocation3 + $0x160] sm:$0xff]
    %v2248 = vld [vmem:[#allocation3 + $0x168] sm:$0xff]
    %v2249 = vld [vmem:[#allocation3 + $0x170] sm:$0xff]
    %v2250 = vld [vmem:[#allocation3 + $0x178] sm:$0xff]
    %v2251 = vld [vmem:[#allocation3 + $0x180] sm:$0xff]
    %v2252 = vld [vmem:[#allocation3 + $0x188] sm:$0xff]
    %v2253 = vld [vmem:[#allocation3 + $0x190] sm:$0xff]
    %v2254 = vld [vmem:[#allocation3 + $0x198] sm:$0xff]
    %v2255 = vld [vmem:[#allocation3 + $0x1a0] sm:$0xff]
    %v2256 = vld [vmem:[#allocation3 + $0x1a8] sm:$0xff]
    %v2257 = vld [vmem:[#allocation3 + $0x1b0] sm:$0xff]
    %v2258 = vld [vmem:[#allocation3 + $0x1b8] sm:$0xff]
    %v2259 = vld [vmem:[#allocation3 + $0x1c0] sm:$0xff]
    %v2260 = vld [vmem:[#allocation3 + $0x1c8] sm:$0xff]
    %v2261 = vld [vmem:[#allocation3 + $0x1d0] sm:$0xff]
    %v2262 = vld [vmem:[#allocation3 + $0x1d8] sm:$0xff]
    %v2263 = vld [vmem:[#allocation3 + $0x1e0] sm:$0xff]
    %v2264 = vld [vmem:[#allocation3 + $0x1e8] sm:$0xff]
    %v2265 = vld [vmem:[#allocation3 + $0x1f0] sm:$0xff]
    %v2266 = vld [vmem:[#allocation3 + $0x1f8] sm:$0xff]
    %v2267 = vld [vmem:[#allocation3 + $0x200] sm:$0xff]
    %v2268 = vld [vmem:[#allocation3 + $0x208] sm:$0xff]
    %v2269 = vld [vmem:[#allocation3 + $0x210] sm:$0xff]
    %v2270 = vld [vmem:[#allocation3 + $0x218] sm:$0xff]
    %v2271 = vld [vmem:[#allocation3 + $0x220] sm:$0xff]
    %v2272 = vld [vmem:[#allocation3 + $0x228] sm:$0xff]
    %v2273 = vld [vmem:[#allocation3 + $0x230] sm:$0xff]
    %v2274 = vld [vmem:[#allocation3 + $0x238] sm:$0xff]
    %v2275 = vld [vmem:[#allocation3 + $0x240] sm:$0xff]
    %v2276 = vld [vmem:[#allocation3 + $0x248] sm:$0xff]
    %v2277 = vld [vmem:[#allocation3 + $0x250] sm:$0xff]
    %v2278 = vld [vmem:[#allocation3 + $0x258] sm:$0xff]
    %v2279 = vld [vmem:[#allocation3 + $0x260] sm:$0xff]
    %v2280 = vld [vmem:[#allocation3 + $0x268] sm:$0xff]
    %v2281 = vld [vmem:[#allocation3 + $0x270] sm:$0xff]
    %v2282 = vld [vmem:[#allocation3 + $0x278] sm:$0xff]
    %v2283 = vld [vmem:[#allocation3 + $0x280] sm:$0xff]
    %v2284 = vld [vmem:[#allocation3 + $0x288] sm:$0xff]
    %v2285 = vld [vmem:[#allocation3 + $0x290] sm:$0xff]
    %v2286 = vld [vmem:[#allocation3 + $0x298] sm:$0xff]
    %v2287 = vld [vmem:[#allocation3 + $0x2a0] sm:$0xff]
    %v2288 = vld [vmem:[#allocation3 + $0x2a8] sm:$0xff]
    %v2289 = vld [vmem:[#allocation3 + $0x2b0] sm:$0xff]
    %v2290 = vld [vmem:[#allocation3 + $0x2b8] sm:$0xff]
    %v2291 = vld [vmem:[#allocation3 + $0x2c0] sm:$0xff]
    %v2292 = vld [vmem:[#allocation3 + $0x2c8] sm:$0xff]
    %v2293 = vld [vmem:[#allocation3 + $0x2d0] sm:$0xff]
    %v2294 = vld [vmem:[#allocation3 + $0x2d8] sm:$0xff]
    %v2295 = vld [vmem:[#allocation3 + $0x2e0] sm:$0xff]
    %v2296 = vld [vmem:[#allocation3 + $0x2e8] sm:$0xff]
    %v2297 = vld [vmem:[#allocation3 + $0x2f0] sm:$0xff]
    %v2298 = vld [vmem:[#allocation3 + $0x2f8] sm:$0xff]
    %v2299 = vld [vmem:[#allocation3 + $0x300] sm:$0xff]
    %v2300 = vld [vmem:[#allocation3 + $0x308] sm:$0xff]
    %v2301 = vld [vmem:[#allocation3 + $0x310] sm:$0xff]
    %v2302 = vld [vmem:[#allocation3 + $0x318] sm:$0xff]
    %v2303 = vld [vmem:[#allocation3 + $0x320] sm:$0xff]
    %v2304 = vld [vmem:[#allocation3 + $0x328] sm:$0xff]
    %v2305 = vld [vmem:[#allocation3 + $0x330] sm:$0xff]
    %v2306 = vld [vmem:[#allocation3 + $0x338] sm:$0xff]
    %v2307 = vld [vmem:[#allocation3 + $0x340] sm:$0xff]
    %v2308 = vld [vmem:[#allocation3 + $0x348] sm:$0xff]
    %v2309 = vld [vmem:[#allocation3 + $0x350] sm:$0xff]
    %v2310 = vld [vmem:[#allocation3 + $0x358] sm:$0xff]
    %v2311 = vld [vmem:[#allocation3 + $0x360] sm:$0xff]
    %v2312 = vld [vmem:[#allocation3 + $0x368] sm:$0xff]
    %v2313 = vld [vmem:[#allocation3 + $0x370] sm:$0xff]
    %v2314 = vld [vmem:[#allocation3 + $0x378] sm:$0xff]
    %v2315 = vld [vmem:[#allocation3 + $0x380] sm:$0xff]
    %v2316 = vld [vmem:[#allocation3 + $0x388] sm:$0xff]
    %v2317 = vld [vmem:[#allocation3 + $0x390] sm:$0xff]
    %v2318 = vld [vmem:[#allocation3 + $0x398] sm:$0xff]
    %v2319 = vld [vmem:[#allocation3 + $0x3a0] sm:$0xff]
    %v2320 = vld [vmem:[#allocation3 + $0x3a8] sm:$0xff]
    %v2321 = vld [vmem:[#allocation3 + $0x3b0] sm:$0xff]
    %v2322 = vld [vmem:[#allocation3 + $0x3b8] sm:$0xff]
    %v2323 = vld [vmem:[#allocation3 + $0x3c0] sm:$0xff]
    %v2324 = vld [vmem:[#allocation3 + $0x3c8] sm:$0xff]
    %v2325 = vld [vmem:[#allocation3 + $0x3d0] sm:$0xff]
    %v2326 = vld [vmem:[#allocation3 + $0x3d8] sm:$0xff]
    %v2327 = vld [vmem:[#allocation3 + $0x3e0] sm:$0xff]
    %v2328 = vld [vmem:[#allocation3 + $0x3e8] sm:$0xff]
    %v2329 = vld [vmem:[#allocation3 + $0x3f0] sm:$0xff]
    %v2330 = vld [vmem:[#allocation3 + $0x3f8] sm:$0xff]
    %v2331 = vld [vmem:[#allocation3 + $0x400] sm:$0xff]
    %v2332 = vld [vmem:[#allocation3 + $0x408] sm:$0xff]
    %v2333 = vld [vmem:[#allocation3 + $0x410] sm:$0xff]
    %v2334 = vld [vmem:[#allocation3 + $0x418] sm:$0xff]
    %v2335 = vld [vmem:[#allocation3 + $0x420] sm:$0xff]
    %v2336 = vld [vmem:[#allocation3 + $0x428] sm:$0xff]
    %v2337 = vld [vmem:[#allocation3 + $0x430] sm:$0xff]
    %v2338 = vld [vmem:[#allocation3 + $0x438] sm:$0xff]
    %v2339 = vld [vmem:[#allocation3 + $0x440] sm:$0xff]
    %v2340 = vld [vmem:[#allocation3 + $0x448] sm:$0xff]
    %v2341 = vld [vmem:[#allocation3 + $0x450] sm:$0xff]
    %v2342 = vld [vmem:[#allocation3 + $0x458] sm:$0xff]
    %v2343 = vld [vmem:[#allocation3 + $0x460] sm:$0xff]
    %v2344 = vld [vmem:[#allocation3 + $0x468] sm:$0xff]
    %v2345 = vld [vmem:[#allocation3 + $0x470] sm:$0xff]
    %v2346 = vld [vmem:[#allocation3 + $0x478] sm:$0xff]
    %v2347 = vld [vmem:[#allocation3 + $0x480] sm:$0xff]
    %v2348 = vld [vmem:[#allocation3 + $0x488] sm:$0xff]
    %v2349 = vld [vmem:[#allocation3 + $0x490] sm:$0xff]
    %v2350 = vld [vmem:[#allocation3 + $0x498] sm:$0xff]
    %v2351 = vld [vmem:[#allocation3 + $0x4a0] sm:$0xff]
    %v2352 = vld [vmem:[#allocation3 + $0x4a8] sm:$0xff]
    %v2353 = vld [vmem:[#allocation3 + $0x4b0] sm:$0xff]
    %v2354 = vld [vmem:[#allocation3 + $0x4b8] sm:$0xff]
    %v2355 = vld [vmem:[#allocation3 + $0x4c0] sm:$0xff]
    %v2356 = vld [vmem:[#allocation3 + $0x4c8] sm:$0xff]
    %v2357 = vld [vmem:[#allocation3 + $0x4d0] sm:$0xff]
    %v2358 = vld [vmem:[#allocation3 + $0x4d8] sm:$0xff]
    %v2359 = vld [vmem:[#allocation3 + $0x4e0] sm:$0xff]
    %v2360 = vld [vmem:[#allocation3 + $0x4e8] sm:$0xff]
    %v2361 = vld [vmem:[#allocation3 + $0x4f0] sm:$0xff]
    %v2362 = vld [vmem:[#allocation3 + $0x4f8] sm:$0xff]
    %v2363 = vld [vmem:[#allocation3 + $0x500] sm:$0xff]
    %v2364 = vld [vmem:[#allocation3 + $0x508] sm:$0xff]
    %v2365 = vld [vmem:[#allocation3 + $0x510] sm:$0xff]
    %v2366 = vld [vmem:[#allocation3 + $0x518] sm:$0xff]
    %v2367 = vld [vmem:[#allocation3 + $0x520] sm:$0xff]
    %v2368 = vld [vmem:[#allocation3 + $0x528] sm:$0xff]
    %v2369 = vld [vmem:[#allocation3 + $0x530] sm:$0xff]
    %v2370 = vld [vmem:[#allocation3 + $0x538] sm:$0xff]
    %v2371 = vld [vmem:[#allocation3 + $0x540] sm:$0xff]
    %v2372 = vld [vmem:[#allocation3 + $0x548] sm:$0xff]
    %v2373 = vld [vmem:[#allocation3 + $0x550] sm:$0xff]
    %v2374 = vld [vmem:[#allocation3 + $0x558] sm:$0xff]
    %v2375 = vld [vmem:[#allocation3 + $0x560] sm:$0xff]
    %v2376 = vld [vmem:[#allocation3 + $0x568] sm:$0xff]
    %v2377 = vld [vmem:[#allocation3 + $0x570] sm:$0xff]
    %v2378 = vld [vmem:[#allocation3 + $0x578] sm:$0xff]
    %v2379 = vld [vmem:[#allocation3 + $0x580] sm:$0xff]
    %v2380 = vld [vmem:[#allocation3 + $0x588] sm:$0xff]
    %v2381 = vld [vmem:[#allocation3 + $0x590] sm:$0xff]
    %v2382 = vld [vmem:[#allocation3 + $0x598] sm:$0xff]
    %v2383 = vld [vmem:[#allocation3 + $0x5a0] sm:$0xff]
    %v2384 = vld [vmem:[#allocation3 + $0x5a8] sm:$0xff]
    %v2385 = vld [vmem:[#allocation3 + $0x5b0] sm:$0xff]
    %v2386 = vld [vmem:[#allocation3 + $0x5b8] sm:$0xff]
    %v2387 = vld [vmem:[#allocation3 + $0x5c0] sm:$0xff]
    %v2388 = vld [vmem:[#allocation3 + $0x5c8] sm:$0xff]
    %v2389 = vld [vmem:[#allocation3 + $0x5d0] sm:$0xff]
    %v2390 = vld [vmem:[#allocation3 + $0x5d8] sm:$0xff]
    %v2391 = vld [vmem:[#allocation3 + $0x5e0] sm:$0xff]
    %v2392 = vld [vmem:[#allocation3 + $0x5e8] sm:$0xff]
    %v2393 = vld [vmem:[#allocation3 + $0x5f0] sm:$0xff]
    %v2394 = vld [vmem:[#allocation3 + $0x5f8] sm:$0xff]
    %v2395 = vld [vmem:[#allocation3 + $0x600] sm:$0xff]
    %v2396 = vld [vmem:[#allocation3 + $0x608] sm:$0xff]
    %v2397 = vld [vmem:[#allocation3 + $0x610] sm:$0xff]
    %v2398 = vld [vmem:[#allocation3 + $0x618] sm:$0xff]
    %v2399 = vld [vmem:[#allocation3 + $0x620] sm:$0xff]
    %v2400 = vld [vmem:[#allocation3 + $0x628] sm:$0xff]
    %v2401 = vld [vmem:[#allocation3 + $0x630] sm:$0xff]
    %v2402 = vld [vmem:[#allocation3 + $0x638] sm:$0xff]
    %v2403 = vld [vmem:[#allocation3 + $0x640] sm:$0xff]
    %v2404 = vld [vmem:[#allocation3 + $0x648] sm:$0xff]
    %v2405 = vld [vmem:[#allocation3 + $0x650] sm:$0xff]
    %v2406 = vld [vmem:[#allocation3 + $0x658] sm:$0xff]
    %v2407 = vld [vmem:[#allocation3 + $0x660] sm:$0xff]
    %v2408 = vld [vmem:[#allocation3 + $0x668] sm:$0xff]
    %v2409 = vld [vmem:[#allocation3 + $0x670] sm:$0xff]
    %v2410 = vld [vmem:[#allocation3 + $0x678] sm:$0xff]
    %v2411 = vld [vmem:[#allocation3 + $0x680] sm:$0xff]
    %v2412 = vld [vmem:[#allocation3 + $0x688] sm:$0xff]
    %v2413 = vld [vmem:[#allocation3 + $0x690] sm:$0xff]
    %v2414 = vld [vmem:[#allocation3 + $0x698] sm:$0xff]
    %v2415 = vld [vmem:[#allocation3 + $0x6a0] sm:$0xff]
    %v2416 = vld [vmem:[#allocation3 + $0x6a8] sm:$0xff]
    %v2417 = vld [vmem:[#allocation3 + $0x6b0] sm:$0xff]
    %v2418 = vld [vmem:[#allocation3 + $0x6b8] sm:$0xff]
    %v2419 = vld [vmem:[#allocation3 + $0x6c0] sm:$0xff]
    %v2420 = vld [vmem:[#allocation3 + $0x6c8] sm:$0xff]
    %v2421 = vld [vmem:[#allocation3 + $0x6d0] sm:$0xff]
    %v2422 = vld [vmem:[#allocation3 + $0x6d8] sm:$0xff]
    %v2423 = vld [vmem:[#allocation3 + $0x6e0] sm:$0xff]
    %v2424 = vld [vmem:[#allocation3 + $0x6e8] sm:$0xff]
    %v2425 = vld [vmem:[#allocation3 + $0x6f0] sm:$0xff]
    %v2426 = vld [vmem:[#allocation3 + $0x6f8] sm:$0xff]
    %v2427 = vld [vmem:[#allocation3 + $0x700] sm:$0xff]
    %v2428 = vld [vmem:[#allocation3 + $0x708] sm:$0xff]
    %v2429 = vld [vmem:[#allocation3 + $0x710] sm:$0xff]
    %v2430 = vld [vmem:[#allocation3 + $0x718] sm:$0xff]
    %v2431 = vld [vmem:[#allocation3 + $0x720] sm:$0xff]
    %v2432 = vld [vmem:[#allocation3 + $0x728] sm:$0xff]
    %v2433 = vld [vmem:[#allocation3 + $0x730] sm:$0xff]
    %v2434 = vld [vmem:[#allocation3 + $0x738] sm:$0xff]
    %v2435 = vld [vmem:[#allocation3 + $0x740] sm:$0xff]
    %v2436 = vld [vmem:[#allocation3 + $0x748] sm:$0xff]
    %v2437 = vld [vmem:[#allocation3 + $0x750] sm:$0xff]
    %v2438 = vld [vmem:[#allocation3 + $0x758] sm:$0xff]
    %v2439 = vld [vmem:[#allocation3 + $0x760] sm:$0xff]
    %v2440 = vld [vmem:[#allocation3 + $0x768] sm:$0xff]
    %v2441 = vld [vmem:[#allocation3 + $0x770] sm:$0xff]
    %v2442 = vld [vmem:[#allocation3 + $0x778] sm:$0xff]
    %v2443 = vld [vmem:[#allocation3 + $0x780] sm:$0xff]
    %v2444 = vld [vmem:[#allocation3 + $0x788] sm:$0xff]
    %v2445 = vld [vmem:[#allocation3 + $0x790] sm:$0xff]
    %v2446 = vld [vmem:[#allocation3 + $0x798] sm:$0xff]
    %v2447 = vld [vmem:[#allocation3 + $0x7a0] sm:$0xff]
    %v2448 = vld [vmem:[#allocation3 + $0x7a8] sm:$0xff]
    %v2449 = vld [vmem:[#allocation3 + $0x7b0] sm:$0xff]
    %v2450 = vld [vmem:[#allocation3 + $0x7b8] sm:$0xff]
    %v2451 = vld [vmem:[#allocation3 + $0x7c0] sm:$0xff]
    %v2452 = vld [vmem:[#allocation3 + $0x7c8] sm:$0xff]
    %v2453 = vld [vmem:[#allocation3 + $0x7d0] sm:$0xff]
    %v2454 = vld [vmem:[#allocation3 + $0x7d8] sm:$0xff]
    %v2455 = vld [vmem:[#allocation3 + $0x7e0] sm:$0xff]
    %v2456 = vld [vmem:[#allocation3 + $0x7e8] sm:$0xff]
    %v2457 = vld [vmem:[#allocation3 + $0x7f0] sm:$0xff]
    %v2458 = vld [vmem:[#allocation3 + $0x7f8] sm:$0xff]
    %v2459 = vunpack.c.l.s8.bf16 %v2203
    %v2460 = vunpack.c.l.s8.bf16 %v2204
    %v2461 = vunpack.c.l.s8.bf16 %v2205
    %v2462 = vunpack.c.l.s8.bf16 %v2206
    %v2463 = vunpack.c.h.s8.bf16 %v2203
    %v2464 = vunpack.c.h.s8.bf16 %v2204
    %v2465 = vunpack.c.h.s8.bf16 %v2205
    %v2466 = vunpack.c.h.s8.bf16 %v2206
    %v2467 = vunpack.c.l.s8.bf16 %v2207
    %v2468 = vunpack.c.l.s8.bf16 %v2208
    %v2469 = vunpack.c.l.s8.bf16 %v2209
    %v2470 = vunpack.c.l.s8.bf16 %v2210
    %v2471 = vunpack.c.h.s8.bf16 %v2207
    %v2472 = vunpack.c.h.s8.bf16 %v2208
    %v2473 = vunpack.c.h.s8.bf16 %v2209
    %v2474 = vunpack.c.h.s8.bf16 %v2210
    %v2475 = vunpack.c.l.s8.bf16 %v2211
    %v2476 = vunpack.c.l.s8.bf16 %v2212
    %v2477 = vunpack.c.l.s8.bf16 %v2213
    %v2478 = vunpack.c.l.s8.bf16 %v2214
    %v2479 = vunpack.c.h.s8.bf16 %v2211
    %v2480 = vunpack.c.h.s8.bf16 %v2212
    %v2481 = vunpack.c.h.s8.bf16 %v2213
    %v2482 = vunpack.c.h.s8.bf16 %v2214
    %v2483 = vunpack.c.l.s8.bf16 %v2215
    %v2484 = vunpack.c.l.s8.bf16 %v2216
    %v2485 = vunpack.c.l.s8.bf16 %v2217
    %v2486 = vunpack.c.l.s8.bf16 %v2218
    %v2487 = vunpack.c.h.s8.bf16 %v2215
    %v2488 = vunpack.c.h.s8.bf16 %v2216
    %v2489 = vunpack.c.h.s8.bf16 %v2217
    %v2490 = vunpack.c.h.s8.bf16 %v2218
    %v2491 = vunpack.c.l.s8.bf16 %v2219
    %v2492 = vunpack.c.l.s8.bf16 %v2220
    %v2493 = vunpack.c.l.s8.bf16 %v2221
    %v2494 = vunpack.c.l.s8.bf16 %v2222
    %v2495 = vunpack.c.h.s8.bf16 %v2219
    %v2496 = vunpack.c.h.s8.bf16 %v2220
    %v2497 = vunpack.c.h.s8.bf16 %v2221
    %v2498 = vunpack.c.h.s8.bf16 %v2222
    %v2499 = vunpack.c.l.s8.bf16 %v2223
    %v2500 = vunpack.c.l.s8.bf16 %v2224
    %v2501 = vunpack.c.l.s8.bf16 %v2225
    %v2502 = vunpack.c.l.s8.bf16 %v2226
    %v2503 = vunpack.c.h.s8.bf16 %v2223
    %v2504 = vunpack.c.h.s8.bf16 %v2224
    %v2505 = vunpack.c.h.s8.bf16 %v2225
    %v2506 = vunpack.c.h.s8.bf16 %v2226
    %v2507 = vunpack.c.l.s8.bf16 %v2227
    %v2508 = vunpack.c.l.s8.bf16 %v2228
    %v2509 = vunpack.c.l.s8.bf16 %v2229
    %v2510 = vunpack.c.l.s8.bf16 %v2230
    %v2511 = vunpack.c.h.s8.bf16 %v2227
    %v2512 = vunpack.c.h.s8.bf16 %v2228
    %v2513 = vunpack.c.h.s8.bf16 %v2229
    %v2514 = vunpack.c.h.s8.bf16 %v2230
    %v2515 = vunpack.c.l.s8.bf16 %v2231
    %v2516 = vunpack.c.l.s8.bf16 %v2232
    %v2517 = vunpack.c.l.s8.bf16 %v2233
    %v2518 = vunpack.c.l.s8.bf16 %v2234
    %v2519 = vunpack.c.h.s8.bf16 %v2231
    %v2520 = vunpack.c.h.s8.bf16 %v2232
    %v2521 = vunpack.c.h.s8.bf16 %v2233
    %v2522 = vunpack.c.h.s8.bf16 %v2234
    %v2523 = vunpack.c.l.s8.bf16 %v2235
    %v2524 = vunpack.c.l.s8.bf16 %v2236
    %v2525 = vunpack.c.l.s8.bf16 %v2237
    %v2526 = vunpack.c.l.s8.bf16 %v2238
    %v2527 = vunpack.c.h.s8.bf16 %v2235
    %v2528 = vunpack.c.h.s8.bf16 %v2236
    %v2529 = vunpack.c.h.s8.bf16 %v2237
    %v2530 = vunpack.c.h.s8.bf16 %v2238
    %v2531 = vunpack.c.l.s8.bf16 %v2239
    %v2532 = vunpack.c.l.s8.bf16 %v2240
    %v2533 = vunpack.c.l.s8.bf16 %v2241
    %v2534 = vunpack.c.l.s8.bf16 %v2242
    %v2535 = vunpack.c.h.s8.bf16 %v2239
    %v2536 = vunpack.c.h.s8.bf16 %v2240
    %v2537 = vunpack.c.h.s8.bf16 %v2241
    %v2538 = vunpack.c.h.s8.bf16 %v2242
    %v2539 = vunpack.c.l.s8.bf16 %v2243
    %v2540 = vunpack.c.l.s8.bf16 %v2244
    %v2541 = vunpack.c.l.s8.bf16 %v2245
    %v2542 = vunpack.c.l.s8.bf16 %v2246
    %v2543 = vunpack.c.h.s8.bf16 %v2243
    %v2544 = vunpack.c.h.s8.bf16 %v2244
    %v2545 = vunpack.c.h.s8.bf16 %v2245
    %v2546 = vunpack.c.h.s8.bf16 %v2246
    %v2547 = vunpack.c.l.s8.bf16 %v2247
    %v2548 = vunpack.c.l.s8.bf16 %v2248
    %v2549 = vunpack.c.l.s8.bf16 %v2249
    %v2550 = vunpack.c.l.s8.bf16 %v2250
    %v2551 = vunpack.c.h.s8.bf16 %v2247
    %v2552 = vunpack.c.h.s8.bf16 %v2248
    %v2553 = vunpack.c.h.s8.bf16 %v2249
    %v2554 = vunpack.c.h.s8.bf16 %v2250
    %v2555 = vunpack.c.l.s8.bf16 %v2251
    %v2556 = vunpack.c.l.s8.bf16 %v2252
    %v2557 = vunpack.c.l.s8.bf16 %v2253
    %v2558 = vunpack.c.l.s8.bf16 %v2254
    %v2559 = vunpack.c.h.s8.bf16 %v2251
    %v2560 = vunpack.c.h.s8.bf16 %v2252
    %v2561 = vunpack.c.h.s8.bf16 %v2253
    %v2562 = vunpack.c.h.s8.bf16 %v2254
    %v2563 = vunpack.c.l.s8.bf16 %v2255
    %v2564 = vunpack.c.l.s8.bf16 %v2256
    %v2565 = vunpack.c.l.s8.bf16 %v2257
    %v2566 = vunpack.c.l.s8.bf16 %v2258
    %v2567 = vunpack.c.h.s8.bf16 %v2255
    %v2568 = vunpack.c.h.s8.bf16 %v2256
    %v2569 = vunpack.c.h.s8.bf16 %v2257
    %v2570 = vunpack.c.h.s8.bf16 %v2258
    %v2571 = vunpack.c.l.s8.bf16 %v2259
    %v2572 = vunpack.c.l.s8.bf16 %v2260
    %v2573 = vunpack.c.l.s8.bf16 %v2261
    %v2574 = vunpack.c.l.s8.bf16 %v2262
    %v2575 = vunpack.c.h.s8.bf16 %v2259
    %v2576 = vunpack.c.h.s8.bf16 %v2260
    %v2577 = vunpack.c.h.s8.bf16 %v2261
    %v2578 = vunpack.c.h.s8.bf16 %v2262
    %v2579 = vunpack.c.l.s8.bf16 %v2263
    %v2580 = vunpack.c.l.s8.bf16 %v2264
    %v2581 = vunpack.c.l.s8.bf16 %v2265
    %v2582 = vunpack.c.l.s8.bf16 %v2266
    %v2583 = vunpack.c.h.s8.bf16 %v2263
    %v2584 = vunpack.c.h.s8.bf16 %v2264
    %v2585 = vunpack.c.h.s8.bf16 %v2265
    %v2586 = vunpack.c.h.s8.bf16 %v2266
    %v2587 = vunpack.c.l.s8.bf16 %v2267
    %v2588 = vunpack.c.l.s8.bf16 %v2268
    %v2589 = vunpack.c.l.s8.bf16 %v2269
    %v2590 = vunpack.c.l.s8.bf16 %v2270
    %v2591 = vunpack.c.h.s8.bf16 %v2267
    %v2592 = vunpack.c.h.s8.bf16 %v2268
    %v2593 = vunpack.c.h.s8.bf16 %v2269
    %v2594 = vunpack.c.h.s8.bf16 %v2270
    %v2595 = vunpack.c.l.s8.bf16 %v2271
    %v2596 = vunpack.c.l.s8.bf16 %v2272
    %v2597 = vunpack.c.l.s8.bf16 %v2273
    %v2598 = vunpack.c.l.s8.bf16 %v2274
    %v2599 = vunpack.c.h.s8.bf16 %v2271
    %v2600 = vunpack.c.h.s8.bf16 %v2272
    %v2601 = vunpack.c.h.s8.bf16 %v2273
    %v2602 = vunpack.c.h.s8.bf16 %v2274
    %v2603 = vunpack.c.l.s8.bf16 %v2275
    %v2604 = vunpack.c.l.s8.bf16 %v2276
    %v2605 = vunpack.c.l.s8.bf16 %v2277
    %v2606 = vunpack.c.l.s8.bf16 %v2278
    %v2607 = vunpack.c.h.s8.bf16 %v2275
    %v2608 = vunpack.c.h.s8.bf16 %v2276
    %v2609 = vunpack.c.h.s8.bf16 %v2277
    %v2610 = vunpack.c.h.s8.bf16 %v2278
    %v2611 = vunpack.c.l.s8.bf16 %v2279
    %v2612 = vunpack.c.l.s8.bf16 %v2280
    %v2613 = vunpack.c.l.s8.bf16 %v2281
    %v2614 = vunpack.c.l.s8.bf16 %v2282
    %v2615 = vunpack.c.h.s8.bf16 %v2279
    %v2616 = vunpack.c.h.s8.bf16 %v2280
    %v2617 = vunpack.c.h.s8.bf16 %v2281
    %v2618 = vunpack.c.h.s8.bf16 %v2282
    %v2619 = vunpack.c.l.s8.bf16 %v2283
    %v2620 = vunpack.c.l.s8.bf16 %v2284
    %v2621 = vunpack.c.l.s8.bf16 %v2285
    %v2622 = vunpack.c.l.s8.bf16 %v2286
    %v2623 = vunpack.c.h.s8.bf16 %v2283
    %v2624 = vunpack.c.h.s8.bf16 %v2284
    %v2625 = vunpack.c.h.s8.bf16 %v2285
    %v2626 = vunpack.c.h.s8.bf16 %v2286
    %v2627 = vunpack.c.l.s8.bf16 %v2287
    %v2628 = vunpack.c.l.s8.bf16 %v2288
    %v2629 = vunpack.c.l.s8.bf16 %v2289
    %v2630 = vunpack.c.l.s8.bf16 %v2290
    %v2631 = vunpack.c.h.s8.bf16 %v2287
    %v2632 = vunpack.c.h.s8.bf16 %v2288
    %v2633 = vunpack.c.h.s8.bf16 %v2289
    %v2634 = vunpack.c.h.s8.bf16 %v2290
    %v2635 = vunpack.c.l.s8.bf16 %v2291
    %v2636 = vunpack.c.l.s8.bf16 %v2292
    %v2637 = vunpack.c.l.s8.bf16 %v2293
    %v2638 = vunpack.c.l.s8.bf16 %v2294
    %v2639 = vunpack.c.h.s8.bf16 %v2291
    %v2640 = vunpack.c.h.s8.bf16 %v2292
    %v2641 = vunpack.c.h.s8.bf16 %v2293
    %v2642 = vunpack.c.h.s8.bf16 %v2294
    %v2643 = vunpack.c.l.s8.bf16 %v2295
    %v2644 = vunpack.c.l.s8.bf16 %v2296
    %v2645 = vunpack.c.l.s8.bf16 %v2297
    %v2646 = vunpack.c.l.s8.bf16 %v2298
    %v2647 = vunpack.c.h.s8.bf16 %v2295
    %v2648 = vunpack.c.h.s8.bf16 %v2296
    %v2649 = vunpack.c.h.s8.bf16 %v2297
    %v2650 = vunpack.c.h.s8.bf16 %v2298
    %v2651 = vunpack.c.l.s8.bf16 %v2299
    %v2652 = vunpack.c.l.s8.bf16 %v2300
    %v2653 = vunpack.c.l.s8.bf16 %v2301
    %v2654 = vunpack.c.l.s8.bf16 %v2302
    %v2655 = vunpack.c.h.s8.bf16 %v2299
    %v2656 = vunpack.c.h.s8.bf16 %v2300
    %v2657 = vunpack.c.h.s8.bf16 %v2301
    %v2658 = vunpack.c.h.s8.bf16 %v2302
    %v2659 = vunpack.c.l.s8.bf16 %v2303
    %v2660 = vunpack.c.l.s8.bf16 %v2304
    %v2661 = vunpack.c.l.s8.bf16 %v2305
    %v2662 = vunpack.c.l.s8.bf16 %v2306
    %v2663 = vunpack.c.h.s8.bf16 %v2303
    %v2664 = vunpack.c.h.s8.bf16 %v2304
    %v2665 = vunpack.c.h.s8.bf16 %v2305
    %v2666 = vunpack.c.h.s8.bf16 %v2306
    %v2667 = vunpack.c.l.s8.bf16 %v2307
    %v2668 = vunpack.c.l.s8.bf16 %v2308
    %v2669 = vunpack.c.l.s8.bf16 %v2309
    %v2670 = vunpack.c.l.s8.bf16 %v2310
    %v2671 = vunpack.c.h.s8.bf16 %v2307
    %v2672 = vunpack.c.h.s8.bf16 %v2308
    %v2673 = vunpack.c.h.s8.bf16 %v2309
    %v2674 = vunpack.c.h.s8.bf16 %v2310
    %v2675 = vunpack.c.l.s8.bf16 %v2311
    %v2676 = vunpack.c.l.s8.bf16 %v2312
    %v2677 = vunpack.c.l.s8.bf16 %v2313
    %v2678 = vunpack.c.l.s8.bf16 %v2314
    %v2679 = vunpack.c.h.s8.bf16 %v2311
    %v2680 = vunpack.c.h.s8.bf16 %v2312
    %v2681 = vunpack.c.h.s8.bf16 %v2313
    %v2682 = vunpack.c.h.s8.bf16 %v2314
    %v2683 = vunpack.c.l.s8.bf16 %v2315
    %v2684 = vunpack.c.l.s8.bf16 %v2316
    %v2685 = vunpack.c.l.s8.bf16 %v2317
    %v2686 = vunpack.c.l.s8.bf16 %v2318
    %v2687 = vunpack.c.h.s8.bf16 %v2315
    %v2688 = vunpack.c.h.s8.bf16 %v2316
    %v2689 = vunpack.c.h.s8.bf16 %v2317
    %v2690 = vunpack.c.h.s8.bf16 %v2318
    %v2691 = vunpack.c.l.s8.bf16 %v2319
    %v2692 = vunpack.c.l.s8.bf16 %v2320
    %v2693 = vunpack.c.l.s8.bf16 %v2321
    %v2694 = vunpack.c.l.s8.bf16 %v2322
    %v2695 = vunpack.c.h.s8.bf16 %v2319
    %v2696 = vunpack.c.h.s8.bf16 %v2320
    %v2697 = vunpack.c.h.s8.bf16 %v2321
    %v2698 = vunpack.c.h.s8.bf16 %v2322
    %v2699 = vunpack.c.l.s8.bf16 %v2323
    %v2700 = vunpack.c.l.s8.bf16 %v2324
    %v2701 = vunpack.c.l.s8.bf16 %v2325
    %v2702 = vunpack.c.l.s8.bf16 %v2326
    %v2703 = vunpack.c.h.s8.bf16 %v2323
    %v2704 = vunpack.c.h.s8.bf16 %v2324
    %v2705 = vunpack.c.h.s8.bf16 %v2325
    %v2706 = vunpack.c.h.s8.bf16 %v2326
    %v2707 = vunpack.c.l.s8.bf16 %v2327
    %v2708 = vunpack.c.l.s8.bf16 %v2328
    %v2709 = vunpack.c.l.s8.bf16 %v2329
    %v2710 = vunpack.c.l.s8.bf16 %v2330
    %v2711 = vunpack.c.h.s8.bf16 %v2327
    %v2712 = vunpack.c.h.s8.bf16 %v2328
    %v2713 = vunpack.c.h.s8.bf16 %v2329
    %v2714 = vunpack.c.h.s8.bf16 %v2330
    %v2715 = vunpack.c.l.s8.bf16 %v2331
    %v2716 = vunpack.c.l.s8.bf16 %v2332
    %v2717 = vunpack.c.l.s8.bf16 %v2333
    %v2718 = vunpack.c.l.s8.bf16 %v2334
    %v2719 = vunpack.c.h.s8.bf16 %v2331
    %v2720 = vunpack.c.h.s8.bf16 %v2332
    %v2721 = vunpack.c.h.s8.bf16 %v2333
    %v2722 = vunpack.c.h.s8.bf16 %v2334
    %v2723 = vunpack.c.l.s8.bf16 %v2335
    %v2724 = vunpack.c.l.s8.bf16 %v2336
    %v2725 = vunpack.c.l.s8.bf16 %v2337
    %v2726 = vunpack.c.l.s8.bf16 %v2338
    %v2727 = vunpack.c.h.s8.bf16 %v2335
    %v2728 = vunpack.c.h.s8.bf16 %v2336
    %v2729 = vunpack.c.h.s8.bf16 %v2337
    %v2730 = vunpack.c.h.s8.bf16 %v2338
    %v2731 = vunpack.c.l.s8.bf16 %v2339
    %v2732 = vunpack.c.l.s8.bf16 %v2340
    %v2733 = vunpack.c.l.s8.bf16 %v2341
    %v2734 = vunpack.c.l.s8.bf16 %v2342
    %v2735 = vunpack.c.h.s8.bf16 %v2339
    %v2736 = vunpack.c.h.s8.bf16 %v2340
    %v2737 = vunpack.c.h.s8.bf16 %v2341
    %v2738 = vunpack.c.h.s8.bf16 %v2342
    %v2739 = vunpack.c.l.s8.bf16 %v2343
    %v2740 = vunpack.c.l.s8.bf16 %v2344
    %v2741 = vunpack.c.l.s8.bf16 %v2345
    %v2742 = vunpack.c.l.s8.bf16 %v2346
    %v2743 = vunpack.c.h.s8.bf16 %v2343
    %v2744 = vunpack.c.h.s8.bf16 %v2344
    %v2745 = vunpack.c.h.s8.bf16 %v2345
    %v2746 = vunpack.c.h.s8.bf16 %v2346
    %v2747 = vunpack.c.l.s8.bf16 %v2347
    %v2748 = vunpack.c.l.s8.bf16 %v2348
    %v2749 = vunpack.c.l.s8.bf16 %v2349
    %v2750 = vunpack.c.l.s8.bf16 %v2350
    %v2751 = vunpack.c.h.s8.bf16 %v2347
    %v2752 = vunpack.c.h.s8.bf16 %v2348
    %v2753 = vunpack.c.h.s8.bf16 %v2349
    %v2754 = vunpack.c.h.s8.bf16 %v2350
    %v2755 = vunpack.c.l.s8.bf16 %v2351
    %v2756 = vunpack.c.l.s8.bf16 %v2352
    %v2757 = vunpack.c.l.s8.bf16 %v2353
    %v2758 = vunpack.c.l.s8.bf16 %v2354
    %v2759 = vunpack.c.h.s8.bf16 %v2351
    %v2760 = vunpack.c.h.s8.bf16 %v2352
    %v2761 = vunpack.c.h.s8.bf16 %v2353
    %v2762 = vunpack.c.h.s8.bf16 %v2354
    %v2763 = vunpack.c.l.s8.bf16 %v2355
    %v2764 = vunpack.c.l.s8.bf16 %v2356
    %v2765 = vunpack.c.l.s8.bf16 %v2357
    %v2766 = vunpack.c.l.s8.bf16 %v2358
    %v2767 = vunpack.c.h.s8.bf16 %v2355
    %v2768 = vunpack.c.h.s8.bf16 %v2356
    %v2769 = vunpack.c.h.s8.bf16 %v2357
    %v2770 = vunpack.c.h.s8.bf16 %v2358
    %v2771 = vunpack.c.l.s8.bf16 %v2359
    %v2772 = vunpack.c.l.s8.bf16 %v2360
    %v2773 = vunpack.c.l.s8.bf16 %v2361
    %v2774 = vunpack.c.l.s8.bf16 %v2362
    %v2775 = vunpack.c.h.s8.bf16 %v2359
    %v2776 = vunpack.c.h.s8.bf16 %v2360
    %v2777 = vunpack.c.h.s8.bf16 %v2361
    %v2778 = vunpack.c.h.s8.bf16 %v2362
    %v2779 = vunpack.c.l.s8.bf16 %v2363
    %v2780 = vunpack.c.l.s8.bf16 %v2364
    %v2781 = vunpack.c.l.s8.bf16 %v2365
    %v2782 = vunpack.c.l.s8.bf16 %v2366
    %v2783 = vunpack.c.h.s8.bf16 %v2363
    %v2784 = vunpack.c.h.s8.bf16 %v2364
    %v2785 = vunpack.c.h.s8.bf16 %v2365
    %v2786 = vunpack.c.h.s8.bf16 %v2366
    %v2787 = vunpack.c.l.s8.bf16 %v2367
    %v2788 = vunpack.c.l.s8.bf16 %v2368
    %v2789 = vunpack.c.l.s8.bf16 %v2369
    %v2790 = vunpack.c.l.s8.bf16 %v2370
    %v2791 = vunpack.c.h.s8.bf16 %v2367
    %v2792 = vunpack.c.h.s8.bf16 %v2368
    %v2793 = vunpack.c.h.s8.bf16 %v2369
    %v2794 = vunpack.c.h.s8.bf16 %v2370
    %v2795 = vunpack.c.l.s8.bf16 %v2371
    %v2796 = vunpack.c.l.s8.bf16 %v2372
    %v2797 = vunpack.c.l.s8.bf16 %v2373
    %v2798 = vunpack.c.l.s8.bf16 %v2374
    %v2799 = vunpack.c.h.s8.bf16 %v2371
    %v2800 = vunpack.c.h.s8.bf16 %v2372
    %v2801 = vunpack.c.h.s8.bf16 %v2373
    %v2802 = vunpack.c.h.s8.bf16 %v2374
    %v2803 = vunpack.c.l.s8.bf16 %v2375
    %v2804 = vunpack.c.l.s8.bf16 %v2376
    %v2805 = vunpack.c.l.s8.bf16 %v2377
    %v2806 = vunpack.c.l.s8.bf16 %v2378
    %v2807 = vunpack.c.h.s8.bf16 %v2375
    %v2808 = vunpack.c.h.s8.bf16 %v2376
    %v2809 = vunpack.c.h.s8.bf16 %v2377
    %v2810 = vunpack.c.h.s8.bf16 %v2378
    %v2811 = vunpack.c.l.s8.bf16 %v2379
    %v2812 = vunpack.c.l.s8.bf16 %v2380
    %v2813 = vunpack.c.l.s8.bf16 %v2381
    %v2814 = vunpack.c.l.s8.bf16 %v2382
    %v2815 = vunpack.c.h.s8.bf16 %v2379
    %v2816 = vunpack.c.h.s8.bf16 %v2380
    %v2817 = vunpack.c.h.s8.bf16 %v2381
    %v2818 = vunpack.c.h.s8.bf16 %v2382
    %v2819 = vunpack.c.l.s8.bf16 %v2383
    %v2820 = vunpack.c.l.s8.bf16 %v2384
    %v2821 = vunpack.c.l.s8.bf16 %v2385
    %v2822 = vunpack.c.l.s8.bf16 %v2386
    %v2823 = vunpack.c.h.s8.bf16 %v2383
    %v2824 = vunpack.c.h.s8.bf16 %v2384
    %v2825 = vunpack.c.h.s8.bf16 %v2385
    %v2826 = vunpack.c.h.s8.bf16 %v2386
    %v2827 = vunpack.c.l.s8.bf16 %v2387
    %v2828 = vunpack.c.l.s8.bf16 %v2388
    %v2829 = vunpack.c.l.s8.bf16 %v2389
    %v2830 = vunpack.c.l.s8.bf16 %v2390
    %v2831 = vunpack.c.h.s8.bf16 %v2387
    %v2832 = vunpack.c.h.s8.bf16 %v2388
    %v2833 = vunpack.c.h.s8.bf16 %v2389
    %v2834 = vunpack.c.h.s8.bf16 %v2390
    %v2835 = vunpack.c.l.s8.bf16 %v2391
    %v2836 = vunpack.c.l.s8.bf16 %v2392
    %v2837 = vunpack.c.l.s8.bf16 %v2393
    %v2838 = vunpack.c.l.s8.bf16 %v2394
    %v2839 = vunpack.c.h.s8.bf16 %v2391
    %v2840 = vunpack.c.h.s8.bf16 %v2392
    %v2841 = vunpack.c.h.s8.bf16 %v2393
    %v2842 = vunpack.c.h.s8.bf16 %v2394
    %v2843 = vunpack.c.l.s8.bf16 %v2395
    %v2844 = vunpack.c.l.s8.bf16 %v2396
    %v2845 = vunpack.c.l.s8.bf16 %v2397
    %v2846 = vunpack.c.l.s8.bf16 %v2398
    %v2847 = vunpack.c.h.s8.bf16 %v2395
    %v2848 = vunpack.c.h.s8.bf16 %v2396
    %v2849 = vunpack.c.h.s8.bf16 %v2397
    %v2850 = vunpack.c.h.s8.bf16 %v2398
    %v2851 = vunpack.c.l.s8.bf16 %v2399
    %v2852 = vunpack.c.l.s8.bf16 %v2400
    %v2853 = vunpack.c.l.s8.bf16 %v2401
    %v2854 = vunpack.c.l.s8.bf16 %v2402
    %v2855 = vunpack.c.h.s8.bf16 %v2399
    %v2856 = vunpack.c.h.s8.bf16 %v2400
    %v2857 = vunpack.c.h.s8.bf16 %v2401
    %v2858 = vunpack.c.h.s8.bf16 %v2402
    %v2859 = vunpack.c.l.s8.bf16 %v2403
    %v2860 = vunpack.c.l.s8.bf16 %v2404
    %v2861 = vunpack.c.l.s8.bf16 %v2405
    %v2862 = vunpack.c.l.s8.bf16 %v2406
    %v2863 = vunpack.c.h.s8.bf16 %v2403
    %v2864 = vunpack.c.h.s8.bf16 %v2404
    %v2865 = vunpack.c.h.s8.bf16 %v2405
    %v2866 = vunpack.c.h.s8.bf16 %v2406
    %v2867 = vunpack.c.l.s8.bf16 %v2407
    %v2868 = vunpack.c.l.s8.bf16 %v2408
    %v2869 = vunpack.c.l.s8.bf16 %v2409
    %v2870 = vunpack.c.l.s8.bf16 %v2410
    %v2871 = vunpack.c.h.s8.bf16 %v2407
    %v2872 = vunpack.c.h.s8.bf16 %v2408
    %v2873 = vunpack.c.h.s8.bf16 %v2409
    %v2874 = vunpack.c.h.s8.bf16 %v2410
    %v2875 = vunpack.c.l.s8.bf16 %v2411
    %v2876 = vunpack.c.l.s8.bf16 %v2412
    %v2877 = vunpack.c.l.s8.bf16 %v2413
    %v2878 = vunpack.c.l.s8.bf16 %v2414
    %v2879 = vunpack.c.h.s8.bf16 %v2411
    %v2880 = vunpack.c.h.s8.bf16 %v2412
    %v2881 = vunpack.c.h.s8.bf16 %v2413
    %v2882 = vunpack.c.h.s8.bf16 %v2414
    %v2883 = vunpack.c.l.s8.bf16 %v2415
    %v2884 = vunpack.c.l.s8.bf16 %v2416
    %v2885 = vunpack.c.l.s8.bf16 %v2417
    %v2886 = vunpack.c.l.s8.bf16 %v2418
    %v2887 = vunpack.c.h.s8.bf16 %v2415
    %v2888 = vunpack.c.h.s8.bf16 %v2416
    %v2889 = vunpack.c.h.s8.bf16 %v2417
    %v2890 = vunpack.c.h.s8.bf16 %v2418
    %v2891 = vunpack.c.l.s8.bf16 %v2419
    %v2892 = vunpack.c.l.s8.bf16 %v2420
    %v2893 = vunpack.c.l.s8.bf16 %v2421
    %v2894 = vunpack.c.l.s8.bf16 %v2422
    %v2895 = vunpack.c.h.s8.bf16 %v2419
    %v2896 = vunpack.c.h.s8.bf16 %v2420
    %v2897 = vunpack.c.h.s8.bf16 %v2421
    %v2898 = vunpack.c.h.s8.bf16 %v2422
    %v2899 = vunpack.c.l.s8.bf16 %v2423
    %v2900 = vunpack.c.l.s8.bf16 %v2424
    %v2901 = vunpack.c.l.s8.bf16 %v2425
    %v2902 = vunpack.c.l.s8.bf16 %v2426
    %v2903 = vunpack.c.h.s8.bf16 %v2423
    %v2904 = vunpack.c.h.s8.bf16 %v2424
    %v2905 = vunpack.c.h.s8.bf16 %v2425
    %v2906 = vunpack.c.h.s8.bf16 %v2426
    %v2907 = vunpack.c.l.s8.bf16 %v2427
    %v2908 = vunpack.c.l.s8.bf16 %v2428
    %v2909 = vunpack.c.l.s8.bf16 %v2429
    %v2910 = vunpack.c.l.s8.bf16 %v2430
    %v2911 = vunpack.c.h.s8.bf16 %v2427
    %v2912 = vunpack.c.h.s8.bf16 %v2428
    %v2913 = vunpack.c.h.s8.bf16 %v2429
    %v2914 = vunpack.c.h.s8.bf16 %v2430
    %v2915 = vunpack.c.l.s8.bf16 %v2431
    %v2916 = vunpack.c.l.s8.bf16 %v2432
    %v2917 = vunpack.c.l.s8.bf16 %v2433
    %v2918 = vunpack.c.l.s8.bf16 %v2434
    %v2919 = vunpack.c.h.s8.bf16 %v2431
    %v2920 = vunpack.c.h.s8.bf16 %v2432
    %v2921 = vunpack.c.h.s8.bf16 %v2433
    %v2922 = vunpack.c.h.s8.bf16 %v2434
    %v2923 = vunpack.c.l.s8.bf16 %v2435
    %v2924 = vunpack.c.l.s8.bf16 %v2436
    %v2925 = vunpack.c.l.s8.bf16 %v2437
    %v2926 = vunpack.c.l.s8.bf16 %v2438
    %v2927 = vunpack.c.h.s8.bf16 %v2435
    %v2928 = vunpack.c.h.s8.bf16 %v2436
    %v2929 = vunpack.c.h.s8.bf16 %v2437
    %v2930 = vunpack.c.h.s8.bf16 %v2438
    %v2931 = vunpack.c.l.s8.bf16 %v2439
    %v2932 = vunpack.c.l.s8.bf16 %v2440
    %v2933 = vunpack.c.l.s8.bf16 %v2441
    %v2934 = vunpack.c.l.s8.bf16 %v2442
    %v2935 = vunpack.c.h.s8.bf16 %v2439
    %v2936 = vunpack.c.h.s8.bf16 %v2440
    %v2937 = vunpack.c.h.s8.bf16 %v2441
    %v2938 = vunpack.c.h.s8.bf16 %v2442
    %v2939 = vunpack.c.l.s8.bf16 %v2443
    %v2940 = vunpack.c.l.s8.bf16 %v2444
    %v2941 = vunpack.c.l.s8.bf16 %v2445
    %v2942 = vunpack.c.l.s8.bf16 %v2446
    %v2943 = vunpack.c.h.s8.bf16 %v2443
    %v2944 = vunpack.c.h.s8.bf16 %v2444
    %v2945 = vunpack.c.h.s8.bf16 %v2445
    %v2946 = vunpack.c.h.s8.bf16 %v2446
    %v2947 = vunpack.c.l.s8.bf16 %v2447
    %v2948 = vunpack.c.l.s8.bf16 %v2448
    %v2949 = vunpack.c.l.s8.bf16 %v2449
    %v2950 = vunpack.c.l.s8.bf16 %v2450
    %v2951 = vunpack.c.h.s8.bf16 %v2447
    %v2952 = vunpack.c.h.s8.bf16 %v2448
    %v2953 = vunpack.c.h.s8.bf16 %v2449
    %v2954 = vunpack.c.h.s8.bf16 %v2450
    %v2955 = vunpack.c.l.s8.bf16 %v2451
    %v2956 = vunpack.c.l.s8.bf16 %v2452
    %v2957 = vunpack.c.l.s8.bf16 %v2453
    %v2958 = vunpack.c.l.s8.bf16 %v2454
    %v2959 = vunpack.c.h.s8.bf16 %v2451
    %v2960 = vunpack.c.h.s8.bf16 %v2452
    %v2961 = vunpack.c.h.s8.bf16 %v2453
    %v2962 = vunpack.c.h.s8.bf16 %v2454
    %v2963 = vunpack.c.l.s8.bf16 %v2455
    %v2964 = vunpack.c.l.s8.bf16 %v2456
    %v2965 = vunpack.c.l.s8.bf16 %v2457
    %v2966 = vunpack.c.l.s8.bf16 %v2458
    %v2967 = vunpack.c.h.s8.bf16 %v2455
    %v2968 = vunpack.c.h.s8.bf16 %v2456
    %v2969 = vunpack.c.h.s8.bf16 %v2457
    %v2970 = vunpack.c.h.s8.bf16 %v2458
    %2971 = vmatprep.subr.bf16.mxu0 %v2460
    %2972 = vmatpush1.bf16.msra.mxu0 %v2459
    %2973 = vmatprep.subr.bf16.mxu0 %v2464
    %2974 = vmatpush1.bf16.msra.mxu0 %v2463
    %2975 = vmatprep.subr.bf16.mxu0 %v2468
    %2976 = vmatpush1.bf16.msra.mxu0 %v2467
    %2977 = vmatprep.subr.bf16.mxu0 %v2472
    %2978 = vmatpush1.bf16.msra.mxu0 %v2471
    %2979 = vmatprep.subr.bf16.mxu0 %v2476
    %2980 = vmatpush1.bf16.msra.mxu0 %v2475
    %2981 = vmatprep.subr.bf16.mxu0 %v2480
    %2982 = vmatpush1.bf16.msra.mxu0 %v2479
    %2983 = vmatprep.subr.bf16.mxu0 %v2484
    %2984 = vmatpush1.bf16.msra.mxu0 %v2483
    %2985 = vmatprep.subr.bf16.mxu0 %v2488
    %2986 = vmatpush1.bf16.msra.mxu0 %v2487
    %2987 = vmatprep.subr.bf16.mxu0 %v2492
    %2988 = vmatpush1.bf16.msra.mxu0 %v2491
    %2989 = vmatprep.subr.bf16.mxu0 %v2496
    %2990 = vmatpush1.bf16.msra.mxu0 %v2495
    %2991 = vmatprep.subr.bf16.mxu0 %v2500
    %2992 = vmatpush1.bf16.msra.mxu0 %v2499
    %2993 = vmatprep.subr.bf16.mxu0 %v2504
    %2994 = vmatpush1.bf16.msra.mxu0 %v2503
    %2995 = vmatprep.subr.bf16.mxu0 %v2508
    %2996 = vmatpush1.bf16.msra.mxu0 %v2507
    %2997 = vmatprep.subr.bf16.mxu0 %v2512
    %2998 = vmatpush1.bf16.msra.mxu0 %v2511
    %2999 = vmatprep.subr.bf16.mxu0 %v2516
    %3000 = vmatpush1.bf16.msra.mxu0 %v2515
    %3001 = vmatprep.subr.bf16.mxu0 %v2520
    %3002 = vmatpush1.bf16.msra.mxu0 %v2519
    %3003 = vmatprep.mubr.bf16.mxu0 %v2184
    %3004 = vmatmul.mubr.bf16.gmra.mrb[0].mxu0 %v2183
    %v3005 = vpop.f32.mrb[0].mxu0
    %v3006 = vadd.f32 0.0, %v3005
    %v3007 = vpop.f32.mrb[0].mxu0
    %v3008 = vadd.f32 0.0, %v3007
    %v3009 = vpop.f32.mrb[0].mxu0
    %v3010 = vpop.f32.mrb[0].mxu0
    %3011 = vdwg.mxu0
    %3012 = vmatprep.subr.bf16.mxu0 %v2524
    %3013 = vmatpush1.bf16.msra.mxu0 %v2523
    %3014 = vmatprep.subr.bf16.mxu0 %v2528
    %3015 = vmatpush1.bf16.msra.mxu0 %v2527
    %3016 = vmatprep.subr.bf16.mxu0 %v2532
    %3017 = vmatpush1.bf16.msra.mxu0 %v2531
    %3018 = vmatprep.subr.bf16.mxu0 %v2536
    %3019 = vmatpush1.bf16.msra.mxu0 %v2535
    %3020 = vmatprep.subr.bf16.mxu0 %v2540
    %3021 = vmatpush1.bf16.msra.mxu0 %v2539
    %3022 = vmatprep.subr.bf16.mxu0 %v2544
    %3023 = vmatpush1.bf16.msra.mxu0 %v2543
    %3024 = vmatprep.subr.bf16.mxu0 %v2548
    %3025 = vmatpush1.bf16.msra.mxu0 %v2547
    %3026 = vmatprep.subr.bf16.mxu0 %v2552
    %3027 = vmatpush1.bf16.msra.mxu0 %v2551
    %3028 = vmatprep.subr.bf16.mxu0 %v2556
    %3029 = vmatpush1.bf16.msra.mxu0 %v2555
    %3030 = vmatprep.subr.bf16.mxu0 %v2560
    %3031 = vmatpush1.bf16.msra.mxu0 %v2559
    %3032 = vmatprep.subr.bf16.mxu0 %v2564
    %3033 = vmatpush1.bf16.msra.mxu0 %v2563
    %3034 = vmatprep.subr.bf16.mxu0 %v2568
    %3035 = vmatpush1.bf16.msra.mxu0 %v2567
    %3036 = vmatprep.subr.bf16.mxu0 %v2572
    %3037 = vmatpush1.bf16.msra.mxu0 %v2571
    %3038 = vmatprep.subr.bf16.mxu0 %v2576
    %3039 = vmatpush1.bf16.msra.mxu0 %v2575
    %3040 = vmatprep.subr.bf16.mxu0 %v2580
    %3041 = vmatpush1.bf16.msra.mxu0 %v2579
    %3042 = vmatprep.subr.bf16.mxu0 %v2584
    %3043 = vmatpush1.bf16.msra.mxu0 %v2583
    %3044 = vmatprep.mubr.bf16.mxu0 %v2186
    %3045 = vmatmul.mubr.bf16.gmra.mrb[0].mxu0 %v2185
    %v3046 = vpop.f32.mrb[0].mxu0
    %v3047 = vadd.f32 %v3006, %v3046
    %v3048 = vpop.f32.mrb[0].mxu0
    %v3049 = vadd.f32 %v3008, %v3048
    %v3050 = vpop.f32.mrb[0].mxu0
    %v3051 = vpop.f32.mrb[0].mxu0
    %3052 = vdwg.mxu0
    %3053 = vmatprep.subr.bf16.mxu0 %v2588
    %3054 = vmatpush1.bf16.msra.mxu0 %v2587
    %3055 = vmatprep.subr.bf16.mxu0 %v2592
    %3056 = vmatpush1.bf16.msra.mxu0 %v2591
    %3057 = vmatprep.subr.bf16.mxu0 %v2596
    %3058 = vmatpush1.bf16.msra.mxu0 %v2595
    %3059 = vmatprep.subr.bf16.mxu0 %v2600
    %3060 = vmatpush1.bf16.msra.mxu0 %v2599
    %3061 = vmatprep.subr.bf16.mxu0 %v2604
    %3062 = vmatpush1.bf16.msra.mxu0 %v2603
    %3063 = vmatprep.subr.bf16.mxu0 %v2608
    %3064 = vmatpush1.bf16.msra.mxu0 %v2607
    %3065 = vmatprep.subr.bf16.mxu0 %v2612
    %3066 = vmatpush1.bf16.msra.mxu0 %v2611
    %3067 = vmatprep.subr.bf16.mxu0 %v2616
    %3068 = vmatpush1.bf16.msra.mxu0 %v2615
    %3069 = vmatprep.subr.bf16.mxu0 %v2620
    %3070 = vmatpush1.bf16.msra.mxu0 %v2619
    %3071 = vmatprep.subr.bf16.mxu0 %v2624
    %3072 = vmatpush1.bf16.msra.mxu0 %v2623
    %3073 = vmatprep.subr.bf16.mxu0 %v2628
    %3074 = vmatpush1.bf16.msra.mxu0 %v2627
    %3075 = vmatprep.subr.bf16.mxu0 %v2632
    %3076 = vmatpush1.bf16.msra.mxu0 %v2631
    %3077 = vmatprep.subr.bf16.mxu0 %v2636
    %3078 = vmatpush1.bf16.msra.mxu0 %v2635
    %3079 = vmatprep.subr.bf16.mxu0 %v2640
    %3080 = vmatpush1.bf16.msra.mxu0 %v2639
    %3081 = vmatprep.subr.bf16.mxu0 %v2644
    %3082 = vmatpush1.bf16.msra.mxu0 %v2643
    %3083 = vmatprep.subr.bf16.mxu0 %v2648
    %3084 = vmatpush1.bf16.msra.mxu0 %v2647
    %3085 = vmatprep.mubr.bf16.mxu0 %v2188
    %3086 = vmatmul.mubr.bf16.gmra.mrb[0].mxu0 %v2187
    %v3087 = vpop.f32.mrb[0].mxu0
    %v3088 = vadd.f32 %v3047, %v3087
    %v3089 = vpop.f32.mrb[0].mxu0
    %v3090 = vadd.f32 %v3049, %v3089
    %v3091 = vpop.f32.mrb[0].mxu0
    %v3092 = vpop.f32.mrb[0].mxu0
    %3093 = vdwg.mxu0
    %3094 = vmatprep.subr.bf16.mxu0 %v2652
    %3095 = vmatpush1.bf16.msra.mxu0 %v2651
    %3096 = vmatprep.subr.bf16.mxu0 %v2656
    %3097 = vmatpush1.bf16.msra.mxu0 %v2655
    %3098 = vmatprep.subr.bf16.mxu0 %v2660
    %3099 = vmatpush1.bf16.msra.mxu0 %v2659
    %3100 = vmatprep.subr.bf16.mxu0 %v2664
    %3101 = vmatpush1.bf16.msra.mxu0 %v2663
    %3102 = vmatprep.subr.bf16.mxu0 %v2668
    %3103 = vmatpush1.bf16.msra.mxu0 %v2667
    %3104 = vmatprep.subr.bf16.mxu0 %v2672
    %3105 = vmatpush1.bf16.msra.mxu0 %v2671
    %3106 = vmatprep.subr.bf16.mxu0 %v2676
    %3107 = vmatpush1.bf16.msra.mxu0 %v2675
    %3108 = vmatprep.subr.bf16.mxu0 %v2680
    %3109 = vmatpush1.bf16.msra.mxu0 %v2679
    %3110 = vmatprep.subr.bf16.mxu0 %v2684
    %3111 = vmatpush1.bf16.msra.mxu0 %v2683
    %3112 = vmatprep.subr.bf16.mxu0 %v2688
    %3113 = vmatpush1.bf16.msra.mxu0 %v2687
    %3114 = vmatprep.subr.bf16.mxu0 %v2692
    %3115 = vmatpush1.bf16.msra.mxu0 %v2691
    %3116 = vmatprep.subr.bf16.mxu0 %v2696
    %3117 = vmatpush1.bf16.msra.mxu0 %v2695
    %3118 = vmatprep.subr.bf16.mxu0 %v2700
    %3119 = vmatpush1.bf16.msra.mxu0 %v2699
    %3120 = vmatprep.subr.bf16.mxu0 %v2704
    %3121 = vmatpush1.bf16.msra.mxu0 %v2703
    %3122 = vmatprep.subr.bf16.mxu0 %v2708
    %3123 = vmatpush1.bf16.msra.mxu0 %v2707
    %3124 = vmatprep.subr.bf16.mxu0 %v2712
    %3125 = vmatpush1.bf16.msra.mxu0 %v2711
    %3126 = vmatprep.mubr.bf16.mxu0 %v2190
    %3127 = vmatmul.mubr.bf16.gmra.mrb[0].mxu0 %v2189
    %v3128 = vpop.f32.mrb[0].mxu0
    %v3129 = vadd.f32 %v3088, %v3128
    %v3130 = vpop.f32.mrb[0].mxu0
    %v3131 = vadd.f32 %v3090, %v3130
    %v3132 = vpop.f32.mrb[0].mxu0
    %v3133 = vpop.f32.mrb[0].mxu0
    %3134 = vdwg.mxu0
    %3135 = vmatprep.subr.bf16.mxu0 %v2716
    %3136 = vmatpush1.bf16.msra.mxu0 %v2715
    %3137 = vmatprep.subr.bf16.mxu0 %v2720
    %3138 = vmatpush1.bf16.msra.mxu0 %v2719
    %3139 = vmatprep.subr.bf16.mxu0 %v2724
    %3140 = vmatpush1.bf16.msra.mxu0 %v2723
    %3141 = vmatprep.subr.bf16.mxu0 %v2728
    %3142 = vmatpush1.bf16.msra.mxu0 %v2727
    %3143 = vmatprep.subr.bf16.mxu0 %v2732
    %3144 = vmatpush1.bf16.msra.mxu0 %v2731
    %3145 = vmatprep.subr.bf16.mxu0 %v2736
    %3146 = vmatpush1.bf16.msra.mxu0 %v2735
    %3147 = vmatprep.subr.bf16.mxu0 %v2740
    %3148 = vmatpush1.bf16.msra.mxu0 %v2739
    %3149 = vmatprep.subr.bf16.mxu0 %v2744
    %3150 = vmatpush1.bf16.msra.mxu0 %v2743
    %3151 = vmatprep.subr.bf16.mxu0 %v2748
    %3152 = vmatpush1.bf16.msra.mxu0 %v2747
    %3153 = vmatprep.subr.bf16.mxu0 %v2752
    %3154 = vmatpush1.bf16.msra.mxu0 %v2751
    %3155 = vmatprep.subr.bf16.mxu0 %v2756
    %3156 = vmatpush1.bf16.msra.mxu0 %v2755
    %3157 = vmatprep.subr.bf16.mxu0 %v2760
    %3158 = vmatpush1.bf16.msra.mxu0 %v2759
    %3159 = vmatprep.subr.bf16.mxu0 %v2764
    %3160 = vmatpush1.bf16.msra.mxu0 %v2763
    %3161 = vmatprep.subr.bf16.mxu0 %v2768
    %3162 = vmatpush1.bf16.msra.mxu0 %v2767
    %3163 = vmatprep.subr.bf16.mxu0 %v2772
    %3164 = vmatpush1.bf16.msra.mxu0 %v2771
    %3165 = vmatprep.subr.bf16.mxu0 %v2776
    %3166 = vmatpush1.bf16.msra.mxu0 %v2775
    %3167 = vmatprep.mubr.bf16.mxu0 %v2192
    %3168 = vmatmul.mubr.bf16.gmra.mrb[0].mxu0 %v2191
    %v3169 = vpop.f32.mrb[0].mxu0
    %v3170 = vadd.f32 %v3129, %v3169
    %v3171 = vpop.f32.mrb[0].mxu0
    %v3172 = vadd.f32 %v3131, %v3171
    %v3173 = vpop.f32.mrb[0].mxu0
    %v3174 = vpop.f32.mrb[0].mxu0
    %3175 = vdwg.mxu0
    %3176 = vmatprep.subr.bf16.mxu0 %v2780
    %3177 = vmatpush1.bf16.msra.mxu0 %v2779
    %3178 = vmatprep.subr.bf16.mxu0 %v2784
    %3179 = vmatpush1.bf16.msra.mxu0 %v2783
    %3180 = vmatprep.subr.bf16.mxu0 %v2788
    %3181 = vmatpush1.bf16.msra.mxu0 %v2787
    %3182 = vmatprep.subr.bf16.mxu0 %v2792
    %3183 = vmatpush1.bf16.msra.mxu0 %v2791
    %3184 = vmatprep.subr.bf16.mxu0 %v2796
    %3185 = vmatpush1.bf16.msra.mxu0 %v2795
    %3186 = vmatprep.subr.bf16.mxu0 %v2800
    %3187 = vmatpush1.bf16.msra.mxu0 %v2799
    %3188 = vmatprep.subr.bf16.mxu0 %v2804
    %3189 = vmatpush1.bf16.msra.mxu0 %v2803
    %3190 = vmatprep.subr.bf16.mxu0 %v2808
    %3191 = vmatpush1.bf16.msra.mxu0 %v2807
    %3192 = vmatprep.subr.bf16.mxu0 %v2812
    %3193 = vmatpush1.bf16.msra.mxu0 %v2811
    %3194 = vmatprep.subr.bf16.mxu0 %v2816
    %3195 = vmatpush1.bf16.msra.mxu0 %v2815
    %3196 = vmatprep.subr.bf16.mxu0 %v2820
    %3197 = vmatpush1.bf16.msra.mxu0 %v2819
    %3198 = vmatprep.subr.bf16.mxu0 %v2824
    %3199 = vmatpush1.bf16.msra.mxu0 %v2823
    %3200 = vmatprep.subr.bf16.mxu0 %v2828
    %3201 = vmatpush1.bf16.msra.mxu0 %v2827
    %3202 = vmatprep.subr.bf16.mxu0 %v2832
    %3203 = vmatpush1.bf16.msra.mxu0 %v2831
    %3204 = vmatprep.subr.bf16.mxu0 %v2836
    %3205 = vmatpush1.bf16.msra.mxu0 %v2835
    %3206 = vmatprep.subr.bf16.mxu0 %v2840
    %3207 = vmatpush1.bf16.msra.mxu0 %v2839
    %3208 = vmatprep.mubr.bf16.mxu0 %v2194
    %3209 = vmatmul.mubr.bf16.gmra.mrb[0].mxu0 %v2193
    %v3210 = vpop.f32.mrb[0].mxu0
    %v3211 = vadd.f32 %v3170, %v3210
    %v3212 = vpop.f32.mrb[0].mxu0
    %v3213 = vadd.f32 %v3172, %v3212
    %v3214 = vpop.f32.mrb[0].mxu0
    %v3215 = vpop.f32.mrb[0].mxu0
    %3216 = vdwg.mxu0
    %3217 = vmatprep.subr.bf16.mxu0 %v2844
    %3218 = vmatpush1.bf16.msra.mxu0 %v2843
    %3219 = vmatprep.subr.bf16.mxu0 %v2848
    %3220 = vmatpush1.bf16.msra.mxu0 %v2847
    %3221 = vmatprep.subr.bf16.mxu0 %v2852
    %3222 = vmatpush1.bf16.msra.mxu0 %v2851
    %3223 = vmatprep.subr.bf16.mxu0 %v2856
    %3224 = vmatpush1.bf16.msra.mxu0 %v2855
    %3225 = vmatprep.subr.bf16.mxu0 %v2860
    %3226 = vmatpush1.bf16.msra.mxu0 %v2859
    %3227 = vmatprep.subr.bf16.mxu0 %v2864
    %3228 = vmatpush1.bf16.msra.mxu0 %v2863
    %3229 = vmatprep.subr.bf16.mxu0 %v2868
    %3230 = vmatpush1.bf16.msra.mxu0 %v2867
    %3231 = vmatprep.subr.bf16.mxu0 %v2872
    %3232 = vmatpush1.bf16.msra.mxu0 %v2871
    %3233 = vmatprep.subr.bf16.mxu0 %v2876
    %3234 = vmatpush1.bf16.msra.mxu0 %v2875
    %3235 = vmatprep.subr.bf16.mxu0 %v2880
    %3236 = vmatpush1.bf16.msra.mxu0 %v2879
    %3237 = vmatprep.subr.bf16.mxu0 %v2884
    %3238 = vmatpush1.bf16.msra.mxu0 %v2883
    %3239 = vmatprep.subr.bf16.mxu0 %v2888
    %3240 = vmatpush1.bf16.msra.mxu0 %v2887
    %3241 = vmatprep.subr.bf16.mxu0 %v2892
    %3242 = vmatpush1.bf16.msra.mxu0 %v2891
    %3243 = vmatprep.subr.bf16.mxu0 %v2896
    %3244 = vmatpush1.bf16.msra.mxu0 %v2895
    %3245 = vmatprep.subr.bf16.mxu0 %v2900
    %3246 = vmatpush1.bf16.msra.mxu0 %v2899
    %3247 = vmatprep.subr.bf16.mxu0 %v2904
    %3248 = vmatpush1.bf16.msra.mxu0 %v2903
    %3249 = vmatprep.mubr.bf16.mxu0 %v2196
    %3250 = vmatmul.mubr.bf16.gmra.mrb[0].mxu0 %v2195
    %v3251 = vpop.f32.mrb[0].mxu0
    %v3252 = vadd.f32 %v3211, %v3251
    %v3253 = vpop.f32.mrb[0].mxu0
    %v3254 = vadd.f32 %v3213, %v3253
    %v3255 = vpop.f32.mrb[0].mxu0
    %v3256 = vpop.f32.mrb[0].mxu0
    %3257 = vdwg.mxu0
    %3258 = vmatprep.subr.bf16.mxu0 %v2908
    %3259 = vmatpush1.bf16.msra.mxu0 %v2907
    %3260 = vmatprep.subr.bf16.mxu0 %v2912
    %3261 = vmatpush1.bf16.msra.mxu0 %v2911
    %3262 = vmatprep.subr.bf16.mxu0 %v2916
    %3263 = vmatpush1.bf16.msra.mxu0 %v2915
    %3264 = vmatprep.subr.bf16.mxu0 %v2920
    %3265 = vmatpush1.bf16.msra.mxu0 %v2919
    %3266 = vmatprep.subr.bf16.mxu0 %v2924
    %3267 = vmatpush1.bf16.msra.mxu0 %v2923
    %3268 = vmatprep.subr.bf16.mxu0 %v2928
    %3269 = vmatpush1.bf16.msra.mxu0 %v2927
    %3270 = vmatprep.subr.bf16.mxu0 %v2932
    %3271 = vmatpush1.bf16.msra.mxu0 %v2931
    %3272 = vmatprep.subr.bf16.mxu0 %v2936
    %3273 = vmatpush1.bf16.msra.mxu0 %v2935
    %3274 = vmatprep.subr.bf16.mxu0 %v2940
    %3275 = vmatpush1.bf16.msra.mxu0 %v2939
    %3276 = vmatprep.subr.bf16.mxu0 %v2944
    %3277 = vmatpush1.bf16.msra.mxu0 %v2943
    %3278 = vmatprep.subr.bf16.mxu0 %v2948
    %3279 = vmatpush1.bf16.msra.mxu0 %v2947
    %3280 = vmatprep.subr.bf16.mxu0 %v2952
    %3281 = vmatpush1.bf16.msra.mxu0 %v2951
    %3282 = vmatprep.subr.bf16.mxu0 %v2956
    %3283 = vmatpush1.bf16.msra.mxu0 %v2955
    %3284 = vmatprep.subr.bf16.mxu0 %v2960
    %3285 = vmatpush1.bf16.msra.mxu0 %v2959
    %3286 = vmatprep.subr.bf16.mxu0 %v2964
    %3287 = vmatpush1.bf16.msra.mxu0 %v2963
    %3288 = vmatprep.subr.bf16.mxu0 %v2968
    %3289 = vmatpush1.bf16.msra.mxu0 %v2967
    %3290 = vmatprep.mubr.bf16.mxu0 %v2198
    %3291 = vmatmul.mubr.bf16.gmra.mrb[0].mxu0 %v2197
    %v3292 = vpop.f32.mrb[0].mxu0
    %v3293 = vadd.f32 %v3252, %v3292
    %v3294 = vpop.f32.mrb[0].mxu0
    %v3295 = vadd.f32 %v3254, %v3294
    %v3296 = vpop.f32.mrb[0].mxu0
    %v3297 = vpop.f32.mrb[0].mxu0
    %3298 = vdwg.mxu0
    %3299 = vmatprep.subr.bf16.mxu0 %v2462
    %3300 = vmatpush1.bf16.msra.mxu0 %v2461
    %3301 = vmatprep.subr.bf16.mxu0 %v2466
    %3302 = vmatpush1.bf16.msra.mxu0 %v2465
    %3303 = vmatprep.subr.bf16.mxu0 %v2470
    %3304 = vmatpush1.bf16.msra.mxu0 %v2469
    %3305 = vmatprep.subr.bf16.mxu0 %v2474
    %3306 = vmatpush1.bf16.msra.mxu0 %v2473
    %3307 = vmatprep.subr.bf16.mxu0 %v2478
    %3308 = vmatpush1.bf16.msra.mxu0 %v2477
    %3309 = vmatprep.subr.bf16.mxu0 %v2482
    %3310 = vmatpush1.bf16.msra.mxu0 %v2481
    %3311 = vmatprep.subr.bf16.mxu0 %v2486
    %3312 = vmatpush1.bf16.msra.mxu0 %v2485
    %3313 = vmatprep.subr.bf16.mxu0 %v2490
    %3314 = vmatpush1.bf16.msra.mxu0 %v2489
    %3315 = vmatprep.subr.bf16.mxu0 %v2494
    %3316 = vmatpush1.bf16.msra.mxu0 %v2493
    %3317 = vmatprep.subr.bf16.mxu0 %v2498
    %3318 = vmatpush1.bf16.msra.mxu0 %v2497
    %3319 = vmatprep.subr.bf16.mxu0 %v2502
    %3320 = vmatpush1.bf16.msra.mxu0 %v2501
    %3321 = vmatprep.subr.bf16.mxu0 %v2506
    %3322 = vmatpush1.bf16.msra.mxu0 %v2505
    %3323 = vmatprep.subr.bf16.mxu0 %v2510
    %3324 = vmatpush1.bf16.msra.mxu0 %v2509
    %3325 = vmatprep.subr.bf16.mxu0 %v2514
    %3326 = vmatpush1.bf16.msra.mxu0 %v2513
    %3327 = vmatprep.subr.bf16.mxu0 %v2518
    %3328 = vmatpush1.bf16.msra.mxu0 %v2517
    %3329 = vmatprep.subr.bf16.mxu0 %v2522
    %3330 = vmatpush1.bf16.msra.mxu0 %v2521
    %3331 = vmatprep.mubr.bf16.mxu0 %v2184
    %3332 = vmatmul.mubr.bf16.gmra.mrb[0].mxu0 %v2183
    %v3333 = vpop.f32.mrb[0].mxu0
    %v3334 = vadd.f32 0.0, %v3333
    %v3335 = vpop.f32.mrb[0].mxu0
    %v3336 = vadd.f32 0.0, %v3335
    %v3337 = vpop.f32.mrb[0].mxu0
    %v3338 = vpop.f32.mrb[0].mxu0
    %3339 = vdwg.mxu0
    %3340 = vmatprep.subr.bf16.mxu0 %v2526
    %3341 = vmatpush1.bf16.msra.mxu0 %v2525
    %3342 = vmatprep.subr.bf16.mxu0 %v2530
    %3343 = vmatpush1.bf16.msra.mxu0 %v2529
    %3344 = vmatprep.subr.bf16.mxu0 %v2534
    %3345 = vmatpush1.bf16.msra.mxu0 %v2533
    %3346 = vmatprep.subr.bf16.mxu0 %v2538
    %3347 = vmatpush1.bf16.msra.mxu0 %v2537
    %3348 = vmatprep.subr.bf16.mxu0 %v2542
    %3349 = vmatpush1.bf16.msra.mxu0 %v2541
    %3350 = vmatprep.subr.bf16.mxu0 %v2546
    %3351 = vmatpush1.bf16.msra.mxu0 %v2545
    %3352 = vmatprep.subr.bf16.mxu0 %v2550
    %3353 = vmatpush1.bf16.msra.mxu0 %v2549
    %3354 = vmatprep.subr.bf16.mxu0 %v2554
    %3355 = vmatpush1.bf16.msra.mxu0 %v2553
    %3356 = vmatprep.subr.bf16.mxu0 %v2558
    %3357 = vmatpush1.bf16.msra.mxu0 %v2557
    %3358 = vmatprep.subr.bf16.mxu0 %v2562
    %3359 = vmatpush1.bf16.msra.mxu0 %v2561
    %3360 = vmatprep.subr.bf16.mxu0 %v2566
    %3361 = vmatpush1.bf16.msra.mxu0 %v2565
    %3362 = vmatprep.subr.bf16.mxu0 %v2570
    %3363 = vmatpush1.bf16.msra.mxu0 %v2569
    %3364 = vmatprep.subr.bf16.mxu0 %v2574
    %3365 = vmatpush1.bf16.msra.mxu0 %v2573
    %3366 = vmatprep.subr.bf16.mxu0 %v2578
    %3367 = vmatpush1.bf16.msra.mxu0 %v2577
    %3368 = vmatprep.subr.bf16.mxu0 %v2582
    %3369 = vmatpush1.bf16.msra.mxu0 %v2581
    %3370 = vmatprep.subr.bf16.mxu0 %v2586
    %3371 = vmatpush1.bf16.msra.mxu0 %v2585
    %3372 = vmatprep.mubr.bf16.mxu0 %v2186
    %3373 = vmatmul.mubr.bf16.gmra.mrb[0].mxu0 %v2185
    %v3374 = vpop.f32.mrb[0].mxu0
    %v3375 = vadd.f32 %v3334, %v3374
    %v3376 = vpop.f32.mrb[0].mxu0
    %v3377 = vadd.f32 %v3336, %v3376
    %v3378 = vpop.f32.mrb[0].mxu0
    %v3379 = vpop.f32.mrb[0].mxu0
    %3380 = vdwg.mxu0
    %3381 = vmatprep.subr.bf16.mxu0 %v2590
    %3382 = vmatpush1.bf16.msra.mxu0 %v2589
    %3383 = vmatprep.subr.bf16.mxu0 %v2594
    %3384 = vmatpush1.bf16.msra.mxu0 %v2593
    %3385 = vmatprep.subr.bf16.mxu0 %v2598
    %3386 = vmatpush1.bf16.msra.mxu0 %v2597
    %3387 = vmatprep.subr.bf16.mxu0 %v2602
    %3388 = vmatpush1.bf16.msra.mxu0 %v2601
    %3389 = vmatprep.subr.bf16.mxu0 %v2606
    %3390 = vmatpush1.bf16.msra.mxu0 %v2605
    %3391 = vmatprep.subr.bf16.mxu0 %v2610
    %3392 = vmatpush1.bf16.msra.mxu0 %v2609
    %3393 = vmatprep.subr.bf16.mxu0 %v2614
    %3394 = vmatpush1.bf16.msra.mxu0 %v2613
    %3395 = vmatprep.subr.bf16.mxu0 %v2618
    %3396 = vmatpush1.bf16.msra.mxu0 %v2617
    %3397 = vmatprep.subr.bf16.mxu0 %v2622
    %3398 = vmatpush1.bf16.msra.mxu0 %v2621
    %3399 = vmatprep.subr.bf16.mxu0 %v2626
    %3400 = vmatpush1.bf16.msra.mxu0 %v2625
    %3401 = vmatprep.subr.bf16.mxu0 %v2630
    %3402 = vmatpush1.bf16.msra.mxu0 %v2629
    %3403 = vmatprep.subr.bf16.mxu0 %v2634
    %3404 = vmatpush1.bf16.msra.mxu0 %v2633
    %3405 = vmatprep.subr.bf16.mxu0 %v2638
    %3406 = vmatpush1.bf16.msra.mxu0 %v2637
    %3407 = vmatprep.subr.bf16.mxu0 %v2642
    %3408 = vmatpush1.bf16.msra.mxu0 %v2641
    %3409 = vmatprep.subr.bf16.mxu0 %v2646
    %3410 = vmatpush1.bf16.msra.mxu0 %v2645
    %3411 = vmatprep.subr.bf16.mxu0 %v2650
    %3412 = vmatpush1.bf16.msra.mxu0 %v2649
    %3413 = vmatprep.mubr.bf16.mxu0 %v2188
    %3414 = vmatmul.mubr.bf16.gmra.mrb[0].mxu0 %v2187
    %v3415 = vpop.f32.mrb[0].mxu0
    %v3416 = vadd.f32 %v3375, %v3415
    %v3417 = vpop.f32.mrb[0].mxu0
    %v3418 = vadd.f32 %v3377, %v3417
    %v3419 = vpop.f32.mrb[0].mxu0
    %v3420 = vpop.f32.mrb[0].mxu0
    %3421 = vdwg.mxu0
    %3422 = vmatprep.subr.bf16.mxu0 %v2654
    %3423 = vmatpush1.bf16.msra.mxu0 %v2653
    %3424 = vmatprep.subr.bf16.mxu0 %v2658
    %3425 = vmatpush1.bf16.msra.mxu0 %v2657
    %3426 = vmatprep.subr.bf16.mxu0 %v2662
    %3427 = vmatpush1.bf16.msra.mxu0 %v2661
    %3428 = vmatprep.subr.bf16.mxu0 %v2666
    %3429 = vmatpush1.bf16.msra.mxu0 %v2665
    %3430 = vmatprep.subr.bf16.mxu0 %v2670
    %3431 = vmatpush1.bf16.msra.mxu0 %v2669
    %3432 = vmatprep.subr.bf16.mxu0 %v2674
    %3433 = vmatpush1.bf16.msra.mxu0 %v2673
    %3434 = vmatprep.subr.bf16.mxu0 %v2678
    %3435 = vmatpush1.bf16.msra.mxu0 %v2677
    %3436 = vmatprep.subr.bf16.mxu0 %v2682
    %3437 = vmatpush1.bf16.msra.mxu0 %v2681
    %3438 = vmatprep.subr.bf16.mxu0 %v2686
    %3439 = vmatpush1.bf16.msra.mxu0 %v2685
    %3440 = vmatprep.subr.bf16.mxu0 %v2690
    %3441 = vmatpush1.bf16.msra.mxu0 %v2689
    %3442 = vmatprep.subr.bf16.mxu0 %v2694
    %3443 = vmatpush1.bf16.msra.mxu0 %v2693
    %3444 = vmatprep.subr.bf16.mxu0 %v2698
    %3445 = vmatpush1.bf16.msra.mxu0 %v2697
    %3446 = vmatprep.subr.bf16.mxu0 %v2702
    %3447 = vmatpush1.bf16.msra.mxu0 %v2701
    %3448 = vmatprep.subr.bf16.mxu0 %v2706
    %3449 = vmatpush1.bf16.msra.mxu0 %v2705
    %3450 = vmatprep.subr.bf16.mxu0 %v2710
    %3451 = vmatpush1.bf16.msra.mxu0 %v2709
    %3452 = vmatprep.subr.bf16.mxu0 %v2714
    %3453 = vmatpush1.bf16.msra.mxu0 %v2713
    %3454 = vmatprep.mubr.bf16.mxu0 %v2190
    %3455 = vmatmul.mubr.bf16.gmra.mrb[0].mxu0 %v2189
    %v3456 = vpop.f32.mrb[0].mxu0
    %v3457 = vadd.f32 %v3416, %v3456
    %v3458 = vpop.f32.mrb[0].mxu0
    %v3459 = vadd.f32 %v3418, %v3458
    %v3460 = vpop.f32.mrb[0].mxu0
    %v3461 = vpop.f32.mrb[0].mxu0
    %3462 = vdwg.mxu0
    %3463 = vmatprep.subr.bf16.mxu0 %v2718
    %3464 = vmatpush1.bf16.msra.mxu0 %v2717
    %3465 = vmatprep.subr.bf16.mxu0 %v2722
    %3466 = vmatpush1.bf16.msra.mxu0 %v2721
    %3467 = vmatprep.subr.bf16.mxu0 %v2726
    %3468 = vmatpush1.bf16.msra.mxu0 %v2725
    %3469 = vmatprep.subr.bf16.mxu0 %v2730
    %3470 = vmatpush1.bf16.msra.mxu0 %v2729
    %3471 = vmatprep.subr.bf16.mxu0 %v2734
    %3472 = vmatpush1.bf16.msra.mxu0 %v2733
    %3473 = vmatprep.subr.bf16.mxu0 %v2738
    %3474 = vmatpush1.bf16.msra.mxu0 %v2737
    %3475 = vmatprep.subr.bf16.mxu0 %v2742
    %3476 = vmatpush1.bf16.msra.mxu0 %v2741
    %3477 = vmatprep.subr.bf16.mxu0 %v2746
    %3478 = vmatpush1.bf16.msra.mxu0 %v2745
    %3479 = vmatprep.subr.bf16.mxu0 %v2750
    %3480 = vmatpush1.bf16.msra.mxu0 %v2749
    %3481 = vmatprep.subr.bf16.mxu0 %v2754
    %3482 = vmatpush1.bf16.msra.mxu0 %v2753
    %3483 = vmatprep.subr.bf16.mxu0 %v2758
    %3484 = vmatpush1.bf16.msra.mxu0 %v2757
    %3485 = vmatprep.subr.bf16.mxu0 %v2762
    %3486 = vmatpush1.bf16.msra.mxu0 %v2761
    %3487 = vmatprep.subr.bf16.mxu0 %v2766
    %3488 = vmatpush1.bf16.msra.mxu0 %v2765
    %3489 = vmatprep.subr.bf16.mxu0 %v2770
    %3490 = vmatpush1.bf16.msra.mxu0 %v2769
    %3491 = vmatprep.subr.bf16.mxu0 %v2774
    %3492 = vmatpush1.bf16.msra.mxu0 %v2773
    %3493 = vmatprep.subr.bf16.mxu0 %v2778
    %3494 = vmatpush1.bf16.msra.mxu0 %v2777
    %3495 = vmatprep.mubr.bf16.mxu0 %v2192
    %3496 = vmatmul.mubr.bf16.gmra.mrb[0].mxu0 %v2191
    %v3497 = vpop.f32.mrb[0].mxu0
    %v3498 = vadd.f32 %v3457, %v3497
    %v3499 = vpop.f32.mrb[0].mxu0
    %v3500 = vadd.f32 %v3459, %v3499
    %v3501 = vpop.f32.mrb[0].mxu0
    %v3502 = vpop.f32.mrb[0].mxu0
    %3503 = vdwg.mxu0
    %3504 = vmatprep.subr.bf16.mxu0 %v2782
    %3505 = vmatpush1.bf16.msra.mxu0 %v2781
    %3506 = vmatprep.subr.bf16.mxu0 %v2786
    %3507 = vmatpush1.bf16.msra.mxu0 %v2785
    %3508 = vmatprep.subr.bf16.mxu0 %v2790
    %3509 = vmatpush1.bf16.msra.mxu0 %v2789
    %3510 = vmatprep.subr.bf16.mxu0 %v2794
    %3511 = vmatpush1.bf16.msra.mxu0 %v2793
    %3512 = vmatprep.subr.bf16.mxu0 %v2798
    %3513 = vmatpush1.bf16.msra.mxu0 %v2797
    %3514 = vmatprep.subr.bf16.mxu0 %v2802
    %3515 = vmatpush1.bf16.msra.mxu0 %v2801
    %3516 = vmatprep.subr.bf16.mxu0 %v2806
    %3517 = vmatpush1.bf16.msra.mxu0 %v2805
    %3518 = vmatprep.subr.bf16.mxu0 %v2810
    %3519 = vmatpush1.bf16.msra.mxu0 %v2809
    %3520 = vmatprep.subr.bf16.mxu0 %v2814
    %3521 = vmatpush1.bf16.msra.mxu0 %v2813
    %3522 = vmatprep.subr.bf16.mxu0 %v2818
    %3523 = vmatpush1.bf16.msra.mxu0 %v2817
    %3524 = vmatprep.subr.bf16.mxu0 %v2822
    %3525 = vmatpush1.bf16.msra.mxu0 %v2821
    %3526 = vmatprep.subr.bf16.mxu0 %v2826
    %3527 = vmatpush1.bf16.msra.mxu0 %v2825
    %3528 = vmatprep.subr.bf16.mxu0 %v2830
    %3529 = vmatpush1.bf16.msra.mxu0 %v2829
    %3530 = vmatprep.subr.bf16.mxu0 %v2834
    %3531 = vmatpush1.bf16.msra.mxu0 %v2833
    %3532 = vmatprep.subr.bf16.mxu0 %v2838
    %3533 = vmatpush1.bf16.msra.mxu0 %v2837
    %3534 = vmatprep.subr.bf16.mxu0 %v2842
    %3535 = vmatpush1.bf16.msra.mxu0 %v2841
    %3536 = vmatprep.mubr.bf16.mxu0 %v2194
    %3537 = vmatmul.mubr.bf16.gmra.mrb[0].mxu0 %v2193
    %v3538 = vpop.f32.mrb[0].mxu0
    %v3539 = vadd.f32 %v3498, %v3538
    %v3540 = vpop.f32.mrb[0].mxu0
    %v3541 = vadd.f32 %v3500, %v3540
    %v3542 = vpop.f32.mrb[0].mxu0
    %v3543 = vpop.f32.mrb[0].mxu0
    %3544 = vdwg.mxu0
    %3545 = vmatprep.subr.bf16.mxu0 %v2846
    %3546 = vmatpush1.bf16.msra.mxu0 %v2845
    %3547 = vmatprep.subr.bf16.mxu0 %v2850
    %3548 = vmatpush1.bf16.msra.mxu0 %v2849
    %3549 = vmatprep.subr.bf16.mxu0 %v2854
    %3550 = vmatpush1.bf16.msra.mxu0 %v2853
    %3551 = vmatprep.subr.bf16.mxu0 %v2858
    %3552 = vmatpush1.bf16.msra.mxu0 %v2857
    %3553 = vmatprep.subr.bf16.mxu0 %v2862
    %3554 = vmatpush1.bf16.msra.mxu0 %v2861
    %3555 = vmatprep.subr.bf16.mxu0 %v2866
    %3556 = vmatpush1.bf16.msra.mxu0 %v2865
    %3557 = vmatprep.subr.bf16.mxu0 %v2870
    %3558 = vmatpush1.bf16.msra.mxu0 %v2869
    %3559 = vmatprep.subr.bf16.mxu0 %v2874
    %3560 = vmatpush1.bf16.msra.mxu0 %v2873
    %3561 = vmatprep.subr.bf16.mxu0 %v2878
    %3562 = vmatpush1.bf16.msra.mxu0 %v2877
    %3563 = vmatprep.subr.bf16.mxu0 %v2882
    %3564 = vmatpush1.bf16.msra.mxu0 %v2881
    %3565 = vmatprep.subr.bf16.mxu0 %v2886
    %3566 = vmatpush1.bf16.msra.mxu0 %v2885
    %3567 = vmatprep.subr.bf16.mxu0 %v2890
    %3568 = vmatpush1.bf16.msra.mxu0 %v2889
    %3569 = vmatprep.subr.bf16.mxu0 %v2894
    %3570 = vmatpush1.bf16.msra.mxu0 %v2893
    %3571 = vmatprep.subr.bf16.mxu0 %v2898
    %3572 = vmatpush1.bf16.msra.mxu0 %v2897
    %3573 = vmatprep.subr.bf16.mxu0 %v2902
    %3574 = vmatpush1.bf16.msra.mxu0 %v2901
    %3575 = vmatprep.subr.bf16.mxu0 %v2906
    %3576 = vmatpush1.bf16.msra.mxu0 %v2905
    %3577 = vmatprep.mubr.bf16.mxu0 %v2196
    %3578 = vmatmul.mubr.bf16.gmra.mrb[0].mxu0 %v2195
    %v3579 = vpop.f32.mrb[0].mxu0
    %v3580 = vadd.f32 %v3539, %v3579
    %v3581 = vpop.f32.mrb[0].mxu0
    %v3582 = vadd.f32 %v3541, %v3581
    %v3583 = vpop.f32.mrb[0].mxu0
    %v3584 = vpop.f32.mrb[0].mxu0
    %3585 = vdwg.mxu0
    %3586 = vmatprep.subr.bf16.mxu0 %v2910
    %3587 = vmatpush1.bf16.msra.mxu0 %v2909
    %3588 = vmatprep.subr.bf16.mxu0 %v2914
    %3589 = vmatpush1.bf16.msra.mxu0 %v2913
    %3590 = vmatprep.subr.bf16.mxu0 %v2918
    %3591 = vmatpush1.bf16.msra.mxu0 %v2917
    %3592 = vmatprep.subr.bf16.mxu0 %v2922
    %3593 = vmatpush1.bf16.msra.mxu0 %v2921
    %3594 = vmatprep.subr.bf16.mxu0 %v2926
    %3595 = vmatpush1.bf16.msra.mxu0 %v2925
    %3596 = vmatprep.subr.bf16.mxu0 %v2930
    %3597 = vmatpush1.bf16.msra.mxu0 %v2929
    %3598 = vmatprep.subr.bf16.mxu0 %v2934
    %3599 = vmatpush1.bf16.msra.mxu0 %v2933
    %3600 = vmatprep.subr.bf16.mxu0 %v2938
    %3601 = vmatpush1.bf16.msra.mxu0 %v2937
    %3602 = vmatprep.subr.bf16.mxu0 %v2942
    %3603 = vmatpush1.bf16.msra.mxu0 %v2941
    %3604 = vmatprep.subr.bf16.mxu0 %v2946
    %3605 = vmatpush1.bf16.msra.mxu0 %v2945
    %3606 = vmatprep.subr.bf16.mxu0 %v2950
    %3607 = vmatpush1.bf16.msra.mxu0 %v2949
    %3608 = vmatprep.subr.bf16.mxu0 %v2954
    %3609 = vmatpush1.bf16.msra.mxu0 %v2953
    %3610 = vmatprep.subr.bf16.mxu0 %v2958
    %3611 = vmatpush1.bf16.msra.mxu0 %v2957
    %3612 = vmatprep.subr.bf16.mxu0 %v2962
    %3613 = vmatpush1.bf16.msra.mxu0 %v2961
    %3614 = vmatprep.subr.bf16.mxu0 %v2966
    %3615 = vmatpush1.bf16.msra.mxu0 %v2965
    %3616 = vmatprep.subr.bf16.mxu0 %v2970
    %3617 = vmatpush1.bf16.msra.mxu0 %v2969
    %3618 = vmatprep.mubr.bf16.mxu0 %v2198
    %3619 = vmatmul.mubr.bf16.gmra.mrb[0].mxu0 %v2197
    %v3620 = vpop.f32.mrb[0].mxu0
    %v3621 = vadd.f32 %v3580, %v3620
    %v3622 = vpop.f32.mrb[0].mxu0
    %v3623 = vadd.f32 %v3582, %v3622
    %v3624 = vpop.f32.mrb[0].mxu0
    %v3625 = vpop.f32.mrb[0].mxu0
    %3626 = vdwg.mxu0
    %v3627 = vlaneseq
    %v3628 = vshrl.u32 %v3627, 7
    %v3629 = vsub.s32 6, %v3628
    %v3630 = vrot.slane %v1499, %v3629
    %v3631 = vlaneseq
    %v3632 = vshrl.u32 %v3631, 7
    %v3633 = vsub.s32 6, %v3632
    %v3634 = vrot.slane %v1500, %v3633
    %v3635 = vlaneseq
    %v3636 = vshrl.u32 %v3635, 7
    %v3637 = vsub.s32 6, %v3636
    %v3638 = vrot.slane %v1501, %v3637
    %v3639 = vlaneseq
    %v3640 = vshrl.u32 %v3639, 7
    %v3641 = vsub.s32 6, %v3640
    %v3642 = vrot.slane %v1502, %v3641
    %v3643 = vmul.f32 %v3293, %v3630
    %v3644 = vmul.f32 %v3295, %v3634
    %v3645 = vmul.f32 %v3621, %v3638
    %v3646 = vmul.f32 %v3623, %v3642
    %v3647 = vlaneseq
    %v3648 = vshrl.u32 %v3647, 7
    %v3649 = vsub.s32 1, %v3648
    %v3650 = vrot.slane %v1499, %v3649
    %v3651 = vlaneseq
    %v3652 = vshrl.u32 %v3651, 7
    %v3653 = vsub.s32 1, %v3652
    %v3654 = vrot.slane %v1500, %v3653
    %v3655 = vlaneseq
    %v3656 = vshrl.u32 %v3655, 7
    %v3657 = vsub.s32 1, %v3656
    %v3658 = vrot.slane %v1501, %v3657
    %v3659 = vlaneseq
    %v3660 = vshrl.u32 %v3659, 7
    %v3661 = vsub.s32 1, %v3660
    %v3662 = vrot.slane %v1502, %v3661
    %v3663 = vadd.f32 %v3643, %v3650
    %v3664 = vadd.f32 %v3644, %v3654
    %v3665 = vadd.f32 %v3645, %v3658
    %v3666 = vadd.f32 %v3646, %v3662
    %v3667 = vmax.f32 %v3663, 0.0
    %v3668 = vmax.f32 %v3664, 0.0
    %v3669 = vmax.f32 %v3665, 0.0
    %v3670 = vmax.f32 %v3666, 0.0
    %s3671 = sshll.u32 %s2200, 4
    %3672 = dma.done %s163, %s3671
    %v3673 = vld [vmem:[%s162] sm:$0xff]
    %v3674 = vld [vmem:[%s162 + $0x8] sm:$0xff]
    %v3675 = vld [vmem:[%s162 + $0x10] sm:$0xff]
    %v3676 = vld [vmem:[%s162 + $0x18] sm:$0xff]
    %v3677 = vld [vmem:[%s162 + $0x20] sm:$0xff]
    %v3678 = vld [vmem:[%s162 + $0x28] sm:$0xff]
    %v3679 = vld [vmem:[%s162 + $0x30] sm:$0xff]
    %v3680 = vld [vmem:[%s162 + $0x38] sm:$0xff]
    %v3681 = vld [vmem:[%s162 + $0x40] sm:$0xff]
    %v3682 = vld [vmem:[%s162 + $0x48] sm:$0xff]
    %v3683 = vld [vmem:[%s162 + $0x50] sm:$0xff]
    %v3684 = vld [vmem:[%s162 + $0x58] sm:$0xff]
    %v3685 = vld [vmem:[%s162 + $0x60] sm:$0xff]
    %v3686 = vld [vmem:[%s162 + $0x68] sm:$0xff]
    %v3687 = vld [vmem:[%s162 + $0x70] sm:$0xff]
    %v3688 = vld [vmem:[%s162 + $0x78] sm:$0xff]
    %v3689 = vld [vmem:[%s162 + $0x80] sm:$0xff]
    %v3690 = vld [vmem:[%s162 + $0x88] sm:$0xff]
    %v3691 = vld [vmem:[%s162 + $0x90] sm:$0xff]
    %v3692 = vld [vmem:[%s162 + $0x98] sm:$0xff]
    %v3693 = vld [vmem:[%s162 + $0xa0] sm:$0xff]
    %v3694 = vld [vmem:[%s162 + $0xa8] sm:$0xff]
    %v3695 = vld [vmem:[%s162 + $0xb0] sm:$0xff]
    %v3696 = vld [vmem:[%s162 + $0xb8] sm:$0xff]
    %v3697 = vld [vmem:[%s162 + $0xc0] sm:$0xff]
    %v3698 = vld [vmem:[%s162 + $0xc8] sm:$0xff]
    %v3699 = vld [vmem:[%s162 + $0xd0] sm:$0xff]
    %v3700 = vld [vmem:[%s162 + $0xd8] sm:$0xff]
    %v3701 = vld [vmem:[%s162 + $0xe0] sm:$0xff]
    %v3702 = vld [vmem:[%s162 + $0xe8] sm:$0xff]
    %v3703 = vld [vmem:[%s162 + $0xf0] sm:$0xff]
    %v3704 = vld [vmem:[%s162 + $0xf8] sm:$0xff]
    %v3705 = vld [vmem:[%s162 + $0x100] sm:$0xff]
    %v3706 = vld [vmem:[%s162 + $0x108] sm:$0xff]
    %v3707 = vld [vmem:[%s162 + $0x110] sm:$0xff]
    %v3708 = vld [vmem:[%s162 + $0x118] sm:$0xff]
    %v3709 = vld [vmem:[%s162 + $0x120] sm:$0xff]
    %v3710 = vld [vmem:[%s162 + $0x128] sm:$0xff]
    %v3711 = vld [vmem:[%s162 + $0x130] sm:$0xff]
    %v3712 = vld [vmem:[%s162 + $0x138] sm:$0xff]
    %v3713 = vld [vmem:[%s162 + $0x140] sm:$0xff]
    %v3714 = vld [vmem:[%s162 + $0x148] sm:$0xff]
    %v3715 = vld [vmem:[%s162 + $0x150] sm:$0xff]
    %v3716 = vld [vmem:[%s162 + $0x158] sm:$0xff]
    %v3717 = vld [vmem:[%s162 + $0x160] sm:$0xff]
    %v3718 = vld [vmem:[%s162 + $0x168] sm:$0xff]
    %v3719 = vld [vmem:[%s162 + $0x170] sm:$0xff]
    %v3720 = vld [vmem:[%s162 + $0x178] sm:$0xff]
    %v3721 = vld [vmem:[%s162 + $0x180] sm:$0xff]
    %v3722 = vld [vmem:[%s162 + $0x188] sm:$0xff]
    %v3723 = vld [vmem:[%s162 + $0x190] sm:$0xff]
    %v3724 = vld [vmem:[%s162 + $0x198] sm:$0xff]
    %v3725 = vld [vmem:[%s162 + $0x1a0] sm:$0xff]
    %v3726 = vld [vmem:[%s162 + $0x1a8] sm:$0xff]
    %v3727 = vld [vmem:[%s162 + $0x1b0] sm:$0xff]
    %v3728 = vld [vmem:[%s162 + $0x1b8] sm:$0xff]
    %v3729 = vld [vmem:[%s162 + $0x1c0] sm:$0xff]
    %v3730 = vld [vmem:[%s162 + $0x1c8] sm:$0xff]
    %v3731 = vld [vmem:[%s162 + $0x1d0] sm:$0xff]
    %v3732 = vld [vmem:[%s162 + $0x1d8] sm:$0xff]
    %v3733 = vld [vmem:[%s162 + $0x1e0] sm:$0xff]
    %v3734 = vld [vmem:[%s162 + $0x1e8] sm:$0xff]
    %v3735 = vld [vmem:[%s162 + $0x1f0] sm:$0xff]
    %v3736 = vld [vmem:[%s162 + $0x1f8] sm:$0xff]
    %v3737 = vld [vmem:[%s162 + $0x200] sm:$0xff]
    %v3738 = vld [vmem:[%s162 + $0x208] sm:$0xff]
    %v3739 = vld [vmem:[%s162 + $0x210] sm:$0xff]
    %v3740 = vld [vmem:[%s162 + $0x218] sm:$0xff]
    %v3741 = vld [vmem:[%s162 + $0x220] sm:$0xff]
    %v3742 = vld [vmem:[%s162 + $0x228] sm:$0xff]
    %v3743 = vld [vmem:[%s162 + $0x230] sm:$0xff]
    %v3744 = vld [vmem:[%s162 + $0x238] sm:$0xff]
    %v3745 = vld [vmem:[%s162 + $0x240] sm:$0xff]
    %v3746 = vld [vmem:[%s162 + $0x248] sm:$0xff]
    %v3747 = vld [vmem:[%s162 + $0x250] sm:$0xff]
    %v3748 = vld [vmem:[%s162 + $0x258] sm:$0xff]
    %v3749 = vld [vmem:[%s162 + $0x260] sm:$0xff]
    %v3750 = vld [vmem:[%s162 + $0x268] sm:$0xff]
    %v3751 = vld [vmem:[%s162 + $0x270] sm:$0xff]
    %v3752 = vld [vmem:[%s162 + $0x278] sm:$0xff]
    %v3753 = vld [vmem:[%s162 + $0x280] sm:$0xff]
    %v3754 = vld [vmem:[%s162 + $0x288] sm:$0xff]
    %v3755 = vld [vmem:[%s162 + $0x290] sm:$0xff]
    %v3756 = vld [vmem:[%s162 + $0x298] sm:$0xff]
    %v3757 = vld [vmem:[%s162 + $0x2a0] sm:$0xff]
    %v3758 = vld [vmem:[%s162 + $0x2a8] sm:$0xff]
    %v3759 = vld [vmem:[%s162 + $0x2b0] sm:$0xff]
    %v3760 = vld [vmem:[%s162 + $0x2b8] sm:$0xff]
    %v3761 = vld [vmem:[%s162 + $0x2c0] sm:$0xff]
    %v3762 = vld [vmem:[%s162 + $0x2c8] sm:$0xff]
    %v3763 = vld [vmem:[%s162 + $0x2d0] sm:$0xff]
    %v3764 = vld [vmem:[%s162 + $0x2d8] sm:$0xff]
    %v3765 = vld [vmem:[%s162 + $0x2e0] sm:$0xff]
    %v3766 = vld [vmem:[%s162 + $0x2e8] sm:$0xff]
    %v3767 = vld [vmem:[%s162 + $0x2f0] sm:$0xff]
    %v3768 = vld [vmem:[%s162 + $0x2f8] sm:$0xff]
    %v3769 = vld [vmem:[%s162 + $0x300] sm:$0xff]
    %v3770 = vld [vmem:[%s162 + $0x308] sm:$0xff]
    %v3771 = vld [vmem:[%s162 + $0x310] sm:$0xff]
    %v3772 = vld [vmem:[%s162 + $0x318] sm:$0xff]
    %v3773 = vld [vmem:[%s162 + $0x320] sm:$0xff]
    %v3774 = vld [vmem:[%s162 + $0x328] sm:$0xff]
    %v3775 = vld [vmem:[%s162 + $0x330] sm:$0xff]
    %v3776 = vld [vmem:[%s162 + $0x338] sm:$0xff]
    %v3777 = vld [vmem:[%s162 + $0x340] sm:$0xff]
    %v3778 = vld [vmem:[%s162 + $0x348] sm:$0xff]
    %v3779 = vld [vmem:[%s162 + $0x350] sm:$0xff]
    %v3780 = vld [vmem:[%s162 + $0x358] sm:$0xff]
    %v3781 = vld [vmem:[%s162 + $0x360] sm:$0xff]
    %v3782 = vld [vmem:[%s162 + $0x368] sm:$0xff]
    %v3783 = vld [vmem:[%s162 + $0x370] sm:$0xff]
    %v3784 = vld [vmem:[%s162 + $0x378] sm:$0xff]
    %v3785 = vld [vmem:[%s162 + $0x380] sm:$0xff]
    %v3786 = vld [vmem:[%s162 + $0x388] sm:$0xff]
    %v3787 = vld [vmem:[%s162 + $0x390] sm:$0xff]
    %v3788 = vld [vmem:[%s162 + $0x398] sm:$0xff]
    %v3789 = vld [vmem:[%s162 + $0x3a0] sm:$0xff]
    %v3790 = vld [vmem:[%s162 + $0x3a8] sm:$0xff]
    %v3791 = vld [vmem:[%s162 + $0x3b0] sm:$0xff]
    %v3792 = vld [vmem:[%s162 + $0x3b8] sm:$0xff]
    %v3793 = vld [vmem:[%s162 + $0x3c0] sm:$0xff]
    %v3794 = vld [vmem:[%s162 + $0x3c8] sm:$0xff]
    %v3795 = vld [vmem:[%s162 + $0x3d0] sm:$0xff]
    %v3796 = vld [vmem:[%s162 + $0x3d8] sm:$0xff]
    %v3797 = vld [vmem:[%s162 + $0x3e0] sm:$0xff]
    %v3798 = vld [vmem:[%s162 + $0x3e8] sm:$0xff]
    %v3799 = vld [vmem:[%s162 + $0x3f0] sm:$0xff]
    %v3800 = vld [vmem:[%s162 + $0x3f8] sm:$0xff]
    %v3801 = vld [vmem:[%s162 + $0x400] sm:$0xff]
    %v3802 = vld [vmem:[%s162 + $0x408] sm:$0xff]
    %v3803 = vld [vmem:[%s162 + $0x410] sm:$0xff]
    %v3804 = vld [vmem:[%s162 + $0x418] sm:$0xff]
    %v3805 = vld [vmem:[%s162 + $0x420] sm:$0xff]
    %v3806 = vld [vmem:[%s162 + $0x428] sm:$0xff]
    %v3807 = vld [vmem:[%s162 + $0x430] sm:$0xff]
    %v3808 = vld [vmem:[%s162 + $0x438] sm:$0xff]
    %v3809 = vld [vmem:[%s162 + $0x440] sm:$0xff]
    %v3810 = vld [vmem:[%s162 + $0x448] sm:$0xff]
    %v3811 = vld [vmem:[%s162 + $0x450] sm:$0xff]
    %v3812 = vld [vmem:[%s162 + $0x458] sm:$0xff]
    %v3813 = vld [vmem:[%s162 + $0x460] sm:$0xff]
    %v3814 = vld [vmem:[%s162 + $0x468] sm:$0xff]
    %v3815 = vld [vmem:[%s162 + $0x470] sm:$0xff]
    %v3816 = vld [vmem:[%s162 + $0x478] sm:$0xff]
    %v3817 = vld [vmem:[%s162 + $0x480] sm:$0xff]
    %v3818 = vld [vmem:[%s162 + $0x488] sm:$0xff]
    %v3819 = vld [vmem:[%s162 + $0x490] sm:$0xff]
    %v3820 = vld [vmem:[%s162 + $0x498] sm:$0xff]
    %v3821 = vld [vmem:[%s162 + $0x4a0] sm:$0xff]
    %v3822 = vld [vmem:[%s162 + $0x4a8] sm:$0xff]
    %v3823 = vld [vmem:[%s162 + $0x4b0] sm:$0xff]
    %v3824 = vld [vmem:[%s162 + $0x4b8] sm:$0xff]
    %v3825 = vld [vmem:[%s162 + $0x4c0] sm:$0xff]
    %v3826 = vld [vmem:[%s162 + $0x4c8] sm:$0xff]
    %v3827 = vld [vmem:[%s162 + $0x4d0] sm:$0xff]
    %v3828 = vld [vmem:[%s162 + $0x4d8] sm:$0xff]
    %v3829 = vld [vmem:[%s162 + $0x4e0] sm:$0xff]
    %v3830 = vld [vmem:[%s162 + $0x4e8] sm:$0xff]
    %v3831 = vld [vmem:[%s162 + $0x4f0] sm:$0xff]
    %v3832 = vld [vmem:[%s162 + $0x4f8] sm:$0xff]
    %v3833 = vld [vmem:[%s162 + $0x500] sm:$0xff]
    %v3834 = vld [vmem:[%s162 + $0x508] sm:$0xff]
    %v3835 = vld [vmem:[%s162 + $0x510] sm:$0xff]
    %v3836 = vld [vmem:[%s162 + $0x518] sm:$0xff]
    %v3837 = vld [vmem:[%s162 + $0x520] sm:$0xff]
    %v3838 = vld [vmem:[%s162 + $0x528] sm:$0xff]
    %v3839 = vld [vmem:[%s162 + $0x530] sm:$0xff]
    %v3840 = vld [vmem:[%s162 + $0x538] sm:$0xff]
    %v3841 = vld [vmem:[%s162 + $0x540] sm:$0xff]
    %v3842 = vld [vmem:[%s162 + $0x548] sm:$0xff]
    %v3843 = vld [vmem:[%s162 + $0x550] sm:$0xff]
    %v3844 = vld [vmem:[%s162 + $0x558] sm:$0xff]
    %v3845 = vld [vmem:[%s162 + $0x560] sm:$0xff]
    %v3846 = vld [vmem:[%s162 + $0x568] sm:$0xff]
    %v3847 = vld [vmem:[%s162 + $0x570] sm:$0xff]
    %v3848 = vld [vmem:[%s162 + $0x578] sm:$0xff]
    %v3849 = vld [vmem:[%s162 + $0x580] sm:$0xff]
    %v3850 = vld [vmem:[%s162 + $0x588] sm:$0xff]
    %v3851 = vld [vmem:[%s162 + $0x590] sm:$0xff]
    %v3852 = vld [vmem:[%s162 + $0x598] sm:$0xff]
    %v3853 = vld [vmem:[%s162 + $0x5a0] sm:$0xff]
    %v3854 = vld [vmem:[%s162 + $0x5a8] sm:$0xff]
    %v3855 = vld [vmem:[%s162 + $0x5b0] sm:$0xff]
    %v3856 = vld [vmem:[%s162 + $0x5b8] sm:$0xff]
    %v3857 = vld [vmem:[%s162 + $0x5c0] sm:$0xff]
    %v3858 = vld [vmem:[%s162 + $0x5c8] sm:$0xff]
    %v3859 = vld [vmem:[%s162 + $0x5d0] sm:$0xff]
    %v3860 = vld [vmem:[%s162 + $0x5d8] sm:$0xff]
    %v3861 = vld [vmem:[%s162 + $0x5e0] sm:$0xff]
    %v3862 = vld [vmem:[%s162 + $0x5e8] sm:$0xff]
    %v3863 = vld [vmem:[%s162 + $0x5f0] sm:$0xff]
    %v3864 = vld [vmem:[%s162 + $0x5f8] sm:$0xff]
    %v3865 = vld [vmem:[%s162 + $0x600] sm:$0xff]
    %v3866 = vld [vmem:[%s162 + $0x608] sm:$0xff]
    %v3867 = vld [vmem:[%s162 + $0x610] sm:$0xff]
    %v3868 = vld [vmem:[%s162 + $0x618] sm:$0xff]
    %v3869 = vld [vmem:[%s162 + $0x620] sm:$0xff]
    %v3870 = vld [vmem:[%s162 + $0x628] sm:$0xff]
    %v3871 = vld [vmem:[%s162 + $0x630] sm:$0xff]
    %v3872 = vld [vmem:[%s162 + $0x638] sm:$0xff]
    %v3873 = vld [vmem:[%s162 + $0x640] sm:$0xff]
    %v3874 = vld [vmem:[%s162 + $0x648] sm:$0xff]
    %v3875 = vld [vmem:[%s162 + $0x650] sm:$0xff]
    %v3876 = vld [vmem:[%s162 + $0x658] sm:$0xff]
    %v3877 = vld [vmem:[%s162 + $0x660] sm:$0xff]
    %v3878 = vld [vmem:[%s162 + $0x668] sm:$0xff]
    %v3879 = vld [vmem:[%s162 + $0x670] sm:$0xff]
    %v3880 = vld [vmem:[%s162 + $0x678] sm:$0xff]
    %v3881 = vld [vmem:[%s162 + $0x680] sm:$0xff]
    %v3882 = vld [vmem:[%s162 + $0x688] sm:$0xff]
    %v3883 = vld [vmem:[%s162 + $0x690] sm:$0xff]
    %v3884 = vld [vmem:[%s162 + $0x698] sm:$0xff]
    %v3885 = vld [vmem:[%s162 + $0x6a0] sm:$0xff]
    %v3886 = vld [vmem:[%s162 + $0x6a8] sm:$0xff]
    %v3887 = vld [vmem:[%s162 + $0x6b0] sm:$0xff]
    %v3888 = vld [vmem:[%s162 + $0x6b8] sm:$0xff]
    %v3889 = vld [vmem:[%s162 + $0x6c0] sm:$0xff]
    %v3890 = vld [vmem:[%s162 + $0x6c8] sm:$0xff]
    %v3891 = vld [vmem:[%s162 + $0x6d0] sm:$0xff]
    %v3892 = vld [vmem:[%s162 + $0x6d8] sm:$0xff]
    %v3893 = vld [vmem:[%s162 + $0x6e0] sm:$0xff]
    %v3894 = vld [vmem:[%s162 + $0x6e8] sm:$0xff]
    %v3895 = vld [vmem:[%s162 + $0x6f0] sm:$0xff]
    %v3896 = vld [vmem:[%s162 + $0x6f8] sm:$0xff]
    %v3897 = vld [vmem:[%s162 + $0x700] sm:$0xff]
    %v3898 = vld [vmem:[%s162 + $0x708] sm:$0xff]
    %v3899 = vld [vmem:[%s162 + $0x710] sm:$0xff]
    %v3900 = vld [vmem:[%s162 + $0x718] sm:$0xff]
    %v3901 = vld [vmem:[%s162 + $0x720] sm:$0xff]
    %v3902 = vld [vmem:[%s162 + $0x728] sm:$0xff]
    %v3903 = vld [vmem:[%s162 + $0x730] sm:$0xff]
    %v3904 = vld [vmem:[%s162 + $0x738] sm:$0xff]
    %v3905 = vld [vmem:[%s162 + $0x740] sm:$0xff]
    %v3906 = vld [vmem:[%s162 + $0x748] sm:$0xff]
    %v3907 = vld [vmem:[%s162 + $0x750] sm:$0xff]
    %v3908 = vld [vmem:[%s162 + $0x758] sm:$0xff]
    %v3909 = vld [vmem:[%s162 + $0x760] sm:$0xff]
    %v3910 = vld [vmem:[%s162 + $0x768] sm:$0xff]
    %v3911 = vld [vmem:[%s162 + $0x770] sm:$0xff]
    %v3912 = vld [vmem:[%s162 + $0x778] sm:$0xff]
    %v3913 = vld [vmem:[%s162 + $0x780] sm:$0xff]
    %v3914 = vld [vmem:[%s162 + $0x788] sm:$0xff]
    %v3915 = vld [vmem:[%s162 + $0x790] sm:$0xff]
    %v3916 = vld [vmem:[%s162 + $0x798] sm:$0xff]
    %v3917 = vld [vmem:[%s162 + $0x7a0] sm:$0xff]
    %v3918 = vld [vmem:[%s162 + $0x7a8] sm:$0xff]
    %v3919 = vld [vmem:[%s162 + $0x7b0] sm:$0xff]
    %v3920 = vld [vmem:[%s162 + $0x7b8] sm:$0xff]
    %v3921 = vld [vmem:[%s162 + $0x7c0] sm:$0xff]
    %v3922 = vld [vmem:[%s162 + $0x7c8] sm:$0xff]
    %v3923 = vld [vmem:[%s162 + $0x7d0] sm:$0xff]
    %v3924 = vld [vmem:[%s162 + $0x7d8] sm:$0xff]
    %v3925 = vld [vmem:[%s162 + $0x7e0] sm:$0xff]
    %v3926 = vld [vmem:[%s162 + $0x7e8] sm:$0xff]
    %v3927 = vld [vmem:[%s162 + $0x7f0] sm:$0xff]
    %v3928 = vld [vmem:[%s162 + $0x7f8] sm:$0xff]
    %v3929 = vunpack.c.l.s8.bf16 %v3673
    %v3930 = vunpack.c.l.s8.bf16 %v3674
    %v3931 = vunpack.c.l.s8.bf16 %v3675
    %v3932 = vunpack.c.l.s8.bf16 %v3676
    %v3933 = vunpack.c.h.s8.bf16 %v3673
    %v3934 = vunpack.c.h.s8.bf16 %v3674
    %v3935 = vunpack.c.h.s8.bf16 %v3675
    %v3936 = vunpack.c.h.s8.bf16 %v3676
    %v3937 = vunpack.c.l.s8.bf16 %v3677
    %v3938 = vunpack.c.l.s8.bf16 %v3678
    %v3939 = vunpack.c.l.s8.bf16 %v3679
    %v3940 = vunpack.c.l.s8.bf16 %v3680
    %v3941 = vunpack.c.h.s8.bf16 %v3677
    %v3942 = vunpack.c.h.s8.bf16 %v3678
    %v3943 = vunpack.c.h.s8.bf16 %v3679
    %v3944 = vunpack.c.h.s8.bf16 %v3680
    %v3945 = vunpack.c.l.s8.bf16 %v3681
    %v3946 = vunpack.c.l.s8.bf16 %v3682
    %v3947 = vunpack.c.l.s8.bf16 %v3683
    %v3948 = vunpack.c.l.s8.bf16 %v3684
    %v3949 = vunpack.c.h.s8.bf16 %v3681
    %v3950 = vunpack.c.h.s8.bf16 %v3682
    %v3951 = vunpack.c.h.s8.bf16 %v3683
    %v3952 = vunpack.c.h.s8.bf16 %v3684
    %v3953 = vunpack.c.l.s8.bf16 %v3685
    %v3954 = vunpack.c.l.s8.bf16 %v3686
    %v3955 = vunpack.c.l.s8.bf16 %v3687
    %v3956 = vunpack.c.l.s8.bf16 %v3688
    %v3957 = vunpack.c.h.s8.bf16 %v3685
    %v3958 = vunpack.c.h.s8.bf16 %v3686
    %v3959 = vunpack.c.h.s8.bf16 %v3687
    %v3960 = vunpack.c.h.s8.bf16 %v3688
    %v3961 = vunpack.c.l.s8.bf16 %v3689
    %v3962 = vunpack.c.l.s8.bf16 %v3690
    %v3963 = vunpack.c.l.s8.bf16 %v3691
    %v3964 = vunpack.c.l.s8.bf16 %v3692
    %v3965 = vunpack.c.h.s8.bf16 %v3689
    %v3966 = vunpack.c.h.s8.bf16 %v3690
    %v3967 = vunpack.c.h.s8.bf16 %v3691
    %v3968 = vunpack.c.h.s8.bf16 %v3692
    %v3969 = vunpack.c.l.s8.bf16 %v3693
    %v3970 = vunpack.c.l.s8.bf16 %v3694
    %v3971 = vunpack.c.l.s8.bf16 %v3695
    %v3972 = vunpack.c.l.s8.bf16 %v3696
    %v3973 = vunpack.c.h.s8.bf16 %v3693
    %v3974 = vunpack.c.h.s8.bf16 %v3694
    %v3975 = vunpack.c.h.s8.bf16 %v3695
    %v3976 = vunpack.c.h.s8.bf16 %v3696
    %v3977 = vunpack.c.l.s8.bf16 %v3697
    %v3978 = vunpack.c.l.s8.bf16 %v3698
    %v3979 = vunpack.c.l.s8.bf16 %v3699
    %v3980 = vunpack.c.l.s8.bf16 %v3700
    %v3981 = vunpack.c.h.s8.bf16 %v3697
    %v3982 = vunpack.c.h.s8.bf16 %v3698
    %v3983 = vunpack.c.h.s8.bf16 %v3699
    %v3984 = vunpack.c.h.s8.bf16 %v3700
    %v3985 = vunpack.c.l.s8.bf16 %v3701
    %v3986 = vunpack.c.l.s8.bf16 %v3702
    %v3987 = vunpack.c.l.s8.bf16 %v3703
    %v3988 = vunpack.c.l.s8.bf16 %v3704
    %v3989 = vunpack.c.h.s8.bf16 %v3701
    %v3990 = vunpack.c.h.s8.bf16 %v3702
    %v3991 = vunpack.c.h.s8.bf16 %v3703
    %v3992 = vunpack.c.h.s8.bf16 %v3704
    %v3993 = vunpack.c.l.s8.bf16 %v3705
    %v3994 = vunpack.c.l.s8.bf16 %v3706
    %v3995 = vunpack.c.l.s8.bf16 %v3707
    %v3996 = vunpack.c.l.s8.bf16 %v3708
    %v3997 = vunpack.c.h.s8.bf16 %v3705
    %v3998 = vunpack.c.h.s8.bf16 %v3706
    %v3999 = vunpack.c.h.s8.bf16 %v3707
    %v4000 = vunpack.c.h.s8.bf16 %v3708
    %v4001 = vunpack.c.l.s8.bf16 %v3709
    %v4002 = vunpack.c.l.s8.bf16 %v3710
    %v4003 = vunpack.c.l.s8.bf16 %v3711
    %v4004 = vunpack.c.l.s8.bf16 %v3712
    %v4005 = vunpack.c.h.s8.bf16 %v3709
    %v4006 = vunpack.c.h.s8.bf16 %v3710
    %v4007 = vunpack.c.h.s8.bf16 %v3711
    %v4008 = vunpack.c.h.s8.bf16 %v3712
    %v4009 = vunpack.c.l.s8.bf16 %v3713
    %v4010 = vunpack.c.l.s8.bf16 %v3714
    %v4011 = vunpack.c.l.s8.bf16 %v3715
    %v4012 = vunpack.c.l.s8.bf16 %v3716
    %v4013 = vunpack.c.h.s8.bf16 %v3713
    %v4014 = vunpack.c.h.s8.bf16 %v3714
    %v4015 = vunpack.c.h.s8.bf16 %v3715
    %v4016 = vunpack.c.h.s8.bf16 %v3716
    %v4017 = vunpack.c.l.s8.bf16 %v3717
    %v4018 = vunpack.c.l.s8.bf16 %v3718
    %v4019 = vunpack.c.l.s8.bf16 %v3719
    %v4020 = vunpack.c.l.s8.bf16 %v3720
    %v4021 = vunpack.c.h.s8.bf16 %v3717
    %v4022 = vunpack.c.h.s8.bf16 %v3718
    %v4023 = vunpack.c.h.s8.bf16 %v3719
    %v4024 = vunpack.c.h.s8.bf16 %v3720
    %v4025 = vunpack.c.l.s8.bf16 %v3721
    %v4026 = vunpack.c.l.s8.bf16 %v3722
    %v4027 = vunpack.c.l.s8.bf16 %v3723
    %v4028 = vunpack.c.l.s8.bf16 %v3724
    %v4029 = vunpack.c.h.s8.bf16 %v3721
    %v4030 = vunpack.c.h.s8.bf16 %v3722
    %v4031 = vunpack.c.h.s8.bf16 %v3723
    %v4032 = vunpack.c.h.s8.bf16 %v3724
    %v4033 = vunpack.c.l.s8.bf16 %v3725
    %v4034 = vunpack.c.l.s8.bf16 %v3726
    %v4035 = vunpack.c.l.s8.bf16 %v3727
    %v4036 = vunpack.c.l.s8.bf16 %v3728
    %v4037 = vunpack.c.h.s8.bf16 %v3725
    %v4038 = vunpack.c.h.s8.bf16 %v3726
    %v4039 = vunpack.c.h.s8.bf16 %v3727
    %v4040 = vunpack.c.h.s8.bf16 %v3728
    %v4041 = vunpack.c.l.s8.bf16 %v3729
    %v4042 = vunpack.c.l.s8.bf16 %v3730
    %v4043 = vunpack.c.l.s8.bf16 %v3731
    %v4044 = vunpack.c.l.s8.bf16 %v3732
    %v4045 = vunpack.c.h.s8.bf16 %v3729
    %v4046 = vunpack.c.h.s8.bf16 %v3730
    %v4047 = vunpack.c.h.s8.bf16 %v3731
    %v4048 = vunpack.c.h.s8.bf16 %v3732
    %v4049 = vunpack.c.l.s8.bf16 %v3733
    %v4050 = vunpack.c.l.s8.bf16 %v3734
    %v4051 = vunpack.c.l.s8.bf16 %v3735
    %v4052 = vunpack.c.l.s8.bf16 %v3736
    %v4053 = vunpack.c.h.s8.bf16 %v3733
    %v4054 = vunpack.c.h.s8.bf16 %v3734
    %v4055 = vunpack.c.h.s8.bf16 %v3735
    %v4056 = vunpack.c.h.s8.bf16 %v3736
    %v4057 = vunpack.c.l.s8.bf16 %v3737
    %v4058 = vunpack.c.l.s8.bf16 %v3738
    %v4059 = vunpack.c.l.s8.bf16 %v3739
    %v4060 = vunpack.c.l.s8.bf16 %v3740
    %v4061 = vunpack.c.h.s8.bf16 %v3737
    %v4062 = vunpack.c.h.s8.bf16 %v3738
    %v4063 = vunpack.c.h.s8.bf16 %v3739
    %v4064 = vunpack.c.h.s8.bf16 %v3740
    %v4065 = vunpack.c.l.s8.bf16 %v3741
    %v4066 = vunpack.c.l.s8.bf16 %v3742
    %v4067 = vunpack.c.l.s8.bf16 %v3743
    %v4068 = vunpack.c.l.s8.bf16 %v3744
    %v4069 = vunpack.c.h.s8.bf16 %v3741
    %v4070 = vunpack.c.h.s8.bf16 %v3742
    %v4071 = vunpack.c.h.s8.bf16 %v3743
    %v4072 = vunpack.c.h.s8.bf16 %v3744
    %v4073 = vunpack.c.l.s8.bf16 %v3745
    %v4074 = vunpack.c.l.s8.bf16 %v3746
    %v4075 = vunpack.c.l.s8.bf16 %v3747
    %v4076 = vunpack.c.l.s8.bf16 %v3748
    %v4077 = vunpack.c.h.s8.bf16 %v3745
    %v4078 = vunpack.c.h.s8.bf16 %v3746
    %v4079 = vunpack.c.h.s8.bf16 %v3747
    %v4080 = vunpack.c.h.s8.bf16 %v3748
    %v4081 = vunpack.c.l.s8.bf16 %v3749
    %v4082 = vunpack.c.l.s8.bf16 %v3750
    %v4083 = vunpack.c.l.s8.bf16 %v3751
    %v4084 = vunpack.c.l.s8.bf16 %v3752
    %v4085 = vunpack.c.h.s8.bf16 %v3749
    %v4086 = vunpack.c.h.s8.bf16 %v3750
    %v4087 = vunpack.c.h.s8.bf16 %v3751
    %v4088 = vunpack.c.h.s8.bf16 %v3752
    %v4089 = vunpack.c.l.s8.bf16 %v3753
    %v4090 = vunpack.c.l.s8.bf16 %v3754
    %v4091 = vunpack.c.l.s8.bf16 %v3755
    %v4092 = vunpack.c.l.s8.bf16 %v3756
    %v4093 = vunpack.c.h.s8.bf16 %v3753
    %v4094 = vunpack.c.h.s8.bf16 %v3754
    %v4095 = vunpack.c.h.s8.bf16 %v3755
    %v4096 = vunpack.c.h.s8.bf16 %v3756
    %v4097 = vunpack.c.l.s8.bf16 %v3757
    %v4098 = vunpack.c.l.s8.bf16 %v3758
    %v4099 = vunpack.c.l.s8.bf16 %v3759
    %v4100 = vunpack.c.l.s8.bf16 %v3760
    %v4101 = vunpack.c.h.s8.bf16 %v3757
    %v4102 = vunpack.c.h.s8.bf16 %v3758
    %v4103 = vunpack.c.h.s8.bf16 %v3759
    %v4104 = vunpack.c.h.s8.bf16 %v3760
    %v4105 = vunpack.c.l.s8.bf16 %v3761
    %v4106 = vunpack.c.l.s8.bf16 %v3762
    %v4107 = vunpack.c.l.s8.bf16 %v3763
    %v4108 = vunpack.c.l.s8.bf16 %v3764
    %v4109 = vunpack.c.h.s8.bf16 %v3761
    %v4110 = vunpack.c.h.s8.bf16 %v3762
    %v4111 = vunpack.c.h.s8.bf16 %v3763
    %v4112 = vunpack.c.h.s8.bf16 %v3764
    %v4113 = vunpack.c.l.s8.bf16 %v3765
    %v4114 = vunpack.c.l.s8.bf16 %v3766
    %v4115 = vunpack.c.l.s8.bf16 %v3767
    %v4116 = vunpack.c.l.s8.bf16 %v3768
    %v4117 = vunpack.c.h.s8.bf16 %v3765
    %v4118 = vunpack.c.h.s8.bf16 %v3766
    %v4119 = vunpack.c.h.s8.bf16 %v3767
    %v4120 = vunpack.c.h.s8.bf16 %v3768
    %v4121 = vunpack.c.l.s8.bf16 %v3769
    %v4122 = vunpack.c.l.s8.bf16 %v3770
    %v4123 = vunpack.c.l.s8.bf16 %v3771
    %v4124 = vunpack.c.l.s8.bf16 %v3772
    %v4125 = vunpack.c.h.s8.bf16 %v3769
    %v4126 = vunpack.c.h.s8.bf16 %v3770
    %v4127 = vunpack.c.h.s8.bf16 %v3771
    %v4128 = vunpack.c.h.s8.bf16 %v3772
    %v4129 = vunpack.c.l.s8.bf16 %v3773
    %v4130 = vunpack.c.l.s8.bf16 %v3774
    %v4131 = vunpack.c.l.s8.bf16 %v3775
    %v4132 = vunpack.c.l.s8.bf16 %v3776
    %v4133 = vunpack.c.h.s8.bf16 %v3773
    %v4134 = vunpack.c.h.s8.bf16 %v3774
    %v4135 = vunpack.c.h.s8.bf16 %v3775
    %v4136 = vunpack.c.h.s8.bf16 %v3776
    %v4137 = vunpack.c.l.s8.bf16 %v3777
    %v4138 = vunpack.c.l.s8.bf16 %v3778
    %v4139 = vunpack.c.l.s8.bf16 %v3779
    %v4140 = vunpack.c.l.s8.bf16 %v3780
    %v4141 = vunpack.c.h.s8.bf16 %v3777
    %v4142 = vunpack.c.h.s8.bf16 %v3778
    %v4143 = vunpack.c.h.s8.bf16 %v3779
    %v4144 = vunpack.c.h.s8.bf16 %v3780
    %v4145 = vunpack.c.l.s8.bf16 %v3781
    %v4146 = vunpack.c.l.s8.bf16 %v3782
    %v4147 = vunpack.c.l.s8.bf16 %v3783
    %v4148 = vunpack.c.l.s8.bf16 %v3784
    %v4149 = vunpack.c.h.s8.bf16 %v3781
    %v4150 = vunpack.c.h.s8.bf16 %v3782
    %v4151 = vunpack.c.h.s8.bf16 %v3783
    %v4152 = vunpack.c.h.s8.bf16 %v3784
    %v4153 = vunpack.c.l.s8.bf16 %v3785
    %v4154 = vunpack.c.l.s8.bf16 %v3786
    %v4155 = vunpack.c.l.s8.bf16 %v3787
    %v4156 = vunpack.c.l.s8.bf16 %v3788
    %v4157 = vunpack.c.h.s8.bf16 %v3785
    %v4158 = vunpack.c.h.s8.bf16 %v3786
    %v4159 = vunpack.c.h.s8.bf16 %v3787
    %v4160 = vunpack.c.h.s8.bf16 %v3788
    %v4161 = vunpack.c.l.s8.bf16 %v3789
    %v4162 = vunpack.c.l.s8.bf16 %v3790
    %v4163 = vunpack.c.l.s8.bf16 %v3791
    %v4164 = vunpack.c.l.s8.bf16 %v3792
    %v4165 = vunpack.c.h.s8.bf16 %v3789
    %v4166 = vunpack.c.h.s8.bf16 %v3790
    %v4167 = vunpack.c.h.s8.bf16 %v3791
    %v4168 = vunpack.c.h.s8.bf16 %v3792
    %v4169 = vunpack.c.l.s8.bf16 %v3793
    %v4170 = vunpack.c.l.s8.bf16 %v3794
    %v4171 = vunpack.c.l.s8.bf16 %v3795
    %v4172 = vunpack.c.l.s8.bf16 %v3796
    %v4173 = vunpack.c.h.s8.bf16 %v3793
    %v4174 = vunpack.c.h.s8.bf16 %v3794
    %v4175 = vunpack.c.h.s8.bf16 %v3795
    %v4176 = vunpack.c.h.s8.bf16 %v3796
    %v4177 = vunpack.c.l.s8.bf16 %v3797
    %v4178 = vunpack.c.l.s8.bf16 %v3798
    %v4179 = vunpack.c.l.s8.bf16 %v3799
    %v4180 = vunpack.c.l.s8.bf16 %v3800
    %v4181 = vunpack.c.h.s8.bf16 %v3797
    %v4182 = vunpack.c.h.s8.bf16 %v3798
    %v4183 = vunpack.c.h.s8.bf16 %v3799
    %v4184 = vunpack.c.h.s8.bf16 %v3800
    %v4185 = vunpack.c.l.s8.bf16 %v3801
    %v4186 = vunpack.c.l.s8.bf16 %v3802
    %v4187 = vunpack.c.l.s8.bf16 %v3803
    %v4188 = vunpack.c.l.s8.bf16 %v3804
    %v4189 = vunpack.c.h.s8.bf16 %v3801
    %v4190 = vunpack.c.h.s8.bf16 %v3802
    %v4191 = vunpack.c.h.s8.bf16 %v3803
    %v4192 = vunpack.c.h.s8.bf16 %v3804
    %v4193 = vunpack.c.l.s8.bf16 %v3805
    %v4194 = vunpack.c.l.s8.bf16 %v3806
    %v4195 = vunpack.c.l.s8.bf16 %v3807
    %v4196 = vunpack.c.l.s8.bf16 %v3808
    %v4197 = vunpack.c.h.s8.bf16 %v3805
    %v4198 = vunpack.c.h.s8.bf16 %v3806
    %v4199 = vunpack.c.h.s8.bf16 %v3807
    %v4200 = vunpack.c.h.s8.bf16 %v3808
    %v4201 = vunpack.c.l.s8.bf16 %v3809
    %v4202 = vunpack.c.l.s8.bf16 %v3810
    %v4203 = vunpack.c.l.s8.bf16 %v3811
    %v4204 = vunpack.c.l.s8.bf16 %v3812
    %v4205 = vunpack.c.h.s8.bf16 %v3809
    %v4206 = vunpack.c.h.s8.bf16 %v3810
    %v4207 = vunpack.c.h.s8.bf16 %v3811
    %v4208 = vunpack.c.h.s8.bf16 %v3812
    %v4209 = vunpack.c.l.s8.bf16 %v3813
    %v4210 = vunpack.c.l.s8.bf16 %v3814
    %v4211 = vunpack.c.l.s8.bf16 %v3815
    %v4212 = vunpack.c.l.s8.bf16 %v3816
    %v4213 = vunpack.c.h.s8.bf16 %v3813
    %v4214 = vunpack.c.h.s8.bf16 %v3814
    %v4215 = vunpack.c.h.s8.bf16 %v3815
    %v4216 = vunpack.c.h.s8.bf16 %v3816
    %v4217 = vunpack.c.l.s8.bf16 %v3817
    %v4218 = vunpack.c.l.s8.bf16 %v3818
    %v4219 = vunpack.c.l.s8.bf16 %v3819
    %v4220 = vunpack.c.l.s8.bf16 %v3820
    %v4221 = vunpack.c.h.s8.bf16 %v3817
    %v4222 = vunpack.c.h.s8.bf16 %v3818
    %v4223 = vunpack.c.h.s8.bf16 %v3819
    %v4224 = vunpack.c.h.s8.bf16 %v3820
    %v4225 = vunpack.c.l.s8.bf16 %v3821
    %v4226 = vunpack.c.l.s8.bf16 %v3822
    %v4227 = vunpack.c.l.s8.bf16 %v3823
    %v4228 = vunpack.c.l.s8.bf16 %v3824
    %v4229 = vunpack.c.h.s8.bf16 %v3821
    %v4230 = vunpack.c.h.s8.bf16 %v3822
    %v4231 = vunpack.c.h.s8.bf16 %v3823
    %v4232 = vunpack.c.h.s8.bf16 %v3824
    %v4233 = vunpack.c.l.s8.bf16 %v3825
    %v4234 = vunpack.c.l.s8.bf16 %v3826
    %v4235 = vunpack.c.l.s8.bf16 %v3827
    %v4236 = vunpack.c.l.s8.bf16 %v3828
    %v4237 = vunpack.c.h.s8.bf16 %v3825
    %v4238 = vunpack.c.h.s8.bf16 %v3826
    %v4239 = vunpack.c.h.s8.bf16 %v3827
    %v4240 = vunpack.c.h.s8.bf16 %v3828
    %v4241 = vunpack.c.l.s8.bf16 %v3829
    %v4242 = vunpack.c.l.s8.bf16 %v3830
    %v4243 = vunpack.c.l.s8.bf16 %v3831
    %v4244 = vunpack.c.l.s8.bf16 %v3832
    %v4245 = vunpack.c.h.s8.bf16 %v3829
    %v4246 = vunpack.c.h.s8.bf16 %v3830
    %v4247 = vunpack.c.h.s8.bf16 %v3831
    %v4248 = vunpack.c.h.s8.bf16 %v3832
    %v4249 = vunpack.c.l.s8.bf16 %v3833
    %v4250 = vunpack.c.l.s8.bf16 %v3834
    %v4251 = vunpack.c.l.s8.bf16 %v3835
    %v4252 = vunpack.c.l.s8.bf16 %v3836
    %v4253 = vunpack.c.h.s8.bf16 %v3833
    %v4254 = vunpack.c.h.s8.bf16 %v3834
    %v4255 = vunpack.c.h.s8.bf16 %v3835
    %v4256 = vunpack.c.h.s8.bf16 %v3836
    %v4257 = vunpack.c.l.s8.bf16 %v3837
    %v4258 = vunpack.c.l.s8.bf16 %v3838
    %v4259 = vunpack.c.l.s8.bf16 %v3839
    %v4260 = vunpack.c.l.s8.bf16 %v3840
    %v4261 = vunpack.c.h.s8.bf16 %v3837
    %v4262 = vunpack.c.h.s8.bf16 %v3838
    %v4263 = vunpack.c.h.s8.bf16 %v3839
    %v4264 = vunpack.c.h.s8.bf16 %v3840
    %v4265 = vunpack.c.l.s8.bf16 %v3841
    %v4266 = vunpack.c.l.s8.bf16 %v3842
    %v4267 = vunpack.c.l.s8.bf16 %v3843
    %v4268 = vunpack.c.l.s8.bf16 %v3844
    %v4269 = vunpack.c.h.s8.bf16 %v3841
    %v4270 = vunpack.c.h.s8.bf16 %v3842
    %v4271 = vunpack.c.h.s8.bf16 %v3843
    %v4272 = vunpack.c.h.s8.bf16 %v3844
    %v4273 = vunpack.c.l.s8.bf16 %v3845
    %v4274 = vunpack.c.l.s8.bf16 %v3846
    %v4275 = vunpack.c.l.s8.bf16 %v3847
    %v4276 = vunpack.c.l.s8.bf16 %v3848
    %v4277 = vunpack.c.h.s8.bf16 %v3845
    %v4278 = vunpack.c.h.s8.bf16 %v3846
    %v4279 = vunpack.c.h.s8.bf16 %v3847
    %v4280 = vunpack.c.h.s8.bf16 %v3848
    %v4281 = vunpack.c.l.s8.bf16 %v3849
    %v4282 = vunpack.c.l.s8.bf16 %v3850
    %v4283 = vunpack.c.l.s8.bf16 %v3851
    %v4284 = vunpack.c.l.s8.bf16 %v3852
    %v4285 = vunpack.c.h.s8.bf16 %v3849
    %v4286 = vunpack.c.h.s8.bf16 %v3850
    %v4287 = vunpack.c.h.s8.bf16 %v3851
    %v4288 = vunpack.c.h.s8.bf16 %v3852
    %v4289 = vunpack.c.l.s8.bf16 %v3853
    %v4290 = vunpack.c.l.s8.bf16 %v3854
    %v4291 = vunpack.c.l.s8.bf16 %v3855
    %v4292 = vunpack.c.l.s8.bf16 %v3856
    %v4293 = vunpack.c.h.s8.bf16 %v3853
    %v4294 = vunpack.c.h.s8.bf16 %v3854
    %v4295 = vunpack.c.h.s8.bf16 %v3855
    %v4296 = vunpack.c.h.s8.bf16 %v3856
    %v4297 = vunpack.c.l.s8.bf16 %v3857
    %v4298 = vunpack.c.l.s8.bf16 %v3858
    %v4299 = vunpack.c.l.s8.bf16 %v3859
    %v4300 = vunpack.c.l.s8.bf16 %v3860
    %v4301 = vunpack.c.h.s8.bf16 %v3857
    %v4302 = vunpack.c.h.s8.bf16 %v3858
    %v4303 = vunpack.c.h.s8.bf16 %v3859
    %v4304 = vunpack.c.h.s8.bf16 %v3860
    %v4305 = vunpack.c.l.s8.bf16 %v3861
    %v4306 = vunpack.c.l.s8.bf16 %v3862
    %v4307 = vunpack.c.l.s8.bf16 %v3863
    %v4308 = vunpack.c.l.s8.bf16 %v3864
    %v4309 = vunpack.c.h.s8.bf16 %v3861
    %v4310 = vunpack.c.h.s8.bf16 %v3862
    %v4311 = vunpack.c.h.s8.bf16 %v3863
    %v4312 = vunpack.c.h.s8.bf16 %v3864
    %v4313 = vunpack.c.l.s8.bf16 %v3865
    %v4314 = vunpack.c.l.s8.bf16 %v3866
    %v4315 = vunpack.c.l.s8.bf16 %v3867
    %v4316 = vunpack.c.l.s8.bf16 %v3868
    %v4317 = vunpack.c.h.s8.bf16 %v3865
    %v4318 = vunpack.c.h.s8.bf16 %v3866
    %v4319 = vunpack.c.h.s8.bf16 %v3867
    %v4320 = vunpack.c.h.s8.bf16 %v3868
    %v4321 = vunpack.c.l.s8.bf16 %v3869
    %v4322 = vunpack.c.l.s8.bf16 %v3870
    %v4323 = vunpack.c.l.s8.bf16 %v3871
    %v4324 = vunpack.c.l.s8.bf16 %v3872
    %v4325 = vunpack.c.h.s8.bf16 %v3869
    %v4326 = vunpack.c.h.s8.bf16 %v3870
    %v4327 = vunpack.c.h.s8.bf16 %v3871
    %v4328 = vunpack.c.h.s8.bf16 %v3872
    %v4329 = vunpack.c.l.s8.bf16 %v3873
    %v4330 = vunpack.c.l.s8.bf16 %v3874
    %v4331 = vunpack.c.l.s8.bf16 %v3875
    %v4332 = vunpack.c.l.s8.bf16 %v3876
    %v4333 = vunpack.c.h.s8.bf16 %v3873
    %v4334 = vunpack.c.h.s8.bf16 %v3874
    %v4335 = vunpack.c.h.s8.bf16 %v3875
    %v4336 = vunpack.c.h.s8.bf16 %v3876
    %v4337 = vunpack.c.l.s8.bf16 %v3877
    %v4338 = vunpack.c.l.s8.bf16 %v3878
    %v4339 = vunpack.c.l.s8.bf16 %v3879
    %v4340 = vunpack.c.l.s8.bf16 %v3880
    %v4341 = vunpack.c.h.s8.bf16 %v3877
    %v4342 = vunpack.c.h.s8.bf16 %v3878
    %v4343 = vunpack.c.h.s8.bf16 %v3879
    %v4344 = vunpack.c.h.s8.bf16 %v3880
    %v4345 = vunpack.c.l.s8.bf16 %v3881
    %v4346 = vunpack.c.l.s8.bf16 %v3882
    %v4347 = vunpack.c.l.s8.bf16 %v3883
    %v4348 = vunpack.c.l.s8.bf16 %v3884
    %v4349 = vunpack.c.h.s8.bf16 %v3881
    %v4350 = vunpack.c.h.s8.bf16 %v3882
    %v4351 = vunpack.c.h.s8.bf16 %v3883
    %v4352 = vunpack.c.h.s8.bf16 %v3884
    %v4353 = vunpack.c.l.s8.bf16 %v3885
    %v4354 = vunpack.c.l.s8.bf16 %v3886
    %v4355 = vunpack.c.l.s8.bf16 %v3887
    %v4356 = vunpack.c.l.s8.bf16 %v3888
    %v4357 = vunpack.c.h.s8.bf16 %v3885
    %v4358 = vunpack.c.h.s8.bf16 %v3886
    %v4359 = vunpack.c.h.s8.bf16 %v3887
    %v4360 = vunpack.c.h.s8.bf16 %v3888
    %v4361 = vunpack.c.l.s8.bf16 %v3889
    %v4362 = vunpack.c.l.s8.bf16 %v3890
    %v4363 = vunpack.c.l.s8.bf16 %v3891
    %v4364 = vunpack.c.l.s8.bf16 %v3892
    %v4365 = vunpack.c.h.s8.bf16 %v3889
    %v4366 = vunpack.c.h.s8.bf16 %v3890
    %v4367 = vunpack.c.h.s8.bf16 %v3891
    %v4368 = vunpack.c.h.s8.bf16 %v3892
    %v4369 = vunpack.c.l.s8.bf16 %v3893
    %v4370 = vunpack.c.l.s8.bf16 %v3894
    %v4371 = vunpack.c.l.s8.bf16 %v3895
    %v4372 = vunpack.c.l.s8.bf16 %v3896
    %v4373 = vunpack.c.h.s8.bf16 %v3893
    %v4374 = vunpack.c.h.s8.bf16 %v3894
    %v4375 = vunpack.c.h.s8.bf16 %v3895
    %v4376 = vunpack.c.h.s8.bf16 %v3896
    %v4377 = vunpack.c.l.s8.bf16 %v3897
    %v4378 = vunpack.c.l.s8.bf16 %v3898
    %v4379 = vunpack.c.l.s8.bf16 %v3899
    %v4380 = vunpack.c.l.s8.bf16 %v3900
    %v4381 = vunpack.c.h.s8.bf16 %v3897
    %v4382 = vunpack.c.h.s8.bf16 %v3898
    %v4383 = vunpack.c.h.s8.bf16 %v3899
    %v4384 = vunpack.c.h.s8.bf16 %v3900
    %v4385 = vunpack.c.l.s8.bf16 %v3901
    %v4386 = vunpack.c.l.s8.bf16 %v3902
    %v4387 = vunpack.c.l.s8.bf16 %v3903
    %v4388 = vunpack.c.l.s8.bf16 %v3904
    %v4389 = vunpack.c.h.s8.bf16 %v3901
    %v4390 = vunpack.c.h.s8.bf16 %v3902
    %v4391 = vunpack.c.h.s8.bf16 %v3903
    %v4392 = vunpack.c.h.s8.bf16 %v3904
    %v4393 = vunpack.c.l.s8.bf16 %v3905
    %v4394 = vunpack.c.l.s8.bf16 %v3906
    %v4395 = vunpack.c.l.s8.bf16 %v3907
    %v4396 = vunpack.c.l.s8.bf16 %v3908
    %v4397 = vunpack.c.h.s8.bf16 %v3905
    %v4398 = vunpack.c.h.s8.bf16 %v3906
    %v4399 = vunpack.c.h.s8.bf16 %v3907
    %v4400 = vunpack.c.h.s8.bf16 %v3908
    %v4401 = vunpack.c.l.s8.bf16 %v3909
    %v4402 = vunpack.c.l.s8.bf16 %v3910
    %v4403 = vunpack.c.l.s8.bf16 %v3911
    %v4404 = vunpack.c.l.s8.bf16 %v3912
    %v4405 = vunpack.c.h.s8.bf16 %v3909
    %v4406 = vunpack.c.h.s8.bf16 %v3910
    %v4407 = vunpack.c.h.s8.bf16 %v3911
    %v4408 = vunpack.c.h.s8.bf16 %v3912
    %v4409 = vunpack.c.l.s8.bf16 %v3913
    %v4410 = vunpack.c.l.s8.bf16 %v3914
    %v4411 = vunpack.c.l.s8.bf16 %v3915
    %v4412 = vunpack.c.l.s8.bf16 %v3916
    %v4413 = vunpack.c.h.s8.bf16 %v3913
    %v4414 = vunpack.c.h.s8.bf16 %v3914
    %v4415 = vunpack.c.h.s8.bf16 %v3915
    %v4416 = vunpack.c.h.s8.bf16 %v3916
    %v4417 = vunpack.c.l.s8.bf16 %v3917
    %v4418 = vunpack.c.l.s8.bf16 %v3918
    %v4419 = vunpack.c.l.s8.bf16 %v3919
    %v4420 = vunpack.c.l.s8.bf16 %v3920
    %v4421 = vunpack.c.h.s8.bf16 %v3917
    %v4422 = vunpack.c.h.s8.bf16 %v3918
    %v4423 = vunpack.c.h.s8.bf16 %v3919
    %v4424 = vunpack.c.h.s8.bf16 %v3920
    %v4425 = vunpack.c.l.s8.bf16 %v3921
    %v4426 = vunpack.c.l.s8.bf16 %v3922
    %v4427 = vunpack.c.l.s8.bf16 %v3923
    %v4428 = vunpack.c.l.s8.bf16 %v3924
    %v4429 = vunpack.c.h.s8.bf16 %v3921
    %v4430 = vunpack.c.h.s8.bf16 %v3922
    %v4431 = vunpack.c.h.s8.bf16 %v3923
    %v4432 = vunpack.c.h.s8.bf16 %v3924
    %v4433 = vunpack.c.l.s8.bf16 %v3925
    %v4434 = vunpack.c.l.s8.bf16 %v3926
    %v4435 = vunpack.c.l.s8.bf16 %v3927
    %v4436 = vunpack.c.l.s8.bf16 %v3928
    %v4437 = vunpack.c.h.s8.bf16 %v3925
    %v4438 = vunpack.c.h.s8.bf16 %v3926
    %v4439 = vunpack.c.h.s8.bf16 %v3927
    %v4440 = vunpack.c.h.s8.bf16 %v3928
    %4441 = vmatprep.subr.bf16.mxu0 %v3930
    %4442 = vmatpush1.bf16.msra.mxu0 %v3929
    %4443 = vmatprep.subr.bf16.mxu0 %v3934
    %4444 = vmatpush1.bf16.msra.mxu0 %v3933
    %4445 = vmatprep.subr.bf16.mxu0 %v3938
    %4446 = vmatpush1.bf16.msra.mxu0 %v3937
    %4447 = vmatprep.subr.bf16.mxu0 %v3942
    %4448 = vmatpush1.bf16.msra.mxu0 %v3941
    %4449 = vmatprep.subr.bf16.mxu0 %v3946
    %4450 = vmatpush1.bf16.msra.mxu0 %v3945
    %4451 = vmatprep.subr.bf16.mxu0 %v3950
    %4452 = vmatpush1.bf16.msra.mxu0 %v3949
    %4453 = vmatprep.subr.bf16.mxu0 %v3954
    %4454 = vmatpush1.bf16.msra.mxu0 %v3953
    %4455 = vmatprep.subr.bf16.mxu0 %v3958
    %4456 = vmatpush1.bf16.msra.mxu0 %v3957
    %4457 = vmatprep.subr.bf16.mxu0 %v3962
    %4458 = vmatpush1.bf16.msra.mxu0 %v3961
    %4459 = vmatprep.subr.bf16.mxu0 %v3966
    %4460 = vmatpush1.bf16.msra.mxu0 %v3965
    %4461 = vmatprep.subr.bf16.mxu0 %v3970
    %4462 = vmatpush1.bf16.msra.mxu0 %v3969
    %4463 = vmatprep.subr.bf16.mxu0 %v3974
    %4464 = vmatpush1.bf16.msra.mxu0 %v3973
    %4465 = vmatprep.subr.bf16.mxu0 %v3978
    %4466 = vmatpush1.bf16.msra.mxu0 %v3977
    %4467 = vmatprep.subr.bf16.mxu0 %v3982
    %4468 = vmatpush1.bf16.msra.mxu0 %v3981
    %4469 = vmatprep.subr.bf16.mxu0 %v3986
    %4470 = vmatpush1.bf16.msra.mxu0 %v3985
    %4471 = vmatprep.subr.bf16.mxu0 %v3990
    %4472 = vmatpush1.bf16.msra.mxu0 %v3989
    %4473 = vmatprep.mubr.bf16.mxu0 %v2184
    %4474 = vmatmul.mubr.bf16.gmra.mrb[0].mxu0 %v2183
    %v4475 = vpop.f32.mrb[0].mxu0
    %v4476 = vadd.f32 0.0, %v4475
    %v4477 = vpop.f32.mrb[0].mxu0
    %v4478 = vadd.f32 0.0, %v4477
    %v4479 = vpop.f32.mrb[0].mxu0
    %v4480 = vpop.f32.mrb[0].mxu0
    %4481 = vdwg.mxu0
    %4482 = vmatprep.subr.bf16.mxu0 %v3994
    %4483 = vmatpush1.bf16.msra.mxu0 %v3993
    %4484 = vmatprep.subr.bf16.mxu0 %v3998
    %4485 = vmatpush1.bf16.msra.mxu0 %v3997
    %4486 = vmatprep.subr.bf16.mxu0 %v4002
    %4487 = vmatpush1.bf16.msra.mxu0 %v4001
    %4488 = vmatprep.subr.bf16.mxu0 %v4006
    %4489 = vmatpush1.bf16.msra.mxu0 %v4005
    %4490 = vmatprep.subr.bf16.mxu0 %v4010
    %4491 = vmatpush1.bf16.msra.mxu0 %v4009
    %4492 = vmatprep.subr.bf16.mxu0 %v4014
    %4493 = vmatpush1.bf16.msra.mxu0 %v4013
    %4494 = vmatprep.subr.bf16.mxu0 %v4018
    %4495 = vmatpush1.bf16.msra.mxu0 %v4017
    %4496 = vmatprep.subr.bf16.mxu0 %v4022
    %4497 = vmatpush1.bf16.msra.mxu0 %v4021
    %4498 = vmatprep.subr.bf16.mxu0 %v4026
    %4499 = vmatpush1.bf16.msra.mxu0 %v4025
    %4500 = vmatprep.subr.bf16.mxu0 %v4030
    %4501 = vmatpush1.bf16.msra.mxu0 %v4029
    %4502 = vmatprep.subr.bf16.mxu0 %v4034
    %4503 = vmatpush1.bf16.msra.mxu0 %v4033
    %4504 = vmatprep.subr.bf16.mxu0 %v4038
    %4505 = vmatpush1.bf16.msra.mxu0 %v4037
    %4506 = vmatprep.subr.bf16.mxu0 %v4042
    %4507 = vmatpush1.bf16.msra.mxu0 %v4041
    %4508 = vmatprep.subr.bf16.mxu0 %v4046
    %4509 = vmatpush1.bf16.msra.mxu0 %v4045
    %4510 = vmatprep.subr.bf16.mxu0 %v4050
    %4511 = vmatpush1.bf16.msra.mxu0 %v4049
    %4512 = vmatprep.subr.bf16.mxu0 %v4054
    %4513 = vmatpush1.bf16.msra.mxu0 %v4053
    %4514 = vmatprep.mubr.bf16.mxu0 %v2186
    %4515 = vmatmul.mubr.bf16.gmra.mrb[0].mxu0 %v2185
    %v4516 = vpop.f32.mrb[0].mxu0
    %v4517 = vadd.f32 %v4476, %v4516
    %v4518 = vpop.f32.mrb[0].mxu0
    %v4519 = vadd.f32 %v4478, %v4518
    %v4520 = vpop.f32.mrb[0].mxu0
    %v4521 = vpop.f32.mrb[0].mxu0
    %4522 = vdwg.mxu0
    %4523 = vmatprep.subr.bf16.mxu0 %v4058
    %4524 = vmatpush1.bf16.msra.mxu0 %v4057
    %4525 = vmatprep.subr.bf16.mxu0 %v4062
    %4526 = vmatpush1.bf16.msra.mxu0 %v4061
    %4527 = vmatprep.subr.bf16.mxu0 %v4066
    %4528 = vmatpush1.bf16.msra.mxu0 %v4065
    %4529 = vmatprep.subr.bf16.mxu0 %v4070
    %4530 = vmatpush1.bf16.msra.mxu0 %v4069
    %4531 = vmatprep.subr.bf16.mxu0 %v4074
    %4532 = vmatpush1.bf16.msra.mxu0 %v4073
    %4533 = vmatprep.subr.bf16.mxu0 %v4078
    %4534 = vmatpush1.bf16.msra.mxu0 %v4077
    %4535 = vmatprep.subr.bf16.mxu0 %v4082
    %4536 = vmatpush1.bf16.msra.mxu0 %v4081
    %4537 = vmatprep.subr.bf16.mxu0 %v4086
    %4538 = vmatpush1.bf16.msra.mxu0 %v4085
    %4539 = vmatprep.subr.bf16.mxu0 %v4090
    %4540 = vmatpush1.bf16.msra.mxu0 %v4089
    %4541 = vmatprep.subr.bf16.mxu0 %v4094
    %4542 = vmatpush1.bf16.msra.mxu0 %v4093
    %4543 = vmatprep.subr.bf16.mxu0 %v4098
    %4544 = vmatpush1.bf16.msra.mxu0 %v4097
    %4545 = vmatprep.subr.bf16.mxu0 %v4102
    %4546 = vmatpush1.bf16.msra.mxu0 %v4101
    %4547 = vmatprep.subr.bf16.mxu0 %v4106
    %4548 = vmatpush1.bf16.msra.mxu0 %v4105
    %4549 = vmatprep.subr.bf16.mxu0 %v4110
    %4550 = vmatpush1.bf16.msra.mxu0 %v4109
    %4551 = vmatprep.subr.bf16.mxu0 %v4114
    %4552 = vmatpush1.bf16.msra.mxu0 %v4113
    %4553 = vmatprep.subr.bf16.mxu0 %v4118
    %4554 = vmatpush1.bf16.msra.mxu0 %v4117
    %4555 = vmatprep.mubr.bf16.mxu0 %v2188
    %4556 = vmatmul.mubr.bf16.gmra.mrb[0].mxu0 %v2187
    %v4557 = vpop.f32.mrb[0].mxu0
    %v4558 = vadd.f32 %v4517, %v4557
    %v4559 = vpop.f32.mrb[0].mxu0
    %v4560 = vadd.f32 %v4519, %v4559
    %v4561 = vpop.f32.mrb[0].mxu0
    %v4562 = vpop.f32.mrb[0].mxu0
    %4563 = vdwg.mxu0
    %4564 = vmatprep.subr.bf16.mxu0 %v4122
    %4565 = vmatpush1.bf16.msra.mxu0 %v4121
    %4566 = vmatprep.subr.bf16.mxu0 %v4126
    %4567 = vmatpush1.bf16.msra.mxu0 %v4125
    %4568 = vmatprep.subr.bf16.mxu0 %v4130
    %4569 = vmatpush1.bf16.msra.mxu0 %v4129
    %4570 = vmatprep.subr.bf16.mxu0 %v4134
    %4571 = vmatpush1.bf16.msra.mxu0 %v4133
    %4572 = vmatprep.subr.bf16.mxu0 %v4138
    %4573 = vmatpush1.bf16.msra.mxu0 %v4137
    %4574 = vmatprep.subr.bf16.mxu0 %v4142
    %4575 = vmatpush1.bf16.msra.mxu0 %v4141
    %4576 = vmatprep.subr.bf16.mxu0 %v4146
    %4577 = vmatpush1.bf16.msra.mxu0 %v4145
    %4578 = vmatprep.subr.bf16.mxu0 %v4150
    %4579 = vmatpush1.bf16.msra.mxu0 %v4149
    %4580 = vmatprep.subr.bf16.mxu0 %v4154
    %4581 = vmatpush1.bf16.msra.mxu0 %v4153
    %4582 = vmatprep.subr.bf16.mxu0 %v4158
    %4583 = vmatpush1.bf16.msra.mxu0 %v4157
    %4584 = vmatprep.subr.bf16.mxu0 %v4162
    %4585 = vmatpush1.bf16.msra.mxu0 %v4161
    %4586 = vmatprep.subr.bf16.mxu0 %v4166
    %4587 = vmatpush1.bf16.msra.mxu0 %v4165
    %4588 = vmatprep.subr.bf16.mxu0 %v4170
    %4589 = vmatpush1.bf16.msra.mxu0 %v4169
    %4590 = vmatprep.subr.bf16.mxu0 %v4174
    %4591 = vmatpush1.bf16.msra.mxu0 %v4173
    %4592 = vmatprep.subr.bf16.mxu0 %v4178
    %4593 = vmatpush1.bf16.msra.mxu0 %v4177
    %4594 = vmatprep.subr.bf16.mxu0 %v4182
    %4595 = vmatpush1.bf16.msra.mxu0 %v4181
    %4596 = vmatprep.mubr.bf16.mxu0 %v2190
    %4597 = vmatmul.mubr.bf16.gmra.mrb[0].mxu0 %v2189
    %v4598 = vpop.f32.mrb[0].mxu0
    %v4599 = vadd.f32 %v4558, %v4598
    %v4600 = vpop.f32.mrb[0].mxu0
    %v4601 = vadd.f32 %v4560, %v4600
    %v4602 = vpop.f32.mrb[0].mxu0
    %v4603 = vpop.f32.mrb[0].mxu0
    %4604 = vdwg.mxu0
    %4605 = vmatprep.subr.bf16.mxu0 %v4186
    %4606 = vmatpush1.bf16.msra.mxu0 %v4185
    %4607 = vmatprep.subr.bf16.mxu0 %v4190
    %4608 = vmatpush1.bf16.msra.mxu0 %v4189
    %4609 = vmatprep.subr.bf16.mxu0 %v4194
    %4610 = vmatpush1.bf16.msra.mxu0 %v4193
    %4611 = vmatprep.subr.bf16.mxu0 %v4198
    %4612 = vmatpush1.bf16.msra.mxu0 %v4197
    %4613 = vmatprep.subr.bf16.mxu0 %v4202
    %4614 = vmatpush1.bf16.msra.mxu0 %v4201
    %4615 = vmatprep.subr.bf16.mxu0 %v4206
    %4616 = vmatpush1.bf16.msra.mxu0 %v4205
    %4617 = vmatprep.subr.bf16.mxu0 %v4210
    %4618 = vmatpush1.bf16.msra.mxu0 %v4209
    %4619 = vmatprep.subr.bf16.mxu0 %v4214
    %4620 = vmatpush1.bf16.msra.mxu0 %v4213
    %4621 = vmatprep.subr.bf16.mxu0 %v4218
    %4622 = vmatpush1.bf16.msra.mxu0 %v4217
    %4623 = vmatprep.subr.bf16.mxu0 %v4222
    %4624 = vmatpush1.bf16.msra.mxu0 %v4221
    %4625 = vmatprep.subr.bf16.mxu0 %v4226
    %4626 = vmatpush1.bf16.msra.mxu0 %v4225
    %4627 = vmatprep.subr.bf16.mxu0 %v4230
    %4628 = vmatpush1.bf16.msra.mxu0 %v4229
    %4629 = vmatprep.subr.bf16.mxu0 %v4234
    %4630 = vmatpush1.bf16.msra.mxu0 %v4233
    %4631 = vmatprep.subr.bf16.mxu0 %v4238
    %4632 = vmatpush1.bf16.msra.mxu0 %v4237
    %4633 = vmatprep.subr.bf16.mxu0 %v4242
    %4634 = vmatpush1.bf16.msra.mxu0 %v4241
    %4635 = vmatprep.subr.bf16.mxu0 %v4246
    %4636 = vmatpush1.bf16.msra.mxu0 %v4245
    %4637 = vmatprep.mubr.bf16.mxu0 %v2192
    %4638 = vmatmul.mubr.bf16.gmra.mrb[0].mxu0 %v2191
    %v4639 = vpop.f32.mrb[0].mxu0
    %v4640 = vadd.f32 %v4599, %v4639
    %v4641 = vpop.f32.mrb[0].mxu0
    %v4642 = vadd.f32 %v4601, %v4641
    %v4643 = vpop.f32.mrb[0].mxu0
    %v4644 = vpop.f32.mrb[0].mxu0
    %4645 = vdwg.mxu0
    %4646 = vmatprep.subr.bf16.mxu0 %v4250
    %4647 = vmatpush1.bf16.msra.mxu0 %v4249
    %4648 = vmatprep.subr.bf16.mxu0 %v4254
    %4649 = vmatpush1.bf16.msra.mxu0 %v4253
    %4650 = vmatprep.subr.bf16.mxu0 %v4258
    %4651 = vmatpush1.bf16.msra.mxu0 %v4257
    %4652 = vmatprep.subr.bf16.mxu0 %v4262
    %4653 = vmatpush1.bf16.msra.mxu0 %v4261
    %4654 = vmatprep.subr.bf16.mxu0 %v4266
    %4655 = vmatpush1.bf16.msra.mxu0 %v4265
    %4656 = vmatprep.subr.bf16.mxu0 %v4270
    %4657 = vmatpush1.bf16.msra.mxu0 %v4269
    %4658 = vmatprep.subr.bf16.mxu0 %v4274
    %4659 = vmatpush1.bf16.msra.mxu0 %v4273
    %4660 = vmatprep.subr.bf16.mxu0 %v4278
    %4661 = vmatpush1.bf16.msra.mxu0 %v4277
    %4662 = vmatprep.subr.bf16.mxu0 %v4282
    %4663 = vmatpush1.bf16.msra.mxu0 %v4281
    %4664 = vmatprep.subr.bf16.mxu0 %v4286
    %4665 = vmatpush1.bf16.msra.mxu0 %v4285
    %4666 = vmatprep.subr.bf16.mxu0 %v4290
    %4667 = vmatpush1.bf16.msra.mxu0 %v4289
    %4668 = vmatprep.subr.bf16.mxu0 %v4294
    %4669 = vmatpush1.bf16.msra.mxu0 %v4293
    %4670 = vmatprep.subr.bf16.mxu0 %v4298
    %4671 = vmatpush1.bf16.msra.mxu0 %v4297
    %4672 = vmatprep.subr.bf16.mxu0 %v4302
    %4673 = vmatpush1.bf16.msra.mxu0 %v4301
    %4674 = vmatprep.subr.bf16.mxu0 %v4306
    %4675 = vmatpush1.bf16.msra.mxu0 %v4305
    %4676 = vmatprep.subr.bf16.mxu0 %v4310
    %4677 = vmatpush1.bf16.msra.mxu0 %v4309
    %4678 = vmatprep.mubr.bf16.mxu0 %v2194
    %4679 = vmatmul.mubr.bf16.gmra.mrb[0].mxu0 %v2193
    %v4680 = vpop.f32.mrb[0].mxu0
    %v4681 = vadd.f32 %v4640, %v4680
    %v4682 = vpop.f32.mrb[0].mxu0
    %v4683 = vadd.f32 %v4642, %v4682
    %v4684 = vpop.f32.mrb[0].mxu0
    %v4685 = vpop.f32.mrb[0].mxu0
    %4686 = vdwg.mxu0
    %4687 = vmatprep.subr.bf16.mxu0 %v4314
    %4688 = vmatpush1.bf16.msra.mxu0 %v4313
    %4689 = vmatprep.subr.bf16.mxu0 %v4318
    %4690 = vmatpush1.bf16.msra.mxu0 %v4317
    %4691 = vmatprep.subr.bf16.mxu0 %v4322
    %4692 = vmatpush1.bf16.msra.mxu0 %v4321
    %4693 = vmatprep.subr.bf16.mxu0 %v4326
    %4694 = vmatpush1.bf16.msra.mxu0 %v4325
    %4695 = vmatprep.subr.bf16.mxu0 %v4330
    %4696 = vmatpush1.bf16.msra.mxu0 %v4329
    %4697 = vmatprep.subr.bf16.mxu0 %v4334
    %4698 = vmatpush1.bf16.msra.mxu0 %v4333
    %4699 = vmatprep.subr.bf16.mxu0 %v4338
    %4700 = vmatpush1.bf16.msra.mxu0 %v4337
    %4701 = vmatprep.subr.bf16.mxu0 %v4342
    %4702 = vmatpush1.bf16.msra.mxu0 %v4341
    %4703 = vmatprep.subr.bf16.mxu0 %v4346
    %4704 = vmatpush1.bf16.msra.mxu0 %v4345
    %4705 = vmatprep.subr.bf16.mxu0 %v4350
    %4706 = vmatpush1.bf16.msra.mxu0 %v4349
    %4707 = vmatprep.subr.bf16.mxu0 %v4354
    %4708 = vmatpush1.bf16.msra.mxu0 %v4353
    %4709 = vmatprep.subr.bf16.mxu0 %v4358
    %4710 = vmatpush1.bf16.msra.mxu0 %v4357
    %4711 = vmatprep.subr.bf16.mxu0 %v4362
    %4712 = vmatpush1.bf16.msra.mxu0 %v4361
    %4713 = vmatprep.subr.bf16.mxu0 %v4366
    %4714 = vmatpush1.bf16.msra.mxu0 %v4365
    %4715 = vmatprep.subr.bf16.mxu0 %v4370
    %4716 = vmatpush1.bf16.msra.mxu0 %v4369
    %4717 = vmatprep.subr.bf16.mxu0 %v4374
    %4718 = vmatpush1.bf16.msra.mxu0 %v4373
    %4719 = vmatprep.mubr.bf16.mxu0 %v2196
    %4720 = vmatmul.mubr.bf16.gmra.mrb[0].mxu0 %v2195
    %v4721 = vpop.f32.mrb[0].mxu0
    %v4722 = vadd.f32 %v4681, %v4721
    %v4723 = vpop.f32.mrb[0].mxu0
    %v4724 = vadd.f32 %v4683, %v4723
    %v4725 = vpop.f32.mrb[0].mxu0
    %v4726 = vpop.f32.mrb[0].mxu0
    %4727 = vdwg.mxu0
    %4728 = vmatprep.subr.bf16.mxu0 %v4378
    %4729 = vmatpush1.bf16.msra.mxu0 %v4377
    %4730 = vmatprep.subr.bf16.mxu0 %v4382
    %4731 = vmatpush1.bf16.msra.mxu0 %v4381
    %4732 = vmatprep.subr.bf16.mxu0 %v4386
    %4733 = vmatpush1.bf16.msra.mxu0 %v4385
    %4734 = vmatprep.subr.bf16.mxu0 %v4390
    %4735 = vmatpush1.bf16.msra.mxu0 %v4389
    %4736 = vmatprep.subr.bf16.mxu0 %v4394
    %4737 = vmatpush1.bf16.msra.mxu0 %v4393
    %4738 = vmatprep.subr.bf16.mxu0 %v4398
    %4739 = vmatpush1.bf16.msra.mxu0 %v4397
    %4740 = vmatprep.subr.bf16.mxu0 %v4402
    %4741 = vmatpush1.bf16.msra.mxu0 %v4401
    %4742 = vmatprep.subr.bf16.mxu0 %v4406
    %4743 = vmatpush1.bf16.msra.mxu0 %v4405
    %4744 = vmatprep.subr.bf16.mxu0 %v4410
    %4745 = vmatpush1.bf16.msra.mxu0 %v4409
    %4746 = vmatprep.subr.bf16.mxu0 %v4414
    %4747 = vmatpush1.bf16.msra.mxu0 %v4413
    %4748 = vmatprep.subr.bf16.mxu0 %v4418
    %4749 = vmatpush1.bf16.msra.mxu0 %v4417
    %4750 = vmatprep.subr.bf16.mxu0 %v4422
    %4751 = vmatpush1.bf16.msra.mxu0 %v4421
    %4752 = vmatprep.subr.bf16.mxu0 %v4426
    %4753 = vmatpush1.bf16.msra.mxu0 %v4425
    %4754 = vmatprep.subr.bf16.mxu0 %v4430
    %4755 = vmatpush1.bf16.msra.mxu0 %v4429
    %4756 = vmatprep.subr.bf16.mxu0 %v4434
    %4757 = vmatpush1.bf16.msra.mxu0 %v4433
    %4758 = vmatprep.subr.bf16.mxu0 %v4438
    %4759 = vmatpush1.bf16.msra.mxu0 %v4437
    %4760 = vmatprep.mubr.bf16.mxu0 %v2198
    %4761 = vmatmul.mubr.bf16.gmra.mrb[0].mxu0 %v2197
    %v4762 = vpop.f32.mrb[0].mxu0
    %v4763 = vadd.f32 %v4722, %v4762
    %v4764 = vpop.f32.mrb[0].mxu0
    %v4765 = vadd.f32 %v4724, %v4764
    %v4766 = vpop.f32.mrb[0].mxu0
    %v4767 = vpop.f32.mrb[0].mxu0
    %4768 = vdwg.mxu0
    %4769 = vmatprep.subr.bf16.mxu0 %v3932
    %4770 = vmatpush1.bf16.msra.mxu0 %v3931
    %4771 = vmatprep.subr.bf16.mxu0 %v3936
    %4772 = vmatpush1.bf16.msra.mxu0 %v3935
    %4773 = vmatprep.subr.bf16.mxu0 %v3940
    %4774 = vmatpush1.bf16.msra.mxu0 %v3939
    %4775 = vmatprep.subr.bf16.mxu0 %v3944
    %4776 = vmatpush1.bf16.msra.mxu0 %v3943
    %4777 = vmatprep.subr.bf16.mxu0 %v3948
    %4778 = vmatpush1.bf16.msra.mxu0 %v3947
    %4779 = vmatprep.subr.bf16.mxu0 %v3952
    %4780 = vmatpush1.bf16.msra.mxu0 %v3951
    %4781 = vmatprep.subr.bf16.mxu0 %v3956
    %4782 = vmatpush1.bf16.msra.mxu0 %v3955
    %4783 = vmatprep.subr.bf16.mxu0 %v3960
    %4784 = vmatpush1.bf16.msra.mxu0 %v3959
    %4785 = vmatprep.subr.bf16.mxu0 %v3964
    %4786 = vmatpush1.bf16.msra.mxu0 %v3963
    %4787 = vmatprep.subr.bf16.mxu0 %v3968
    %4788 = vmatpush1.bf16.msra.mxu0 %v3967
    %4789 = vmatprep.subr.bf16.mxu0 %v3972
    %4790 = vmatpush1.bf16.msra.mxu0 %v3971
    %4791 = vmatprep.subr.bf16.mxu0 %v3976
    %4792 = vmatpush1.bf16.msra.mxu0 %v3975
    %4793 = vmatprep.subr.bf16.mxu0 %v3980
    %4794 = vmatpush1.bf16.msra.mxu0 %v3979
    %4795 = vmatprep.subr.bf16.mxu0 %v3984
    %4796 = vmatpush1.bf16.msra.mxu0 %v3983
    %4797 = vmatprep.subr.bf16.mxu0 %v3988
    %4798 = vmatpush1.bf16.msra.mxu0 %v3987
    %4799 = vmatprep.subr.bf16.mxu0 %v3992
    %4800 = vmatpush1.bf16.msra.mxu0 %v3991
    %4801 = vmatprep.mubr.bf16.mxu0 %v2184
    %4802 = vmatmul.mubr.bf16.gmra.mrb[0].mxu0 %v2183
    %v4803 = vpop.f32.mrb[0].mxu0
    %v4804 = vadd.f32 0.0, %v4803
    %v4805 = vpop.f32.mrb[0].mxu0
    %v4806 = vadd.f32 0.0, %v4805
    %v4807 = vpop.f32.mrb[0].mxu0
    %v4808 = vpop.f32.mrb[0].mxu0
    %4809 = vdwg.mxu0
    %4810 = vmatprep.subr.bf16.mxu0 %v3996
    %4811 = vmatpush1.bf16.msra.mxu0 %v3995
    %4812 = vmatprep.subr.bf16.mxu0 %v4000
    %4813 = vmatpush1.bf16.msra.mxu0 %v3999
    %4814 = vmatprep.subr.bf16.mxu0 %v4004
    %4815 = vmatpush1.bf16.msra.mxu0 %v4003
    %4816 = vmatprep.subr.bf16.mxu0 %v4008
    %4817 = vmatpush1.bf16.msra.mxu0 %v4007
    %4818 = vmatprep.subr.bf16.mxu0 %v4012
    %4819 = vmatpush1.bf16.msra.mxu0 %v4011
    %4820 = vmatprep.subr.bf16.mxu0 %v4016
    %4821 = vmatpush1.bf16.msra.mxu0 %v4015
    %4822 = vmatprep.subr.bf16.mxu0 %v4020
    %4823 = vmatpush1.bf16.msra.mxu0 %v4019
    %4824 = vmatprep.subr.bf16.mxu0 %v4024
    %4825 = vmatpush1.bf16.msra.mxu0 %v4023
    %4826 = vmatprep.subr.bf16.mxu0 %v4028
    %4827 = vmatpush1.bf16.msra.mxu0 %v4027
    %4828 = vmatprep.subr.bf16.mxu0 %v4032
    %4829 = vmatpush1.bf16.msra.mxu0 %v4031
    %4830 = vmatprep.subr.bf16.mxu0 %v4036
    %4831 = vmatpush1.bf16.msra.mxu0 %v4035
    %4832 = vmatprep.subr.bf16.mxu0 %v4040
    %4833 = vmatpush1.bf16.msra.mxu0 %v4039
    %4834 = vmatprep.subr.bf16.mxu0 %v4044
    %4835 = vmatpush1.bf16.msra.mxu0 %v4043
    %4836 = vmatprep.subr.bf16.mxu0 %v4048
    %4837 = vmatpush1.bf16.msra.mxu0 %v4047
    %4838 = vmatprep.subr.bf16.mxu0 %v4052
    %4839 = vmatpush1.bf16.msra.mxu0 %v4051
    %4840 = vmatprep.subr.bf16.mxu0 %v4056
    %4841 = vmatpush1.bf16.msra.mxu0 %v4055
    %4842 = vmatprep.mubr.bf16.mxu0 %v2186
    %4843 = vmatmul.mubr.bf16.gmra.mrb[0].mxu0 %v2185
    %v4844 = vpop.f32.mrb[0].mxu0
    %v4845 = vadd.f32 %v4804, %v4844
    %v4846 = vpop.f32.mrb[0].mxu0
    %v4847 = vadd.f32 %v4806, %v4846
    %v4848 = vpop.f32.mrb[0].mxu0
    %v4849 = vpop.f32.mrb[0].mxu0
    %4850 = vdwg.mxu0
    %4851 = vmatprep.subr.bf16.mxu0 %v4060
    %4852 = vmatpush1.bf16.msra.mxu0 %v4059
    %4853 = vmatprep.subr.bf16.mxu0 %v4064
    %4854 = vmatpush1.bf16.msra.mxu0 %v4063
    %4855 = vmatprep.subr.bf16.mxu0 %v4068
    %4856 = vmatpush1.bf16.msra.mxu0 %v4067
    %4857 = vmatprep.subr.bf16.mxu0 %v4072
    %4858 = vmatpush1.bf16.msra.mxu0 %v4071
    %4859 = vmatprep.subr.bf16.mxu0 %v4076
    %4860 = vmatpush1.bf16.msra.mxu0 %v4075
    %4861 = vmatprep.subr.bf16.mxu0 %v4080
    %4862 = vmatpush1.bf16.msra.mxu0 %v4079
    %4863 = vmatprep.subr.bf16.mxu0 %v4084
    %4864 = vmatpush1.bf16.msra.mxu0 %v4083
    %4865 = vmatprep.subr.bf16.mxu0 %v4088
    %4866 = vmatpush1.bf16.msra.mxu0 %v4087
    %4867 = vmatprep.subr.bf16.mxu0 %v4092
    %4868 = vmatpush1.bf16.msra.mxu0 %v4091
    %4869 = vmatprep.subr.bf16.mxu0 %v4096
    %4870 = vmatpush1.bf16.msra.mxu0 %v4095
    %4871 = vmatprep.subr.bf16.mxu0 %v4100
    %4872 = vmatpush1.bf16.msra.mxu0 %v4099
    %4873 = vmatprep.subr.bf16.mxu0 %v4104
    %4874 = vmatpush1.bf16.msra.mxu0 %v4103
    %4875 = vmatprep.subr.bf16.mxu0 %v4108
    %4876 = vmatpush1.bf16.msra.mxu0 %v4107
    %4877 = vmatprep.subr.bf16.mxu0 %v4112
    %4878 = vmatpush1.bf16.msra.mxu0 %v4111
    %4879 = vmatprep.subr.bf16.mxu0 %v4116
    %4880 = vmatpush1.bf16.msra.mxu0 %v4115
    %4881 = vmatprep.subr.bf16.mxu0 %v4120
    %4882 = vmatpush1.bf16.msra.mxu0 %v4119
    %4883 = vmatprep.mubr.bf16.mxu0 %v2188
    %4884 = vmatmul.mubr.bf16.gmra.mrb[0].mxu0 %v2187
    %v4885 = vpop.f32.mrb[0].mxu0
    %v4886 = vadd.f32 %v4845, %v4885
    %v4887 = vpop.f32.mrb[0].mxu0
    %v4888 = vadd.f32 %v4847, %v4887
    %v4889 = vpop.f32.mrb[0].mxu0
    %v4890 = vpop.f32.mrb[0].mxu0
    %4891 = vdwg.mxu0
    %4892 = vmatprep.subr.bf16.mxu0 %v4124
    %4893 = vmatpush1.bf16.msra.mxu0 %v4123
    %4894 = vmatprep.subr.bf16.mxu0 %v4128
    %4895 = vmatpush1.bf16.msra.mxu0 %v4127
    %4896 = vmatprep.subr.bf16.mxu0 %v4132
    %4897 = vmatpush1.bf16.msra.mxu0 %v4131
    %4898 = vmatprep.subr.bf16.mxu0 %v4136
    %4899 = vmatpush1.bf16.msra.mxu0 %v4135
    %4900 = vmatprep.subr.bf16.mxu0 %v4140
    %4901 = vmatpush1.bf16.msra.mxu0 %v4139
    %4902 = vmatprep.subr.bf16.mxu0 %v4144
    %4903 = vmatpush1.bf16.msra.mxu0 %v4143
    %4904 = vmatprep.subr.bf16.mxu0 %v4148
    %4905 = vmatpush1.bf16.msra.mxu0 %v4147
    %4906 = vmatprep.subr.bf16.mxu0 %v4152
    %4907 = vmatpush1.bf16.msra.mxu0 %v4151
    %4908 = vmatprep.subr.bf16.mxu0 %v4156
    %4909 = vmatpush1.bf16.msra.mxu0 %v4155
    %4910 = vmatprep.subr.bf16.mxu0 %v4160
    %4911 = vmatpush1.bf16.msra.mxu0 %v4159
    %4912 = vmatprep.subr.bf16.mxu0 %v4164
    %4913 = vmatpush1.bf16.msra.mxu0 %v4163
    %4914 = vmatprep.subr.bf16.mxu0 %v4168
    %4915 = vmatpush1.bf16.msra.mxu0 %v4167
    %4916 = vmatprep.subr.bf16.mxu0 %v4172
    %4917 = vmatpush1.bf16.msra.mxu0 %v4171
    %4918 = vmatprep.subr.bf16.mxu0 %v4176
    %4919 = vmatpush1.bf16.msra.mxu0 %v4175
    %4920 = vmatprep.subr.bf16.mxu0 %v4180
    %4921 = vmatpush1.bf16.msra.mxu0 %v4179
    %4922 = vmatprep.subr.bf16.mxu0 %v4184
    %4923 = vmatpush1.bf16.msra.mxu0 %v4183
    %4924 = vmatprep.mubr.bf16.mxu0 %v2190
    %4925 = vmatmul.mubr.bf16.gmra.mrb[0].mxu0 %v2189
    %v4926 = vpop.f32.mrb[0].mxu0
    %v4927 = vadd.f32 %v4886, %v4926
    %v4928 = vpop.f32.mrb[0].mxu0
    %v4929 = vadd.f32 %v4888, %v4928
    %v4930 = vpop.f32.mrb[0].mxu0
    %v4931 = vpop.f32.mrb[0].mxu0
    %4932 = vdwg.mxu0
    %4933 = vmatprep.subr.bf16.mxu0 %v4188
    %4934 = vmatpush1.bf16.msra.mxu0 %v4187
    %4935 = vmatprep.subr.bf16.mxu0 %v4192
    %4936 = vmatpush1.bf16.msra.mxu0 %v4191
    %4937 = vmatprep.subr.bf16.mxu0 %v4196
    %4938 = vmatpush1.bf16.msra.mxu0 %v4195
    %4939 = vmatprep.subr.bf16.mxu0 %v4200
    %4940 = vmatpush1.bf16.msra.mxu0 %v4199
    %4941 = vmatprep.subr.bf16.mxu0 %v4204
    %4942 = vmatpush1.bf16.msra.mxu0 %v4203
    %4943 = vmatprep.subr.bf16.mxu0 %v4208
    %4944 = vmatpush1.bf16.msra.mxu0 %v4207
    %4945 = vmatprep.subr.bf16.mxu0 %v4212
    %4946 = vmatpush1.bf16.msra.mxu0 %v4211
    %4947 = vmatprep.subr.bf16.mxu0 %v4216
    %4948 = vmatpush1.bf16.msra.mxu0 %v4215
    %4949 = vmatprep.subr.bf16.mxu0 %v4220
    %4950 = vmatpush1.bf16.msra.mxu0 %v4219
    %4951 = vmatprep.subr.bf16.mxu0 %v4224
    %4952 = vmatpush1.bf16.msra.mxu0 %v4223
    %4953 = vmatprep.subr.bf16.mxu0 %v4228
    %4954 = vmatpush1.bf16.msra.mxu0 %v4227
    %4955 = vmatprep.subr.bf16.mxu0 %v4232
    %4956 = vmatpush1.bf16.msra.mxu0 %v4231
    %4957 = vmatprep.subr.bf16.mxu0 %v4236
    %4958 = vmatpush1.bf16.msra.mxu0 %v4235
    %4959 = vmatprep.subr.bf16.mxu0 %v4240
    %4960 = vmatpush1.bf16.msra.mxu0 %v4239
    %4961 = vmatprep.subr.bf16.mxu0 %v4244
    %4962 = vmatpush1.bf16.msra.mxu0 %v4243
    %4963 = vmatprep.subr.bf16.mxu0 %v4248
    %4964 = vmatpush1.bf16.msra.mxu0 %v4247
    %4965 = vmatprep.mubr.bf16.mxu0 %v2192
    %4966 = vmatmul.mubr.bf16.gmra.mrb[0].mxu0 %v2191
    %v4967 = vpop.f32.mrb[0].mxu0
    %v4968 = vadd.f32 %v4927, %v4967
    %v4969 = vpop.f32.mrb[0].mxu0
    %v4970 = vadd.f32 %v4929, %v4969
    %v4971 = vpop.f32.mrb[0].mxu0
    %v4972 = vpop.f32.mrb[0].mxu0
    %4973 = vdwg.mxu0
    %4974 = vmatprep.subr.bf16.mxu0 %v4252
    %4975 = vmatpush1.bf16.msra.mxu0 %v4251
    %4976 = vmatprep.subr.bf16.mxu0 %v4256
    %4977 = vmatpush1.bf16.msra.mxu0 %v4255
    %4978 = vmatprep.subr.bf16.mxu0 %v4260
    %4979 = vmatpush1.bf16.msra.mxu0 %v4259
    %4980 = vmatprep.subr.bf16.mxu0 %v4264
    %4981 = vmatpush1.bf16.msra.mxu0 %v4263
    %4982 = vmatprep.subr.bf16.mxu0 %v4268
    %4983 = vmatpush1.bf16.msra.mxu0 %v4267
    %4984 = vmatprep.subr.bf16.mxu0 %v4272
    %4985 = vmatpush1.bf16.msra.mxu0 %v4271
    %4986 = vmatprep.subr.bf16.mxu0 %v4276
    %4987 = vmatpush1.bf16.msra.mxu0 %v4275
    %4988 = vmatprep.subr.bf16.mxu0 %v4280
    %4989 = vmatpush1.bf16.msra.mxu0 %v4279
    %4990 = vmatprep.subr.bf16.mxu0 %v4284
    %4991 = vmatpush1.bf16.msra.mxu0 %v4283
    %4992 = vmatprep.subr.bf16.mxu0 %v4288
    %4993 = vmatpush1.bf16.msra.mxu0 %v4287
    %4994 = vmatprep.subr.bf16.mxu0 %v4292
    %4995 = vmatpush1.bf16.msra.mxu0 %v4291
    %4996 = vmatprep.subr.bf16.mxu0 %v4296
    %4997 = vmatpush1.bf16.msra.mxu0 %v4295
    %4998 = vmatprep.subr.bf16.mxu0 %v4300
    %4999 = vmatpush1.bf16.msra.mxu0 %v4299
    %5000 = vmatprep.subr.bf16.mxu0 %v4304
    %5001 = vmatpush1.bf16.msra.mxu0 %v4303
    %5002 = vmatprep.subr.bf16.mxu0 %v4308
    %5003 = vmatpush1.bf16.msra.mxu0 %v4307
    %5004 = vmatprep.subr.bf16.mxu0 %v4312
    %5005 = vmatpush1.bf16.msra.mxu0 %v4311
    %5006 = vmatprep.mubr.bf16.mxu0 %v2194
    %5007 = vmatmul.mubr.bf16.gmra.mrb[0].mxu0 %v2193
    %v5008 = vpop.f32.mrb[0].mxu0
    %v5009 = vadd.f32 %v4968, %v5008
    %v5010 = vpop.f32.mrb[0].mxu0
    %v5011 = vadd.f32 %v4970, %v5010
    %v5012 = vpop.f32.mrb[0].mxu0
    %v5013 = vpop.f32.mrb[0].mxu0
    %5014 = vdwg.mxu0
    %5015 = vmatprep.subr.bf16.mxu0 %v4316
    %5016 = vmatpush1.bf16.msra.mxu0 %v4315
    %5017 = vmatprep.subr.bf16.mxu0 %v4320
    %5018 = vmatpush1.bf16.msra.mxu0 %v4319
    %5019 = vmatprep.subr.bf16.mxu0 %v4324
    %5020 = vmatpush1.bf16.msra.mxu0 %v4323
    %5021 = vmatprep.subr.bf16.mxu0 %v4328
    %5022 = vmatpush1.bf16.msra.mxu0 %v4327
    %5023 = vmatprep.subr.bf16.mxu0 %v4332
    %5024 = vmatpush1.bf16.msra.mxu0 %v4331
    %5025 = vmatprep.subr.bf16.mxu0 %v4336
    %5026 = vmatpush1.bf16.msra.mxu0 %v4335
    %5027 = vmatprep.subr.bf16.mxu0 %v4340
    %5028 = vmatpush1.bf16.msra.mxu0 %v4339
    %5029 = vmatprep.subr.bf16.mxu0 %v4344
    %5030 = vmatpush1.bf16.msra.mxu0 %v4343
    %5031 = vmatprep.subr.bf16.mxu0 %v4348
    %5032 = vmatpush1.bf16.msra.mxu0 %v4347
    %5033 = vmatprep.subr.bf16.mxu0 %v4352
    %5034 = vmatpush1.bf16.msra.mxu0 %v4351
    %5035 = vmatprep.subr.bf16.mxu0 %v4356
    %5036 = vmatpush1.bf16.msra.mxu0 %v4355
    %5037 = vmatprep.subr.bf16.mxu0 %v4360
    %5038 = vmatpush1.bf16.msra.mxu0 %v4359
    %5039 = vmatprep.subr.bf16.mxu0 %v4364
    %5040 = vmatpush1.bf16.msra.mxu0 %v4363
    %5041 = vmatprep.subr.bf16.mxu0 %v4368
    %5042 = vmatpush1.bf16.msra.mxu0 %v4367
    %5043 = vmatprep.subr.bf16.mxu0 %v4372
    %5044 = vmatpush1.bf16.msra.mxu0 %v4371
    %5045 = vmatprep.subr.bf16.mxu0 %v4376
    %5046 = vmatpush1.bf16.msra.mxu0 %v4375
    %5047 = vmatprep.mubr.bf16.mxu0 %v2196
    %5048 = vmatmul.mubr.bf16.gmra.mrb[0].mxu0 %v2195
    %v5049 = vpop.f32.mrb[0].mxu0
    %v5050 = vadd.f32 %v5009, %v5049
    %v5051 = vpop.f32.mrb[0].mxu0
    %v5052 = vadd.f32 %v5011, %v5051
    %v5053 = vpop.f32.mrb[0].mxu0
    %v5054 = vpop.f32.mrb[0].mxu0
    %5055 = vdwg.mxu0
    %5056 = vmatprep.subr.bf16.mxu0 %v4380
    %5057 = vmatpush1.bf16.msra.mxu0 %v4379
    %5058 = vmatprep.subr.bf16.mxu0 %v4384
    %5059 = vmatpush1.bf16.msra.mxu0 %v4383
    %5060 = vmatprep.subr.bf16.mxu0 %v4388
    %5061 = vmatpush1.bf16.msra.mxu0 %v4387
    %5062 = vmatprep.subr.bf16.mxu0 %v4392
    %5063 = vmatpush1.bf16.msra.mxu0 %v4391
    %5064 = vmatprep.subr.bf16.mxu0 %v4396
    %5065 = vmatpush1.bf16.msra.mxu0 %v4395
    %5066 = vmatprep.subr.bf16.mxu0 %v4400
    %5067 = vmatpush1.bf16.msra.mxu0 %v4399
    %5068 = vmatprep.subr.bf16.mxu0 %v4404
    %5069 = vmatpush1.bf16.msra.mxu0 %v4403
    %5070 = vmatprep.subr.bf16.mxu0 %v4408
    %5071 = vmatpush1.bf16.msra.mxu0 %v4407
    %5072 = vmatprep.subr.bf16.mxu0 %v4412
    %5073 = vmatpush1.bf16.msra.mxu0 %v4411
    %5074 = vmatprep.subr.bf16.mxu0 %v4416
    %5075 = vmatpush1.bf16.msra.mxu0 %v4415
    %5076 = vmatprep.subr.bf16.mxu0 %v4420
    %5077 = vmatpush1.bf16.msra.mxu0 %v4419
    %5078 = vmatprep.subr.bf16.mxu0 %v4424
    %5079 = vmatpush1.bf16.msra.mxu0 %v4423
    %5080 = vmatprep.subr.bf16.mxu0 %v4428
    %5081 = vmatpush1.bf16.msra.mxu0 %v4427
    %5082 = vmatprep.subr.bf16.mxu0 %v4432
    %5083 = vmatpush1.bf16.msra.mxu0 %v4431
    %5084 = vmatprep.subr.bf16.mxu0 %v4436
    %5085 = vmatpush1.bf16.msra.mxu0 %v4435
    %5086 = vmatprep.subr.bf16.mxu0 %v4440
    %5087 = vmatpush1.bf16.msra.mxu0 %v4439
    %5088 = vmatprep.mubr.bf16.mxu0 %v2198
    %5089 = vmatmul.mubr.bf16.gmra.mrb[0].mxu0 %v2197
    %v5090 = vpop.f32.mrb[0].mxu0
    %v5091 = vadd.f32 %v5050, %v5090
    %v5092 = vpop.f32.mrb[0].mxu0
    %v5093 = vadd.f32 %v5052, %v5092
    %v5094 = vpop.f32.mrb[0].mxu0
    %v5095 = vpop.f32.mrb[0].mxu0
    %5096 = vdwg.mxu0
    %v5097 = vlaneseq
    %v5098 = vshrl.u32 %v5097, 7
    %v5099 = vsub.s32 6, %v5098
    %v5100 = vrot.slane %v1503, %v5099
    %v5101 = vlaneseq
    %v5102 = vshrl.u32 %v5101, 7
    %v5103 = vsub.s32 6, %v5102
    %v5104 = vrot.slane %v1504, %v5103
    %v5105 = vlaneseq
    %v5106 = vshrl.u32 %v5105, 7
    %v5107 = vsub.s32 6, %v5106
    %v5108 = vrot.slane %v1505, %v5107
    %v5109 = vlaneseq
    %v5110 = vshrl.u32 %v5109, 7
    %v5111 = vsub.s32 6, %v5110
    %v5112 = vrot.slane %v1506, %v5111
    %v5113 = vmul.f32 %v4763, %v5100
    %v5114 = vmul.f32 %v4765, %v5104
    %v5115 = vmul.f32 %v5091, %v5108
    %v5116 = vmul.f32 %v5093, %v5112
    %v5117 = vlaneseq
    %v5118 = vshrl.u32 %v5117, 7
    %v5119 = vsub.s32 1, %v5118
    %v5120 = vrot.slane %v1503, %v5119
    %v5121 = vlaneseq
    %v5122 = vshrl.u32 %v5121, 7
    %v5123 = vsub.s32 1, %v5122
    %v5124 = vrot.slane %v1504, %v5123
    %v5125 = vlaneseq
    %v5126 = vshrl.u32 %v5125, 7
    %v5127 = vsub.s32 1, %v5126
    %v5128 = vrot.slane %v1505, %v5127
    %v5129 = vlaneseq
    %v5130 = vshrl.u32 %v5129, 7
    %v5131 = vsub.s32 1, %v5130
    %v5132 = vrot.slane %v1506, %v5131
    %v5133 = vadd.f32 %v5113, %v5120
    %v5134 = vadd.f32 %v5114, %v5124
    %v5135 = vadd.f32 %v5115, %v5128
    %v5136 = vadd.f32 %v5116, %v5132
    %v5137 = vmax.f32 %v5133, 0.0
    %v5138 = vmax.f32 %v5134, 0.0
    %v5139 = vmax.f32 %v5135, 0.0
    %v5140 = vmax.f32 %v5136, 0.0
    %v5141 = vpack.c.bf16 %v3667, %v3667
    %v5142 = vpack.c.bf16 %v3668, %v3668
    %v5143 = vpack.c.bf16 %v3669, %v3669
    %v5144 = vpack.c.bf16 %v3670, %v3670
    %v5145 = vpack.c.bf16 %v5137, %v5137
    %v5146 = vpack.c.bf16 %v5138, %v5138
    %v5147 = vpack.c.bf16 %v5139, %v5139
    %v5148 = vpack.c.bf16 %v5140, %v5140
    %s5149 = smul.u32 2, 128
    %s5150 = smul.u32 %s5149, 4
    %s5151 = sshll.u32 %s5150, 4
    %5152 = dma.done %s175, %s5151
    %v5153 = vld [vmem:[#allocation4] sm:$0xff]
    %v5154 = vld [vmem:[#allocation4 + $0x8] sm:$0xff]
    %v5155 = vld [vmem:[#allocation4 + $0x10] sm:$0xff]
    %v5156 = vld [vmem:[#allocation4 + $0x18] sm:$0xff]
    %v5157 = vld [vmem:[#allocation4 + $0x20] sm:$0xff]
    %v5158 = vld [vmem:[#allocation4 + $0x28] sm:$0xff]
    %v5159 = vld [vmem:[#allocation4 + $0x30] sm:$0xff]
    %v5160 = vld [vmem:[#allocation4 + $0x38] sm:$0xff]
    %v5161 = vld [vmem:[#allocation4 + $0x40] sm:$0xff]
    %v5162 = vld [vmem:[#allocation4 + $0x48] sm:$0xff]
    %v5163 = vld [vmem:[#allocation4 + $0x50] sm:$0xff]
    %v5164 = vld [vmem:[#allocation4 + $0x58] sm:$0xff]
    %v5165 = vld [vmem:[#allocation4 + $0x60] sm:$0xff]
    %v5166 = vld [vmem:[#allocation4 + $0x68] sm:$0xff]
    %v5167 = vld [vmem:[#allocation4 + $0x70] sm:$0xff]
    %v5168 = vld [vmem:[#allocation4 + $0x78] sm:$0xff]
    %v5169 = vld [vmem:[#allocation4 + $0x80] sm:$0xff]
    %v5170 = vld [vmem:[#allocation4 + $0x88] sm:$0xff]
    %v5171 = vld [vmem:[#allocation4 + $0x90] sm:$0xff]
    %v5172 = vld [vmem:[#allocation4 + $0x98] sm:$0xff]
    %v5173 = vld [vmem:[#allocation4 + $0xa0] sm:$0xff]
    %v5174 = vld [vmem:[#allocation4 + $0xa8] sm:$0xff]
    %v5175 = vld [vmem:[#allocation4 + $0xb0] sm:$0xff]
    %v5176 = vld [vmem:[#allocation4 + $0xb8] sm:$0xff]
    %v5177 = vld [vmem:[#allocation4 + $0xc0] sm:$0xff]
    %v5178 = vld [vmem:[#allocation4 + $0xc8] sm:$0xff]
    %v5179 = vld [vmem:[#allocation4 + $0xd0] sm:$0xff]
    %v5180 = vld [vmem:[#allocation4 + $0xd8] sm:$0xff]
    %v5181 = vld [vmem:[#allocation4 + $0xe0] sm:$0xff]
    %v5182 = vld [vmem:[#allocation4 + $0xe8] sm:$0xff]
    %v5183 = vld [vmem:[#allocation4 + $0xf0] sm:$0xff]
    %v5184 = vld [vmem:[#allocation4 + $0xf8] sm:$0xff]
    %v5185 = vld [vmem:[#allocation4 + $0x100] sm:$0xff]
    %v5186 = vld [vmem:[#allocation4 + $0x108] sm:$0xff]
    %v5187 = vld [vmem:[#allocation4 + $0x110] sm:$0xff]
    %v5188 = vld [vmem:[#allocation4 + $0x118] sm:$0xff]
    %v5189 = vld [vmem:[#allocation4 + $0x120] sm:$0xff]
    %v5190 = vld [vmem:[#allocation4 + $0x128] sm:$0xff]
    %v5191 = vld [vmem:[#allocation4 + $0x130] sm:$0xff]
    %v5192 = vld [vmem:[#allocation4 + $0x138] sm:$0xff]
    %v5193 = vld [vmem:[#allocation4 + $0x140] sm:$0xff]
    %v5194 = vld [vmem:[#allocation4 + $0x148] sm:$0xff]
    %v5195 = vld [vmem:[#allocation4 + $0x150] sm:$0xff]
    %v5196 = vld [vmem:[#allocation4 + $0x158] sm:$0xff]
    %v5197 = vld [vmem:[#allocation4 + $0x160] sm:$0xff]
    %v5198 = vld [vmem:[#allocation4 + $0x168] sm:$0xff]
    %v5199 = vld [vmem:[#allocation4 + $0x170] sm:$0xff]
    %v5200 = vld [vmem:[#allocation4 + $0x178] sm:$0xff]
    %v5201 = vld [vmem:[#allocation4 + $0x180] sm:$0xff]
    %v5202 = vld [vmem:[#allocation4 + $0x188] sm:$0xff]
    %v5203 = vld [vmem:[#allocation4 + $0x190] sm:$0xff]
    %v5204 = vld [vmem:[#allocation4 + $0x198] sm:$0xff]
    %v5205 = vld [vmem:[#allocation4 + $0x1a0] sm:$0xff]
    %v5206 = vld [vmem:[#allocation4 + $0x1a8] sm:$0xff]
    %v5207 = vld [vmem:[#allocation4 + $0x1b0] sm:$0xff]
    %v5208 = vld [vmem:[#allocation4 + $0x1b8] sm:$0xff]
    %v5209 = vld [vmem:[#allocation4 + $0x1c0] sm:$0xff]
    %v5210 = vld [vmem:[#allocation4 + $0x1c8] sm:$0xff]
    %v5211 = vld [vmem:[#allocation4 + $0x1d0] sm:$0xff]
    %v5212 = vld [vmem:[#allocation4 + $0x1d8] sm:$0xff]
    %v5213 = vld [vmem:[#allocation4 + $0x1e0] sm:$0xff]
    %v5214 = vld [vmem:[#allocation4 + $0x1e8] sm:$0xff]
    %v5215 = vld [vmem:[#allocation4 + $0x1f0] sm:$0xff]
    %v5216 = vld [vmem:[#allocation4 + $0x1f8] sm:$0xff]
    %v5217 = vld [vmem:[#allocation4 + $0x200] sm:$0xff]
    %v5218 = vld [vmem:[#allocation4 + $0x208] sm:$0xff]
    %v5219 = vld [vmem:[#allocation4 + $0x210] sm:$0xff]
    %v5220 = vld [vmem:[#allocation4 + $0x218] sm:$0xff]
    %v5221 = vld [vmem:[#allocation4 + $0x220] sm:$0xff]
    %v5222 = vld [vmem:[#allocation4 + $0x228] sm:$0xff]
    %v5223 = vld [vmem:[#allocation4 + $0x230] sm:$0xff]
    %v5224 = vld [vmem:[#allocation4 + $0x238] sm:$0xff]
    %v5225 = vld [vmem:[#allocation4 + $0x240] sm:$0xff]
    %v5226 = vld [vmem:[#allocation4 + $0x248] sm:$0xff]
    %v5227 = vld [vmem:[#allocation4 + $0x250] sm:$0xff]
    %v5228 = vld [vmem:[#allocation4 + $0x258] sm:$0xff]
    %v5229 = vld [vmem:[#allocation4 + $0x260] sm:$0xff]
    %v5230 = vld [vmem:[#allocation4 + $0x268] sm:$0xff]
    %v5231 = vld [vmem:[#allocation4 + $0x270] sm:$0xff]
    %v5232 = vld [vmem:[#allocation4 + $0x278] sm:$0xff]
    %v5233 = vld [vmem:[#allocation4 + $0x280] sm:$0xff]
    %v5234 = vld [vmem:[#allocation4 + $0x288] sm:$0xff]
    %v5235 = vld [vmem:[#allocation4 + $0x290] sm:$0xff]
    %v5236 = vld [vmem:[#allocation4 + $0x298] sm:$0xff]
    %v5237 = vld [vmem:[#allocation4 + $0x2a0] sm:$0xff]
    %v5238 = vld [vmem:[#allocation4 + $0x2a8] sm:$0xff]
    %v5239 = vld [vmem:[#allocation4 + $0x2b0] sm:$0xff]
    %v5240 = vld [vmem:[#allocation4 + $0x2b8] sm:$0xff]
    %v5241 = vld [vmem:[#allocation4 + $0x2c0] sm:$0xff]
    %v5242 = vld [vmem:[#allocation4 + $0x2c8] sm:$0xff]
    %v5243 = vld [vmem:[#allocation4 + $0x2d0] sm:$0xff]
    %v5244 = vld [vmem:[#allocation4 + $0x2d8] sm:$0xff]
    %v5245 = vld [vmem:[#allocation4 + $0x2e0] sm:$0xff]
    %v5246 = vld [vmem:[#allocation4 + $0x2e8] sm:$0xff]
    %v5247 = vld [vmem:[#allocation4 + $0x2f0] sm:$0xff]
    %v5248 = vld [vmem:[#allocation4 + $0x2f8] sm:$0xff]
    %v5249 = vld [vmem:[#allocation4 + $0x300] sm:$0xff]
    %v5250 = vld [vmem:[#allocation4 + $0x308] sm:$0xff]
    %v5251 = vld [vmem:[#allocation4 + $0x310] sm:$0xff]
    %v5252 = vld [vmem:[#allocation4 + $0x318] sm:$0xff]
    %v5253 = vld [vmem:[#allocation4 + $0x320] sm:$0xff]
    %v5254 = vld [vmem:[#allocation4 + $0x328] sm:$0xff]
    %v5255 = vld [vmem:[#allocation4 + $0x330] sm:$0xff]
    %v5256 = vld [vmem:[#allocation4 + $0x338] sm:$0xff]
    %v5257 = vld [vmem:[#allocation4 + $0x340] sm:$0xff]
    %v5258 = vld [vmem:[#allocation4 + $0x348] sm:$0xff]
    %v5259 = vld [vmem:[#allocation4 + $0x350] sm:$0xff]
    %v5260 = vld [vmem:[#allocation4 + $0x358] sm:$0xff]
    %v5261 = vld [vmem:[#allocation4 + $0x360] sm:$0xff]
    %v5262 = vld [vmem:[#allocation4 + $0x368] sm:$0xff]
    %v5263 = vld [vmem:[#allocation4 + $0x370] sm:$0xff]
    %v5264 = vld [vmem:[#allocation4 + $0x378] sm:$0xff]
    %v5265 = vld [vmem:[#allocation4 + $0x380] sm:$0xff]
    %v5266 = vld [vmem:[#allocation4 + $0x388] sm:$0xff]
    %v5267 = vld [vmem:[#allocation4 + $0x390] sm:$0xff]
    %v5268 = vld [vmem:[#allocation4 + $0x398] sm:$0xff]
    %v5269 = vld [vmem:[#allocation4 + $0x3a0] sm:$0xff]
    %v5270 = vld [vmem:[#allocation4 + $0x3a8] sm:$0xff]
    %v5271 = vld [vmem:[#allocation4 + $0x3b0] sm:$0xff]
    %v5272 = vld [vmem:[#allocation4 + $0x3b8] sm:$0xff]
    %v5273 = vld [vmem:[#allocation4 + $0x3c0] sm:$0xff]
    %v5274 = vld [vmem:[#allocation4 + $0x3c8] sm:$0xff]
    %v5275 = vld [vmem:[#allocation4 + $0x3d0] sm:$0xff]
    %v5276 = vld [vmem:[#allocation4 + $0x3d8] sm:$0xff]
    %v5277 = vld [vmem:[#allocation4 + $0x3e0] sm:$0xff]
    %v5278 = vld [vmem:[#allocation4 + $0x3e8] sm:$0xff]
    %v5279 = vld [vmem:[#allocation4 + $0x3f0] sm:$0xff]
    %v5280 = vld [vmem:[#allocation4 + $0x3f8] sm:$0xff]
    %v5281 = vunpack.c.l.s8.bf16 %v5153
    %v5282 = vunpack.c.l.s8.bf16 %v5154
    %v5283 = vunpack.c.l.s8.bf16 %v5155
    %v5284 = vunpack.c.l.s8.bf16 %v5156
    %v5285 = vunpack.c.h.s8.bf16 %v5153
    %v5286 = vunpack.c.h.s8.bf16 %v5154
    %v5287 = vunpack.c.h.s8.bf16 %v5155
    %v5288 = vunpack.c.h.s8.bf16 %v5156
    %v5289 = vunpack.c.l.s8.bf16 %v5157
    %v5290 = vunpack.c.l.s8.bf16 %v5158
    %v5291 = vunpack.c.l.s8.bf16 %v5159
    %v5292 = vunpack.c.l.s8.bf16 %v5160
    %v5293 = vunpack.c.h.s8.bf16 %v5157
    %v5294 = vunpack.c.h.s8.bf16 %v5158
    %v5295 = vunpack.c.h.s8.bf16 %v5159
    %v5296 = vunpack.c.h.s8.bf16 %v5160
    %v5297 = vunpack.c.l.s8.bf16 %v5161
    %v5298 = vunpack.c.l.s8.bf16 %v5162
    %v5299 = vunpack.c.l.s8.bf16 %v5163
    %v5300 = vunpack.c.l.s8.bf16 %v5164
    %v5301 = vunpack.c.h.s8.bf16 %v5161
    %v5302 = vunpack.c.h.s8.bf16 %v5162
    %v5303 = vunpack.c.h.s8.bf16 %v5163
    %v5304 = vunpack.c.h.s8.bf16 %v5164
    %v5305 = vunpack.c.l.s8.bf16 %v5165
    %v5306 = vunpack.c.l.s8.bf16 %v5166
    %v5307 = vunpack.c.l.s8.bf16 %v5167
    %v5308 = vunpack.c.l.s8.bf16 %v5168
    %v5309 = vunpack.c.h.s8.bf16 %v5165
    %v5310 = vunpack.c.h.s8.bf16 %v5166
    %v5311 = vunpack.c.h.s8.bf16 %v5167
    %v5312 = vunpack.c.h.s8.bf16 %v5168
    %v5313 = vunpack.c.l.s8.bf16 %v5169
    %v5314 = vunpack.c.l.s8.bf16 %v5170
    %v5315 = vunpack.c.l.s8.bf16 %v5171
    %v5316 = vunpack.c.l.s8.bf16 %v5172
    %v5317 = vunpack.c.h.s8.bf16 %v5169
    %v5318 = vunpack.c.h.s8.bf16 %v5170
    %v5319 = vunpack.c.h.s8.bf16 %v5171
    %v5320 = vunpack.c.h.s8.bf16 %v5172
    %v5321 = vunpack.c.l.s8.bf16 %v5173
    %v5322 = vunpack.c.l.s8.bf16 %v5174
    %v5323 = vunpack.c.l.s8.bf16 %v5175
    %v5324 = vunpack.c.l.s8.bf16 %v5176
    %v5325 = vunpack.c.h.s8.bf16 %v5173
    %v5326 = vunpack.c.h.s8.bf16 %v5174
    %v5327 = vunpack.c.h.s8.bf16 %v5175
    %v5328 = vunpack.c.h.s8.bf16 %v5176
    %v5329 = vunpack.c.l.s8.bf16 %v5177
    %v5330 = vunpack.c.l.s8.bf16 %v5178
    %v5331 = vunpack.c.l.s8.bf16 %v5179
    %v5332 = vunpack.c.l.s8.bf16 %v5180
    %v5333 = vunpack.c.h.s8.bf16 %v5177
    %v5334 = vunpack.c.h.s8.bf16 %v5178
    %v5335 = vunpack.c.h.s8.bf16 %v5179
    %v5336 = vunpack.c.h.s8.bf16 %v5180
    %v5337 = vunpack.c.l.s8.bf16 %v5181
    %v5338 = vunpack.c.l.s8.bf16 %v5182
    %v5339 = vunpack.c.l.s8.bf16 %v5183
    %v5340 = vunpack.c.l.s8.bf16 %v5184
    %v5341 = vunpack.c.h.s8.bf16 %v5181
    %v5342 = vunpack.c.h.s8.bf16 %v5182
    %v5343 = vunpack.c.h.s8.bf16 %v5183
    %v5344 = vunpack.c.h.s8.bf16 %v5184
    %v5345 = vunpack.c.l.s8.bf16 %v5185
    %v5346 = vunpack.c.l.s8.bf16 %v5186
    %v5347 = vunpack.c.l.s8.bf16 %v5187
    %v5348 = vunpack.c.l.s8.bf16 %v5188
    %v5349 = vunpack.c.h.s8.bf16 %v5185
    %v5350 = vunpack.c.h.s8.bf16 %v5186
    %v5351 = vunpack.c.h.s8.bf16 %v5187
    %v5352 = vunpack.c.h.s8.bf16 %v5188
    %v5353 = vunpack.c.l.s8.bf16 %v5189
    %v5354 = vunpack.c.l.s8.bf16 %v5190
    %v5355 = vunpack.c.l.s8.bf16 %v5191
    %v5356 = vunpack.c.l.s8.bf16 %v5192
    %v5357 = vunpack.c.h.s8.bf16 %v5189
    %v5358 = vunpack.c.h.s8.bf16 %v5190
    %v5359 = vunpack.c.h.s8.bf16 %v5191
    %v5360 = vunpack.c.h.s8.bf16 %v5192
    %v5361 = vunpack.c.l.s8.bf16 %v5193
    %v5362 = vunpack.c.l.s8.bf16 %v5194
    %v5363 = vunpack.c.l.s8.bf16 %v5195
    %v5364 = vunpack.c.l.s8.bf16 %v5196
    %v5365 = vunpack.c.h.s8.bf16 %v5193
    %v5366 = vunpack.c.h.s8.bf16 %v5194
    %v5367 = vunpack.c.h.s8.bf16 %v5195
    %v5368 = vunpack.c.h.s8.bf16 %v5196
    %v5369 = vunpack.c.l.s8.bf16 %v5197
    %v5370 = vunpack.c.l.s8.bf16 %v5198
    %v5371 = vunpack.c.l.s8.bf16 %v5199
    %v5372 = vunpack.c.l.s8.bf16 %v5200
    %v5373 = vunpack.c.h.s8.bf16 %v5197
    %v5374 = vunpack.c.h.s8.bf16 %v5198
    %v5375 = vunpack.c.h.s8.bf16 %v5199
    %v5376 = vunpack.c.h.s8.bf16 %v5200
    %v5377 = vunpack.c.l.s8.bf16 %v5201
    %v5378 = vunpack.c.l.s8.bf16 %v5202
    %v5379 = vunpack.c.l.s8.bf16 %v5203
    %v5380 = vunpack.c.l.s8.bf16 %v5204
    %v5381 = vunpack.c.h.s8.bf16 %v5201
    %v5382 = vunpack.c.h.s8.bf16 %v5202
    %v5383 = vunpack.c.h.s8.bf16 %v5203
    %v5384 = vunpack.c.h.s8.bf16 %v5204
    %v5385 = vunpack.c.l.s8.bf16 %v5205
    %v5386 = vunpack.c.l.s8.bf16 %v5206
    %v5387 = vunpack.c.l.s8.bf16 %v5207
    %v5388 = vunpack.c.l.s8.bf16 %v5208
    %v5389 = vunpack.c.h.s8.bf16 %v5205
    %v5390 = vunpack.c.h.s8.bf16 %v5206
    %v5391 = vunpack.c.h.s8.bf16 %v5207
    %v5392 = vunpack.c.h.s8.bf16 %v5208
    %v5393 = vunpack.c.l.s8.bf16 %v5209
    %v5394 = vunpack.c.l.s8.bf16 %v5210
    %v5395 = vunpack.c.l.s8.bf16 %v5211
    %v5396 = vunpack.c.l.s8.bf16 %v5212
    %v5397 = vunpack.c.h.s8.bf16 %v5209
    %v5398 = vunpack.c.h.s8.bf16 %v5210
    %v5399 = vunpack.c.h.s8.bf16 %v5211
    %v5400 = vunpack.c.h.s8.bf16 %v5212
    %v5401 = vunpack.c.l.s8.bf16 %v5213
    %v5402 = vunpack.c.l.s8.bf16 %v5214
    %v5403 = vunpack.c.l.s8.bf16 %v5215
    %v5404 = vunpack.c.l.s8.bf16 %v5216
    %v5405 = vunpack.c.h.s8.bf16 %v5213
    %v5406 = vunpack.c.h.s8.bf16 %v5214
    %v5407 = vunpack.c.h.s8.bf16 %v5215
    %v5408 = vunpack.c.h.s8.bf16 %v5216
    %v5409 = vunpack.c.l.s8.bf16 %v5217
    %v5410 = vunpack.c.l.s8.bf16 %v5218
    %v5411 = vunpack.c.l.s8.bf16 %v5219
    %v5412 = vunpack.c.l.s8.bf16 %v5220
    %v5413 = vunpack.c.h.s8.bf16 %v5217
    %v5414 = vunpack.c.h.s8.bf16 %v5218
    %v5415 = vunpack.c.h.s8.bf16 %v5219
    %v5416 = vunpack.c.h.s8.bf16 %v5220
    %v5417 = vunpack.c.l.s8.bf16 %v5221
    %v5418 = vunpack.c.l.s8.bf16 %v5222
    %v5419 = vunpack.c.l.s8.bf16 %v5223
    %v5420 = vunpack.c.l.s8.bf16 %v5224
    %v5421 = vunpack.c.h.s8.bf16 %v5221
    %v5422 = vunpack.c.h.s8.bf16 %v5222
    %v5423 = vunpack.c.h.s8.bf16 %v5223
    %v5424 = vunpack.c.h.s8.bf16 %v5224
    %v5425 = vunpack.c.l.s8.bf16 %v5225
    %v5426 = vunpack.c.l.s8.bf16 %v5226
    %v5427 = vunpack.c.l.s8.bf16 %v5227
    %v5428 = vunpack.c.l.s8.bf16 %v5228
    %v5429 = vunpack.c.h.s8.bf16 %v5225
    %v5430 = vunpack.c.h.s8.bf16 %v5226
    %v5431 = vunpack.c.h.s8.bf16 %v5227
    %v5432 = vunpack.c.h.s8.bf16 %v5228
    %v5433 = vunpack.c.l.s8.bf16 %v5229
    %v5434 = vunpack.c.l.s8.bf16 %v5230
    %v5435 = vunpack.c.l.s8.bf16 %v5231
    %v5436 = vunpack.c.l.s8.bf16 %v5232
    %v5437 = vunpack.c.h.s8.bf16 %v5229
    %v5438 = vunpack.c.h.s8.bf16 %v5230
    %v5439 = vunpack.c.h.s8.bf16 %v5231
    %v5440 = vunpack.c.h.s8.bf16 %v5232
    %v5441 = vunpack.c.l.s8.bf16 %v5233
    %v5442 = vunpack.c.l.s8.bf16 %v5234
    %v5443 = vunpack.c.l.s8.bf16 %v5235
    %v5444 = vunpack.c.l.s8.bf16 %v5236
    %v5445 = vunpack.c.h.s8.bf16 %v5233
    %v5446 = vunpack.c.h.s8.bf16 %v5234
    %v5447 = vunpack.c.h.s8.bf16 %v5235
    %v5448 = vunpack.c.h.s8.bf16 %v5236
    %v5449 = vunpack.c.l.s8.bf16 %v5237
    %v5450 = vunpack.c.l.s8.bf16 %v5238
    %v5451 = vunpack.c.l.s8.bf16 %v5239
    %v5452 = vunpack.c.l.s8.bf16 %v5240
    %v5453 = vunpack.c.h.s8.bf16 %v5237
    %v5454 = vunpack.c.h.s8.bf16 %v5238
    %v5455 = vunpack.c.h.s8.bf16 %v5239
    %v5456 = vunpack.c.h.s8.bf16 %v5240
    %v5457 = vunpack.c.l.s8.bf16 %v5241
    %v5458 = vunpack.c.l.s8.bf16 %v5242
    %v5459 = vunpack.c.l.s8.bf16 %v5243
    %v5460 = vunpack.c.l.s8.bf16 %v5244
    %v5461 = vunpack.c.h.s8.bf16 %v5241
    %v5462 = vunpack.c.h.s8.bf16 %v5242
    %v5463 = vunpack.c.h.s8.bf16 %v5243
    %v5464 = vunpack.c.h.s8.bf16 %v5244
    %v5465 = vunpack.c.l.s8.bf16 %v5245
    %v5466 = vunpack.c.l.s8.bf16 %v5246
    %v5467 = vunpack.c.l.s8.bf16 %v5247
    %v5468 = vunpack.c.l.s8.bf16 %v5248
    %v5469 = vunpack.c.h.s8.bf16 %v5245
    %v5470 = vunpack.c.h.s8.bf16 %v5246
    %v5471 = vunpack.c.h.s8.bf16 %v5247
    %v5472 = vunpack.c.h.s8.bf16 %v5248
    %v5473 = vunpack.c.l.s8.bf16 %v5249
    %v5474 = vunpack.c.l.s8.bf16 %v5250
    %v5475 = vunpack.c.l.s8.bf16 %v5251
    %v5476 = vunpack.c.l.s8.bf16 %v5252
    %v5477 = vunpack.c.h.s8.bf16 %v5249
    %v5478 = vunpack.c.h.s8.bf16 %v5250
    %v5479 = vunpack.c.h.s8.bf16 %v5251
    %v5480 = vunpack.c.h.s8.bf16 %v5252
    %v5481 = vunpack.c.l.s8.bf16 %v5253
    %v5482 = vunpack.c.l.s8.bf16 %v5254
    %v5483 = vunpack.c.l.s8.bf16 %v5255
    %v5484 = vunpack.c.l.s8.bf16 %v5256
    %v5485 = vunpack.c.h.s8.bf16 %v5253
    %v5486 = vunpack.c.h.s8.bf16 %v5254
    %v5487 = vunpack.c.h.s8.bf16 %v5255
    %v5488 = vunpack.c.h.s8.bf16 %v5256
    %v5489 = vunpack.c.l.s8.bf16 %v5257
    %v5490 = vunpack.c.l.s8.bf16 %v5258
    %v5491 = vunpack.c.l.s8.bf16 %v5259
    %v5492 = vunpack.c.l.s8.bf16 %v5260
    %v5493 = vunpack.c.h.s8.bf16 %v5257
    %v5494 = vunpack.c.h.s8.bf16 %v5258
    %v5495 = vunpack.c.h.s8.bf16 %v5259
    %v5496 = vunpack.c.h.s8.bf16 %v5260
    %v5497 = vunpack.c.l.s8.bf16 %v5261
    %v5498 = vunpack.c.l.s8.bf16 %v5262
    %v5499 = vunpack.c.l.s8.bf16 %v5263
    %v5500 = vunpack.c.l.s8.bf16 %v5264
    %v5501 = vunpack.c.h.s8.bf16 %v5261
    %v5502 = vunpack.c.h.s8.bf16 %v5262
    %v5503 = vunpack.c.h.s8.bf16 %v5263
    %v5504 = vunpack.c.h.s8.bf16 %v5264
    %v5505 = vunpack.c.l.s8.bf16 %v5265
    %v5506 = vunpack.c.l.s8.bf16 %v5266
    %v5507 = vunpack.c.l.s8.bf16 %v5267
    %v5508 = vunpack.c.l.s8.bf16 %v5268
    %v5509 = vunpack.c.h.s8.bf16 %v5265
    %v5510 = vunpack.c.h.s8.bf16 %v5266
    %v5511 = vunpack.c.h.s8.bf16 %v5267
    %v5512 = vunpack.c.h.s8.bf16 %v5268
    %v5513 = vunpack.c.l.s8.bf16 %v5269
    %v5514 = vunpack.c.l.s8.bf16 %v5270
    %v5515 = vunpack.c.l.s8.bf16 %v5271
    %v5516 = vunpack.c.l.s8.bf16 %v5272
    %v5517 = vunpack.c.h.s8.bf16 %v5269
    %v5518 = vunpack.c.h.s8.bf16 %v5270
    %v5519 = vunpack.c.h.s8.bf16 %v5271
    %v5520 = vunpack.c.h.s8.bf16 %v5272
    %v5521 = vunpack.c.l.s8.bf16 %v5273
    %v5522 = vunpack.c.l.s8.bf16 %v5274
    %v5523 = vunpack.c.l.s8.bf16 %v5275
    %v5524 = vunpack.c.l.s8.bf16 %v5276
    %v5525 = vunpack.c.h.s8.bf16 %v5273
    %v5526 = vunpack.c.h.s8.bf16 %v5274
    %v5527 = vunpack.c.h.s8.bf16 %v5275
    %v5528 = vunpack.c.h.s8.bf16 %v5276
    %v5529 = vunpack.c.l.s8.bf16 %v5277
    %v5530 = vunpack.c.l.s8.bf16 %v5278
    %v5531 = vunpack.c.l.s8.bf16 %v5279
    %v5532 = vunpack.c.l.s8.bf16 %v5280
    %v5533 = vunpack.c.h.s8.bf16 %v5277
    %v5534 = vunpack.c.h.s8.bf16 %v5278
    %v5535 = vunpack.c.h.s8.bf16 %v5279
    %v5536 = vunpack.c.h.s8.bf16 %v5280
    %5537 = vmatprep.subr.bf16.mxu0 %v5282
    %5538 = vmatpush1.bf16.msra.mxu0 %v5281
    %5539 = vmatprep.subr.bf16.mxu0 %v5286
    %5540 = vmatpush1.bf16.msra.mxu0 %v5285
    %5541 = vmatprep.subr.bf16.mxu0 %v5290
    %5542 = vmatpush1.bf16.msra.mxu0 %v5289
    %5543 = vmatprep.subr.bf16.mxu0 %v5294
    %5544 = vmatpush1.bf16.msra.mxu0 %v5293
    %5545 = vmatprep.subr.bf16.mxu0 %v5298
    %5546 = vmatpush1.bf16.msra.mxu0 %v5297
    %5547 = vmatprep.subr.bf16.mxu0 %v5302
    %5548 = vmatpush1.bf16.msra.mxu0 %v5301
    %5549 = vmatprep.subr.bf16.mxu0 %v5306
    %5550 = vmatpush1.bf16.msra.mxu0 %v5305
    %5551 = vmatprep.subr.bf16.mxu0 %v5310
    %5552 = vmatpush1.bf16.msra.mxu0 %v5309
    %5553 = vmatprep.subr.bf16.mxu0 %v5314
    %5554 = vmatpush1.bf16.msra.mxu0 %v5313
    %5555 = vmatprep.subr.bf16.mxu0 %v5318
    %5556 = vmatpush1.bf16.msra.mxu0 %v5317
    %5557 = vmatprep.subr.bf16.mxu0 %v5322
    %5558 = vmatpush1.bf16.msra.mxu0 %v5321
    %5559 = vmatprep.subr.bf16.mxu0 %v5326
    %5560 = vmatpush1.bf16.msra.mxu0 %v5325
    %5561 = vmatprep.subr.bf16.mxu0 %v5330
    %5562 = vmatpush1.bf16.msra.mxu0 %v5329
    %5563 = vmatprep.subr.bf16.mxu0 %v5334
    %5564 = vmatpush1.bf16.msra.mxu0 %v5333
    %5565 = vmatprep.subr.bf16.mxu0 %v5338
    %5566 = vmatpush1.bf16.msra.mxu0 %v5337
    %5567 = vmatprep.subr.bf16.mxu0 %v5342
    %5568 = vmatpush1.bf16.msra.mxu0 %v5341
    %5569 = vmatprep.mubr.bf16.mxu0 %v5142
    %5570 = vmatmul.mubr.bf16.gmra.mrb[0].mxu0 %v5141
    %v5571 = vpop.f32.mrb[0].mxu0
    %v5572 = vadd.f32 0.0, %v5571
    %v5573 = vpop.f32.mrb[0].mxu0
    %v5574 = vadd.f32 0.0, %v5573
    %v5575 = vpop.f32.mrb[0].mxu0
    %v5576 = vpop.f32.mrb[0].mxu0
    %5577 = vdwg.mxu0
    %5578 = vmatprep.subr.bf16.mxu0 %v5346
    %5579 = vmatpush1.bf16.msra.mxu0 %v5345
    %5580 = vmatprep.subr.bf16.mxu0 %v5350
    %5581 = vmatpush1.bf16.msra.mxu0 %v5349
    %5582 = vmatprep.subr.bf16.mxu0 %v5354
    %5583 = vmatpush1.bf16.msra.mxu0 %v5353
    %5584 = vmatprep.subr.bf16.mxu0 %v5358
    %5585 = vmatpush1.bf16.msra.mxu0 %v5357
    %5586 = vmatprep.subr.bf16.mxu0 %v5362
    %5587 = vmatpush1.bf16.msra.mxu0 %v5361
    %5588 = vmatprep.subr.bf16.mxu0 %v5366
    %5589 = vmatpush1.bf16.msra.mxu0 %v5365
    %5590 = vmatprep.subr.bf16.mxu0 %v5370
    %5591 = vmatpush1.bf16.msra.mxu0 %v5369
    %5592 = vmatprep.subr.bf16.mxu0 %v5374
    %5593 = vmatpush1.bf16.msra.mxu0 %v5373
    %5594 = vmatprep.subr.bf16.mxu0 %v5378
    %5595 = vmatpush1.bf16.msra.mxu0 %v5377
    %5596 = vmatprep.subr.bf16.mxu0 %v5382
    %5597 = vmatpush1.bf16.msra.mxu0 %v5381
    %5598 = vmatprep.subr.bf16.mxu0 %v5386
    %5599 = vmatpush1.bf16.msra.mxu0 %v5385
    %5600 = vmatprep.subr.bf16.mxu0 %v5390
    %5601 = vmatpush1.bf16.msra.mxu0 %v5389
    %5602 = vmatprep.subr.bf16.mxu0 %v5394
    %5603 = vmatpush1.bf16.msra.mxu0 %v5393
    %5604 = vmatprep.subr.bf16.mxu0 %v5398
    %5605 = vmatpush1.bf16.msra.mxu0 %v5397
    %5606 = vmatprep.subr.bf16.mxu0 %v5402
    %5607 = vmatpush1.bf16.msra.mxu0 %v5401
    %5608 = vmatprep.subr.bf16.mxu0 %v5406
    %5609 = vmatpush1.bf16.msra.mxu0 %v5405
    %5610 = vmatprep.mubr.bf16.mxu0 %v5144
    %5611 = vmatmul.mubr.bf16.gmra.mrb[0].mxu0 %v5143
    %v5612 = vpop.f32.mrb[0].mxu0
    %v5613 = vadd.f32 %v5572, %v5612
    %v5614 = vpop.f32.mrb[0].mxu0
    %v5615 = vadd.f32 %v5574, %v5614
    %v5616 = vpop.f32.mrb[0].mxu0
    %v5617 = vpop.f32.mrb[0].mxu0
    %5618 = vdwg.mxu0
    %5619 = vmatprep.subr.bf16.mxu0 %v5410
    %5620 = vmatpush1.bf16.msra.mxu0 %v5409
    %5621 = vmatprep.subr.bf16.mxu0 %v5414
    %5622 = vmatpush1.bf16.msra.mxu0 %v5413
    %5623 = vmatprep.subr.bf16.mxu0 %v5418
    %5624 = vmatpush1.bf16.msra.mxu0 %v5417
    %5625 = vmatprep.subr.bf16.mxu0 %v5422
    %5626 = vmatpush1.bf16.msra.mxu0 %v5421
    %5627 = vmatprep.subr.bf16.mxu0 %v5426
    %5628 = vmatpush1.bf16.msra.mxu0 %v5425
    %5629 = vmatprep.subr.bf16.mxu0 %v5430
    %5630 = vmatpush1.bf16.msra.mxu0 %v5429
    %5631 = vmatprep.subr.bf16.mxu0 %v5434
    %5632 = vmatpush1.bf16.msra.mxu0 %v5433
    %5633 = vmatprep.subr.bf16.mxu0 %v5438
    %5634 = vmatpush1.bf16.msra.mxu0 %v5437
    %5635 = vmatprep.subr.bf16.mxu0 %v5442
    %5636 = vmatpush1.bf16.msra.mxu0 %v5441
    %5637 = vmatprep.subr.bf16.mxu0 %v5446
    %5638 = vmatpush1.bf16.msra.mxu0 %v5445
    %5639 = vmatprep.subr.bf16.mxu0 %v5450
    %5640 = vmatpush1.bf16.msra.mxu0 %v5449
    %5641 = vmatprep.subr.bf16.mxu0 %v5454
    %5642 = vmatpush1.bf16.msra.mxu0 %v5453
    %5643 = vmatprep.subr.bf16.mxu0 %v5458
    %5644 = vmatpush1.bf16.msra.mxu0 %v5457
    %5645 = vmatprep.subr.bf16.mxu0 %v5462
    %5646 = vmatpush1.bf16.msra.mxu0 %v5461
    %5647 = vmatprep.subr.bf16.mxu0 %v5466
    %5648 = vmatpush1.bf16.msra.mxu0 %v5465
    %5649 = vmatprep.subr.bf16.mxu0 %v5470
    %5650 = vmatpush1.bf16.msra.mxu0 %v5469
    %5651 = vmatprep.mubr.bf16.mxu0 %v5146
    %5652 = vmatmul.mubr.bf16.gmra.mrb[0].mxu0 %v5145
    %v5653 = vpop.f32.mrb[0].mxu0
    %v5654 = vadd.f32 %v5613, %v5653
    %v5655 = vpop.f32.mrb[0].mxu0
    %v5656 = vadd.f32 %v5615, %v5655
    %v5657 = vpop.f32.mrb[0].mxu0
    %v5658 = vpop.f32.mrb[0].mxu0
    %5659 = vdwg.mxu0
    %5660 = vmatprep.subr.bf16.mxu0 %v5474
    %5661 = vmatpush1.bf16.msra.mxu0 %v5473
    %5662 = vmatprep.subr.bf16.mxu0 %v5478
    %5663 = vmatpush1.bf16.msra.mxu0 %v5477
    %5664 = vmatprep.subr.bf16.mxu0 %v5482
    %5665 = vmatpush1.bf16.msra.mxu0 %v5481
    %5666 = vmatprep.subr.bf16.mxu0 %v5486
    %5667 = vmatpush1.bf16.msra.mxu0 %v5485
    %5668 = vmatprep.subr.bf16.mxu0 %v5490
    %5669 = vmatpush1.bf16.msra.mxu0 %v5489
    %5670 = vmatprep.subr.bf16.mxu0 %v5494
    %5671 = vmatpush1.bf16.msra.mxu0 %v5493
    %5672 = vmatprep.subr.bf16.mxu0 %v5498
    %5673 = vmatpush1.bf16.msra.mxu0 %v5497
    %5674 = vmatprep.subr.bf16.mxu0 %v5502
    %5675 = vmatpush1.bf16.msra.mxu0 %v5501
    %5676 = vmatprep.subr.bf16.mxu0 %v5506
    %5677 = vmatpush1.bf16.msra.mxu0 %v5505
    %5678 = vmatprep.subr.bf16.mxu0 %v5510
    %5679 = vmatpush1.bf16.msra.mxu0 %v5509
    %5680 = vmatprep.subr.bf16.mxu0 %v5514
    %5681 = vmatpush1.bf16.msra.mxu0 %v5513
    %5682 = vmatprep.subr.bf16.mxu0 %v5518
    %5683 = vmatpush1.bf16.msra.mxu0 %v5517
    %5684 = vmatprep.subr.bf16.mxu0 %v5522
    %5685 = vmatpush1.bf16.msra.mxu0 %v5521
    %5686 = vmatprep.subr.bf16.mxu0 %v5526
    %5687 = vmatpush1.bf16.msra.mxu0 %v5525
    %5688 = vmatprep.subr.bf16.mxu0 %v5530
    %5689 = vmatpush1.bf16.msra.mxu0 %v5529
    %5690 = vmatprep.subr.bf16.mxu0 %v5534
    %5691 = vmatpush1.bf16.msra.mxu0 %v5533
    %5692 = vmatprep.mubr.bf16.mxu0 %v5148
    %5693 = vmatmul.mubr.bf16.gmra.mrb[0].mxu0 %v5147
    %v5694 = vpop.f32.mrb[0].mxu0
    %v5695 = vadd.f32 %v5654, %v5694
    %v5696 = vpop.f32.mrb[0].mxu0
    %v5697 = vadd.f32 %v5656, %v5696
    %v5698 = vpop.f32.mrb[0].mxu0
    %v5699 = vpop.f32.mrb[0].mxu0
    %5700 = vdwg.mxu0
    %5701 = vmatprep.subr.bf16.mxu0 %v5284
    %5702 = vmatpush1.bf16.msra.mxu0 %v5283
    %5703 = vmatprep.subr.bf16.mxu0 %v5288
    %5704 = vmatpush1.bf16.msra.mxu0 %v5287
    %5705 = vmatprep.subr.bf16.mxu0 %v5292
    %5706 = vmatpush1.bf16.msra.mxu0 %v5291
    %5707 = vmatprep.subr.bf16.mxu0 %v5296
    %5708 = vmatpush1.bf16.msra.mxu0 %v5295
    %5709 = vmatprep.subr.bf16.mxu0 %v5300
    %5710 = vmatpush1.bf16.msra.mxu0 %v5299
    %5711 = vmatprep.subr.bf16.mxu0 %v5304
    %5712 = vmatpush1.bf16.msra.mxu0 %v5303
    %5713 = vmatprep.subr.bf16.mxu0 %v5308
    %5714 = vmatpush1.bf16.msra.mxu0 %v5307
    %5715 = vmatprep.subr.bf16.mxu0 %v5312
    %5716 = vmatpush1.bf16.msra.mxu0 %v5311
    %5717 = vmatprep.subr.bf16.mxu0 %v5316
    %5718 = vmatpush1.bf16.msra.mxu0 %v5315
    %5719 = vmatprep.subr.bf16.mxu0 %v5320
    %5720 = vmatpush1.bf16.msra.mxu0 %v5319
    %5721 = vmatprep.subr.bf16.mxu0 %v5324
    %5722 = vmatpush1.bf16.msra.mxu0 %v5323
    %5723 = vmatprep.subr.bf16.mxu0 %v5328
    %5724 = vmatpush1.bf16.msra.mxu0 %v5327
    %5725 = vmatprep.subr.bf16.mxu0 %v5332
    %5726 = vmatpush1.bf16.msra.mxu0 %v5331
    %5727 = vmatprep.subr.bf16.mxu0 %v5336
    %5728 = vmatpush1.bf16.msra.mxu0 %v5335
    %5729 = vmatprep.subr.bf16.mxu0 %v5340
    %5730 = vmatpush1.bf16.msra.mxu0 %v5339
    %5731 = vmatprep.subr.bf16.mxu0 %v5344
    %5732 = vmatpush1.bf16.msra.mxu0 %v5343
    %5733 = vmatprep.mubr.bf16.mxu0 %v5142
    %5734 = vmatmul.mubr.bf16.gmra.mrb[0].mxu0 %v5141
    %v5735 = vpop.f32.mrb[0].mxu0
    %v5736 = vadd.f32 0.0, %v5735
    %v5737 = vpop.f32.mrb[0].mxu0
    %v5738 = vadd.f32 0.0, %v5737
    %v5739 = vpop.f32.mrb[0].mxu0
    %v5740 = vpop.f32.mrb[0].mxu0
    %5741 = vdwg.mxu0
    %5742 = vmatprep.subr.bf16.mxu0 %v5348
    %5743 = vmatpush1.bf16.msra.mxu0 %v5347
    %5744 = vmatprep.subr.bf16.mxu0 %v5352
    %5745 = vmatpush1.bf16.msra.mxu0 %v5351
    %5746 = vmatprep.subr.bf16.mxu0 %v5356
    %5747 = vmatpush1.bf16.msra.mxu0 %v5355
    %5748 = vmatprep.subr.bf16.mxu0 %v5360
    %5749 = vmatpush1.bf16.msra.mxu0 %v5359
    %5750 = vmatprep.subr.bf16.mxu0 %v5364
    %5751 = vmatpush1.bf16.msra.mxu0 %v5363
    %5752 = vmatprep.subr.bf16.mxu0 %v5368
    %5753 = vmatpush1.bf16.msra.mxu0 %v5367
    %5754 = vmatprep.subr.bf16.mxu0 %v5372
    %5755 = vmatpush1.bf16.msra.mxu0 %v5371
    %5756 = vmatprep.subr.bf16.mxu0 %v5376
    %5757 = vmatpush1.bf16.msra.mxu0 %v5375
    %5758 = vmatprep.subr.bf16.mxu0 %v5380
    %5759 = vmatpush1.bf16.msra.mxu0 %v5379
    %5760 = vmatprep.subr.bf16.mxu0 %v5384
    %5761 = vmatpush1.bf16.msra.mxu0 %v5383
    %5762 = vmatprep.subr.bf16.mxu0 %v5388
    %5763 = vmatpush1.bf16.msra.mxu0 %v5387
    %5764 = vmatprep.subr.bf16.mxu0 %v5392
    %5765 = vmatpush1.bf16.msra.mxu0 %v5391
    %5766 = vmatprep.subr.bf16.mxu0 %v5396
    %5767 = vmatpush1.bf16.msra.mxu0 %v5395
    %5768 = vmatprep.subr.bf16.mxu0 %v5400
    %5769 = vmatpush1.bf16.msra.mxu0 %v5399
    %5770 = vmatprep.subr.bf16.mxu0 %v5404
    %5771 = vmatpush1.bf16.msra.mxu0 %v5403
    %5772 = vmatprep.subr.bf16.mxu0 %v5408
    %5773 = vmatpush1.bf16.msra.mxu0 %v5407
    %5774 = vmatprep.mubr.bf16.mxu0 %v5144
    %5775 = vmatmul.mubr.bf16.gmra.mrb[0].mxu0 %v5143
    %v5776 = vpop.f32.mrb[0].mxu0
    %v5777 = vadd.f32 %v5736, %v5776
    %v5778 = vpop.f32.mrb[0].mxu0
    %v5779 = vadd.f32 %v5738, %v5778
    %v5780 = vpop.f32.mrb[0].mxu0
    %v5781 = vpop.f32.mrb[0].mxu0
    %5782 = vdwg.mxu0
    %5783 = vmatprep.subr.bf16.mxu0 %v5412
    %5784 = vmatpush1.bf16.msra.mxu0 %v5411
    %5785 = vmatprep.subr.bf16.mxu0 %v5416
    %5786 = vmatpush1.bf16.msra.mxu0 %v5415
    %5787 = vmatprep.subr.bf16.mxu0 %v5420
    %5788 = vmatpush1.bf16.msra.mxu0 %v5419
    %5789 = vmatprep.subr.bf16.mxu0 %v5424
    %5790 = vmatpush1.bf16.msra.mxu0 %v5423
    %5791 = vmatprep.subr.bf16.mxu0 %v5428
    %5792 = vmatpush1.bf16.msra.mxu0 %v5427
    %5793 = vmatprep.subr.bf16.mxu0 %v5432
    %5794 = vmatpush1.bf16.msra.mxu0 %v5431
    %5795 = vmatprep.subr.bf16.mxu0 %v5436
    %5796 = vmatpush1.bf16.msra.mxu0 %v5435
    %5797 = vmatprep.subr.bf16.mxu0 %v5440
    %5798 = vmatpush1.bf16.msra.mxu0 %v5439
    %5799 = vmatprep.subr.bf16.mxu0 %v5444
    %5800 = vmatpush1.bf16.msra.mxu0 %v5443
    %5801 = vmatprep.subr.bf16.mxu0 %v5448
    %5802 = vmatpush1.bf16.msra.mxu0 %v5447
    %5803 = vmatprep.subr.bf16.mxu0 %v5452
    %5804 = vmatpush1.bf16.msra.mxu0 %v5451
    %5805 = vmatprep.subr.bf16.mxu0 %v5456
    %5806 = vmatpush1.bf16.msra.mxu0 %v5455
    %5807 = vmatprep.subr.bf16.mxu0 %v5460
    %5808 = vmatpush1.bf16.msra.mxu0 %v5459
    %5809 = vmatprep.subr.bf16.mxu0 %v5464
    %5810 = vmatpush1.bf16.msra.mxu0 %v5463
    %5811 = vmatprep.subr.bf16.mxu0 %v5468
    %5812 = vmatpush1.bf16.msra.mxu0 %v5467
    %5813 = vmatprep.subr.bf16.mxu0 %v5472
    %5814 = vmatpush1.bf16.msra.mxu0 %v5471
    %5815 = vmatprep.mubr.bf16.mxu0 %v5146
    %5816 = vmatmul.mubr.bf16.gmra.mrb[0].mxu0 %v5145
    %v5817 = vpop.f32.mrb[0].mxu0
    %v5818 = vadd.f32 %v5777, %v5817
    %v5819 = vpop.f32.mrb[0].mxu0
    %v5820 = vadd.f32 %v5779, %v5819
    %v5821 = vpop.f32.mrb[0].mxu0
    %v5822 = vpop.f32.mrb[0].mxu0
    %5823 = vdwg.mxu0
    %5824 = vmatprep.subr.bf16.mxu0 %v5476
    %5825 = vmatpush1.bf16.msra.mxu0 %v5475
    %5826 = vmatprep.subr.bf16.mxu0 %v5480
    %5827 = vmatpush1.bf16.msra.mxu0 %v5479
    %5828 = vmatprep.subr.bf16.mxu0 %v5484
    %5829 = vmatpush1.bf16.msra.mxu0 %v5483
    %5830 = vmatprep.subr.bf16.mxu0 %v5488
    %5831 = vmatpush1.bf16.msra.mxu0 %v5487
    %5832 = vmatprep.subr.bf16.mxu0 %v5492
    %5833 = vmatpush1.bf16.msra.mxu0 %v5491
    %5834 = vmatprep.subr.bf16.mxu0 %v5496
    %5835 = vmatpush1.bf16.msra.mxu0 %v5495
    %5836 = vmatprep.subr.bf16.mxu0 %v5500
    %5837 = vmatpush1.bf16.msra.mxu0 %v5499
    %5838 = vmatprep.subr.bf16.mxu0 %v5504
    %5839 = vmatpush1.bf16.msra.mxu0 %v5503
    %5840 = vmatprep.subr.bf16.mxu0 %v5508
    %5841 = vmatpush1.bf16.msra.mxu0 %v5507
    %5842 = vmatprep.subr.bf16.mxu0 %v5512
    %5843 = vmatpush1.bf16.msra.mxu0 %v5511
    %5844 = vmatprep.subr.bf16.mxu0 %v5516
    %5845 = vmatpush1.bf16.msra.mxu0 %v5515
    %5846 = vmatprep.subr.bf16.mxu0 %v5520
    %5847 = vmatpush1.bf16.msra.mxu0 %v5519
    %5848 = vmatprep.subr.bf16.mxu0 %v5524
    %5849 = vmatpush1.bf16.msra.mxu0 %v5523
    %5850 = vmatprep.subr.bf16.mxu0 %v5528
    %5851 = vmatpush1.bf16.msra.mxu0 %v5527
    %5852 = vmatprep.subr.bf16.mxu0 %v5532
    %5853 = vmatpush1.bf16.msra.mxu0 %v5531
    %5854 = vmatprep.subr.bf16.mxu0 %v5536
    %5855 = vmatpush1.bf16.msra.mxu0 %v5535
    %5856 = vmatprep.mubr.bf16.mxu0 %v5148
    %5857 = vmatmul.mubr.bf16.gmra.mrb[0].mxu0 %v5147
    %v5858 = vpop.f32.mrb[0].mxu0
    %v5859 = vadd.f32 %v5818, %v5858
    %v5860 = vpop.f32.mrb[0].mxu0
    %v5861 = vadd.f32 %v5820, %v5860
    %v5862 = vpop.f32.mrb[0].mxu0
    %v5863 = vpop.f32.mrb[0].mxu0
    %5864 = vdwg.mxu0
    %v5865 = vlaneseq
    %v5866 = vshrl.u32 %v5865, 7
    %v5867 = vsub.s32 7, %v5866
    %v5868 = vrot.slane %v1499, %v5867
    %v5869 = vlaneseq
    %v5870 = vshrl.u32 %v5869, 7
    %v5871 = vsub.s32 7, %v5870
    %v5872 = vrot.slane %v1500, %v5871
    %v5873 = vlaneseq
    %v5874 = vshrl.u32 %v5873, 7
    %v5875 = vsub.s32 7, %v5874
    %v5876 = vrot.slane %v1501, %v5875
    %v5877 = vlaneseq
    %v5878 = vshrl.u32 %v5877, 7
    %v5879 = vsub.s32 7, %v5878
    %v5880 = vrot.slane %v1502, %v5879
    %v5881 = vmul.f32 %v5695, %v5868
    %v5882 = vmul.f32 %v5697, %v5872
    %v5883 = vmul.f32 %v5859, %v5876
    %v5884 = vmul.f32 %v5861, %v5880
    %v5885 = vlaneseq
    %v5886 = vshrl.u32 %v5885, 7
    %v5887 = vsub.s32 2, %v5886
    %v5888 = vrot.slane %v1499, %v5887
    %v5889 = vlaneseq
    %v5890 = vshrl.u32 %v5889, 7
    %v5891 = vsub.s32 2, %v5890
    %v5892 = vrot.slane %v1500, %v5891
    %v5893 = vlaneseq
    %v5894 = vshrl.u32 %v5893, 7
    %v5895 = vsub.s32 2, %v5894
    %v5896 = vrot.slane %v1501, %v5895
    %v5897 = vlaneseq
    %v5898 = vshrl.u32 %v5897, 7
    %v5899 = vsub.s32 2, %v5898
    %v5900 = vrot.slane %v1502, %v5899
    %v5901 = vadd.f32 %v5881, %v5888
    %v5902 = vadd.f32 %v5882, %v5892
    %v5903 = vadd.f32 %v5883, %v5896
    %v5904 = vadd.f32 %v5884, %v5900
    %v5905 = vmax.f32 %v5901, 0.0
    %v5906 = vmax.f32 %v5902, 0.0
    %v5907 = vmax.f32 %v5903, 0.0
    %v5908 = vmax.f32 %v5904, 0.0
    %v5909 = vlaneseq
    %v5910 = vshrl.u32 %v5909, 7
    %v5911 = vsub.s32 4, %v5910
    %v5912 = vrot.slane %v1499, %v5911
    %v5913 = vlaneseq
    %v5914 = vshrl.u32 %v5913, 7
    %v5915 = vsub.s32 4, %v5914
    %v5916 = vrot.slane %v1500, %v5915
    %v5917 = vlaneseq
    %v5918 = vshrl.u32 %v5917, 7
    %v5919 = vsub.s32 4, %v5918
    %v5920 = vrot.slane %v1501, %v5919
    %v5921 = vlaneseq
    %v5922 = vshrl.u32 %v5921, 7
    %v5923 = vsub.s32 4, %v5922
    %v5924 = vrot.slane %v1502, %v5923
    %v5925 = vmul.f32 %v5905, %v5912
    %v5926 = vmul.f32 %v5906, %v5916
    %v5927 = vmul.f32 %v5907, %v5920
    %v5928 = vmul.f32 %v5908, %v5924
    %v5929 = vadd.f32 %v5925, %v5926
    %v5930 = vadd.f32 %v5929, %v5927
    %v5931 = vadd.f32 %v5930, %v5928
    %5932 = vadd.xlane.f32.xlu0 %v5931
    %v5933 = vpop.xlane.xlu0 %5932
    %v5934 = vlaneseq
    %v5935 = vshrl.u32 %v5934, 7
    %v5936 = vsub.s32 3, %v5935
    %v5937 = vrot.slane %v1499, %v5936
    %v5938 = vadd.f32 %v5933, %v5937
    %vm5939 = vcmask 7168
    %5940 = vst.msk [vmem:[%s13] sm:$0xff] %vm5939, %v5938
    // Predicated region
    $region90: #{tpu_custom_call.1} parent=1 // pred_check
      _
    $region91: #{tpu_custom_call.1} parent=1 // pred_check_branch
      %5942 = sbr.rel (0) target = $region93
    $region92: #{tpu_custom_call.1} parent=1 // pred_region
      _
    $region93: #{tpu_custom_call.1} parent=1 // pred_fallthru
      _
    // Predicated region
    $region94: #{tpu_custom_call.1} parent=1 // pred_check
      _
    $region95: #{tpu_custom_call.1} parent=1 // pred_check_branch
      %5944 = sbr.rel (0) target = $region97
    $region96: #{tpu_custom_call.1} parent=1 // pred_region
      _
    $region97: #{tpu_custom_call.1} parent=1 // pred_fallthru
      _
    %5945 = vsyncpa [#allocation7], 1
    %5946 = vsyncpa [#allocation9], 1
    %5947 = vsyncpa [#allocation12], 1
    %5948 = vsyncpa [#allocation15], 1
    %5949 = vsyncpa [#allocation18], 1
  %5950 = vsyncmov [#allocation5]
  %s5951 = vpop.sfrf %5950
  %p5952 = scmp.eq.s32.totalorder %s5951, 0
  %p5953 = pneg %p5952
  %5955 = shalt.err (%p5953)
  %s5956 = scalar_lea.sflag [#allocation5], 1
  %5957 = vsyncmov %s5956
  %s5958 = vpop.sfrf %5957
  %p5959 = scmp.eq.s32.totalorder %s5958, 0
  %p5960 = pneg %p5959
  %5962 = shalt.err (%p5960)
  %s5963 = scalar_lea.sflag [#allocation5], 2
  %5964 = vsyncmov %s5963
  %s5965 = vpop.sfrf %5964
  %p5966 = scmp.eq.s32.totalorder %s5965, 0
  %p5967 = pneg %p5966
  %5969 = shalt.err (%p5967)
  %s5970 = scalar_lea.sflag [#allocation5], 3
  %5971 = vsyncmov %s5970
  %s5972 = vpop.sfrf %5971
  %p5973 = scmp.eq.s32.totalorder %s5972, 0
  %p5974 = pneg %p5973
  %5976 = shalt.err (%p5974)

</llo_original>
